<compile_context>
chip_gen: v7x
topology: tpu7x:2x2x1
jax: 0.10.0
libtpu: 0.0.40
codegen_flags: <defaults>
</compile_context>

<pallas_src>
import functools

import jax
import jax.numpy as jnp
from jax import lax
from jax.experimental import pallas as pl
from jax.experimental.pallas import tpu as pltpu


# ----------------------------------------------------------------------------
# Conv3x3 (pad=1, im2col) + folded BatchNorm + ReLU + MaxPool over frequency
# ----------------------------------------------------------------------------
def _conv_bn_relu_pool_kernel(xc_ref, w_ref, sc_ref, sh_ref, o_ref, *,
                              FC, T, K, Cout, pool):
    # xc_ref: [1, FC, T, K=9*Cin] (im2col block)   w_ref: [K, Cout]
    # sc/sh : [1, Cout]                            o_ref: [1, FC//pool, T, Cout]
    lhs = xc_ref[0].reshape(FC * T, K)                      # layout no-op (T == 8)
    y = jnp.dot(lhs, w_ref[...], preferred_element_type=jnp.float32)
    y = jnp.maximum(y * sc_ref[...] + sh_ref[...], 0.0)     # folded BN + ReLU
    y = y.reshape(FC // pool, pool, T, Cout).max(axis=1)    # MaxPool2d((1, pool))
    o_ref[0] = y


def conv_bn_relu_pool(x, w, scale, shift, pool):
    # x: [B, F, T, Cin]; w: [3, 3, Cin, Cout]; scale/shift: [1, Cout]
    B, F, T, Cin = x.shape
    Cout = w.shape[-1]
    K = 9 * Cin

    # freq-chunk size: multiple of pool, divides F, matmul M = FC*T capped at 256
    FC = pool
    while (FC * 2 <= F) and (F % (FC * 2) == 0) and (FC * 2 * T <= 256):
        FC *= 2

    # im2col in the wrapper (XLA glue): minor dim becomes 9*Cin.
    xp = jnp.pad(x, ((0, 0), (1, 1), (1, 1), (0, 0)))        # [B, F+2, T+2, Cin]
    cols = [xp[:, kf:kf + F, kt:kt + T, :] for kf in range(3) for kt in range(3)]
    xcol = jnp.concatenate(cols, axis=-1)                    # [B, F, T, 9*Cin]
    wf = w.reshape(K, Cout)                                  # (kf, kt, cin) row order

    kern = functools.partial(_conv_bn_relu_pool_kernel, FC=FC, T=T, K=K,
                             Cout=Cout, pool=pool)
    return pl.pallas_call(
        kern,
        out_shape=jax.ShapeDtypeStruct((B, F // pool, T, Cout), jnp.float32),
        grid_spec=pltpu.PrefetchScalarGridSpec(
            num_scalar_prefetch=0,
            grid=(B, F // FC),
            in_specs=[
                pl.BlockSpec((1, FC, T, K), lambda b, c: (b, c, 0, 0)),
                pl.BlockSpec((K, Cout), lambda b, c: (0, 0)),
                pl.BlockSpec((1, Cout), lambda b, c: (0, 0)),
                pl.BlockSpec((1, Cout), lambda b, c: (0, 0)),
            ],
            out_specs=pl.BlockSpec((1, FC // pool, T, Cout),
                                   lambda b, c: (b, c, 0, 0)),
        ),
        compiler_params=pltpu.CompilerParams(
            dimension_semantics=("parallel", "parallel")),
    )(xcol, wf, scale, shift)


# ----------------------------------------------------------------------------
# Fused bidirectional GRU layer (PyTorch gate order r|z|n).  Both directions
# and the whole batch live in one padded row block (Rp rows, multiple of 8);
# the recurrence is one block-diagonal [Rp,2H]x[2H,3H] dot per time step.
# ----------------------------------------------------------------------------
def _bigru_layer_kernel(xblk_ref, wih_ref, bih_ref, whh_ref, bhh_ref,
                        o_ref, gx_ref, *, T, B, H, Rp):
    # xblk_ref: [T, Rp, 2*IN]  rows per step = [fwd batch | rev bwd batch | pad]
    # wih_ref : [2*IN, 3H]  whh_ref: [2*H, 3H]  bih/bhh_ref: [Rp, 3H]
    # o_ref   : [T, Rp, H]  gx_ref (scratch): [T, Rp, 3H]
    Tn, Rn, IN2 = xblk_ref.shape
    # Input projection for every (t, direction, batch) row: one big MXU matmul.
    # Both reshapes are layout no-ops because Rp is a multiple of 8.
    gx = jnp.dot(xblk_ref[...].reshape(Tn * Rn, IN2), wih_ref[...],
                 preferred_element_type=jnp.float32)
    gx_ref[...] = gx.reshape(Tn, Rn, 3 * H)

    row = lax.broadcasted_iota(jnp.int32, (Rp, 1), 0)
    mf = (row < B).astype(jnp.float32)            # 1 for forward rows, 0 otherwise
    mb = 1.0 - mf

    def step(i, hcat):                            # hcat: [Rp, 2H] block-diag state
        hprev = hcat[:, :H] + hcat[:, H:]         # exactly one half per row is nonzero
        gxt = gx_ref[i] + bih_ref[...]
        gh = jnp.dot(hcat, whh_ref[...],
                     preferred_element_type=jnp.float32) + bhh_ref[...]
        r = jax.nn.sigmoid(gxt[:, 0:H] + gh[:, 0:H])
        z = jax.nn.sigmoid(gxt[:, H:2 * H] + gh[:, H:2 * H])
        n = jnp.tanh(gxt[:, 2 * H:3 * H] + r * gh[:, 2 * H:3 * H])
        hnew = (1.0 - z) * n + z * hprev
        o_ref[i] = hnew
        return jnp.concatenate([hnew * mf, hnew * mb], axis=1)

    lax.fori_loop(0, T, step, jnp.zeros((Rp, 2 * H), jnp.float32), unroll=True)


def bigru_layer(x, pf, pb):
    # x: [B, T, IN]; pf/pb hold torch-transposed weights (gate columns r|z|n)
    B, T, IN = x.shape
    H = pf["whh"].shape[0]
    R = 2 * B
    Rp = ((R + 7) // 8) * 8          # pad rows to a full sublane tile

    # Layout glue (XLA): forward rows carry x, backward rows carry time-reversed x,
    # placed block-diagonally so one [.,2*IN]x[2*IN,3H] matmul applies W_ih per dir.
    xf = jnp.transpose(x, (1, 0, 2))                        # [T, B, IN]
    xb = jnp.transpose(x[:, ::-1, :], (1, 0, 2))            # time-reversed
    zer = jnp.zeros_like(xf)
    xblk = jnp.concatenate(
        [jnp.concatenate([xf, zer], axis=-1),
         jnp.concatenate([zer, xb], axis=-1)], axis=1)      # [T, 2B, 2*IN]
    if Rp > R:
        xblk = jnp.pad(xblk, ((0, 0), (0, Rp - R), (0, 0)))

    wih_blk = jnp.concatenate([pf["wih"], pb["wih"]], axis=0)      # [2*IN, 3H]
    whh_blk = jnp.concatenate([pf["whh"], pb["whh"]], axis=0)      # [2*H, 3H]
    zpad = jnp.zeros((Rp - R, 3 * H), jnp.float32)
    bih_rows = jnp.concatenate([jnp.tile(pf["bih"], (B, 1)),
                                jnp.tile(pb["bih"], (B, 1)), zpad], axis=0)
    bhh_rows = jnp.concatenate([jnp.tile(pf["bhh"], (B, 1)),
                                jnp.tile(pb["bhh"], (B, 1)), zpad], axis=0)

    kern = functools.partial(_bigru_layer_kernel, T=T, B=B, H=H, Rp=Rp)
    hseq = pl.pallas_call(
        kern,
        out_shape=jax.ShapeDtypeStruct((T, Rp, H), jnp.float32),
        scratch_shapes=[pltpu.VMEM((T, Rp, 3 * H), jnp.float32)],
    )(xblk, wih_blk, bih_rows, whh_blk, bhh_rows)

    hf = jnp.transpose(hseq[:, :B, :], (1, 0, 2))                  # [B, T, H]
    hb = jnp.transpose(hseq[:, B:R, :], (1, 0, 2))[:, ::-1, :]     # undo reversal
    return jnp.concatenate([hf, hb], axis=-1)                      # [B, T, 2H]


# ----------------------------------------------------------------------------
# SED / DOA heads: fc_sed1|fc_doa1 fused into one [256,256] dot, then
# fc_sed2 and per-axis fc_doa2 + L2 normalization (torch convention: /(norm+1e-12)).
# ----------------------------------------------------------------------------
def _heads_kernel(x_ref, w1_ref, b1_ref, w2s_ref, b2s_ref,
                  wdx_ref, bdx_ref, wdy_ref, bdy_ref, wdz_ref, bdz_ref,
                  sed_ref, doa_ref):
    H1 = w2s_ref.shape[0]
    x = x_ref[...]                                                 # [BT, 256]
    h = jnp.dot(x, w1_ref[...], preferred_element_type=jnp.float32) + b1_ref[...]
    hs = h[:, :H1]                                                 # fc_sed1 output
    hd = h[:, H1:]                                                 # fc_doa1 output
    sed_ref[...] = (jnp.dot(hs, w2s_ref[...],
                            preferred_element_type=jnp.float32) + b2s_ref[...])
    dx = jnp.dot(hd, wdx_ref[...], preferred_element_type=jnp.float32) + bdx_ref[...]
    dy = jnp.dot(hd, wdy_ref[...], preferred_element_type=jnp.float32) + bdy_ref[...]
    dz = jnp.dot(hd, wdz_ref[...], preferred_element_type=jnp.float32) + bdz_ref[...]
    norm = jnp.sqrt(dx * dx + dy * dy + dz * dz)
    inv = 1.0 / (norm + 1e-12)
    doa_ref[0] = dx * inv
    doa_ref[1] = dy * inv
    doa_ref[2] = dz * inv


def heads(x2d, p):
    BT = x2d.shape[0]
    nc = p["w2s"].shape[-1]
    return pl.pallas_call(
        _heads_kernel,
        out_shape=(jax.ShapeDtypeStruct((BT, nc), jnp.float32),
                   jax.ShapeDtypeStruct((3, BT, nc), jnp.float32)),
    )(x2d, p["w1cat"], p["b1cat"], p["w2s"], p["b2s"],
      p["wdx"], p["bdx"], p["wdy"], p["bdy"], p["wdz"], p["bdz"])


# ----------------------------------------------------------------------------
# Full forward
# ----------------------------------------------------------------------------
def conventional_net_forward(x_in, params, nb_class, nb_gru_layer):
    B, _, T, F, _ = x_in.shape
    assert x_in.shape[1] == 8 and x_in.shape[4] == 2

    # x[:, [0,2,3,4]].permute(0,2,3,1,4).reshape(B,T,F,8).permute(0,3,1,2)  (glue)
    xs = x_in[:, jnp.array([0, 2, 3, 4])]                        # [B, 4, T, F, 2]
    xs = jnp.transpose(xs, (0, 2, 3, 1, 4)).reshape(B, T, F, 8)  # [B, T, F, 8]
    h = jnp.transpose(xs, (0, 2, 1, 3))                          # [B, F, T, 8]

    pools = (8, 8, 4)
    for li in range(3):
        cp = params["conv"][li]
        h = conv_bn_relu_pool(h, cp["w"], cp["scale"], cp["shift"], pool=pools[li])

    # h: [B, F3, T, 64] -> torch permute(0,2,1,3).reshape(B, T, 64*F3) equivalent
    F3 = h.shape[1]
    cur = jnp.transpose(h, (0, 2, 3, 1)).reshape(B, T, 64 * F3)  # [B, T, 256]

    for layer in range(nb_gru_layer):
        pf, pb = params["gru"][layer]
        cur = bigru_layer(cur, pf, pb)
        # TODO(synk): GRU inter-layer dropout and nn.Dropout are inference-mode identities.

    x2d = cur.reshape(B * T, cur.shape[-1])
    sed2d, doa3 = heads(x2d, params["fc"])
    x_sed = sed2d.reshape(B, T, nb_class)
    x_doa = jnp.transpose(doa3, (1, 2, 0)).reshape(B, T, nb_class, 3)
    return x_sed, x_doa


# ----------------------------------------------------------------------------
# Deterministic synthetic parameters + example run
# ----------------------------------------------------------------------------
if __name__ == "__main__":
    B, T, F = 2, 8, 1024          # FREQ=1024 is required: 64ch * F/(8*8*4) == 256
    nb_class, nb_gru_layer, H = 12, 2, 128

    keys = iter(jax.random.split(jax.random.PRNGKey(0), 128))

    def nrm(shape, scale=0.05):
        return scale * jax.random.normal(next(keys), shape, jnp.float32)

    params = {"conv": [], "gru": [], "fc": {}}

    # conv + folded BatchNorm (inference: y = scale*conv + shift)
    for (cin, cout) in [(8, 64), (64, 64), (64, 64)]:
        w = nrm((3, 3, cin, cout))                 # == torch_w.permute(3, 2, 1, 0)
        bias = nrm((cout,))
        gamma = 1.0 + nrm((cout,), 0.1)
        beta = nrm((cout,))
        rmean = nrm((cout,))
        rvar = 1.0 + jnp.abs(nrm((cout,), 0.1))
        scale = gamma / jnp.sqrt(rvar + 1e-5)
        shift = beta + scale * (bias - rmean)
        params["conv"].append({"w": w,
                               "scale": scale.reshape(1, cout),
                               "shift": shift.reshape(1, cout)})

    # bidirectional GRU: input 256 -> hidden 128 for every layer
    for _ in range(nb_gru_layer):
        dirs = []
        for _ in range(2):
            dirs.append({"wih": nrm((256, 3 * H)),   # [r|z|n] columns (torch W_ih^T)
                         "whh": nrm((H, 3 * H)),
                         "bih": nrm((1, 3 * H)),
                         "bhh": nrm((1, 3 * H))})
        params["gru"].append(tuple(dirs))

    # fc heads
    w1s, b1s = nrm((256, 128)), nrm((1, 128))
    w1d, b1d = nrm((256, 128)), nrm((1, 128))
    w2s, b2s = nrm((128, nb_class)), nrm((1, nb_class))
    w2d = nrm((128, 3 * nb_class))                 # torch column order: class*3 + axis
    b2d = nrm((3 * nb_class,))
    params["fc"] = {
        "w1cat": jnp.concatenate([w1s, w1d], axis=1),   # fc_sed1 | fc_doa1 fused
        "b1cat": jnp.concatenate([b1s, b1d], axis=1),
        "w2s": w2s, "b2s": b2s,
        # fc_doa2 split per axis so x_doa[..., k] = hd @ w2d[:, k::3] + b2d[k::3]
        "wdx": w2d[:, 0::3], "bdx": b2d[0::3].reshape(1, nb_class),
        "wdy": w2d[:, 1::3], "bdy": b2d[1::3].reshape(1, nb_class),
        "wdz": w2d[:, 2::3], "bdz": b2d[2::3].reshape(1, nb_class),
    }

    x = jax.random.normal(next(keys), (B, 8, T, F, 2), jnp.float32)

    fwd = jax.jit(functools.partial(conventional_net_forward,
                                    nb_class=nb_class, nb_gru_layer=nb_gru_layer))
    x_sed, x_doa = fwd(x, params)
    jax.block_until_ready((x_sed, x_doa))
    assert x_sed.shape == (B, T, nb_class)
    assert x_doa.shape == (B, T, nb_class, 3)
    print("KERNEL_OK")
</pallas_src>

<mosaic_0001>
module attributes {stable_mosaic.version = 11 : i64} {
  func.func @_conv_bn_relu_pool_kernel(%arg0: i32, %arg1: i32, %arg2: memref<1x32x8x72xf32, #tpu.memory_space<vmem>>, %arg3: memref<72x64xf32, #tpu.memory_space<vmem>>, %arg4: memref<1x64xf32, #tpu.memory_space<vmem>>, %arg5: memref<1x64xf32, #tpu.memory_space<vmem>>, %arg6: memref<1x4x8x64xf32, #tpu.memory_space<vmem>>) attributes {dimension_semantics = [#tpu.dimension_semantics<parallel>, #tpu.dimension_semantics<parallel>], iteration_bounds = array<i64: 2, 32>, scalar_prefetch = 0 : i64, scratch_operands = 0 : i64, tpu.core_type = #tpu.core_type<tc>, window_params = [{transform_indices = @transform_0, window_bounds = array<i64: 1, 32, 8, 72>}, {pipeline_mode = #tpu.pipeline_mode<synchronous>, transform_indices = @transform_1, window_bounds = array<i64: 72, 64>}, {pipeline_mode = #tpu.pipeline_mode<synchronous>, transform_indices = @transform_2, window_bounds = array<i64: 1, 64>}, {pipeline_mode = #tpu.pipeline_mode<synchronous>, transform_indices = @transform_3, window_bounds = array<i64: 1, 64>}, {transform_indices = @transform_4, window_bounds = array<i64: 1, 4, 8, 64>}]} {
    %c0 = arith.constant 0 : index
    %c0_0 = arith.constant 0 : index
    %c0_1 = arith.constant 0 : index
    %c0_2 = arith.constant 0 : index
    %0 = vector.load %arg2[%c0, %c0_0, %c0_1, %c0_2] : memref<1x32x8x72xf32, #tpu.memory_space<vmem>>, vector<1x32x8x72xf32>
    %1 = vector.shape_cast %0 : vector<1x32x8x72xf32> to vector<32x8x72xf32>
    %2 = vector.shape_cast %1 : vector<32x8x72xf32> to vector<256x72xf32>
    %c0_3 = arith.constant 0 : index
    %c0_4 = arith.constant 0 : index
    %3 = vector.load %arg3[%c0_3, %c0_4] : memref<72x64xf32, #tpu.memory_space<vmem>>, vector<72x64xf32>
    %cst = arith.constant dense<0.000000e+00> : vector<256x64xf32>
    %4 = tpu.matmul %2, %3, %cst {dimension_numbers = #tpu.dot_dimension_numbers<[1], [0], [0], [1], [0, 0, 1, 1], [], []>} : vector<256x72xf32>, vector<72x64xf32>, vector<256x64xf32> -> vector<256x64xf32>
    %c0_5 = arith.constant 0 : index
    %c0_6 = arith.constant 0 : index
    %5 = vector.load %arg4[%c0_5, %c0_6] : memref<1x64xf32, #tpu.memory_space<vmem>>, vector<1x64xf32>
    %6 = vector.broadcast %5 : vector<1x64xf32> to vector<256x64xf32>
    %7 = arith.mulf %4, %6 : vector<256x64xf32>
    %c0_7 = arith.constant 0 : index
    %c0_8 = arith.constant 0 : index
    %8 = vector.load %arg5[%c0_7, %c0_8] : memref<1x64xf32, #tpu.memory_space<vmem>>, vector<1x64xf32>
    %9 = vector.broadcast %8 : vector<1x64xf32> to vector<256x64xf32>
    %10 = arith.addf %7, %9 : vector<256x64xf32>
    %cst_9 = arith.constant 0.000000e+00 : f32
    %11 = vector.broadcast %cst_9 : f32 to vector<256x64xf32>
    %12 = arith.maximumf %10, %11 : vector<256x64xf32>
    %13 = vector.shape_cast %12 : vector<256x64xf32> to vector<4x8x8x64xf32>
    %cst_10 = arith.constant dense<0xFF800000> : vector<4x8x64xf32>
    %14 = vector.multi_reduction <maximumf>, %13, %cst_10 [1] : vector<4x8x8x64xf32> to vector<4x8x64xf32>
    %c0_11 = arith.constant 0 : index
    %c0_12 = arith.constant 0 : index
    %c0_13 = arith.constant 0 : index
    %c0_14 = arith.constant 0 : index
    %15 = vector.load %arg6[%c0_11, %c0_12, %c0_13, %c0_14] : memref<1x4x8x64xf32, #tpu.memory_space<vmem>>, vector<1x4x8x64xf32>
    %16 = vector.shape_cast %15 : vector<1x4x8x64xf32> to vector<4x8x64xf32>
    %17 = vector.shape_cast %14 : vector<4x8x64xf32> to vector<1x4x8x64xf32>
    tpu.vector_store %arg6[%c0_11, %c0_12, %c0_13, %c0_14], %17 {strides = array<i32>} : memref<1x4x8x64xf32, #tpu.memory_space<vmem>>, vector<1x4x8x64xf32>,
    return
  }
  func.func @transform_0(%arg0: i32, %arg1: i32) -> (i32, i32, i32, i32) {
    %c0_i32 = arith.constant 0 : i32
    %c0_i32_0 = arith.constant 0 : i32
    %c0_i32_1 = arith.constant 0 : i32
    return %arg0, %arg1, %c0_i32, %c0_i32_0 : i32, i32, i32, i32
  }
  func.func @transform_1(%arg0: i32, %arg1: i32) -> (i32, i32) {
    %c0_i32 = arith.constant 0 : i32
    %c0_i32_0 = arith.constant 0 : i32
    %c0_i32_1 = arith.constant 0 : i32
    return %c0_i32, %c0_i32_0 : i32, i32
  }
  func.func @transform_2(%arg0: i32, %arg1: i32) -> (i32, i32) {
    %c0_i32 = arith.constant 0 : i32
    %c0_i32_0 = arith.constant 0 : i32
    %c0_i32_1 = arith.constant 0 : i32
    return %c0_i32, %c0_i32_0 : i32, i32
  }
  func.func @transform_3(%arg0: i32, %arg1: i32) -> (i32, i32) {
    %c0_i32 = arith.constant 0 : i32
    %c0_i32_0 = arith.constant 0 : i32
    %c0_i32_1 = arith.constant 0 : i32
    return %c0_i32, %c0_i32_0 : i32, i32
  }
  func.func @transform_4(%arg0: i32, %arg1: i32) -> (i32, i32, i32, i32) {
    %c0_i32 = arith.constant 0 : i32
    %c0_i32_0 = arith.constant 0 : i32
    %c0_i32_1 = arith.constant 0 : i32
    return %arg0, %arg1, %c0_i32, %c0_i32_0 : i32, i32, i32, i32
  }
}

module attributes {stable_mosaic.version = 11 : i64} {
  func.func @_conv_bn_relu_pool_kernel(%arg0: i32, %arg1: i32, %arg2: memref<1x32x8x576xf32, #tpu.memory_space<vmem>>, %arg3: memref<576x64xf32, #tpu.memory_space<vmem>>, %arg4: memref<1x64xf32, #tpu.memory_space<vmem>>, %arg5: memref<1x64xf32, #tpu.memory_space<vmem>>, %arg6: memref<1x4x8x64xf32, #tpu.memory_space<vmem>>) attributes {dimension_semantics = [#tpu.dimension_semantics<parallel>, #tpu.dimension_semantics<parallel>], iteration_bounds = array<i64: 2, 4>, scalar_prefetch = 0 : i64, scratch_operands = 0 : i64, tpu.core_type = #tpu.core_type<tc>, window_params = [{transform_indices = @transform_0, window_bounds = array<i64: 1, 32, 8, 576>}, {pipeline_mode = #tpu.pipeline_mode<synchronous>, transform_indices = @transform_1, window_bounds = array<i64: 576, 64>}, {pipeline_mode = #tpu.pipeline_mode<synchronous>, transform_indices = @transform_2, window_bounds = array<i64: 1, 64>}, {pipeline_mode = #tpu.pipeline_mode<synchronous>, transform_indices = @transform_3, window_bounds = array<i64: 1, 64>}, {transform_indices = @transform_4, window_bounds = array<i64: 1, 4, 8, 64>}]} {
    %c0 = arith.constant 0 : index
    %c0_0 = arith.constant 0 : index
    %c0_1 = arith.constant 0 : index
    %c0_2 = arith.constant 0 : index
    %0 = vector.load %arg2[%c0, %c0_0, %c0_1, %c0_2] : memref<1x32x8x576xf32, #tpu.memory_space<vmem>>, vector<1x32x8x576xf32>
    %1 = vector.shape_cast %0 : vector<1x32x8x576xf32> to vector<32x8x576xf32>
    %2 = vector.shape_cast %1 : vector<32x8x576xf32> to vector<256x576xf32>
    %c0_3 = arith.constant 0 : index
    %c0_4 = arith.constant 0 : index
    %3 = vector.load %arg3[%c0_3, %c0_4] : memref<576x64xf32, #tpu.memory_space<vmem>>, vector<576x64xf32>
    %cst = arith.constant dense<0.000000e+00> : vector<256x64xf32>
    %4 = tpu.matmul %2, %3, %cst {dimension_numbers = #tpu.dot_dimension_numbers<[1], [0], [0], [1], [0, 0, 1, 1], [], []>} : vector<256x576xf32>, vector<576x64xf32>, vector<256x64xf32> -> vector<256x64xf32>
    %c0_5 = arith.constant 0 : index
    %c0_6 = arith.constant 0 : index
    %5 = vector.load %arg4[%c0_5, %c0_6] : memref<1x64xf32, #tpu.memory_space<vmem>>, vector<1x64xf32>
    %6 = vector.broadcast %5 : vector<1x64xf32> to vector<256x64xf32>
    %7 = arith.mulf %4, %6 : vector<256x64xf32>
    %c0_7 = arith.constant 0 : index
    %c0_8 = arith.constant 0 : index
    %8 = vector.load %arg5[%c0_7, %c0_8] : memref<1x64xf32, #tpu.memory_space<vmem>>, vector<1x64xf32>
    %9 = vector.broadcast %8 : vector<1x64xf32> to vector<256x64xf32>
    %10 = arith.addf %7, %9 : vector<256x64xf32>
    %cst_9 = arith.constant 0.000000e+00 : f32
    %11 = vector.broadcast %cst_9 : f32 to vector<256x64xf32>
    %12 = arith.maximumf %10, %11 : vector<256x64xf32>
    %13 = vector.shape_cast %12 : vector<256x64xf32> to vector<4x8x8x64xf32>
    %cst_10 = arith.constant dense<0xFF800000> : vector<4x8x64xf32>
    %14 = vector.multi_reduction <maximumf>, %13, %cst_10 [1] : vector<4x8x8x64xf32> to vector<4x8x64xf32>
    %c0_11 = arith.constant 0 : index
    %c0_12 = arith.constant 0 : index
    %c0_13 = arith.constant 0 : index
    %c0_14 = arith.constant 0 : index
    %15 = vector.load %arg6[%c0_11, %c0_12, %c0_13, %c0_14] : memref<1x4x8x64xf32, #tpu.memory_space<vmem>>, vector<1x4x8x64xf32>
    %16 = vector.shape_cast %15 : vector<1x4x8x64xf32> to vector<4x8x64xf32>
    %17 = vector.shape_cast %14 : vector<4x8x64xf32> to vector<1x4x8x64xf32>
    tpu.vector_store %arg6[%c0_11, %c0_12, %c0_13, %c0_14], %17 {strides = array<i32>} : memref<1x4x8x64xf32, #tpu.memory_space<vmem>>, vector<1x4x8x64xf32>,
    return
  }
  func.func @transform_0(%arg0: i32, %arg1: i32) -> (i32, i32, i32, i32) {
    %c0_i32 = arith.constant 0 : i32
    %c0_i32_0 = arith.constant 0 : i32
    %c0_i32_1 = arith.constant 0 : i32
    return %arg0, %arg1, %c0_i32, %c0_i32_0 : i32, i32, i32, i32
  }
  func.func @transform_1(%arg0: i32, %arg1: i32) -> (i32, i32) {
    %c0_i32 = arith.constant 0 : i32
    %c0_i32_0 = arith.constant 0 : i32
    %c0_i32_1 = arith.constant 0 : i32
    return %c0_i32, %c0_i32_0 : i32, i32
  }
  func.func @transform_2(%arg0: i32, %arg1: i32) -> (i32, i32) {
    %c0_i32 = arith.constant 0 : i32
    %c0_i32_0 = arith.constant 0 : i32
    %c0_i32_1 = arith.constant 0 : i32
    return %c0_i32, %c0_i32_0 : i32, i32
  }
  func.func @transform_3(%arg0: i32, %arg1: i32) -> (i32, i32) {
    %c0_i32 = arith.constant 0 : i32
    %c0_i32_0 = arith.constant 0 : i32
    %c0_i32_1 = arith.constant 0 : i32
    return %c0_i32, %c0_i32_0 : i32, i32
  }
  func.func @transform_4(%arg0: i32, %arg1: i32) -> (i32, i32, i32, i32) {
    %c0_i32 = arith.constant 0 : i32
    %c0_i32_0 = arith.constant 0 : i32
    %c0_i32_1 = arith.constant 0 : i32
    return %arg0, %arg1, %c0_i32, %c0_i32_0 : i32, i32, i32, i32
  }
}

module attributes {stable_mosaic.version = 11 : i64} {
  func.func @_conv_bn_relu_pool_kernel(%arg0: i32, %arg1: i32, %arg2: memref<1x16x8x576xf32, #tpu.memory_space<vmem>>, %arg3: memref<576x64xf32, #tpu.memory_space<vmem>>, %arg4: memref<1x64xf32, #tpu.memory_space<vmem>>, %arg5: memref<1x64xf32, #tpu.memory_space<vmem>>, %arg6: memref<1x4x8x64xf32, #tpu.memory_space<vmem>>) attributes {dimension_semantics = [#tpu.dimension_semantics<parallel>, #tpu.dimension_semantics<parallel>], iteration_bounds = array<i64: 2, 1>, scalar_prefetch = 0 : i64, scratch_operands = 0 : i64, tpu.core_type = #tpu.core_type<tc>, window_params = [{transform_indices = @transform_0, window_bounds = array<i64: 1, 16, 8, 576>}, {pipeline_mode = #tpu.pipeline_mode<synchronous>, transform_indices = @transform_1, window_bounds = array<i64: 576, 64>}, {pipeline_mode = #tpu.pipeline_mode<synchronous>, transform_indices = @transform_2, window_bounds = array<i64: 1, 64>}, {pipeline_mode = #tpu.pipeline_mode<synchronous>, transform_indices = @transform_3, window_bounds = array<i64: 1, 64>}, {transform_indices = @transform_4, window_bounds = array<i64: 1, 4, 8, 64>}]} {
    %c0 = arith.constant 0 : index
    %c0_0 = arith.constant 0 : index
    %c0_1 = arith.constant 0 : index
    %c0_2 = arith.constant 0 : index
    %0 = vector.load %arg2[%c0, %c0_0, %c0_1, %c0_2] : memref<1x16x8x576xf32, #tpu.memory_space<vmem>>, vector<1x16x8x576xf32>
    %1 = vector.shape_cast %0 : vector<1x16x8x576xf32> to vector<16x8x576xf32>
    %2 = vector.shape_cast %1 : vector<16x8x576xf32> to vector<128x576xf32>
    %c0_3 = arith.constant 0 : index
    %c0_4 = arith.constant 0 : index
    %3 = vector.load %arg3[%c0_3, %c0_4] : memref<576x64xf32, #tpu.memory_space<vmem>>, vector<576x64xf32>
    %cst = arith.constant dense<0.000000e+00> : vector<128x64xf32>
    %4 = tpu.matmul %2, %3, %cst {dimension_numbers = #tpu.dot_dimension_numbers<[1], [0], [0], [1], [0, 0, 1, 1], [], []>} : vector<128x576xf32>, vector<576x64xf32>, vector<128x64xf32> -> vector<128x64xf32>
    %c0_5 = arith.constant 0 : index
    %c0_6 = arith.constant 0 : index
    %5 = vector.load %arg4[%c0_5, %c0_6] : memref<1x64xf32, #tpu.memory_space<vmem>>, vector<1x64xf32>
    %6 = vector.broadcast %5 : vector<1x64xf32> to vector<128x64xf32>
    %7 = arith.mulf %4, %6 : vector<128x64xf32>
    %c0_7 = arith.constant 0 : index
    %c0_8 = arith.constant 0 : index
    %8 = vector.load %arg5[%c0_7, %c0_8] : memref<1x64xf32, #tpu.memory_space<vmem>>, vector<1x64xf32>
    %9 = vector.broadcast %8 : vector<1x64xf32> to vector<128x64xf32>
    %10 = arith.addf %7, %9 : vector<128x64xf32>
    %cst_9 = arith.constant 0.000000e+00 : f32
    %11 = vector.broadcast %cst_9 : f32 to vector<128x64xf32>
    %12 = arith.maximumf %10, %11 : vector<128x64xf32>
    %13 = vector.shape_cast %12 : vector<128x64xf32> to vector<4x4x8x64xf32>
    %cst_10 = arith.constant dense<0xFF800000> : vector<4x8x64xf32>
    %14 = vector.multi_reduction <maximumf>, %13, %cst_10 [1] : vector<4x4x8x64xf32> to vector<4x8x64xf32>
    %c0_11 = arith.constant 0 : index
    %c0_12 = arith.constant 0 : index
    %c0_13 = arith.constant 0 : index
    %c0_14 = arith.constant 0 : index
    %15 = vector.load %arg6[%c0_11, %c0_12, %c0_13, %c0_14] : memref<1x4x8x64xf32, #tpu.memory_space<vmem>>, vector<1x4x8x64xf32>
    %16 = vector.shape_cast %15 : vector<1x4x8x64xf32> to vector<4x8x64xf32>
    %17 = vector.shape_cast %14 : vector<4x8x64xf32> to vector<1x4x8x64xf32>
    tpu.vector_store %arg6[%c0_11, %c0_12, %c0_13, %c0_14], %17 {strides = array<i32>} : memref<1x4x8x64xf32, #tpu.memory_space<vmem>>, vector<1x4x8x64xf32>,
    return
  }
  func.func @transform_0(%arg0: i32, %arg1: i32) -> (i32, i32, i32, i32) {
    %c0_i32 = arith.constant 0 : i32
    %c0_i32_0 = arith.constant 0 : i32
    %c0_i32_1 = arith.constant 0 : i32
    return %arg0, %arg1, %c0_i32, %c0_i32_0 : i32, i32, i32, i32
  }
  func.func @transform_1(%arg0: i32, %arg1: i32) -> (i32, i32) {
    %c0_i32 = arith.constant 0 : i32
    %c0_i32_0 = arith.constant 0 : i32
    %c0_i32_1 = arith.constant 0 : i32
    return %c0_i32, %c0_i32_0 : i32, i32
  }
  func.func @transform_2(%arg0: i32, %arg1: i32) -> (i32, i32) {
    %c0_i32 = arith.constant 0 : i32
    %c0_i32_0 = arith.constant 0 : i32
    %c0_i32_1 = arith.constant 0 : i32
    return %c0_i32, %c0_i32_0 : i32, i32
  }
  func.func @transform_3(%arg0: i32, %arg1: i32) -> (i32, i32) {
    %c0_i32 = arith.constant 0 : i32
    %c0_i32_0 = arith.constant 0 : i32
    %c0_i32_1 = arith.constant 0 : i32
    return %c0_i32, %c0_i32_0 : i32, i32
  }
  func.func @transform_4(%arg0: i32, %arg1: i32) -> (i32, i32, i32, i32) {
    %c0_i32 = arith.constant 0 : i32
    %c0_i32_0 = arith.constant 0 : i32
    %c0_i32_1 = arith.constant 0 : i32
    return %arg0, %arg1, %c0_i32, %c0_i32_0 : i32, i32, i32, i32
  }
}

module attributes {stable_mosaic.version = 11 : i64} {
  func.func @_bigru_layer_kernel(%arg0: memref<8x8x512xf32, #tpu.memory_space<vmem>>, %arg1: memref<512x384xf32, #tpu.memory_space<vmem>>, %arg2: memref<8x384xf32, #tpu.memory_space<vmem>>, %arg3: memref<256x384xf32, #tpu.memory_space<vmem>>, %arg4: memref<8x384xf32, #tpu.memory_space<vmem>>, %arg5: memref<8x8x128xf32, #tpu.memory_space<vmem>>, %arg6: memref<8x8x384xf32, #tpu.memory_space<vmem>>) attributes {dimension_semantics = [], scalar_prefetch = 0 : i64, scratch_operands = 1 : i64, tpu.core_type = #tpu.core_type<tc>} {
    %c0 = arith.constant 0 : index
    %c0_0 = arith.constant 0 : index
    %c0_1 = arith.constant 0 : index
    %0 = vector.load %arg0[%c0, %c0_0, %c0_1] : memref<8x8x512xf32, #tpu.memory_space<vmem>>, vector<8x8x512xf32>
    %1 = vector.shape_cast %0 : vector<8x8x512xf32> to vector<64x512xf32>
    %c0_2 = arith.constant 0 : index
    %c0_3 = arith.constant 0 : index
    %2 = vector.load %arg1[%c0_2, %c0_3] : memref<512x384xf32, #tpu.memory_space<vmem>>, vector<512x384xf32>
    %cst = arith.constant dense<0.000000e+00> : vector<64x384xf32>
    %3 = tpu.matmul %1, %2, %cst {dimension_numbers = #tpu.dot_dimension_numbers<[1], [0], [0], [1], [0, 0, 1, 1], [], []>} : vector<64x512xf32>, vector<512x384xf32>, vector<64x384xf32> -> vector<64x384xf32>
    %4 = vector.shape_cast %3 : vector<64x384xf32> to vector<8x8x384xf32>
    %c0_4 = arith.constant 0 : index
    %c0_5 = arith.constant 0 : index
    %c0_6 = arith.constant 0 : index
    %5 = vector.load %arg6[%c0_4, %c0_5, %c0_6] : memref<8x8x384xf32, #tpu.memory_space<vmem>>, vector<8x8x384xf32>
    tpu.vector_store %arg6[%c0_4, %c0_5, %c0_6], %4 {strides = array<i32>} : memref<8x8x384xf32, #tpu.memory_space<vmem>>, vector<8x8x384xf32>,
    %6 = tpu.iota {dimensions = array<i32: 0>} : vector<8x1xi32>
    %c2_i32 = arith.constant 2 : i32
    %7 = vector.broadcast %c2_i32 : i32 to vector<8x1xi32>
    %8 = arith.cmpi slt, %6, %7 : vector<8x1xi32>
    %9 = arith.extui %8 : vector<8x1xi1> to vector<8x1xi32>
    %10 = arith.sitofp %9 : vector<8x1xi32> to vector<8x1xf32>
    %cst_7 = arith.constant 1.000000e+00 : f32
    %11 = vector.broadcast %cst_7 : f32 to vector<8x1xf32>
    %12 = arith.subf %11, %10 : vector<8x1xf32>
    %cst_8 = arith.constant 0.000000e+00 : f32
    %13 = vector.broadcast %cst_8 : f32 to vector<8x256xf32>
    %c0_i32 = arith.constant 0 : i32
    %14 = vector.extract_strided_slice %13 {offsets = [0, 0], sizes = [8, 128], strides = [1, 1]} : vector<8x256xf32> to vector<8x128xf32>
    %15 = vector.extract_strided_slice %13 {offsets = [0, 128], sizes = [8, 128], strides = [1, 1]} : vector<8x256xf32> to vector<8x128xf32>
    %16 = arith.addf %14, %15 : vector<8x128xf32>
    %17 = arith.index_cast %c0_i32 : i32 to index
    %c0_9 = arith.constant 0 : index
    %c0_10 = arith.constant 0 : index
    %18 = vector.load %arg6[%17, %c0_9, %c0_10] : memref<8x8x384xf32, #tpu.memory_space<vmem>>, vector<1x8x384xf32>
    %19 = vector.shape_cast %18 : vector<1x8x384xf32> to vector<8x384xf32>
    %c0_11 = arith.constant 0 : index
    %c0_12 = arith.constant 0 : index
    %20 = vector.load %arg2[%c0_11, %c0_12] : memref<8x384xf32, #tpu.memory_space<vmem>>, vector<8x384xf32>
    %21 = arith.addf %19, %20 : vector<8x384xf32>
    %c0_13 = arith.constant 0 : index
    %c0_14 = arith.constant 0 : index
    %22 = vector.load %arg3[%c0_13, %c0_14] : memref<256x384xf32, #tpu.memory_space<vmem>>, vector<256x384xf32>
    %cst_15 = arith.constant dense<0.000000e+00> : vector<8x384xf32>
    %23 = tpu.matmul %13, %22, %cst_15 {dimension_numbers = #tpu.dot_dimension_numbers<[1], [0], [0], [1], [0, 0, 1, 1], [], []>} : vector<8x256xf32>, vector<256x384xf32>, vector<8x384xf32> -> vector<8x384xf32>
    %c0_16 = arith.constant 0 : index
    %c0_17 = arith.constant 0 : index
    %24 = vector.load %arg4[%c0_16, %c0_17] : memref<8x384xf32, #tpu.memory_space<vmem>>, vector<8x384xf32>
    %25 = arith.addf %23, %24 : vector<8x384xf32>
    %26 = vector.extract_strided_slice %21 {offsets = [0, 0], sizes = [8, 128], strides = [1, 1]} : vector<8x384xf32> to vector<8x128xf32>
    %27 = vector.extract_strided_slice %25 {offsets = [0, 0], sizes = [8, 128], strides = [1, 1]} : vector<8x384xf32> to vector<8x128xf32>
    %28 = arith.addf %26, %27 : vector<8x128xf32>
    %29 = arith.negf %28 : vector<8x128xf32>
    %30 = math.exp %29 : vector<8x128xf32>
    %cst_18 = arith.constant 1.000000e+00 : f32
    %31 = vector.broadcast %cst_18 : f32 to vector<8x128xf32>
    %32 = arith.addf %31, %30 : vector<8x128xf32>
    %33 = arith.divf %31, %32 : vector<8x128xf32>
    %34 = vector.extract_strided_slice %21 {offsets = [0, 128], sizes = [8, 128], strides = [1, 1]} : vector<8x384xf32> to vector<8x128xf32>
    %35 = vector.extract_strided_slice %25 {offsets = [0, 128], sizes = [8, 128], strides = [1, 1]} : vector<8x384xf32> to vector<8x128xf32>
    %36 = arith.addf %34, %35 : vector<8x128xf32>
    %37 = arith.negf %36 : vector<8x128xf32>
    %38 = math.exp %37 : vector<8x128xf32>
    %cst_19 = arith.constant 1.000000e+00 : f32
    %39 = vector.broadcast %cst_19 : f32 to vector<8x128xf32>
    %40 = arith.addf %39, %38 : vector<8x128xf32>
    %41 = arith.divf %39, %40 : vector<8x128xf32>
    %42 = vector.extract_strided_slice %21 {offsets = [0, 256], sizes = [8, 128], strides = [1, 1]} : vector<8x384xf32> to vector<8x128xf32>
    %43 = vector.extract_strided_slice %25 {offsets = [0, 256], sizes = [8, 128], strides = [1, 1]} : vector<8x384xf32> to vector<8x128xf32>
    %44 = arith.mulf %33, %43 : vector<8x128xf32>
    %45 = arith.addf %42, %44 : vector<8x128xf32>
    %46 = math.tanh %45 : vector<8x128xf32>
    %cst_20 = arith.constant 1.000000e+00 : f32
    %47 = vector.broadcast %cst_20 : f32 to vector<8x128xf32>
    %48 = arith.subf %47, %41 : vector<8x128xf32>
    %49 = arith.mulf %48, %46 : vector<8x128xf32>
    %50 = arith.mulf %41, %16 : vector<8x128xf32>
    %51 = arith.addf %49, %50 : vector<8x128xf32>
    %52 = arith.index_cast %c0_i32 : i32 to index
    %c0_21 = arith.constant 0 : index
    %c0_22 = arith.constant 0 : index
    %53 = vector.load %arg5[%52, %c0_21, %c0_22] : memref<8x8x128xf32, #tpu.memory_space<vmem>>, vector<1x8x128xf32>
    %54 = vector.shape_cast %53 : vector<1x8x128xf32> to vector<8x128xf32>
    %55 = vector.shape_cast %51 : vector<8x128xf32> to vector<1x8x128xf32>
    tpu.vector_store %arg5[%52, %c0_21, %c0_22], %55 {strides = array<i32>} : memref<8x8x128xf32, #tpu.memory_space<vmem>>, vector<1x8x128xf32>,
    %56 = vector.broadcast %10 : vector<8x1xf32> to vector<8x128xf32>
    %57 = arith.mulf %51, %56 : vector<8x128xf32>
    %58 = vector.broadcast %12 : vector<8x1xf32> to vector<8x128xf32>
    %59 = arith.mulf %51, %58 : vector<8x128xf32>
    %60 = tpu.concatenate %57, %59 in 1 : vector<8x128xf32>, vector<8x128xf32> -> vector<8x256xf32>
    %c1_i32 = arith.constant 1 : i32
    %61 = vector.extract_strided_slice %60 {offsets = [0, 0], sizes = [8, 128], strides = [1, 1]} : vector<8x256xf32> to vector<8x128xf32>
    %62 = vector.extract_strided_slice %60 {offsets = [0, 128], sizes = [8, 128], strides = [1, 1]} : vector<8x256xf32> to vector<8x128xf32>
    %63 = arith.addf %61, %62 : vector<8x128xf32>
    %64 = arith.index_cast %c1_i32 : i32 to index
    %c0_23 = arith.constant 0 : index
    %c0_24 = arith.constant 0 : index
    %65 = vector.load %arg6[%64, %c0_23, %c0_24] : memref<8x8x384xf32, #tpu.memory_space<vmem>>, vector<1x8x384xf32>
    %66 = vector.shape_cast %65 : vector<1x8x384xf32> to vector<8x384xf32>
    %c0_25 = arith.constant 0 : index
    %c0_26 = arith.constant 0 : index
    %67 = vector.load %arg2[%c0_25, %c0_26] : memref<8x384xf32, #tpu.memory_space<vmem>>, vector<8x384xf32>
    %68 = arith.addf %66, %67 : vector<8x384xf32>
    %c0_27 = arith.constant 0 : index
    %c0_28 = arith.constant 0 : index
    %69 = vector.load %arg3[%c0_27, %c0_28] : memref<256x384xf32, #tpu.memory_space<vmem>>, vector<256x384xf32>
    %cst_29 = arith.constant dense<0.000000e+00> : vector<8x384xf32>
    %70 = tpu.matmul %60, %69, %cst_29 {dimension_numbers = #tpu.dot_dimension_numbers<[1], [0], [0], [1], [0, 0, 1, 1], [], []>} : vector<8x256xf32>, vector<256x384xf32>, vector<8x384xf32> -> vector<8x384xf32>
    %c0_30 = arith.constant 0 : index
    %c0_31 = arith.constant 0 : index
    %71 = vector.load %arg4[%c0_30, %c0_31] : memref<8x384xf32, #tpu.memory_space<vmem>>, vector<8x384xf32>
    %72 = arith.addf %70, %71 : vector<8x384xf32>
    %73 = vector.extract_strided_slice %68 {offsets = [0, 0], sizes = [8, 128], strides = [1, 1]} : vector<8x384xf32> to vector<8x128xf32>
    %74 = vector.extract_strided_slice %72 {offsets = [0, 0], sizes = [8, 128], strides = [1, 1]} : vector<8x384xf32> to vector<8x128xf32>
    %75 = arith.addf %73, %74 : vector<8x128xf32>
    %76 = arith.negf %75 : vector<8x128xf32>
    %77 = math.exp %76 : vector<8x128xf32>
    %cst_32 = arith.constant 1.000000e+00 : f32
    %78 = vector.broadcast %cst_32 : f32 to vector<8x128xf32>
    %79 = arith.addf %78, %77 : vector<8x128xf32>
    %80 = arith.divf %78, %79 : vector<8x128xf32>
    %81 = vector.extract_strided_slice %68 {offsets = [0, 128], sizes = [8, 128], strides = [1, 1]} : vector<8x384xf32> to vector<8x128xf32>
    %82 = vector.extract_strided_slice %72 {offsets = [0, 128], sizes = [8, 128], strides = [1, 1]} : vector<8x384xf32> to vector<8x128xf32>
    %83 = arith.addf %81, %82 : vector<8x128xf32>
    %84 = arith.negf %83 : vector<8x128xf32>
    %85 = math.exp %84 : vector<8x128xf32>
    %cst_33 = arith.constant 1.000000e+00 : f32
    %86 = vector.broadcast %cst_33 : f32 to vector<8x128xf32>
    %87 = arith.addf %86, %85 : vector<8x128xf32>
    %88 = arith.divf %86, %87 : vector<8x128xf32>
    %89 = vector.extract_strided_slice %68 {offsets = [0, 256], sizes = [8, 128], strides = [1, 1]} : vector<8x384xf32> to vector<8x128xf32>
    %90 = vector.extract_strided_slice %72 {offsets = [0, 256], sizes = [8, 128], strides = [1, 1]} : vector<8x384xf32> to vector<8x128xf32>
    %91 = arith.mulf %80, %90 : vector<8x128xf32>
    %92 = arith.addf %89, %91 : vector<8x128xf32>
    %93 = math.tanh %92 : vector<8x128xf32>
    %cst_34 = arith.constant 1.000000e+00 : f32
    %94 = vector.broadcast %cst_34 : f32 to vector<8x128xf32>
    %95 = arith.subf %94, %88 : vector<8x128xf32>
    %96 = arith.mulf %95, %93 : vector<8x128xf32>
    %97 = arith.mulf %88, %63 : vector<8x128xf32>
    %98 = arith.addf %96, %97 : vector<8x128xf32>
    %99 = arith.index_cast %c1_i32 : i32 to index
    %c0_35 = arith.constant 0 : index
    %c0_36 = arith.constant 0 : index
    %100 = vector.load %arg5[%99, %c0_35, %c0_36] : memref<8x8x128xf32, #tpu.memory_space<vmem>>, vector<1x8x128xf32>
    %101 = vector.shape_cast %100 : vector<1x8x128xf32> to vector<8x128xf32>
    %102 = vector.shape_cast %98 : vector<8x128xf32> to vector<1x8x128xf32>
    tpu.vector_store %arg5[%99, %c0_35, %c0_36], %102 {strides = array<i32>} : memref<8x8x128xf32, #tpu.memory_space<vmem>>, vector<1x8x128xf32>,
    %103 = vector.broadcast %10 : vector<8x1xf32> to vector<8x128xf32>
    %104 = arith.mulf %98, %103 : vector<8x128xf32>
    %105 = vector.broadcast %12 : vector<8x1xf32> to vector<8x128xf32>
    %106 = arith.mulf %98, %105 : vector<8x128xf32>
    %107 = tpu.concatenate %104, %106 in 1 : vector<8x128xf32>, vector<8x128xf32> -> vector<8x256xf32>
    %c2_i32_37 = arith.constant 2 : i32
    %108 = vector.extract_strided_slice %107 {offsets = [0, 0], sizes = [8, 128], strides = [1, 1]} : vector<8x256xf32> to vector<8x128xf32>
    %109 = vector.extract_strided_slice %107 {offsets = [0, 128], sizes = [8, 128], strides = [1, 1]} : vector<8x256xf32> to vector<8x128xf32>
    %110 = arith.addf %108, %109 : vector<8x128xf32>
    %111 = arith.index_cast %c2_i32_37 : i32 to index
    %c0_38 = arith.constant 0 : index
    %c0_39 = arith.constant 0 : index
    %112 = vector.load %arg6[%111, %c0_38, %c0_39] : memref<8x8x384xf32, #tpu.memory_space<vmem>>, vector<1x8x384xf32>
    %113 = vector.shape_cast %112 : vector<1x8x384xf32> to vector<8x384xf32>
    %c0_40 = arith.constant 0 : index
    %c0_41 = arith.constant 0 : index
    %114 = vector.load %arg2[%c0_40, %c0_41] : memref<8x384xf32, #tpu.memory_space<vmem>>, vector<8x384xf32>
    %115 = arith.addf %113, %114 : vector<8x384xf32>
    %c0_42 = arith.constant 0 : index
    %c0_43 = arith.constant 0 : index
    %116 = vector.load %arg3[%c0_42, %c0_43] : memref<256x384xf32, #tpu.memory_space<vmem>>, vector<256x384xf32>
    %cst_44 = arith.constant dense<0.000000e+00> : vector<8x384xf32>
    %117 = tpu.matmul %107, %116, %cst_44 {dimension_numbers = #tpu.dot_dimension_numbers<[1], [0], [0], [1], [0, 0, 1, 1], [], []>} : vector<8x256xf32>, vector<256x384xf32>, vector<8x384xf32> -> vector<8x384xf32>
    %c0_45 = arith.constant 0 : index
    %c0_46 = arith.constant 0 : index
    %118 = vector.load %arg4[%c0_45, %c0_46] : memref<8x384xf32, #tpu.memory_space<vmem>>, vector<8x384xf32>
    %119 = arith.addf %117, %118 : vector<8x384xf32>
    %120 = vector.extract_strided_slice %115 {offsets = [0, 0], sizes = [8, 128], strides = [1, 1]} : vector<8x384xf32> to vector<8x128xf32>
    %121 = vector.extract_strided_slice %119 {offsets = [0, 0], sizes = [8, 128], strides = [1, 1]} : vector<8x384xf32> to vector<8x128xf32>
    %122 = arith.addf %120, %121 : vector<8x128xf32>
    %123 = arith.negf %122 : vector<8x128xf32>
    %124 = math.exp %123 : vector<8x128xf32>
    %cst_47 = arith.constant 1.000000e+00 : f32
    %125 = vector.broadcast %cst_47 : f32 to vector<8x128xf32>
    %126 = arith.addf %125, %124 : vector<8x128xf32>
    %127 = arith.divf %125, %126 : vector<8x128xf32>
    %128 = vector.extract_strided_slice %115 {offsets = [0, 128], sizes = [8, 128], strides = [1, 1]} : vector<8x384xf32> to vector<8x128xf32>
    %129 = vector.extract_strided_slice %119 {offsets = [0, 128], sizes = [8, 128], strides = [1, 1]} : vector<8x384xf32> to vector<8x128xf32>
    %130 = arith.addf %128, %129 : vector<8x128xf32>
    %131 = arith.negf %130 : vector<8x128xf32>
    %132 = math.exp %131 : vector<8x128xf32>
    %cst_48 = arith.constant 1.000000e+00 : f32
    %133 = vector.broadcast %cst_48 : f32 to vector<8x128xf32>
    %134 = arith.addf %133, %132 : vector<8x128xf32>
    %135 = arith.divf %133, %134 : vector<8x128xf32>
    %136 = vector.extract_strided_slice %115 {offsets = [0, 256], sizes = [8, 128], strides = [1, 1]} : vector<8x384xf32> to vector<8x128xf32>
    %137 = vector.extract_strided_slice %119 {offsets = [0, 256], sizes = [8, 128], strides = [1, 1]} : vector<8x384xf32> to vector<8x128xf32>
    %138 = arith.mulf %127, %137 : vector<8x128xf32>
    %139 = arith.addf %136, %138 : vector<8x128xf32>
    %140 = math.tanh %139 : vector<8x128xf32>
    %cst_49 = arith.constant 1.000000e+00 : f32
    %141 = vector.broadcast %cst_49 : f32 to vector<8x128xf32>
    %142 = arith.subf %141, %135 : vector<8x128xf32>
    %143 = arith.mulf %142, %140 : vector<8x128xf32>
    %144 = arith.mulf %135, %110 : vector<8x128xf32>
    %145 = arith.addf %143, %144 : vector<8x128xf32>
    %146 = arith.index_cast %c2_i32_37 : i32 to index
    %c0_50 = arith.constant 0 : index
    %c0_51 = arith.constant 0 : index
    %147 = vector.load %arg5[%146, %c0_50, %c0_51] : memref<8x8x128xf32, #tpu.memory_space<vmem>>, vector<1x8x128xf32>
    %148 = vector.shape_cast %147 : vector<1x8x128xf32> to vector<8x128xf32>
    %149 = vector.shape_cast %145 : vector<8x128xf32> to vector<1x8x128xf32>
    tpu.vector_store %arg5[%146, %c0_50, %c0_51], %149 {strides = array<i32>} : memref<8x8x128xf32, #tpu.memory_space<vmem>>, vector<1x8x128xf32>,
    %150 = vector.broadcast %10 : vector<8x1xf32> to vector<8x128xf32>
    %151 = arith.mulf %145, %150 : vector<8x128xf32>
    %152 = vector.broadcast %12 : vector<8x1xf32> to vector<8x128xf32>
    %153 = arith.mulf %145, %152 : vector<8x128xf32>
    %154 = tpu.concatenate %151, %153 in 1 : vector<8x128xf32>, vector<8x128xf32> -> vector<8x256xf32>
    %c3_i32 = arith.constant 3 : i32
    %155 = vector.extract_strided_slice %154 {offsets = [0, 0], sizes = [8, 128], strides = [1, 1]} : vector<8x256xf32> to vector<8x128xf32>
    %156 = vector.extract_strided_slice %154 {offsets = [0, 128], sizes = [8, 128], strides = [1, 1]} : vector<8x256xf32> to vector<8x128xf32>
    %157 = arith.addf %155, %156 : vector<8x128xf32>
    %158 = arith.index_cast %c3_i32 : i32 to index
    %c0_52 = arith.constant 0 : index
    %c0_53 = arith.constant 0 : index
    %159 = vector.load %arg6[%158, %c0_52, %c0_53] : memref<8x8x384xf32, #tpu.memory_space<vmem>>, vector<1x8x384xf32>
    %160 = vector.shape_cast %159 : vector<1x8x384xf32> to vector<8x384xf32>
    %c0_54 = arith.constant 0 : index
    %c0_55 = arith.constant 0 : index
    %161 = vector.load %arg2[%c0_54, %c0_55] : memref<8x384xf32, #tpu.memory_space<vmem>>, vector<8x384xf32>
    %162 = arith.addf %160, %161 : vector<8x384xf32>
    %c0_56 = arith.constant 0 : index
    %c0_57 = arith.constant 0 : index
    %163 = vector.load %arg3[%c0_56, %c0_57] : memref<256x384xf32, #tpu.memory_space<vmem>>, vector<256x384xf32>
    %cst_58 = arith.constant dense<0.000000e+00> : vector<8x384xf32>
    %164 = tpu.matmul %154, %163, %cst_58 {dimension_numbers = #tpu.dot_dimension_numbers<[1], [0], [0], [1], [0, 0, 1, 1], [], []>} : vector<8x256xf32>, vector<256x384xf32>, vector<8x384xf32> -> vector<8x384xf32>
    %c0_59 = arith.constant 0 : index
    %c0_60 = arith.constant 0 : index
    %165 = vector.load %arg4[%c0_59, %c0_60] : memref<8x384xf32, #tpu.memory_space<vmem>>, vector<8x384xf32>
    %166 = arith.addf %164, %165 : vector<8x384xf32>
    %167 = vector.extract_strided_slice %162 {offsets = [0, 0], sizes = [8, 128], strides = [1, 1]} : vector<8x384xf32> to vector<8x128xf32>
    %168 = vector.extract_strided_slice %166 {offsets = [0, 0], sizes = [8, 128], strides = [1, 1]} : vector<8x384xf32> to vector<8x128xf32>
    %169 = arith.addf %167, %168 : vector<8x128xf32>
    %170 = arith.negf %169 : vector<8x128xf32>
    %171 = math.exp %170 : vector<8x128xf32>
    %cst_61 = arith.constant 1.000000e+00 : f32
    %172 = vector.broadcast %cst_61 : f32 to vector<8x128xf32>
    %173 = arith.addf %172, %171 : vector<8x128xf32>
    %174 = arith.divf %172, %173 : vector<8x128xf32>
    %175 = vector.extract_strided_slice %162 {offsets = [0, 128], sizes = [8, 128], strides = [1, 1]} : vector<8x384xf32> to vector<8x128xf32>
    %176 = vector.extract_strided_slice %166 {offsets = [0, 128], sizes = [8, 128], strides = [1, 1]} : vector<8x384xf32> to vector<8x128xf32>
    %177 = arith.addf %175, %176 : vector<8x128xf32>
    %178 = arith.negf %177 : vector<8x128xf32>
    %179 = math.exp %178 : vector<8x128xf32>
    %cst_62 = arith.constant 1.000000e+00 : f32
    %180 = vector.broadcast %cst_62 : f32 to vector<8x128xf32>
    %181 = arith.addf %180, %179 : vector<8x128xf32>
    %182 = arith.divf %180, %181 : vector<8x128xf32>
    %183 = vector.extract_strided_slice %162 {offsets = [0, 256], sizes = [8, 128], strides = [1, 1]} : vector<8x384xf32> to vector<8x128xf32>
    %184 = vector.extract_strided_slice %166 {offsets = [0, 256], sizes = [8, 128], strides = [1, 1]} : vector<8x384xf32> to vector<8x128xf32>
    %185 = arith.mulf %174, %184 : vector<8x128xf32>
    %186 = arith.addf %183, %185 : vector<8x128xf32>
    %187 = math.tanh %186 : vector<8x128xf32>
    %cst_63 = arith.constant 1.000000e+00 : f32
    %188 = vector.broadcast %cst_63 : f32 to vector<8x128xf32>
    %189 = arith.subf %188, %182 : vector<8x128xf32>
    %190 = arith.mulf %189, %187 : vector<8x128xf32>
    %191 = arith.mulf %182, %157 : vector<8x128xf32>
    %192 = arith.addf %190, %191 : vector<8x128xf32>
    %193 = arith.index_cast %c3_i32 : i32 to index
    %c0_64 = arith.constant 0 : index
    %c0_65 = arith.constant 0 : index
    %194 = vector.load %arg5[%193, %c0_64, %c0_65] : memref<8x8x128xf32, #tpu.memory_space<vmem>>, vector<1x8x128xf32>
    %195 = vector.shape_cast %194 : vector<1x8x128xf32> to vector<8x128xf32>
    %196 = vector.shape_cast %192 : vector<8x128xf32> to vector<1x8x128xf32>
    tpu.vector_store %arg5[%193, %c0_64, %c0_65], %196 {strides = array<i32>} : memref<8x8x128xf32, #tpu.memory_space<vmem>>, vector<1x8x128xf32>,
    %197 = vector.broadcast %10 : vector<8x1xf32> to vector<8x128xf32>
    %198 = arith.mulf %192, %197 : vector<8x128xf32>
    %199 = vector.broadcast %12 : vector<8x1xf32> to vector<8x128xf32>
    %200 = arith.mulf %192, %199 : vector<8x128xf32>
    %201 = tpu.concatenate %198, %200 in 1 : vector<8x128xf32>, vector<8x128xf32> -> vector<8x256xf32>
    %c4_i32 = arith.constant 4 : i32
    %202 = vector.extract_strided_slice %201 {offsets = [0, 0], sizes = [8, 128], strides = [1, 1]} : vector<8x256xf32> to vector<8x128xf32>
    %203 = vector.extract_strided_slice %201 {offsets = [0, 128], sizes = [8, 128], strides = [1, 1]} : vector<8x256xf32> to vector<8x128xf32>
    %204 = arith.addf %202, %203 : vector<8x128xf32>
    %205 = arith.index_cast %c4_i32 : i32 to index
    %c0_66 = arith.constant 0 : index
    %c0_67 = arith.constant 0 : index
    %206 = vector.load %arg6[%205, %c0_66, %c0_67] : memref<8x8x384xf32, #tpu.memory_space<vmem>>, vector<1x8x384xf32>
    %207 = vector.shape_cast %206 : vector<1x8x384xf32> to vector<8x384xf32>
    %c0_68 = arith.constant 0 : index
    %c0_69 = arith.constant 0 : index
    %208 = vector.load %arg2[%c0_68, %c0_69] : memref<8x384xf32, #tpu.memory_space<vmem>>, vector<8x384xf32>
    %209 = arith.addf %207, %208 : vector<8x384xf32>
    %c0_70 = arith.constant 0 : index
    %c0_71 = arith.constant 0 : index
    %210 = vector.load %arg3[%c0_70, %c0_71] : memref<256x384xf32, #tpu.memory_space<vmem>>, vector<256x384xf32>
    %cst_72 = arith.constant dense<0.000000e+00> : vector<8x384xf32>
    %211 = tpu.matmul %201, %210, %cst_72 {dimension_numbers = #tpu.dot_dimension_numbers<[1], [0], [0], [1], [0, 0, 1, 1], [], []>} : vector<8x256xf32>, vector<256x384xf32>, vector<8x384xf32> -> vector<8x384xf32>
    %c0_73 = arith.constant 0 : index
    %c0_74 = arith.constant 0 : index
    %212 = vector.load %arg4[%c0_73, %c0_74] : memref<8x384xf32, #tpu.memory_space<vmem>>, vector<8x384xf32>
    %213 = arith.addf %211, %212 : vector<8x384xf32>
    %214 = vector.extract_strided_slice %209 {offsets = [0, 0], sizes = [8, 128], strides = [1, 1]} : vector<8x384xf32> to vector<8x128xf32>
    %215 = vector.extract_strided_slice %213 {offsets = [0, 0], sizes = [8, 128], strides = [1, 1]} : vector<8x384xf32> to vector<8x128xf32>
    %216 = arith.addf %214, %215 : vector<8x128xf32>
    %217 = arith.negf %216 : vector<8x128xf32>
    %218 = math.exp %217 : vector<8x128xf32>
    %cst_75 = arith.constant 1.000000e+00 : f32
    %219 = vector.broadcast %cst_75 : f32 to vector<8x128xf32>
    %220 = arith.addf %219, %218 : vector<8x128xf32>
    %221 = arith.divf %219, %220 : vector<8x128xf32>
    %222 = vector.extract_strided_slice %209 {offsets = [0, 128], sizes = [8, 128], strides = [1, 1]} : vector<8x384xf32> to vector<8x128xf32>
    %223 = vector.extract_strided_slice %213 {offsets = [0, 128], sizes = [8, 128], strides = [1, 1]} : vector<8x384xf32> to vector<8x128xf32>
    %224 = arith.addf %222, %223 : vector<8x128xf32>
    %225 = arith.negf %224 : vector<8x128xf32>
    %226 = math.exp %225 : vector<8x128xf32>
    %cst_76 = arith.constant 1.000000e+00 : f32
    %227 = vector.broadcast %cst_76 : f32 to vector<8x128xf32>
    %228 = arith.addf %227, %226 : vector<8x128xf32>
    %229 = arith.divf %227, %228 : vector<8x128xf32>
    %230 = vector.extract_strided_slice %209 {offsets = [0, 256], sizes = [8, 128], strides = [1, 1]} : vector<8x384xf32> to vector<8x128xf32>
    %231 = vector.extract_strided_slice %213 {offsets = [0, 256], sizes = [8, 128], strides = [1, 1]} : vector<8x384xf32> to vector<8x128xf32>
    %232 = arith.mulf %221, %231 : vector<8x128xf32>
    %233 = arith.addf %230, %232 : vector<8x128xf32>
    %234 = math.tanh %233 : vector<8x128xf32>
    %cst_77 = arith.constant 1.000000e+00 : f32
    %235 = vector.broadcast %cst_77 : f32 to vector<8x128xf32>
    %236 = arith.subf %235, %229 : vector<8x128xf32>
    %237 = arith.mulf %236, %234 : vector<8x128xf32>
    %238 = arith.mulf %229, %204 : vector<8x128xf32>
    %239 = arith.addf %237, %238 : vector<8x128xf32>
    %240 = arith.index_cast %c4_i32 : i32 to index
    %c0_78 = arith.constant 0 : index
    %c0_79 = arith.constant 0 : index
    %241 = vector.load %arg5[%240, %c0_78, %c0_79] : memref<8x8x128xf32, #tpu.memory_space<vmem>>, vector<1x8x128xf32>
    %242 = vector.shape_cast %241 : vector<1x8x128xf32> to vector<8x128xf32>
    %243 = vector.shape_cast %239 : vector<8x128xf32> to vector<1x8x128xf32>
    tpu.vector_store %arg5[%240, %c0_78, %c0_79], %243 {strides = array<i32>} : memref<8x8x128xf32, #tpu.memory_space<vmem>>, vector<1x8x128xf32>,
    %244 = vector.broadcast %10 : vector<8x1xf32> to vector<8x128xf32>
    %245 = arith.mulf %239, %244 : vector<8x128xf32>
    %246 = vector.broadcast %12 : vector<8x1xf32> to vector<8x128xf32>
    %247 = arith.mulf %239, %246 : vector<8x128xf32>
    %248 = tpu.concatenate %245, %247 in 1 : vector<8x128xf32>, vector<8x128xf32> -> vector<8x256xf32>
    %c5_i32 = arith.constant 5 : i32
    %249 = vector.extract_strided_slice %248 {offsets = [0, 0], sizes = [8, 128], strides = [1, 1]} : vector<8x256xf32> to vector<8x128xf32>
    %250 = vector.extract_strided_slice %248 {offsets = [0, 128], sizes = [8, 128], strides = [1, 1]} : vector<8x256xf32> to vector<8x128xf32>
    %251 = arith.addf %249, %250 : vector<8x128xf32>
    %252 = arith.index_cast %c5_i32 : i32 to index
    %c0_80 = arith.constant 0 : index
    %c0_81 = arith.constant 0 : index
    %253 = vector.load %arg6[%252, %c0_80, %c0_81] : memref<8x8x384xf32, #tpu.memory_space<vmem>>, vector<1x8x384xf32>
    %254 = vector.shape_cast %253 : vector<1x8x384xf32> to vector<8x384xf32>
    %c0_82 = arith.constant 0 : index
    %c0_83 = arith.constant 0 : index
    %255 = vector.load %arg2[%c0_82, %c0_83] : memref<8x384xf32, #tpu.memory_space<vmem>>, vector<8x384xf32>
    %256 = arith.addf %254, %255 : vector<8x384xf32>
    %c0_84 = arith.constant 0 : index
    %c0_85 = arith.constant 0 : index
    %257 = vector.load %arg3[%c0_84, %c0_85] : memref<256x384xf32, #tpu.memory_space<vmem>>, vector<256x384xf32>
    %cst_86 = arith.constant dense<0.000000e+00> : vector<8x384xf32>
    %258 = tpu.matmul %248, %257, %cst_86 {dimension_numbers = #tpu.dot_dimension_numbers<[1], [0], [0], [1], [0, 0, 1, 1], [], []>} : vector<8x256xf32>, vector<256x384xf32>, vector<8x384xf32> -> vector<8x384xf32>
    %c0_87 = arith.constant 0 : index
    %c0_88 = arith.constant 0 : index
    %259 = vector.load %arg4[%c0_87, %c0_88] : memref<8x384xf32, #tpu.memory_space<vmem>>, vector<8x384xf32>
    %260 = arith.addf %258, %259 : vector<8x384xf32>
    %261 = vector.extract_strided_slice %256 {offsets = [0, 0], sizes = [8, 128], strides = [1, 1]} : vector<8x384xf32> to vector<8x128xf32>
    %262 = vector.extract_strided_slice %260 {offsets = [0, 0], sizes = [8, 128], strides = [1, 1]} : vector<8x384xf32> to vector<8x128xf32>
    %263 = arith.addf %261, %262 : vector<8x128xf32>
    %264 = arith.negf %263 : vector<8x128xf32>
    %265 = math.exp %264 : vector<8x128xf32>
    %cst_89 = arith.constant 1.000000e+00 : f32
    %266 = vector.broadcast %cst_89 : f32 to vector<8x128xf32>
    %267 = arith.addf %266, %265 : vector<8x128xf32>
    %268 = arith.divf %266, %267 : vector<8x128xf32>
    %269 = vector.extract_strided_slice %256 {offsets = [0, 128], sizes = [8, 128], strides = [1, 1]} : vector<8x384xf32> to vector<8x128xf32>
    %270 = vector.extract_strided_slice %260 {offsets = [0, 128], sizes = [8, 128], strides = [1, 1]} : vector<8x384xf32> to vector<8x128xf32>
    %271 = arith.addf %269, %270 : vector<8x128xf32>
    %272 = arith.negf %271 : vector<8x128xf32>
    %273 = math.exp %272 : vector<8x128xf32>
    %cst_90 = arith.constant 1.000000e+00 : f32
    %274 = vector.broadcast %cst_90 : f32 to vector<8x128xf32>
    %275 = arith.addf %274, %273 : vector<8x128xf32>
    %276 = arith.divf %274, %275 : vector<8x128xf32>
    %277 = vector.extract_strided_slice %256 {offsets = [0, 256], sizes = [8, 128], strides = [1, 1]} : vector<8x384xf32> to vector<8x128xf32>
    %278 = vector.extract_strided_slice %260 {offsets = [0, 256], sizes = [8, 128], strides = [1, 1]} : vector<8x384xf32> to vector<8x128xf32>
    %279 = arith.mulf %268, %278 : vector<8x128xf32>
    %280 = arith.addf %277, %279 : vector<8x128xf32>
    %281 = math.tanh %280 : vector<8x128xf32>
    %cst_91 = arith.constant 1.000000e+00 : f32
    %282 = vector.broadcast %cst_91 : f32 to vector<8x128xf32>
    %283 = arith.subf %282, %276 : vector<8x128xf32>
    %284 = arith.mulf %283, %281 : vector<8x128xf32>
    %285 = arith.mulf %276, %251 : vector<8x128xf32>
    %286 = arith.addf %284, %285 : vector<8x128xf32>
    %287 = arith.index_cast %c5_i32 : i32 to index
    %c0_92 = arith.constant 0 : index
    %c0_93 = arith.constant 0 : index
    %288 = vector.load %arg5[%287, %c0_92, %c0_93] : memref<8x8x128xf32, #tpu.memory_space<vmem>>, vector<1x8x128xf32>
    %289 = vector.shape_cast %288 : vector<1x8x128xf32> to vector<8x128xf32>
    %290 = vector.shape_cast %286 : vector<8x128xf32> to vector<1x8x128xf32>
    tpu.vector_store %arg5[%287, %c0_92, %c0_93], %290 {strides = array<i32>} : memref<8x8x128xf32, #tpu.memory_space<vmem>>, vector<1x8x128xf32>,
    %291 = vector.broadcast %10 : vector<8x1xf32> to vector<8x128xf32>
    %292 = arith.mulf %286, %291 : vector<8x128xf32>
    %293 = vector.broadcast %12 : vector<8x1xf32> to vector<8x128xf32>
    %294 = arith.mulf %286, %293 : vector<8x128xf32>
    %295 = tpu.concatenate %292, %294 in 1 : vector<8x128xf32>, vector<8x128xf32> -> vector<8x256xf32>
    %c6_i32 = arith.constant 6 : i32
    %296 = vector.extract_strided_slice %295 {offsets = [0, 0], sizes = [8, 128], strides = [1, 1]} : vector<8x256xf32> to vector<8x128xf32>
    %297 = vector.extract_strided_slice %295 {offsets = [0, 128], sizes = [8, 128], strides = [1, 1]} : vector<8x256xf32> to vector<8x128xf32>
    %298 = arith.addf %296, %297 : vector<8x128xf32>
    %299 = arith.index_cast %c6_i32 : i32 to index
    %c0_94 = arith.constant 0 : index
    %c0_95 = arith.constant 0 : index
    %300 = vector.load %arg6[%299, %c0_94, %c0_95] : memref<8x8x384xf32, #tpu.memory_space<vmem>>, vector<1x8x384xf32>
    %301 = vector.shape_cast %300 : vector<1x8x384xf32> to vector<8x384xf32>
    %c0_96 = arith.constant 0 : index
    %c0_97 = arith.constant 0 : index
    %302 = vector.load %arg2[%c0_96, %c0_97] : memref<8x384xf32, #tpu.memory_space<vmem>>, vector<8x384xf32>
    %303 = arith.addf %301, %302 : vector<8x384xf32>
    %c0_98 = arith.constant 0 : index
    %c0_99 = arith.constant 0 : index
    %304 = vector.load %arg3[%c0_98, %c0_99] : memref<256x384xf32, #tpu.memory_space<vmem>>, vector<256x384xf32>
    %cst_100 = arith.constant dense<0.000000e+00> : vector<8x384xf32>
    %305 = tpu.matmul %295, %304, %cst_100 {dimension_numbers = #tpu.dot_dimension_numbers<[1], [0], [0], [1], [0, 0, 1, 1], [], []>} : vector<8x256xf32>, vector<256x384xf32>, vector<8x384xf32> -> vector<8x384xf32>
    %c0_101 = arith.constant 0 : index
    %c0_102 = arith.constant 0 : index
    %306 = vector.load %arg4[%c0_101, %c0_102] : memref<8x384xf32, #tpu.memory_space<vmem>>, vector<8x384xf32>
    %307 = arith.addf %305, %306 : vector<8x384xf32>
    %308 = vector.extract_strided_slice %303 {offsets = [0, 0], sizes = [8, 128], strides = [1, 1]} : vector<8x384xf32> to vector<8x128xf32>
    %309 = vector.extract_strided_slice %307 {offsets = [0, 0], sizes = [8, 128], strides = [1, 1]} : vector<8x384xf32> to vector<8x128xf32>
    %310 = arith.addf %308, %309 : vector<8x128xf32>
    %311 = arith.negf %310 : vector<8x128xf32>
    %312 = math.exp %311 : vector<8x128xf32>
    %cst_103 = arith.constant 1.000000e+00 : f32
    %313 = vector.broadcast %cst_103 : f32 to vector<8x128xf32>
    %314 = arith.addf %313, %312 : vector<8x128xf32>
    %315 = arith.divf %313, %314 : vector<8x128xf32>
    %316 = vector.extract_strided_slice %303 {offsets = [0, 128], sizes = [8, 128], strides = [1, 1]} : vector<8x384xf32> to vector<8x128xf32>
    %317 = vector.extract_strided_slice %307 {offsets = [0, 128], sizes = [8, 128], strides = [1, 1]} : vector<8x384xf32> to vector<8x128xf32>
    %318 = arith.addf %316, %317 : vector<8x128xf32>
    %319 = arith.negf %318 : vector<8x128xf32>
    %320 = math.exp %319 : vector<8x128xf32>
    %cst_104 = arith.constant 1.000000e+00 : f32
    %321 = vector.broadcast %cst_104 : f32 to vector<8x128xf32>
    %322 = arith.addf %321, %320 : vector<8x128xf32>
    %323 = arith.divf %321, %322 : vector<8x128xf32>
    %324 = vector.extract_strided_slice %303 {offsets = [0, 256], sizes = [8, 128], strides = [1, 1]} : vector<8x384xf32> to vector<8x128xf32>
    %325 = vector.extract_strided_slice %307 {offsets = [0, 256], sizes = [8, 128], strides = [1, 1]} : vector<8x384xf32> to vector<8x128xf32>
    %326 = arith.mulf %315, %325 : vector<8x128xf32>
    %327 = arith.addf %324, %326 : vector<8x128xf32>
    %328 = math.tanh %327 : vector<8x128xf32>
    %cst_105 = arith.constant 1.000000e+00 : f32
    %329 = vector.broadcast %cst_105 : f32 to vector<8x128xf32>
    %330 = arith.subf %329, %323 : vector<8x128xf32>
    %331 = arith.mulf %330, %328 : vector<8x128xf32>
    %332 = arith.mulf %323, %298 : vector<8x128xf32>
    %333 = arith.addf %331, %332 : vector<8x128xf32>
    %334 = arith.index_cast %c6_i32 : i32 to index
    %c0_106 = arith.constant 0 : index
    %c0_107 = arith.constant 0 : index
    %335 = vector.load %arg5[%334, %c0_106, %c0_107] : memref<8x8x128xf32, #tpu.memory_space<vmem>>, vector<1x8x128xf32>
    %336 = vector.shape_cast %335 : vector<1x8x128xf32> to vector<8x128xf32>
    %337 = vector.shape_cast %333 : vector<8x128xf32> to vector<1x8x128xf32>
    tpu.vector_store %arg5[%334, %c0_106, %c0_107], %337 {strides = array<i32>} : memref<8x8x128xf32, #tpu.memory_space<vmem>>, vector<1x8x128xf32>,
    %338 = vector.broadcast %10 : vector<8x1xf32> to vector<8x128xf32>
    %339 = arith.mulf %333, %338 : vector<8x128xf32>
    %340 = vector.broadcast %12 : vector<8x1xf32> to vector<8x128xf32>
    %341 = arith.mulf %333, %340 : vector<8x128xf32>
    %342 = tpu.concatenate %339, %341 in 1 : vector<8x128xf32>, vector<8x128xf32> -> vector<8x256xf32>
    %c7_i32 = arith.constant 7 : i32
    %343 = vector.extract_strided_slice %342 {offsets = [0, 0], sizes = [8, 128], strides = [1, 1]} : vector<8x256xf32> to vector<8x128xf32>
    %344 = vector.extract_strided_slice %342 {offsets = [0, 128], sizes = [8, 128], strides = [1, 1]} : vector<8x256xf32> to vector<8x128xf32>
    %345 = arith.addf %343, %344 : vector<8x128xf32>
    %346 = arith.index_cast %c7_i32 : i32 to index
    %c0_108 = arith.constant 0 : index
    %c0_109 = arith.constant 0 : index
    %347 = vector.load %arg6[%346, %c0_108, %c0_109] : memref<8x8x384xf32, #tpu.memory_space<vmem>>, vector<1x8x384xf32>
    %348 = vector.shape_cast %347 : vector<1x8x384xf32> to vector<8x384xf32>
    %c0_110 = arith.constant 0 : index
    %c0_111 = arith.constant 0 : index
    %349 = vector.load %arg2[%c0_110, %c0_111] : memref<8x384xf32, #tpu.memory_space<vmem>>, vector<8x384xf32>
    %350 = arith.addf %348, %349 : vector<8x384xf32>
    %c0_112 = arith.constant 0 : index
    %c0_113 = arith.constant 0 : index
    %351 = vector.load %arg3[%c0_112, %c0_113] : memref<256x384xf32, #tpu.memory_space<vmem>>, vector<256x384xf32>
    %cst_114 = arith.constant dense<0.000000e+00> : vector<8x384xf32>
    %352 = tpu.matmul %342, %351, %cst_114 {dimension_numbers = #tpu.dot_dimension_numbers<[1], [0], [0], [1], [0, 0, 1, 1], [], []>} : vector<8x256xf32>, vector<256x384xf32>, vector<8x384xf32> -> vector<8x384xf32>
    %c0_115 = arith.constant 0 : index
    %c0_116 = arith.constant 0 : index
    %353 = vector.load %arg4[%c0_115, %c0_116] : memref<8x384xf32, #tpu.memory_space<vmem>>, vector<8x384xf32>
    %354 = arith.addf %352, %353 : vector<8x384xf32>
    %355 = vector.extract_strided_slice %350 {offsets = [0, 0], sizes = [8, 128], strides = [1, 1]} : vector<8x384xf32> to vector<8x128xf32>
    %356 = vector.extract_strided_slice %354 {offsets = [0, 0], sizes = [8, 128], strides = [1, 1]} : vector<8x384xf32> to vector<8x128xf32>
    %357 = arith.addf %355, %356 : vector<8x128xf32>
    %358 = arith.negf %357 : vector<8x128xf32>
    %359 = math.exp %358 : vector<8x128xf32>
    %cst_117 = arith.constant 1.000000e+00 : f32
    %360 = vector.broadcast %cst_117 : f32 to vector<8x128xf32>
    %361 = arith.addf %360, %359 : vector<8x128xf32>
    %362 = arith.divf %360, %361 : vector<8x128xf32>
    %363 = vector.extract_strided_slice %350 {offsets = [0, 128], sizes = [8, 128], strides = [1, 1]} : vector<8x384xf32> to vector<8x128xf32>
    %364 = vector.extract_strided_slice %354 {offsets = [0, 128], sizes = [8, 128], strides = [1, 1]} : vector<8x384xf32> to vector<8x128xf32>
    %365 = arith.addf %363, %364 : vector<8x128xf32>
    %366 = arith.negf %365 : vector<8x128xf32>
    %367 = math.exp %366 : vector<8x128xf32>
    %cst_118 = arith.constant 1.000000e+00 : f32
    %368 = vector.broadcast %cst_118 : f32 to vector<8x128xf32>
    %369 = arith.addf %368, %367 : vector<8x128xf32>
    %370 = arith.divf %368, %369 : vector<8x128xf32>
    %371 = vector.extract_strided_slice %350 {offsets = [0, 256], sizes = [8, 128], strides = [1, 1]} : vector<8x384xf32> to vector<8x128xf32>
    %372 = vector.extract_strided_slice %354 {offsets = [0, 256], sizes = [8, 128], strides = [1, 1]} : vector<8x384xf32> to vector<8x128xf32>
    %373 = arith.mulf %362, %372 : vector<8x128xf32>
    %374 = arith.addf %371, %373 : vector<8x128xf32>
    %375 = math.tanh %374 : vector<8x128xf32>
    %cst_119 = arith.constant 1.000000e+00 : f32
    %376 = vector.broadcast %cst_119 : f32 to vector<8x128xf32>
    %377 = arith.subf %376, %370 : vector<8x128xf32>
    %378 = arith.mulf %377, %375 : vector<8x128xf32>
    %379 = arith.mulf %370, %345 : vector<8x128xf32>
    %380 = arith.addf %378, %379 : vector<8x128xf32>
    %381 = arith.index_cast %c7_i32 : i32 to index
    %c0_120 = arith.constant 0 : index
    %c0_121 = arith.constant 0 : index
    %382 = vector.load %arg5[%381, %c0_120, %c0_121] : memref<8x8x128xf32, #tpu.memory_space<vmem>>, vector<1x8x128xf32>
    %383 = vector.shape_cast %382 : vector<1x8x128xf32> to vector<8x128xf32>
    %384 = vector.shape_cast %380 : vector<8x128xf32> to vector<1x8x128xf32>
    tpu.vector_store %arg5[%381, %c0_120, %c0_121], %384 {strides = array<i32>} : memref<8x8x128xf32, #tpu.memory_space<vmem>>, vector<1x8x128xf32>,
    %385 = vector.broadcast %10 : vector<8x1xf32> to vector<8x128xf32>
    %386 = arith.mulf %380, %385 : vector<8x128xf32>
    %387 = vector.broadcast %12 : vector<8x1xf32> to vector<8x128xf32>
    %388 = arith.mulf %380, %387 : vector<8x128xf32>
    %389 = tpu.concatenate %386, %388 in 1 : vector<8x128xf32>, vector<8x128xf32> -> vector<8x256xf32>
    %c8_i32 = arith.constant 8 : i32
    return
  }
}

module attributes {stable_mosaic.version = 11 : i64} {
  func.func @_heads_kernel(%arg0: memref<16x256xf32, #tpu.memory_space<vmem>>, %arg1: memref<256x256xf32, #tpu.memory_space<vmem>>, %arg2: memref<1x256xf32, #tpu.memory_space<vmem>>, %arg3: memref<128x12xf32, #tpu.memory_space<vmem>>, %arg4: memref<1x12xf32, #tpu.memory_space<vmem>>, %arg5: memref<128x12xf32, #tpu.memory_space<vmem>>, %arg6: memref<1x12xf32, #tpu.memory_space<vmem>>, %arg7: memref<128x12xf32, #tpu.memory_space<vmem>>, %arg8: memref<1x12xf32, #tpu.memory_space<vmem>>, %arg9: memref<128x12xf32, #tpu.memory_space<vmem>>, %arg10: memref<1x12xf32, #tpu.memory_space<vmem>>, %arg11: memref<16x12xf32, #tpu.memory_space<vmem>>, %arg12: memref<3x16x12xf32, #tpu.memory_space<vmem>>) attributes {dimension_semantics = [], scalar_prefetch = 0 : i64, scratch_operands = 0 : i64, tpu.core_type = #tpu.core_type<tc>} {
    %c0 = arith.constant 0 : index
    %c0_0 = arith.constant 0 : index
    %0 = vector.load %arg0[%c0, %c0_0] : memref<16x256xf32, #tpu.memory_space<vmem>>, vector<16x256xf32>
    %c0_1 = arith.constant 0 : index
    %c0_2 = arith.constant 0 : index
    %1 = vector.load %arg1[%c0_1, %c0_2] : memref<256x256xf32, #tpu.memory_space<vmem>>, vector<256x256xf32>
    %cst = arith.constant dense<0.000000e+00> : vector<16x256xf32>
    %2 = tpu.matmul %0, %1, %cst {dimension_numbers = #tpu.dot_dimension_numbers<[1], [0], [0], [1], [0, 0, 1, 1], [], []>} : vector<16x256xf32>, vector<256x256xf32>, vector<16x256xf32> -> vector<16x256xf32>
    %c0_3 = arith.constant 0 : index
    %c0_4 = arith.constant 0 : index
    %3 = vector.load %arg2[%c0_3, %c0_4] : memref<1x256xf32, #tpu.memory_space<vmem>>, vector<1x256xf32>
    %4 = vector.broadcast %3 : vector<1x256xf32> to vector<16x256xf32>
    %5 = arith.addf %2, %4 : vector<16x256xf32>
    %6 = vector.extract_strided_slice %5 {offsets = [0, 0], sizes = [16, 128], strides = [1, 1]} : vector<16x256xf32> to vector<16x128xf32>
    %7 = vector.extract_strided_slice %5 {offsets = [0, 128], sizes = [16, 128], strides = [1, 1]} : vector<16x256xf32> to vector<16x128xf32>
    %c0_5 = arith.constant 0 : index
    %c0_6 = arith.constant 0 : index
    %8 = vector.load %arg3[%c0_5, %c0_6] : memref<128x12xf32, #tpu.memory_space<vmem>>, vector<128x12xf32>
    %cst_7 = arith.constant dense<0.000000e+00> : vector<16x12xf32>
    %9 = tpu.matmul %6, %8, %cst_7 {dimension_numbers = #tpu.dot_dimension_numbers<[1], [0], [0], [1], [0, 0, 1, 1], [], []>} : vector<16x128xf32>, vector<128x12xf32>, vector<16x12xf32> -> vector<16x12xf32>
    %c0_8 = arith.constant 0 : index
    %c0_9 = arith.constant 0 : index
    %10 = vector.load %arg4[%c0_8, %c0_9] : memref<1x12xf32, #tpu.memory_space<vmem>>, vector<1x12xf32>
    %11 = vector.broadcast %10 : vector<1x12xf32> to vector<16x12xf32>
    %12 = arith.addf %9, %11 : vector<16x12xf32>
    %c0_10 = arith.constant 0 : index
    %c0_11 = arith.constant 0 : index
    %13 = vector.load %arg11[%c0_10, %c0_11] : memref<16x12xf32, #tpu.memory_space<vmem>>, vector<16x12xf32>
    tpu.vector_store %arg11[%c0_10, %c0_11], %12 {strides = array<i32>} : memref<16x12xf32, #tpu.memory_space<vmem>>, vector<16x12xf32>,
    %c0_12 = arith.constant 0 : index
    %c0_13 = arith.constant 0 : index
    %14 = vector.load %arg5[%c0_12, %c0_13] : memref<128x12xf32, #tpu.memory_space<vmem>>, vector<128x12xf32>
    %cst_14 = arith.constant dense<0.000000e+00> : vector<16x12xf32>
    %15 = tpu.matmul %7, %14, %cst_14 {dimension_numbers = #tpu.dot_dimension_numbers<[1], [0], [0], [1], [0, 0, 1, 1], [], []>} : vector<16x128xf32>, vector<128x12xf32>, vector<16x12xf32> -> vector<16x12xf32>
    %c0_15 = arith.constant 0 : index
    %c0_16 = arith.constant 0 : index
    %16 = vector.load %arg6[%c0_15, %c0_16] : memref<1x12xf32, #tpu.memory_space<vmem>>, vector<1x12xf32>
    %17 = vector.broadcast %16 : vector<1x12xf32> to vector<16x12xf32>
    %18 = arith.addf %15, %17 : vector<16x12xf32>
    %c0_17 = arith.constant 0 : index
    %c0_18 = arith.constant 0 : index
    %19 = vector.load %arg7[%c0_17, %c0_18] : memref<128x12xf32, #tpu.memory_space<vmem>>, vector<128x12xf32>
    %cst_19 = arith.constant dense<0.000000e+00> : vector<16x12xf32>
    %20 = tpu.matmul %7, %19, %cst_19 {dimension_numbers = #tpu.dot_dimension_numbers<[1], [0], [0], [1], [0, 0, 1, 1], [], []>} : vector<16x128xf32>, vector<128x12xf32>, vector<16x12xf32> -> vector<16x12xf32>
    %c0_20 = arith.constant 0 : index
    %c0_21 = arith.constant 0 : index
    %21 = vector.load %arg8[%c0_20, %c0_21] : memref<1x12xf32, #tpu.memory_space<vmem>>, vector<1x12xf32>
    %22 = vector.broadcast %21 : vector<1x12xf32> to vector<16x12xf32>
    %23 = arith.addf %20, %22 : vector<16x12xf32>
    %c0_22 = arith.constant 0 : index
    %c0_23 = arith.constant 0 : index
    %24 = vector.load %arg9[%c0_22, %c0_23] : memref<128x12xf32, #tpu.memory_space<vmem>>, vector<128x12xf32>
    %cst_24 = arith.constant dense<0.000000e+00> : vector<16x12xf32>
    %25 = tpu.matmul %7, %24, %cst_24 {dimension_numbers = #tpu.dot_dimension_numbers<[1], [0], [0], [1], [0, 0, 1, 1], [], []>} : vector<16x128xf32>, vector<128x12xf32>, vector<16x12xf32> -> vector<16x12xf32>
    %c0_25 = arith.constant 0 : index
    %c0_26 = arith.constant 0 : index
    %26 = vector.load %arg10[%c0_25, %c0_26] : memref<1x12xf32, #tpu.memory_space<vmem>>, vector<1x12xf32>
    %27 = vector.broadcast %26 : vector<1x12xf32> to vector<16x12xf32>
    %28 = arith.addf %25, %27 : vector<16x12xf32>
    %29 = arith.mulf %18, %18 : vector<16x12xf32>
    %30 = arith.mulf %23, %23 : vector<16x12xf32>
    %31 = arith.addf %29, %30 : vector<16x12xf32>
    %32 = arith.mulf %28, %28 : vector<16x12xf32>
    %33 = arith.addf %31, %32 : vector<16x12xf32>
    %34 = math.sqrt %33 : vector<16x12xf32>
    %cst_27 = arith.constant 9.99999996E-13 : f32
    %35 = vector.broadcast %cst_27 : f32 to vector<16x12xf32>
    %36 = arith.addf %34, %35 : vector<16x12xf32>
    %cst_28 = arith.constant 1.000000e+00 : f32
    %37 = vector.broadcast %cst_28 : f32 to vector<16x12xf32>
    %38 = arith.divf %37, %36 : vector<16x12xf32>
    %39 = arith.mulf %18, %38 : vector<16x12xf32>
    %c0_29 = arith.constant 0 : index
    %c0_30 = arith.constant 0 : index
    %c0_31 = arith.constant 0 : index
    %40 = vector.load %arg12[%c0_29, %c0_30, %c0_31] : memref<3x16x12xf32, #tpu.memory_space<vmem>>, vector<1x16x12xf32>
    %41 = vector.shape_cast %40 : vector<1x16x12xf32> to vector<16x12xf32>
    %42 = vector.shape_cast %39 : vector<16x12xf32> to vector<1x16x12xf32>
    tpu.vector_store %arg12[%c0_29, %c0_30, %c0_31], %42 {strides = array<i32>} : memref<3x16x12xf32, #tpu.memory_space<vmem>>, vector<1x16x12xf32>,
    %43 = arith.mulf %23, %38 : vector<16x12xf32>
    %c1 = arith.constant 1 : index
    %c0_32 = arith.constant 0 : index
    %c0_33 = arith.constant 0 : index
    %44 = vector.load %arg12[%c1, %c0_32, %c0_33] : memref<3x16x12xf32, #tpu.memory_space<vmem>>, vector<1x16x12xf32>
    %45 = vector.shape_cast %44 : vector<1x16x12xf32> to vector<16x12xf32>
    %46 = vector.shape_cast %43 : vector<16x12xf32> to vector<1x16x12xf32>
    tpu.vector_store %arg12[%c1, %c0_32, %c0_33], %46 {strides = array<i32>} : memref<3x16x12xf32, #tpu.memory_space<vmem>>, vector<1x16x12xf32>,
    %47 = arith.mulf %28, %38 : vector<16x12xf32>
    %c2 = arith.constant 2 : index
    %c0_34 = arith.constant 0 : index
    %c0_35 = arith.constant 0 : index
    %48 = vector.load %arg12[%c2, %c0_34, %c0_35] : memref<3x16x12xf32, #tpu.memory_space<vmem>>, vector<1x16x12xf32>
    %49 = vector.shape_cast %48 : vector<1x16x12xf32> to vector<16x12xf32>
    %50 = vector.shape_cast %47 : vector<16x12xf32> to vector<1x16x12xf32>
    tpu.vector_store %arg12[%c2, %c0_34, %c0_35], %50 {strides = array<i32>} : memref<3x16x12xf32, #tpu.memory_space<vmem>>, vector<1x16x12xf32>,
    return
  }
}

</mosaic_0001>

<llo_original>
// kernel: conventional_net_forward.6
$region0: #{conventional_net_forward.6}
  #allocation0 [shape = 'u32[]', space=smem, size = 0x4, offset = 0x4, fixed_abs, tag = 'smem constant byte address 0x4 - core index']
  #allocation1 [shape = 'u32[144,128]{1,0:T(1,128)}', space=vmem, size = 0x12000, scoped, tag = 'internal scratch']
  %s0 = inlined_call_operand.hbm [shape: f32[2,1024,8,72], index: 0, kind: input, shape index: {}]
  %s1 = inlined_call_operand.hbm [shape: f32[72,64], index: 1, kind: input, shape index: {}]
  %s2 = inlined_call_operand.hbm [shape: f32[1,64], index: 2, kind: input, shape index: {}]
  %s3 = inlined_call_operand.hbm [shape: f32[1,64], index: 3, kind: input, shape index: {}]
  %s4 = inlined_call_operand.vmem [shape: f32[2,128,8,64], index: 4, kind: output, shape index: {}]
  %s5 = sld [smem:[#allocation0]]
  $region65: #{conventional_net_forward.6} parent=0
    _
  %s7 = ssub.s32 1, %s5
  %s8 = scalar_select 0, %s7, %s5
  $region1: #{conventional_net_forward.6} parent=0
    #allocation2 [shape = 'u8[262144]{0}', space=vmem, size = 0x40000, scoped, tag = 'input window, operand 0']
    #allocation3 [shape = 's32[2]{0}', space=sflag, size = 0x8, scoped, tag = 'scoped memory for conventional_net_forward.6']
    #allocation4 [shape = 'u8[36864]{0}', space=vmem, size = 0x9000, scoped, tag = 'input window, operand 1, single buffered']
    #allocation5 [shape = 's32[1]{0}', space=sflag, size = 0x4, scoped, tag = 'scoped memory for conventional_net_forward.6']
    #allocation6 [shape = 'u8[512]{0}', space=vmem, size = 0x400, scoped, tag = 'input window, operand 2, single buffered']
    #allocation7 [shape = 'u8[512]{0}', space=vmem, size = 0x400, scoped, tag = 'input window, operand 3, single buffered']
    #allocation8 [shape = 's32[1]{0}', space=sflag, size = 0x4, scoped, tag = 'scoped memory for conventional_net_forward.6']
    %9 = vsyncpa [#allocation3], 0
    %s10 = scalar_lea.sflag [#allocation3], 1
    %11 = vsyncpa %s10, 0
    %12 = vsyncpa [#allocation5], 0
    %13 = vsyncpa [#allocation8], 0
    loop: start=0, step=1, limit=66
    $region2: #{conventional_net_forward.6} parent=1 // loop_pre_header
      _
    $region3: #{conventional_net_forward.6} parent=1 // loop_header
      %s15 = sphi 0, %s19
      %p16 = scmp.ge.s32.totalorder %s15, 66
      %s22 = sphi 0, %s34
      %s23 = sphi 0, %s30
      %s24 = sphi 0, %s22
      %s25 = sphi 0, %s23
      %s26 = sphi 0, %s24
      %s27 = sphi 0, %s25
      %s39 = sphi 0, %s41
      %s42 = sphi 0, %s39
      %s43 = sphi 0, %s42
      %s59 = sphi 0, %s43
      %s63 = sphi 0, %s63
      %s65 = sphi 0, %s63
      %s66 = sphi 0, %s65
      %s80 = sphi 0, %s66
      %s84 = sphi 0, %s84
      %s86 = sphi 0, %s84
      %s87 = sphi 0, %s86
      %s101 = sphi 0, %s87
      %s105 = sphi 0, %s105
      %s107 = sphi 0, %s105
      %s108 = sphi 0, %s107
      %s122 = sphi 0, %s108
      %s130 = sphi 0, %s132
      %s133 = sphi 0, %s130
      %s134 = sphi 0, %s133
      %s150 = sphi 0, %s134
    $region4: #{conventional_net_forward.6} parent=1 // loop_header_branch
      %18 = sbr.rel (%p16) target = $region8
    $region5: #{conventional_net_forward.6} parent=1 // loop_body
      %s20 = ssub.s32 %s15, 1
      %s21 = ssub.s32 %s15, 2
      %s28 = sadd.s32 1, %s23
      %p29 = scmp.ge.s32.totalorder %s28, 32
      %s30 = scalar_select %p29, 0, %s28
      %s31 = sadd.s32 1, %s22
      %s32 = scalar_select %p29, %s31, %s22
      %p33 = scmp.ge.s32.totalorder %s32, 2
      %s34 = scalar_select %p33, 0, %s32
      %s35 = ssub.s32 %s22, %s34
      %s36 = ssub.s32 %s23, %s30
      %s37 = sor.u32 %s35, %s36
      %p38 = scmp.eq.s32.totalorder %s37, 0
      %s40 = sadd.s32 %s39, 1
      %s41 = scalar_select %p38, %s39, %s40
      %p44 = pneg %p38
      %p45 = scmp.eq.s32.totalorder %s15, 63
      %p46 = por %p44, %p45
      %p47 = scmp.ne.s32.totalorder %s39, %s42
      %p48 = scmp.eq.s32.totalorder %s15, 0
      %p49 = por %p47, %p48
      %p50 = scmp.ne.s32.totalorder %s39, %s42
      %p51 = scmp.eq.s32.totalorder %s20, 63
      %p52 = por %p50, %p51
      %p53 = scmp.ne.s32.totalorder %s42, %s43
      %p54 = scmp.eq.s32.totalorder %s20, 0
      %p55 = por %p53, %p54
      %p56 = scmp.ne.s32.totalorder %s42, %s43
      %p57 = scmp.eq.s32.totalorder %s21, 63
      %p58 = por %p56, %p57
      %p60 = scmp.ne.s32.totalorder %s43, %s59
      %p61 = scmp.eq.s32.totalorder %s21, 0
      %p62 = por %p60, %p61
      %s64 = sadd.s32 %s63, 1
      %p67 = scmp.eq.s32.totalorder %s15, 63
      %p68 = scmp.ne.s32.totalorder %s63, %s65
      %p69 = scmp.eq.s32.totalorder %s15, 0
      %p70 = por %p68, %p69
      %p71 = scmp.ne.s32.totalorder %s63, %s65
      %p72 = scmp.eq.s32.totalorder %s20, 63
      %p73 = por %p71, %p72
      %p74 = scmp.ne.s32.totalorder %s65, %s66
      %p75 = scmp.eq.s32.totalorder %s20, 0
      %p76 = por %p74, %p75
      %p77 = scmp.ne.s32.totalorder %s65, %s66
      %p78 = scmp.eq.s32.totalorder %s21, 63
      %p79 = por %p77, %p78
      %p81 = scmp.ne.s32.totalorder %s66, %s80
      %p82 = scmp.eq.s32.totalorder %s21, 0
      %p83 = por %p81, %p82
      %s85 = sadd.s32 %s84, 1
      %p88 = scmp.eq.s32.totalorder %s15, 63
      %p89 = scmp.ne.s32.totalorder %s84, %s86
      %p90 = scmp.eq.s32.totalorder %s15, 0
      %p91 = por %p89, %p90
      %p92 = scmp.ne.s32.totalorder %s84, %s86
      %p93 = scmp.eq.s32.totalorder %s20, 63
      %p94 = por %p92, %p93
      %p95 = scmp.ne.s32.totalorder %s86, %s87
      %p96 = scmp.eq.s32.totalorder %s20, 0
      %p97 = por %p95, %p96
      %p98 = scmp.ne.s32.totalorder %s86, %s87
      %p99 = scmp.eq.s32.totalorder %s21, 63
      %p100 = por %p98, %p99
      %p102 = scmp.ne.s32.totalorder %s87, %s101
      %p103 = scmp.eq.s32.totalorder %s21, 0
      %p104 = por %p102, %p103
      %s106 = sadd.s32 %s105, 1
      %p109 = scmp.eq.s32.totalorder %s15, 63
      %p110 = scmp.ne.s32.totalorder %s105, %s107
      %p111 = scmp.eq.s32.totalorder %s15, 0
      %p112 = por %p110, %p111
      %p113 = scmp.ne.s32.totalorder %s105, %s107
      %p114 = scmp.eq.s32.totalorder %s20, 63
      %p115 = por %p113, %p114
      %p116 = scmp.ne.s32.totalorder %s107, %s108
      %p117 = scmp.eq.s32.totalorder %s20, 0
      %p118 = por %p116, %p117
      %p119 = scmp.ne.s32.totalorder %s107, %s108
      %p120 = scmp.eq.s32.totalorder %s21, 63
      %p121 = por %p119, %p120
      %p123 = scmp.ne.s32.totalorder %s108, %s122
      %p124 = scmp.eq.s32.totalorder %s21, 0
      %p125 = por %p123, %p124
      %s126 = ssub.s32 %s22, %s34
      %s127 = ssub.s32 %s23, %s30
      %s128 = sor.u32 %s126, %s127
      %p129 = scmp.eq.s32.totalorder %s128, 0
      %s131 = sadd.s32 %s130, 1
      %s132 = scalar_select %p129, %s130, %s131
      %p135 = pneg %p129
      %p136 = scmp.eq.s32.totalorder %s15, 63
      %p137 = por %p135, %p136
      %p138 = scmp.ne.s32.totalorder %s130, %s133
      %p139 = scmp.eq.s32.totalorder %s15, 0
      %p140 = por %p138, %p139
      %p141 = scmp.ne.s32.totalorder %s130, %s133
      %p142 = scmp.eq.s32.totalorder %s20, 63
      %p143 = por %p141, %p142
      %p144 = scmp.ne.s32.totalorder %s133, %s134
      %p145 = scmp.eq.s32.totalorder %s20, 0
      %p146 = por %p144, %p145
      %p147 = scmp.ne.s32.totalorder %s133, %s134
      %p148 = scmp.eq.s32.totalorder %s21, 63
      %p149 = por %p147, %p148
      %p151 = scmp.ne.s32.totalorder %s134, %s150
      %p152 = scmp.eq.s32.totalorder %s21, 0
      %p153 = por %p151, %p152
      %p154 = scmp.le.s32.totalorder 1, %s15
      %p155 = scmp.lt.s32.totalorder %s15, 65
      %p156 = pnand %p154, %p155
      %p157 = pneg %p156
      // Predicated region
      $region9: #{conventional_net_forward.6} parent=5 // pred_check
        _
      $region10: #{conventional_net_forward.6} parent=5 // pred_check_branch
        %159 = sbr.rel (%p156) target = $region12
      $region11: #{conventional_net_forward.6} parent=5 // pred_region
        %s160 = ssub.s32 %s15, 1
        // Predicated region
        $region13: #{conventional_net_forward.6} parent=11 // pred_check
          %p161 = pneg %p76
        $region14: #{conventional_net_forward.6} parent=11 // pred_check_branch
          %163 = sbr.rel (%p161) target = $region16
        $region15: #{conventional_net_forward.6} parent=11 // pred_region
          %s165 = ssub.s32 1152, 1152
          %166 = vsyncadd [#allocation5], %s165
          %s167 = sshll.u32 [#allocation4], 4
          %s168 = int_to_ptr.vmem [resolvable:$true] %s167
          %173 = dma.hbm_to_vmem [thread:$0]  %s1, 1152, %s168, [#allocation5], 128, 128, 8
        $region16: #{conventional_net_forward.6} parent=11 // pred_fallthru
          _
        // Predicated region
        $region17: #{conventional_net_forward.6} parent=11 // pred_check
          %p174 = pneg %p97
        $region18: #{conventional_net_forward.6} parent=11 // pred_check_branch
          %176 = sbr.rel (%p174) target = $region20
        $region19: #{conventional_net_forward.6} parent=11 // pred_region
          %s178 = ssub.s32 16, 16
          %179 = vsyncadd [#allocation5], %s178
          %s181 = sshll.u32 [#allocation6], 4
          %s182 = int_to_ptr.vmem [resolvable:$true] %s181
          %184 = dma.hbm_to_vmem [thread:$0]  %s2, 16, %s182, [#allocation5]
        $region20: #{conventional_net_forward.6} parent=11 // pred_fallthru
          _
        // Predicated region
        $region21: #{conventional_net_forward.6} parent=11 // pred_check
          %p185 = pneg %p118
        $region22: #{conventional_net_forward.6} parent=11 // pred_check_branch
          %187 = sbr.rel (%p185) target = $region24
        $region23: #{conventional_net_forward.6} parent=11 // pred_region
          %s189 = ssub.s32 16, 16
          %190 = vsyncadd [#allocation8], %s189
          %s192 = sshll.u32 [#allocation7], 4
          %s193 = int_to_ptr.vmem [resolvable:$true] %s192
          %195 = dma.hbm_to_vmem [thread:$0]  %s3, 16, %s193, [#allocation8]
        $region24: #{conventional_net_forward.6} parent=11 // pred_fallthru
          _
      $region12: #{conventional_net_forward.6} parent=5 // pred_fallthru
        _
      %p196 = scmp.lt.s32.totalorder %s15, 64
      // Predicated region
      $region25: #{conventional_net_forward.6} parent=5 // pred_check
        %p197 = pneg %p196
      $region26: #{conventional_net_forward.6} parent=5 // pred_check_branch
        %199 = sbr.rel (%p197) target = $region28
      $region27: #{conventional_net_forward.6} parent=5 // pred_region
        // Predicated region
        $region29: #{conventional_net_forward.6} parent=27 // pred_check
          %p200 = pneg %p49
        $region30: #{conventional_net_forward.6} parent=27 // pred_check_branch
          %202 = sbr.rel (%p200) target = $region32
        $region31: #{conventional_net_forward.6} parent=27 // pred_region
          %s203 = sand.u32 %s39, 1
          %s204 = scalar_lea.sflag [#allocation3], %s203
          %s205 = sand.u32 %s39, 1
          %s206 = smul.addr %s205, 256
          %s207 = scalar_lea.vmem [#allocation2], %s206
          %s208 = smul.u32 32, %s23
          %s210 = ssub.s32 4096, 4096
          %211 = vsyncadd %s204, %s210
          %s212 = smul.addr %s22, 1024
          %s213 = sadd.s32 %s208, %s212
          %s214 = smul.addr %s213, 128
          %s215 = scalar_lea.hbm %s0, %s214
          %s216 = sshll.u32 %s207, 4
          %s217 = int_to_ptr.vmem [resolvable:$true] %s216
          %222 = dma.hbm_to_vmem [thread:$0]  %s215, 4096, %s217, %s204, 128, 128, 8
        $region32: #{conventional_net_forward.6} parent=27 // pred_fallthru
          _
      $region28: #{conventional_net_forward.6} parent=5 // pred_fallthru
        _
      %p223 = scmp.le.s32.totalorder 1, %s15
      %p224 = scmp.lt.s32.totalorder %s15, 65
      %p225 = pnand %p223, %p224
      %p226 = pneg %p225
      // Predicated region
      $region33: #{conventional_net_forward.6} parent=5 // pred_check
        _
      $region34: #{conventional_net_forward.6} parent=5 // pred_check_branch
        %228 = sbr.rel (%p225) target = $region36
      $region35: #{conventional_net_forward.6} parent=5 // pred_region
        %s229 = ssub.s32 %s15, 1
        %s230 = sand.u32 %s42, 1
        %s231 = scalar_lea.sflag [#allocation3], %s230
        %s232 = sand.u32 %s42, 1
        %s233 = smul.addr %s232, 256
        %s234 = scalar_lea.vmem [#allocation2], %s233
        // Predicated region
        $region37: #{conventional_net_forward.6} parent=35 // pred_check
          %p235 = pneg %p55
        $region38: #{conventional_net_forward.6} parent=35 // pred_check_branch
          %237 = sbr.rel (%p235) target = $region40
        $region39: #{conventional_net_forward.6} parent=35 // pred_region
          %238 = dma.done %s231, 4096
        $region40: #{conventional_net_forward.6} parent=35 // pred_fallthru
          _
        // Predicated region
        $region41: #{conventional_net_forward.6} parent=35 // pred_check
          %p239 = pneg %p76
        $region42: #{conventional_net_forward.6} parent=35 // pred_check_branch
          %241 = sbr.rel (%p239) target = $region44
        $region43: #{conventional_net_forward.6} parent=35 // pred_region
          %242 = dma.done [#allocation5], 1152
        $region44: #{conventional_net_forward.6} parent=35 // pred_fallthru
          _
        // Predicated region
        $region45: #{conventional_net_forward.6} parent=35 // pred_check
          %p243 = pneg %p97
        $region46: #{conventional_net_forward.6} parent=35 // pred_check_branch
          %245 = sbr.rel (%p243) target = $region48
        $region47: #{conventional_net_forward.6} parent=35 // pred_region
          %246 = dma.done [#allocation5], 16
        $region48: #{conventional_net_forward.6} parent=35 // pred_fallthru
          _
        // Predicated region
        $region49: #{conventional_net_forward.6} parent=35 // pred_check
          %p247 = pneg %p118
        $region50: #{conventional_net_forward.6} parent=35 // pred_check_branch
          %249 = sbr.rel (%p247) target = $region52
        $region51: #{conventional_net_forward.6} parent=35 // pred_region
          %250 = dma.done [#allocation8], 16
        $region52: #{conventional_net_forward.6} parent=35 // pred_fallthru
          _
        %s251 = sand.u32 %s42, 1
        %s252 = scalar_lea.sflag [#allocation3], %s251
        %s253 = sand.u32 %s42, 1
        %s254 = smul.addr %s253, 256
        %s255 = scalar_lea.vmem [#allocation2], %s254
        %p256 = pneg %p55
        %p257 = pneg %p52
        %p258 = pneg %p76
        %p259 = pneg %p73
        %p260 = pneg %p97
        %p261 = pneg %p94
        %p262 = pneg %p118
        %p263 = pneg %p115
        %p264 = pneg %p146
        %p265 = pneg %p143
        %s266 = smul.u32 4, %s25
        %p267 = scmp.lt.s32.totalorder %s24, 1
        %s268 = scalar_select %p267, %s24, 1
        %p269 = scmp.lt.s32.totalorder %s266, 127
        %s270 = scalar_select %p269, %s266, 127
        %s271 = smul.addr %s268, 128
        %s272 = sadd.s32 %s270, %s271
        %s273 = smul.addr %s272, 8
        %s274 = scalar_lea.vmem %s4, %s273
        %s275 = smul.u32 32, %s25
        %s276 = smul.u32 4, %s25
        %p277 = scmp.lt.s32.totalorder %s24, 1
        %s278 = scalar_select %p277, %s24, 1
        %p279 = scmp.lt.s32.totalorder %s276, 127
        %s280 = scalar_select %p279, %s276, 127
        %s281 = smul.addr %s278, 128
        %s282 = sadd.s32 %s280, %s281
        %s283 = smul.addr %s282, 8
        %s284 = scalar_lea.vmem %s4, %s283
        %s285 = smul.u32 4, %s25
        %v286 = vld [vmem:[%s234] sm:$0xff]
        %v287 = vld [vmem:[%s234 + $0x8] sm:$0xff]
        %v288 = vld [vmem:[%s234 + $0x10] sm:$0xff]
        %v289 = vld [vmem:[%s234 + $0x18] sm:$0xff]
        %v290 = vld [vmem:[%s234 + $0x20] sm:$0xff]
        %v291 = vld [vmem:[%s234 + $0x28] sm:$0xff]
        %v292 = vld [vmem:[%s234 + $0x30] sm:$0xff]
        %v293 = vld [vmem:[%s234 + $0x38] sm:$0xff]
        %v294 = vld [vmem:[%s234 + $0x40] sm:$0xff]
        %v295 = vld [vmem:[%s234 + $0x48] sm:$0xff]
        %v296 = vld [vmem:[%s234 + $0x50] sm:$0xff]
        %v297 = vld [vmem:[%s234 + $0x58] sm:$0xff]
        %v298 = vld [vmem:[%s234 + $0x60] sm:$0xff]
        %v299 = vld [vmem:[%s234 + $0x68] sm:$0xff]
        %v300 = vld [vmem:[%s234 + $0x70] sm:$0xff]
        %v301 = vld [vmem:[%s234 + $0x78] sm:$0xff]
        %v302 = vld [vmem:[%s234 + $0x80] sm:$0xff]
        %v303 = vld [vmem:[%s234 + $0x88] sm:$0xff]
        %v304 = vld [vmem:[%s234 + $0x90] sm:$0xff]
        %v305 = vld [vmem:[%s234 + $0x98] sm:$0xff]
        %v306 = vld [vmem:[%s234 + $0xa0] sm:$0xff]
        %v307 = vld [vmem:[%s234 + $0xa8] sm:$0xff]
        %v308 = vld [vmem:[%s234 + $0xb0] sm:$0xff]
        %v309 = vld [vmem:[%s234 + $0xb8] sm:$0xff]
        %v310 = vld [vmem:[%s234 + $0xc0] sm:$0xff]
        %v311 = vld [vmem:[%s234 + $0xc8] sm:$0xff]
        %v312 = vld [vmem:[%s234 + $0xd0] sm:$0xff]
        %v313 = vld [vmem:[%s234 + $0xd8] sm:$0xff]
        %v314 = vld [vmem:[%s234 + $0xe0] sm:$0xff]
        %v315 = vld [vmem:[%s234 + $0xe8] sm:$0xff]
        %v316 = vld [vmem:[%s234 + $0xf0] sm:$0xff]
        %v317 = vld [vmem:[%s234 + $0xf8] sm:$0xff]
        %v318 = vld [vmem:[#allocation4] sm:$0xff]
        %v319 = vld [vmem:[#allocation4 + $0x8] sm:$0xff]
        %v320 = vld [vmem:[#allocation4 + $0x10] sm:$0xff]
        %v321 = vld [vmem:[#allocation4 + $0x18] sm:$0xff]
        %v322 = vld [vmem:[#allocation4 + $0x20] sm:$0xff]
        %v323 = vld [vmem:[#allocation4 + $0x28] sm:$0xff]
        %v324 = vld [vmem:[#allocation4 + $0x30] sm:$0xff]
        %v325 = vld [vmem:[#allocation4 + $0x38] sm:$0xff]
        %v326 = vld [vmem:[#allocation4 + $0x40] sm:$0xff]
        %vm327 = vcmask 588800
        %v329 = vsel %vm327, %v286, 0
        %v332 = vsel %vm327, %v287, 0
        %v335 = vsel %vm327, %v288, 0
        %v338 = vsel %vm327, %v289, 0
        %v341 = vsel %vm327, %v290, 0
        %v344 = vsel %vm327, %v291, 0
        %v347 = vsel %vm327, %v292, 0
        %v350 = vsel %vm327, %v293, 0
        %v353 = vsel %vm327, %v294, 0
        %v356 = vsel %vm327, %v295, 0
        %v359 = vsel %vm327, %v296, 0
        %v362 = vsel %vm327, %v297, 0
        %v365 = vsel %vm327, %v298, 0
        %v368 = vsel %vm327, %v299, 0
        %v371 = vsel %vm327, %v300, 0
        %v374 = vsel %vm327, %v301, 0
        %v377 = vsel %vm327, %v302, 0
        %v380 = vsel %vm327, %v303, 0
        %v383 = vsel %vm327, %v304, 0
        %v386 = vsel %vm327, %v305, 0
        %v389 = vsel %vm327, %v306, 0
        %v392 = vsel %vm327, %v307, 0
        %v395 = vsel %vm327, %v308, 0
        %v398 = vsel %vm327, %v309, 0
        %v401 = vsel %vm327, %v310, 0
        %v404 = vsel %vm327, %v311, 0
        %v407 = vsel %vm327, %v312, 0
        %v410 = vsel %vm327, %v313, 0
        %v413 = vsel %vm327, %v314, 0
        %v416 = vsel %vm327, %v315, 0
        %v419 = vsel %vm327, %v316, 0
        %v422 = vsel %vm327, %v317, 0
        %424 = vmatprep.subr.mxu0 0.0
        %425 = vmatpush1.msra.mxu0 %v318
        %426 = vmatprep.subr.mxu0 0.0
        %427 = vmatpush1.msra.mxu0 %v319
        %428 = vmatprep.subr.mxu0 0.0
        %429 = vmatpush1.msra.mxu0 %v320
        %430 = vmatprep.subr.mxu0 0.0
        %431 = vmatpush1.msra.mxu0 %v321
        %432 = vmatprep.subr.mxu0 0.0
        %433 = vmatpush1.msra.mxu0 %v322
        %434 = vmatprep.subr.mxu0 0.0
        %435 = vmatpush1.msra.mxu0 %v323
        %436 = vmatprep.subr.mxu0 0.0
        %437 = vmatpush1.msra.mxu0 %v324
        %438 = vmatprep.subr.mxu0 0.0
        %439 = vmatpush1.msra.mxu0 %v325
        %440 = vmatprep.subr.mxu0 0.0
        %441 = vmatpush1.msra.mxu0 %v326
        %442 = vmatprep.subr.mxu0 0.0
        %443 = vmatpush1.msra.mxu0 0.0
        %444 = vmatprep.subr.mxu0 0.0
        %445 = vmatpush1.msra.mxu0 0.0
        %446 = vmatprep.subr.mxu0 0.0
        %447 = vmatpush1.msra.mxu0 0.0
        %448 = vmatprep.subr.mxu0 0.0
        %449 = vmatpush1.msra.mxu0 0.0
        %450 = vmatprep.subr.mxu0 0.0
        %451 = vmatpush1.msra.mxu0 0.0
        %452 = vmatprep.subr.mxu0 0.0
        %453 = vmatpush1.msra.mxu0 0.0
        %454 = vmatprep.subr.mxu0 0.0
        %455 = vmatpush1.msra.mxu0 0.0
        %456 = vmatprep.subr.mxu0 0.0
        %457 = vmatpush1.msra.mxu0 0.0
        %458 = vmatprep.subr.mxu0 0.0
        %459 = vmatpush1.msra.mxu0 0.0
        %460 = vmatprep.subr.mxu0 0.0
        %461 = vmatpush1.msra.mxu0 0.0
        %462 = vmatprep.subr.mxu0 0.0
        %463 = vmatpush1.msra.mxu0 0.0
        %464 = vmatprep.subr.mxu0 0.0
        %465 = vmatpush1.msra.mxu0 0.0
        %466 = vmatprep.subr.mxu0 0.0
        %467 = vmatpush1.msra.mxu0 0.0
        %468 = vmatprep.subr.mxu0 0.0
        %469 = vmatpush1.msra.mxu0 0.0
        %470 = vmatprep.subr.mxu0 0.0
        %471 = vmatpush1.msra.mxu0 0.0
        %472 = vmatprep.subr.mxu0 0.0
        %473 = vmatpush1.msra.mxu0 0.0
        %474 = vmatprep.subr.mxu0 0.0
        %475 = vmatpush1.msra.mxu0 0.0
        %476 = vmatprep.subr.mxu0 0.0
        %477 = vmatpush1.msra.mxu0 0.0
        %478 = vmatprep.subr.mxu0 0.0
        %479 = vmatpush1.msra.mxu0 0.0
        %480 = vmatprep.subr.mxu0 0.0
        %481 = vmatpush1.msra.mxu0 0.0
        %482 = vmatprep.subr.mxu0 0.0
        %483 = vmatpush1.msra.mxu0 0.0
        %484 = vmatprep.subr.mxu0 0.0
        %485 = vmatpush1.msra.mxu0 0.0
        %486 = vmatprep.subr.mxu0 0.0
        %487 = vmatpush1.msra.mxu0 0.0
        %488 = vmatprep.mubr.f32.mxu0 0.0
        %489 = vmatmul.mubr.f32.gmra.mrb[0].mxu0 %v329
        %v490 = vpop.f32.mrb[0].mxu0
        %v491 = vadd.f32 0.0, %v490
        %v492 = vpop.f32.mrb[0].mxu0
        %493 = vmatprep.mubr.f32.mxu0 0.0
        %494 = vmatmul.mubr.f32.gmra.mrb[0].mxu0 %v332
        %v495 = vpop.f32.mrb[0].mxu0
        %v496 = vadd.f32 0.0, %v495
        %v497 = vpop.f32.mrb[0].mxu0
        %498 = vmatprep.mubr.f32.mxu0 0.0
        %499 = vmatmul.mubr.f32.gmra.mrb[0].mxu0 %v335
        %v500 = vpop.f32.mrb[0].mxu0
        %v501 = vadd.f32 0.0, %v500
        %v502 = vpop.f32.mrb[0].mxu0
        %503 = vmatprep.mubr.f32.mxu0 0.0
        %504 = vmatmul.mubr.f32.gmra.mrb[0].mxu0 %v338
        %v505 = vpop.f32.mrb[0].mxu0
        %v506 = vadd.f32 0.0, %v505
        %v507 = vpop.f32.mrb[0].mxu0
        %508 = vmatprep.mubr.f32.mxu0 0.0
        %509 = vmatmul.mubr.f32.gmra.mrb[0].mxu0 %v341
        %v510 = vpop.f32.mrb[0].mxu0
        %v511 = vadd.f32 0.0, %v510
        %v512 = vpop.f32.mrb[0].mxu0
        %513 = vmatprep.mubr.f32.mxu0 0.0
        %514 = vmatmul.mubr.f32.gmra.mrb[0].mxu0 %v344
        %v515 = vpop.f32.mrb[0].mxu0
        %v516 = vadd.f32 0.0, %v515
        %v517 = vpop.f32.mrb[0].mxu0
        %518 = vmatprep.mubr.f32.mxu0 0.0
        %519 = vmatmul.mubr.f32.gmra.mrb[0].mxu0 %v347
        %v520 = vpop.f32.mrb[0].mxu0
        %v521 = vadd.f32 0.0, %v520
        %v522 = vpop.f32.mrb[0].mxu0
        %523 = vmatprep.mubr.f32.mxu0 0.0
        %524 = vmatmul.mubr.f32.gmra.mrb[0].mxu0 %v350
        %v525 = vpop.f32.mrb[0].mxu0
        %v526 = vadd.f32 0.0, %v525
        %v527 = vpop.f32.mrb[0].mxu0
        %528 = vmatprep.mubr.f32.mxu0 0.0
        %529 = vmatmul.mubr.f32.gmra.mrb[0].mxu0 %v353
        %v530 = vpop.f32.mrb[0].mxu0
        %v531 = vadd.f32 0.0, %v530
        %v532 = vpop.f32.mrb[0].mxu0
        %533 = vmatprep.mubr.f32.mxu0 0.0
        %534 = vmatmul.mubr.f32.gmra.mrb[0].mxu0 %v356
        %v535 = vpop.f32.mrb[0].mxu0
        %v536 = vadd.f32 0.0, %v535
        %v537 = vpop.f32.mrb[0].mxu0
        %538 = vmatprep.mubr.f32.mxu0 0.0
        %539 = vmatmul.mubr.f32.gmra.mrb[0].mxu0 %v359
        %v540 = vpop.f32.mrb[0].mxu0
        %v541 = vadd.f32 0.0, %v540
        %v542 = vpop.f32.mrb[0].mxu0
        %543 = vmatprep.mubr.f32.mxu0 0.0
        %544 = vmatmul.mubr.f32.gmra.mrb[0].mxu0 %v362
        %v545 = vpop.f32.mrb[0].mxu0
        %v546 = vadd.f32 0.0, %v545
        %v547 = vpop.f32.mrb[0].mxu0
        %548 = vmatprep.mubr.f32.mxu0 0.0
        %549 = vmatmul.mubr.f32.gmra.mrb[0].mxu0 %v365
        %v550 = vpop.f32.mrb[0].mxu0
        %v551 = vadd.f32 0.0, %v550
        %v552 = vpop.f32.mrb[0].mxu0
        %553 = vmatprep.mubr.f32.mxu0 0.0
        %554 = vmatmul.mubr.f32.gmra.mrb[0].mxu0 %v368
        %v555 = vpop.f32.mrb[0].mxu0
        %v556 = vadd.f32 0.0, %v555
        %v557 = vpop.f32.mrb[0].mxu0
        %558 = vmatprep.mubr.f32.mxu0 0.0
        %559 = vmatmul.mubr.f32.gmra.mrb[0].mxu0 %v371
        %v560 = vpop.f32.mrb[0].mxu0
        %v561 = vadd.f32 0.0, %v560
        %v562 = vpop.f32.mrb[0].mxu0
        %563 = vmatprep.mubr.f32.mxu0 0.0
        %564 = vmatmul.mubr.f32.gmra.mrb[0].mxu0 %v374
        %v565 = vpop.f32.mrb[0].mxu0
        %v566 = vadd.f32 0.0, %v565
        %v567 = vpop.f32.mrb[0].mxu0
        %568 = vmatprep.mubr.f32.mxu0 0.0
        %569 = vmatmul.mubr.f32.gmra.mrb[0].mxu0 %v377
        %v570 = vpop.f32.mrb[0].mxu0
        %v571 = vadd.f32 0.0, %v570
        %v572 = vpop.f32.mrb[0].mxu0
        %573 = vmatprep.mubr.f32.mxu0 0.0
        %574 = vmatmul.mubr.f32.gmra.mrb[0].mxu0 %v380
        %v575 = vpop.f32.mrb[0].mxu0
        %v576 = vadd.f32 0.0, %v575
        %v577 = vpop.f32.mrb[0].mxu0
        %578 = vmatprep.mubr.f32.mxu0 0.0
        %579 = vmatmul.mubr.f32.gmra.mrb[0].mxu0 %v383
        %v580 = vpop.f32.mrb[0].mxu0
        %v581 = vadd.f32 0.0, %v580
        %v582 = vpop.f32.mrb[0].mxu0
        %583 = vmatprep.mubr.f32.mxu0 0.0
        %584 = vmatmul.mubr.f32.gmra.mrb[0].mxu0 %v386
        %v585 = vpop.f32.mrb[0].mxu0
        %v586 = vadd.f32 0.0, %v585
        %v587 = vpop.f32.mrb[0].mxu0
        %588 = vmatprep.mubr.f32.mxu0 0.0
        %589 = vmatmul.mubr.f32.gmra.mrb[0].mxu0 %v389
        %v590 = vpop.f32.mrb[0].mxu0
        %v591 = vadd.f32 0.0, %v590
        %v592 = vpop.f32.mrb[0].mxu0
        %593 = vmatprep.mubr.f32.mxu0 0.0
        %594 = vmatmul.mubr.f32.gmra.mrb[0].mxu0 %v392
        %v595 = vpop.f32.mrb[0].mxu0
        %v596 = vadd.f32 0.0, %v595
        %v597 = vpop.f32.mrb[0].mxu0
        %598 = vmatprep.mubr.f32.mxu0 0.0
        %599 = vmatmul.mubr.f32.gmra.mrb[0].mxu0 %v395
        %v600 = vpop.f32.mrb[0].mxu0
        %v601 = vadd.f32 0.0, %v600
        %v602 = vpop.f32.mrb[0].mxu0
        %603 = vmatprep.mubr.f32.mxu0 0.0
        %604 = vmatmul.mubr.f32.gmra.mrb[0].mxu0 %v398
        %v605 = vpop.f32.mrb[0].mxu0
        %v606 = vadd.f32 0.0, %v605
        %v607 = vpop.f32.mrb[0].mxu0
        %608 = vmatprep.mubr.f32.mxu0 0.0
        %609 = vmatmul.mubr.f32.gmra.mrb[0].mxu0 %v401
        %v610 = vpop.f32.mrb[0].mxu0
        %v611 = vadd.f32 0.0, %v610
        %v612 = vpop.f32.mrb[0].mxu0
        %613 = vmatprep.mubr.f32.mxu0 0.0
        %614 = vmatmul.mubr.f32.gmra.mrb[0].mxu0 %v404
        %v615 = vpop.f32.mrb[0].mxu0
        %v616 = vadd.f32 0.0, %v615
        %v617 = vpop.f32.mrb[0].mxu0
        %618 = vmatprep.mubr.f32.mxu0 0.0
        %619 = vmatmul.mubr.f32.gmra.mrb[0].mxu0 %v407
        %v620 = vpop.f32.mrb[0].mxu0
        %v621 = vadd.f32 0.0, %v620
        %v622 = vpop.f32.mrb[0].mxu0
        %623 = vmatprep.mubr.f32.mxu0 0.0
        %624 = vmatmul.mubr.f32.gmra.mrb[0].mxu0 %v410
        %v625 = vpop.f32.mrb[0].mxu0
        %v626 = vadd.f32 0.0, %v625
        %v627 = vpop.f32.mrb[0].mxu0
        %628 = vmatprep.mubr.f32.mxu0 0.0
        %629 = vmatmul.mubr.f32.gmra.mrb[0].mxu0 %v413
        %v630 = vpop.f32.mrb[0].mxu0
        %v631 = vadd.f32 0.0, %v630
        %v632 = vpop.f32.mrb[0].mxu0
        %633 = vmatprep.mubr.f32.mxu0 0.0
        %634 = vmatmul.mubr.f32.gmra.mrb[0].mxu0 %v416
        %v635 = vpop.f32.mrb[0].mxu0
        %v636 = vadd.f32 0.0, %v635
        %v637 = vpop.f32.mrb[0].mxu0
        %638 = vmatprep.mubr.f32.mxu0 0.0
        %639 = vmatmul.mubr.f32.gmra.mrb[0].mxu0 %v419
        %v640 = vpop.f32.mrb[0].mxu0
        %v641 = vadd.f32 0.0, %v640
        %v642 = vpop.f32.mrb[0].mxu0
        %643 = vmatprep.mubr.f32.mxu0 0.0
        %644 = vmatmul.mubr.f32.gmra.mrb[0].mxu0 %v422
        %v645 = vpop.f32.mrb[0].mxu0
        %v646 = vadd.f32 0.0, %v645
        %v647 = vpop.f32.mrb[0].mxu0
        %648 = vdwg.mxu0
        %v649 = vld [vmem:[#allocation6] sm:$0x1]
        %v651 = vlaneseq
        %v652 = vshrl.u32 %v651, 7
        %v653 = vsub.s32 0, %v652
        %v654 = vrot.slane %v649, %v653
        %v656 = vmul.f32 %v491, %v654
        %v657 = vmul.f32 %v496, %v654
        %v658 = vmul.f32 %v501, %v654
        %v659 = vmul.f32 %v506, %v654
        %v660 = vmul.f32 %v511, %v654
        %v661 = vmul.f32 %v516, %v654
        %v662 = vmul.f32 %v521, %v654
        %v663 = vmul.f32 %v526, %v654
        %v664 = vmul.f32 %v531, %v654
        %v665 = vmul.f32 %v536, %v654
        %v666 = vmul.f32 %v541, %v654
        %v667 = vmul.f32 %v546, %v654
        %v668 = vmul.f32 %v551, %v654
        %v669 = vmul.f32 %v556, %v654
        %v670 = vmul.f32 %v561, %v654
        %v671 = vmul.f32 %v566, %v654
        %v672 = vmul.f32 %v571, %v654
        %v673 = vmul.f32 %v576, %v654
        %v674 = vmul.f32 %v581, %v654
        %v675 = vmul.f32 %v586, %v654
        %v676 = vmul.f32 %v591, %v654
        %v677 = vmul.f32 %v596, %v654
        %v678 = vmul.f32 %v601, %v654
        %v679 = vmul.f32 %v606, %v654
        %v680 = vmul.f32 %v611, %v654
        %v681 = vmul.f32 %v616, %v654
        %v682 = vmul.f32 %v621, %v654
        %v683 = vmul.f32 %v626, %v654
        %v684 = vmul.f32 %v631, %v654
        %v685 = vmul.f32 %v636, %v654
        %v686 = vmul.f32 %v641, %v654
        %v687 = vmul.f32 %v646, %v654
        %v688 = vld [vmem:[#allocation7] sm:$0x1]
        %v690 = vlaneseq
        %v691 = vshrl.u32 %v690, 7
        %v692 = vsub.s32 0, %v691
        %v693 = vrot.slane %v688, %v692
        %v695 = vadd.f32 %v656, %v693
        %v696 = vadd.f32 %v657, %v693
        %v697 = vadd.f32 %v658, %v693
        %v698 = vadd.f32 %v659, %v693
        %v699 = vadd.f32 %v660, %v693
        %v700 = vadd.f32 %v661, %v693
        %v701 = vadd.f32 %v662, %v693
        %v702 = vadd.f32 %v663, %v693
        %v703 = vadd.f32 %v664, %v693
        %v704 = vadd.f32 %v665, %v693
        %v705 = vadd.f32 %v666, %v693
        %v706 = vadd.f32 %v667, %v693
        %v707 = vadd.f32 %v668, %v693
        %v708 = vadd.f32 %v669, %v693
        %v709 = vadd.f32 %v670, %v693
        %v710 = vadd.f32 %v671, %v693
        %v711 = vadd.f32 %v672, %v693
        %v712 = vadd.f32 %v673, %v693
        %v713 = vadd.f32 %v674, %v693
        %v714 = vadd.f32 %v675, %v693
        %v715 = vadd.f32 %v676, %v693
        %v716 = vadd.f32 %v677, %v693
        %v717 = vadd.f32 %v678, %v693
        %v718 = vadd.f32 %v679, %v693
        %v719 = vadd.f32 %v680, %v693
        %v720 = vadd.f32 %v681, %v693
        %v721 = vadd.f32 %v682, %v693
        %v722 = vadd.f32 %v683, %v693
        %v723 = vadd.f32 %v684, %v693
        %v724 = vadd.f32 %v685, %v693
        %v725 = vadd.f32 %v686, %v693
        %v726 = vadd.f32 %v687, %v693
        %v727 = vmax.f32 %v695, 0.0
        %v728 = vmax.f32 %v696, 0.0
        %v729 = vmax.f32 %v697, 0.0
        %v730 = vmax.f32 %v698, 0.0
        %v731 = vmax.f32 %v699, 0.0
        %v732 = vmax.f32 %v700, 0.0
        %v733 = vmax.f32 %v701, 0.0
        %v734 = vmax.f32 %v702, 0.0
        %v735 = vmax.f32 %v703, 0.0
        %v736 = vmax.f32 %v704, 0.0
        %v737 = vmax.f32 %v705, 0.0
        %v738 = vmax.f32 %v706, 0.0
        %v739 = vmax.f32 %v707, 0.0
        %v740 = vmax.f32 %v708, 0.0
        %v741 = vmax.f32 %v709, 0.0
        %v742 = vmax.f32 %v710, 0.0
        %v743 = vmax.f32 %v711, 0.0
        %v744 = vmax.f32 %v712, 0.0
        %v745 = vmax.f32 %v713, 0.0
        %v746 = vmax.f32 %v714, 0.0
        %v747 = vmax.f32 %v715, 0.0
        %v748 = vmax.f32 %v716, 0.0
        %v749 = vmax.f32 %v717, 0.0
        %v750 = vmax.f32 %v718, 0.0
        %v751 = vmax.f32 %v719, 0.0
        %v752 = vmax.f32 %v720, 0.0
        %v753 = vmax.f32 %v721, 0.0
        %v754 = vmax.f32 %v722, 0.0
        %v755 = vmax.f32 %v723, 0.0
        %v756 = vmax.f32 %v724, 0.0
        %v757 = vmax.f32 %v725, 0.0
        %v758 = vmax.f32 %v726, 0.0
        %vm759 = vcmask 523264
        %v760 = vsel %vm759, %v727, -inf
        %v761 = vsel %vm759, %v728, -inf
        %v762 = vmax.f32 %v760, %v761
        %v763 = vsel %vm759, %v729, -inf
        %v764 = vmax.f32 %v762, %v763
        %v765 = vsel %vm759, %v730, -inf
        %v766 = vmax.f32 %v764, %v765
        %v767 = vsel %vm759, %v731, -inf
        %v768 = vmax.f32 %v766, %v767
        %v769 = vsel %vm759, %v732, -inf
        %v770 = vmax.f32 %v768, %v769
        %v771 = vsel %vm759, %v733, -inf
        %v772 = vmax.f32 %v770, %v771
        %v773 = vsel %vm759, %v734, -inf
        %v774 = vmax.f32 %v772, %v773
        %v775 = vsel %vm759, %v735, -inf
        %v776 = vsel %vm759, %v736, -inf
        %v777 = vmax.f32 %v775, %v776
        %v778 = vsel %vm759, %v737, -inf
        %v779 = vmax.f32 %v777, %v778
        %v780 = vsel %vm759, %v738, -inf
        %v781 = vmax.f32 %v779, %v780
        %v782 = vsel %vm759, %v739, -inf
        %v783 = vmax.f32 %v781, %v782
        %v784 = vsel %vm759, %v740, -inf
        %v785 = vmax.f32 %v783, %v784
        %v786 = vsel %vm759, %v741, -inf
        %v787 = vmax.f32 %v785, %v786
        %v788 = vsel %vm759, %v742, -inf
        %v789 = vmax.f32 %v787, %v788
        %v790 = vsel %vm759, %v743, -inf
        %v791 = vsel %vm759, %v744, -inf
        %v792 = vmax.f32 %v790, %v791
        %v793 = vsel %vm759, %v745, -inf
        %v794 = vmax.f32 %v792, %v793
        %v795 = vsel %vm759, %v746, -inf
        %v796 = vmax.f32 %v794, %v795
        %v797 = vsel %vm759, %v747, -inf
        %v798 = vmax.f32 %v796, %v797
        %v799 = vsel %vm759, %v748, -inf
        %v800 = vmax.f32 %v798, %v799
        %v801 = vsel %vm759, %v749, -inf
        %v802 = vmax.f32 %v800, %v801
        %v803 = vsel %vm759, %v750, -inf
        %v804 = vmax.f32 %v802, %v803
        %v805 = vsel %vm759, %v751, -inf
        %v806 = vsel %vm759, %v752, -inf
        %v807 = vmax.f32 %v805, %v806
        %v808 = vsel %vm759, %v753, -inf
        %v809 = vmax.f32 %v807, %v808
        %v810 = vsel %vm759, %v754, -inf
        %v811 = vmax.f32 %v809, %v810
        %v812 = vsel %vm759, %v755, -inf
        %v813 = vmax.f32 %v811, %v812
        %v814 = vsel %vm759, %v756, -inf
        %v815 = vmax.f32 %v813, %v814
        %v816 = vsel %vm759, %v757, -inf
        %v817 = vmax.f32 %v815, %v816
        %v818 = vsel %vm759, %v758, -inf
        %v819 = vmax.f32 %v817, %v818
        %820 = vst.msk [vmem:[%s284] sm:$0xff] %vm759, %v774
        %821 = vst.msk [vmem:[%s284 + $0x8] sm:$0xff] %vm759, %v789
        %822 = vst.msk [vmem:[%s284 + $0x10] sm:$0xff] %vm759, %v804
        %823 = vst.msk [vmem:[%s284 + $0x18] sm:$0xff] %vm759, %v819
        %s824 = smul.u32 4, %s25
        %p825 = scmp.lt.s32.totalorder %s24, 1
        %s826 = scalar_select %p825, %s24, 1
        %p827 = scmp.lt.s32.totalorder %s824, 127
        %s828 = scalar_select %p827, %s824, 127
        %s829 = smul.addr %s826, 128
        %s830 = sadd.s32 %s828, %s829
        %s831 = smul.addr %s830, 8
        %s832 = scalar_lea.vmem %s4, %s831
        // Predicated region
        $region53: #{conventional_net_forward.6} parent=35 // pred_check
          %p833 = pneg %p143
        $region54: #{conventional_net_forward.6} parent=35 // pred_check_branch
          %835 = sbr.rel (%p833) target = $region56
        $region55: #{conventional_net_forward.6} parent=35 // pred_region
          %s836 = smul.u32 4, %s25
        $region56: #{conventional_net_forward.6} parent=35 // pred_fallthru
          _
      $region36: #{conventional_net_forward.6} parent=5 // pred_fallthru
        _
      %p837 = scmp.le.s32.totalorder 2, %s15
      // Predicated region
      $region57: #{conventional_net_forward.6} parent=5 // pred_check
        %p838 = pneg %p837
      $region58: #{conventional_net_forward.6} parent=5 // pred_check_branch
        %840 = sbr.rel (%p838) target = $region60
      $region59: #{conventional_net_forward.6} parent=5 // pred_region
        %s841 = ssub.s32 %s15, 2
        // Predicated region
        $region61: #{conventional_net_forward.6} parent=59 // pred_check
          %p842 = pneg %p149
        $region62: #{conventional_net_forward.6} parent=59 // pred_check_branch
          %844 = sbr.rel (%p842) target = $region64
        $region63: #{conventional_net_forward.6} parent=59 // pred_region
          %s845 = smul.u32 4, %s27
          %p846 = scmp.lt.s32.totalorder %s26, 1
          %s847 = scalar_select %p846, %s26, 1
          %p848 = scmp.lt.s32.totalorder %s845, 127
          %s849 = scalar_select %p848, %s845, 127
          %s850 = smul.addr %s847, 128
          %s851 = sadd.s32 %s849, %s850
          %s852 = smul.addr %s851, 8
          %s853 = scalar_lea.vmem %s4, %s852
        $region64: #{conventional_net_forward.6} parent=59 // pred_fallthru
          _
      $region60: #{conventional_net_forward.6} parent=5 // pred_fallthru
        _
    $region6: #{conventional_net_forward.6} parent=1 // loop_footer
      %s19 = sadd.s32 1, %s15
    $region7: #{conventional_net_forward.6} parent=1 // loop_footer_branch
      %14 = sbr.rel target = $region3
    $region8: #{conventional_net_forward.6} parent=1 // loop_exit
      _
    %854 = vsyncpa [#allocation3], 1
    %s855 = scalar_lea.sflag [#allocation3], 1
    %856 = vsyncpa %s855, 1
    %857 = vsyncpa [#allocation5], 1
    %858 = vsyncpa [#allocation8], 1

// kernel: conventional_net_forward.7
$region0: #{conventional_net_forward.7}
  #allocation0 [shape = 'u32[]', space=smem, size = 0x4, offset = 0x4, fixed_abs, tag = 'smem constant byte address 0x4 - core index']
  #allocation1 [shape = 'u32[144,128]{1,0:T(1,128)}', space=vmem, size = 0x12000, scoped, tag = 'internal scratch']
  %s0 = inlined_call_operand.vmem [shape: f32[2,128,8,576], index: 0, kind: input, shape index: {}]
  %s1 = inlined_call_operand.vmem [shape: f32[576,64], index: 1, kind: input, shape index: {}]
  %s2 = inlined_call_operand.vmem [shape: f32[1,64], index: 2, kind: input, shape index: {}]
  %s3 = inlined_call_operand.vmem [shape: f32[1,64], index: 3, kind: input, shape index: {}]
  %s4 = inlined_call_operand.vmem [shape: f32[2,16,8,64], index: 4, kind: output, shape index: {}]
  %s5 = sld [smem:[#allocation0]]
  $region49: #{conventional_net_forward.7} parent=0
    _
  %s7 = ssub.s32 1, %s5
  %s8 = scalar_select 0, %s7, %s5
  loop: start=0, step=1, limit=10
  $region2: #{conventional_net_forward.7} parent=0 // loop_pre_header
    _
  $region3: #{conventional_net_forward.7} parent=0 // loop_header
    %s10 = sphi 0, %s14
    %p11 = scmp.ge.s32.totalorder %s10, 10
    %s17 = sphi 0, %s29
    %s18 = sphi 0, %s25
    %s19 = sphi 0, %s17
    %s20 = sphi 0, %s18
    %s21 = sphi 0, %s19
    %s22 = sphi 0, %s20
    %s34 = sphi 0, %s36
    %s37 = sphi 0, %s34
    %s38 = sphi 0, %s37
    %s54 = sphi 0, %s38
    %s58 = sphi 0, %s58
    %s60 = sphi 0, %s58
    %s61 = sphi 0, %s60
    %s75 = sphi 0, %s61
    %s79 = sphi 0, %s79
    %s81 = sphi 0, %s79
    %s82 = sphi 0, %s81
    %s96 = sphi 0, %s82
    %s100 = sphi 0, %s100
    %s102 = sphi 0, %s100
    %s103 = sphi 0, %s102
    %s117 = sphi 0, %s103
    %s125 = sphi 0, %s127
    %s128 = sphi 0, %s125
    %s129 = sphi 0, %s128
    %s145 = sphi 0, %s129
  $region4: #{conventional_net_forward.7} parent=0 // loop_header_branch
    %13 = sbr.rel (%p11) target = $region8
  $region5: #{conventional_net_forward.7} parent=0 // loop_body
    %s15 = ssub.s32 %s10, 1
    %s16 = ssub.s32 %s10, 2
    %s23 = sadd.s32 1, %s18
    %p24 = scmp.ge.s32.totalorder %s23, 4
    %s25 = scalar_select %p24, 0, %s23
    %s26 = sadd.s32 1, %s17
    %s27 = scalar_select %p24, %s26, %s17
    %p28 = scmp.ge.s32.totalorder %s27, 2
    %s29 = scalar_select %p28, 0, %s27
    %s30 = ssub.s32 %s17, %s29
    %s31 = ssub.s32 %s18, %s25
    %s32 = sor.u32 %s30, %s31
    %p33 = scmp.eq.s32.totalorder %s32, 0
    %s35 = sadd.s32 %s34, 1
    %s36 = scalar_select %p33, %s34, %s35
    %p39 = pneg %p33
    %p40 = scmp.eq.s32.totalorder %s10, 7
    %p41 = por %p39, %p40
    %p42 = scmp.ne.s32.totalorder %s34, %s37
    %p43 = scmp.eq.s32.totalorder %s10, 0
    %p44 = por %p42, %p43
    %p45 = scmp.ne.s32.totalorder %s34, %s37
    %p46 = scmp.eq.s32.totalorder %s15, 7
    %p47 = por %p45, %p46
    %p48 = scmp.ne.s32.totalorder %s37, %s38
    %p49 = scmp.eq.s32.totalorder %s15, 0
    %p50 = por %p48, %p49
    %p51 = scmp.ne.s32.totalorder %s37, %s38
    %p52 = scmp.eq.s32.totalorder %s16, 7
    %p53 = por %p51, %p52
    %p55 = scmp.ne.s32.totalorder %s38, %s54
    %p56 = scmp.eq.s32.totalorder %s16, 0
    %p57 = por %p55, %p56
    %s59 = sadd.s32 %s58, 1
    %p62 = scmp.eq.s32.totalorder %s10, 7
    %p63 = scmp.ne.s32.totalorder %s58, %s60
    %p64 = scmp.eq.s32.totalorder %s10, 0
    %p65 = por %p63, %p64
    %p66 = scmp.ne.s32.totalorder %s58, %s60
    %p67 = scmp.eq.s32.totalorder %s15, 7
    %p68 = por %p66, %p67
    %p69 = scmp.ne.s32.totalorder %s60, %s61
    %p70 = scmp.eq.s32.totalorder %s15, 0
    %p71 = por %p69, %p70
    %p72 = scmp.ne.s32.totalorder %s60, %s61
    %p73 = scmp.eq.s32.totalorder %s16, 7
    %p74 = por %p72, %p73
    %p76 = scmp.ne.s32.totalorder %s61, %s75
    %p77 = scmp.eq.s32.totalorder %s16, 0
    %p78 = por %p76, %p77
    %s80 = sadd.s32 %s79, 1
    %p83 = scmp.eq.s32.totalorder %s10, 7
    %p84 = scmp.ne.s32.totalorder %s79, %s81
    %p85 = scmp.eq.s32.totalorder %s10, 0
    %p86 = por %p84, %p85
    %p87 = scmp.ne.s32.totalorder %s79, %s81
    %p88 = scmp.eq.s32.totalorder %s15, 7
    %p89 = por %p87, %p88
    %p90 = scmp.ne.s32.totalorder %s81, %s82
    %p91 = scmp.eq.s32.totalorder %s15, 0
    %p92 = por %p90, %p91
    %p93 = scmp.ne.s32.totalorder %s81, %s82
    %p94 = scmp.eq.s32.totalorder %s16, 7
    %p95 = por %p93, %p94
    %p97 = scmp.ne.s32.totalorder %s82, %s96
    %p98 = scmp.eq.s32.totalorder %s16, 0
    %p99 = por %p97, %p98
    %s101 = sadd.s32 %s100, 1
    %p104 = scmp.eq.s32.totalorder %s10, 7
    %p105 = scmp.ne.s32.totalorder %s100, %s102
    %p106 = scmp.eq.s32.totalorder %s10, 0
    %p107 = por %p105, %p106
    %p108 = scmp.ne.s32.totalorder %s100, %s102
    %p109 = scmp.eq.s32.totalorder %s15, 7
    %p110 = por %p108, %p109
    %p111 = scmp.ne.s32.totalorder %s102, %s103
    %p112 = scmp.eq.s32.totalorder %s15, 0
    %p113 = por %p111, %p112
    %p114 = scmp.ne.s32.totalorder %s102, %s103
    %p115 = scmp.eq.s32.totalorder %s16, 7
    %p116 = por %p114, %p115
    %p118 = scmp.ne.s32.totalorder %s103, %s117
    %p119 = scmp.eq.s32.totalorder %s16, 0
    %p120 = por %p118, %p119
    %s121 = ssub.s32 %s17, %s29
    %s122 = ssub.s32 %s18, %s25
    %s123 = sor.u32 %s121, %s122
    %p124 = scmp.eq.s32.totalorder %s123, 0
    %s126 = sadd.s32 %s125, 1
    %s127 = scalar_select %p124, %s125, %s126
    %p130 = pneg %p124
    %p131 = scmp.eq.s32.totalorder %s10, 7
    %p132 = por %p130, %p131
    %p133 = scmp.ne.s32.totalorder %s125, %s128
    %p134 = scmp.eq.s32.totalorder %s10, 0
    %p135 = por %p133, %p134
    %p136 = scmp.ne.s32.totalorder %s125, %s128
    %p137 = scmp.eq.s32.totalorder %s15, 7
    %p138 = por %p136, %p137
    %p139 = scmp.ne.s32.totalorder %s128, %s129
    %p140 = scmp.eq.s32.totalorder %s15, 0
    %p141 = por %p139, %p140
    %p142 = scmp.ne.s32.totalorder %s128, %s129
    %p143 = scmp.eq.s32.totalorder %s16, 7
    %p144 = por %p142, %p143
    %p146 = scmp.ne.s32.totalorder %s129, %s145
    %p147 = scmp.eq.s32.totalorder %s16, 0
    %p148 = por %p146, %p147
    %p149 = scmp.le.s32.totalorder 1, %s10
    %p150 = scmp.lt.s32.totalorder %s10, 9
    %p151 = pnand %p149, %p150
    %p152 = pneg %p151
    // Predicated region
    $region9: #{conventional_net_forward.7} parent=5 // pred_check
      _
    $region10: #{conventional_net_forward.7} parent=5 // pred_check_branch
      %154 = sbr.rel (%p151) target = $region12
    $region11: #{conventional_net_forward.7} parent=5 // pred_region
      %s155 = ssub.s32 %s10, 1
      // Predicated region
      $region13: #{conventional_net_forward.7} parent=11 // pred_check
        %p156 = pneg %p71
      $region14: #{conventional_net_forward.7} parent=11 // pred_check_branch
        %158 = sbr.rel (%p156) target = $region16
      $region15: #{conventional_net_forward.7} parent=11 // pred_region
        _
      $region16: #{conventional_net_forward.7} parent=11 // pred_fallthru
        _
      // Predicated region
      $region17: #{conventional_net_forward.7} parent=11 // pred_check
        %p159 = pneg %p92
      $region18: #{conventional_net_forward.7} parent=11 // pred_check_branch
        %161 = sbr.rel (%p159) target = $region20
      $region19: #{conventional_net_forward.7} parent=11 // pred_region
        _
      $region20: #{conventional_net_forward.7} parent=11 // pred_fallthru
        _
      // Predicated region
      $region21: #{conventional_net_forward.7} parent=11 // pred_check
        %p162 = pneg %p113
      $region22: #{conventional_net_forward.7} parent=11 // pred_check_branch
        %164 = sbr.rel (%p162) target = $region24
      $region23: #{conventional_net_forward.7} parent=11 // pred_region
        _
      $region24: #{conventional_net_forward.7} parent=11 // pred_fallthru
        _
    $region12: #{conventional_net_forward.7} parent=5 // pred_fallthru
      _
    %p165 = scmp.lt.s32.totalorder %s10, 8
    // Predicated region
    $region25: #{conventional_net_forward.7} parent=5 // pred_check
      %p166 = pneg %p165
    $region26: #{conventional_net_forward.7} parent=5 // pred_check_branch
      %168 = sbr.rel (%p166) target = $region28
    $region27: #{conventional_net_forward.7} parent=5 // pred_region
      // Predicated region
      $region29: #{conventional_net_forward.7} parent=27 // pred_check
        %p169 = pneg %p44
      $region30: #{conventional_net_forward.7} parent=27 // pred_check_branch
        %171 = sbr.rel (%p169) target = $region32
      $region31: #{conventional_net_forward.7} parent=27 // pred_region
        %s172 = smul.u32 32, %s18
        %p173 = scmp.lt.s32.totalorder %s17, 1
        %s174 = scalar_select %p173, %s17, 1
        %p175 = scmp.lt.s32.totalorder %s172, 127
        %s176 = scalar_select %p175, %s172, 127
        %s177 = smul.addr %s176, 5
        %s178 = smul.addr %s174, 640
        %s179 = sadd.s32 %s177, %s178
        %s180 = smul.addr %s179, 8
        %s181 = scalar_lea.vmem %s0, %s180
        %s182 = smul.u32 32, %s18
      $region32: #{conventional_net_forward.7} parent=27 // pred_fallthru
        _
    $region28: #{conventional_net_forward.7} parent=5 // pred_fallthru
      _
    %p183 = scmp.le.s32.totalorder 1, %s10
    %p184 = scmp.lt.s32.totalorder %s10, 9
    %p185 = pnand %p183, %p184
    %p186 = pneg %p185
    // Predicated region
    $region33: #{conventional_net_forward.7} parent=5 // pred_check
      _
    $region34: #{conventional_net_forward.7} parent=5 // pred_check_branch
      %188 = sbr.rel (%p185) target = $region36
    $region35: #{conventional_net_forward.7} parent=5 // pred_region
      %s189 = ssub.s32 %s10, 1
      %s190 = smul.u32 32, %s20
      %p191 = scmp.lt.s32.totalorder %s19, 1
      %s192 = scalar_select %p191, %s19, 1
      %p193 = scmp.lt.s32.totalorder %s190, 127
      %s194 = scalar_select %p193, %s190, 127
      %s195 = smul.addr %s194, 5
      %s196 = smul.addr %s192, 640
      %s197 = sadd.s32 %s195, %s196
      %s198 = smul.addr %s197, 8
      %s199 = scalar_lea.vmem %s0, %s198
      %p200 = pneg %p50
      %p201 = pneg %p47
      %p202 = pneg %p71
      %p203 = pneg %p68
      %p204 = pneg %p92
      %p205 = pneg %p89
      %p206 = pneg %p113
      %p207 = pneg %p110
      %p208 = pneg %p141
      %p209 = pneg %p138
      %s210 = smul.u32 4, %s20
      %p211 = scmp.lt.s32.totalorder %s19, 1
      %s212 = scalar_select %p211, %s19, 1
      %p213 = scmp.lt.s32.totalorder %s210, 15
      %s214 = scalar_select %p213, %s210, 15
      %s215 = smul.addr %s212, 16
      %s216 = sadd.s32 %s214, %s215
      %s217 = smul.addr %s216, 8
      %s218 = scalar_lea.vmem %s4, %s217
      %s219 = smul.u32 32, %s20
      %p220 = scmp.lt.s32.totalorder %s19, 1
      %s221 = scalar_select %p220, %s19, 1
      %p222 = scmp.lt.s32.totalorder %s219, 127
      %s223 = scalar_select %p222, %s219, 127
      %s224 = smul.addr %s223, 5
      %s225 = smul.addr %s221, 640
      %s226 = sadd.s32 %s224, %s225
      %s227 = smul.addr %s226, 8
      %s228 = scalar_lea.vmem %s0, %s227
      %s229 = smul.u32 32, %s20
      %s230 = smul.u32 4, %s20
      %p231 = scmp.lt.s32.totalorder %s19, 1
      %s232 = scalar_select %p231, %s19, 1
      %p233 = scmp.lt.s32.totalorder %s230, 15
      %s234 = scalar_select %p233, %s230, 15
      %s235 = smul.addr %s232, 16
      %s236 = sadd.s32 %s234, %s235
      %s237 = smul.addr %s236, 8
      %s238 = scalar_lea.vmem %s4, %s237
      %s239 = smul.u32 4, %s20
      %v240 = vld [vmem:[%s228] sm:$0xff]
      %v241 = vld [vmem:[%s228 + $0x8] sm:$0xff]
      %v242 = vld [vmem:[%s228 + $0x10] sm:$0xff]
      %v243 = vld [vmem:[%s228 + $0x18] sm:$0xff]
      %v244 = vld [vmem:[%s228 + $0x20] sm:$0xff]
      %v245 = vld [vmem:[%s228 + $0x28] sm:$0xff]
      %v246 = vld [vmem:[%s228 + $0x30] sm:$0xff]
      %v247 = vld [vmem:[%s228 + $0x38] sm:$0xff]
      %v248 = vld [vmem:[%s228 + $0x40] sm:$0xff]
      %v249 = vld [vmem:[%s228 + $0x48] sm:$0xff]
      %v250 = vld [vmem:[%s228 + $0x50] sm:$0xff]
      %v251 = vld [vmem:[%s228 + $0x58] sm:$0xff]
      %v252 = vld [vmem:[%s228 + $0x60] sm:$0xff]
      %v253 = vld [vmem:[%s228 + $0x68] sm:$0xff]
      %v254 = vld [vmem:[%s228 + $0x70] sm:$0xff]
      %v255 = vld [vmem:[%s228 + $0x78] sm:$0xff]
      %v256 = vld [vmem:[%s228 + $0x80] sm:$0xff]
      %v257 = vld [vmem:[%s228 + $0x88] sm:$0xff]
      %v258 = vld [vmem:[%s228 + $0x90] sm:$0xff]
      %v259 = vld [vmem:[%s228 + $0x98] sm:$0xff]
      %v260 = vld [vmem:[%s228 + $0xa0] sm:$0xff]
      %v261 = vld [vmem:[%s228 + $0xa8] sm:$0xff]
      %v262 = vld [vmem:[%s228 + $0xb0] sm:$0xff]
      %v263 = vld [vmem:[%s228 + $0xb8] sm:$0xff]
      %v264 = vld [vmem:[%s228 + $0xc0] sm:$0xff]
      %v265 = vld [vmem:[%s228 + $0xc8] sm:$0xff]
      %v266 = vld [vmem:[%s228 + $0xd0] sm:$0xff]
      %v267 = vld [vmem:[%s228 + $0xd8] sm:$0xff]
      %v268 = vld [vmem:[%s228 + $0xe0] sm:$0xff]
      %v269 = vld [vmem:[%s228 + $0xe8] sm:$0xff]
      %v270 = vld [vmem:[%s228 + $0xf0] sm:$0xff]
      %v271 = vld [vmem:[%s228 + $0xf8] sm:$0xff]
      %v272 = vld [vmem:[%s228 + $0x100] sm:$0xff]
      %v273 = vld [vmem:[%s228 + $0x108] sm:$0xff]
      %v274 = vld [vmem:[%s228 + $0x110] sm:$0xff]
      %v275 = vld [vmem:[%s228 + $0x118] sm:$0xff]
      %v276 = vld [vmem:[%s228 + $0x120] sm:$0xff]
      %v277 = vld [vmem:[%s228 + $0x128] sm:$0xff]
      %v278 = vld [vmem:[%s228 + $0x130] sm:$0xff]
      %v279 = vld [vmem:[%s228 + $0x138] sm:$0xff]
      %v280 = vld [vmem:[%s228 + $0x140] sm:$0xff]
      %v281 = vld [vmem:[%s228 + $0x148] sm:$0xff]
      %v282 = vld [vmem:[%s228 + $0x150] sm:$0xff]
      %v283 = vld [vmem:[%s228 + $0x158] sm:$0xff]
      %v284 = vld [vmem:[%s228 + $0x160] sm:$0xff]
      %v285 = vld [vmem:[%s228 + $0x168] sm:$0xff]
      %v286 = vld [vmem:[%s228 + $0x170] sm:$0xff]
      %v287 = vld [vmem:[%s228 + $0x178] sm:$0xff]
      %v288 = vld [vmem:[%s228 + $0x180] sm:$0xff]
      %v289 = vld [vmem:[%s228 + $0x188] sm:$0xff]
      %v290 = vld [vmem:[%s228 + $0x190] sm:$0xff]
      %v291 = vld [vmem:[%s228 + $0x198] sm:$0xff]
      %v292 = vld [vmem:[%s228 + $0x1a0] sm:$0xff]
      %v293 = vld [vmem:[%s228 + $0x1a8] sm:$0xff]
      %v294 = vld [vmem:[%s228 + $0x1b0] sm:$0xff]
      %v295 = vld [vmem:[%s228 + $0x1b8] sm:$0xff]
      %v296 = vld [vmem:[%s228 + $0x1c0] sm:$0xff]
      %v297 = vld [vmem:[%s228 + $0x1c8] sm:$0xff]
      %v298 = vld [vmem:[%s228 + $0x1d0] sm:$0xff]
      %v299 = vld [vmem:[%s228 + $0x1d8] sm:$0xff]
      %v300 = vld [vmem:[%s228 + $0x1e0] sm:$0xff]
      %v301 = vld [vmem:[%s228 + $0x1e8] sm:$0xff]
      %v302 = vld [vmem:[%s228 + $0x1f0] sm:$0xff]
      %v303 = vld [vmem:[%s228 + $0x1f8] sm:$0xff]
      %v304 = vld [vmem:[%s228 + $0x200] sm:$0xff]
      %v305 = vld [vmem:[%s228 + $0x208] sm:$0xff]
      %v306 = vld [vmem:[%s228 + $0x210] sm:$0xff]
      %v307 = vld [vmem:[%s228 + $0x218] sm:$0xff]
      %v308 = vld [vmem:[%s228 + $0x220] sm:$0xff]
      %v309 = vld [vmem:[%s228 + $0x228] sm:$0xff]
      %v310 = vld [vmem:[%s228 + $0x230] sm:$0xff]
      %v311 = vld [vmem:[%s228 + $0x238] sm:$0xff]
      %v312 = vld [vmem:[%s228 + $0x240] sm:$0xff]
      %v313 = vld [vmem:[%s228 + $0x248] sm:$0xff]
      %v314 = vld [vmem:[%s228 + $0x250] sm:$0xff]
      %v315 = vld [vmem:[%s228 + $0x258] sm:$0xff]
      %v316 = vld [vmem:[%s228 + $0x260] sm:$0xff]
      %v317 = vld [vmem:[%s228 + $0x268] sm:$0xff]
      %v318 = vld [vmem:[%s228 + $0x270] sm:$0xff]
      %v319 = vld [vmem:[%s228 + $0x278] sm:$0xff]
      %v320 = vld [vmem:[%s228 + $0x280] sm:$0xff]
      %v321 = vld [vmem:[%s228 + $0x288] sm:$0xff]
      %v322 = vld [vmem:[%s228 + $0x290] sm:$0xff]
      %v323 = vld [vmem:[%s228 + $0x298] sm:$0xff]
      %v324 = vld [vmem:[%s228 + $0x2a0] sm:$0xff]
      %v325 = vld [vmem:[%s228 + $0x2a8] sm:$0xff]
      %v326 = vld [vmem:[%s228 + $0x2b0] sm:$0xff]
      %v327 = vld [vmem:[%s228 + $0x2b8] sm:$0xff]
      %v328 = vld [vmem:[%s228 + $0x2c0] sm:$0xff]
      %v329 = vld [vmem:[%s228 + $0x2c8] sm:$0xff]
      %v330 = vld [vmem:[%s228 + $0x2d0] sm:$0xff]
      %v331 = vld [vmem:[%s228 + $0x2d8] sm:$0xff]
      %v332 = vld [vmem:[%s228 + $0x2e0] sm:$0xff]
      %v333 = vld [vmem:[%s228 + $0x2e8] sm:$0xff]
      %v334 = vld [vmem:[%s228 + $0x2f0] sm:$0xff]
      %v335 = vld [vmem:[%s228 + $0x2f8] sm:$0xff]
      %v336 = vld [vmem:[%s228 + $0x300] sm:$0xff]
      %v337 = vld [vmem:[%s228 + $0x308] sm:$0xff]
      %v338 = vld [vmem:[%s228 + $0x310] sm:$0xff]
      %v339 = vld [vmem:[%s228 + $0x318] sm:$0xff]
      %v340 = vld [vmem:[%s228 + $0x320] sm:$0xff]
      %v341 = vld [vmem:[%s228 + $0x328] sm:$0xff]
      %v342 = vld [vmem:[%s228 + $0x330] sm:$0xff]
      %v343 = vld [vmem:[%s228 + $0x338] sm:$0xff]
      %v344 = vld [vmem:[%s228 + $0x340] sm:$0xff]
      %v345 = vld [vmem:[%s228 + $0x348] sm:$0xff]
      %v346 = vld [vmem:[%s228 + $0x350] sm:$0xff]
      %v347 = vld [vmem:[%s228 + $0x358] sm:$0xff]
      %v348 = vld [vmem:[%s228 + $0x360] sm:$0xff]
      %v349 = vld [vmem:[%s228 + $0x368] sm:$0xff]
      %v350 = vld [vmem:[%s228 + $0x370] sm:$0xff]
      %v351 = vld [vmem:[%s228 + $0x378] sm:$0xff]
      %v352 = vld [vmem:[%s228 + $0x380] sm:$0xff]
      %v353 = vld [vmem:[%s228 + $0x388] sm:$0xff]
      %v354 = vld [vmem:[%s228 + $0x390] sm:$0xff]
      %v355 = vld [vmem:[%s228 + $0x398] sm:$0xff]
      %v356 = vld [vmem:[%s228 + $0x3a0] sm:$0xff]
      %v357 = vld [vmem:[%s228 + $0x3a8] sm:$0xff]
      %v358 = vld [vmem:[%s228 + $0x3b0] sm:$0xff]
      %v359 = vld [vmem:[%s228 + $0x3b8] sm:$0xff]
      %v360 = vld [vmem:[%s228 + $0x3c0] sm:$0xff]
      %v361 = vld [vmem:[%s228 + $0x3c8] sm:$0xff]
      %v362 = vld [vmem:[%s228 + $0x3d0] sm:$0xff]
      %v363 = vld [vmem:[%s228 + $0x3d8] sm:$0xff]
      %v364 = vld [vmem:[%s228 + $0x3e0] sm:$0xff]
      %v365 = vld [vmem:[%s228 + $0x3e8] sm:$0xff]
      %v366 = vld [vmem:[%s228 + $0x3f0] sm:$0xff]
      %v367 = vld [vmem:[%s228 + $0x3f8] sm:$0xff]
      %v368 = vld [vmem:[%s228 + $0x400] sm:$0xff]
      %v369 = vld [vmem:[%s228 + $0x408] sm:$0xff]
      %v370 = vld [vmem:[%s228 + $0x410] sm:$0xff]
      %v371 = vld [vmem:[%s228 + $0x418] sm:$0xff]
      %v372 = vld [vmem:[%s228 + $0x420] sm:$0xff]
      %v373 = vld [vmem:[%s228 + $0x428] sm:$0xff]
      %v374 = vld [vmem:[%s228 + $0x430] sm:$0xff]
      %v375 = vld [vmem:[%s228 + $0x438] sm:$0xff]
      %v376 = vld [vmem:[%s228 + $0x440] sm:$0xff]
      %v377 = vld [vmem:[%s228 + $0x448] sm:$0xff]
      %v378 = vld [vmem:[%s228 + $0x450] sm:$0xff]
      %v379 = vld [vmem:[%s228 + $0x458] sm:$0xff]
      %v380 = vld [vmem:[%s228 + $0x460] sm:$0xff]
      %v381 = vld [vmem:[%s228 + $0x468] sm:$0xff]
      %v382 = vld [vmem:[%s228 + $0x470] sm:$0xff]
      %v383 = vld [vmem:[%s228 + $0x478] sm:$0xff]
      %v384 = vld [vmem:[%s228 + $0x480] sm:$0xff]
      %v385 = vld [vmem:[%s228 + $0x488] sm:$0xff]
      %v386 = vld [vmem:[%s228 + $0x490] sm:$0xff]
      %v387 = vld [vmem:[%s228 + $0x498] sm:$0xff]
      %v388 = vld [vmem:[%s228 + $0x4a0] sm:$0xff]
      %v389 = vld [vmem:[%s228 + $0x4a8] sm:$0xff]
      %v390 = vld [vmem:[%s228 + $0x4b0] sm:$0xff]
      %v391 = vld [vmem:[%s228 + $0x4b8] sm:$0xff]
      %v392 = vld [vmem:[%s228 + $0x4c0] sm:$0xff]
      %v393 = vld [vmem:[%s228 + $0x4c8] sm:$0xff]
      %v394 = vld [vmem:[%s228 + $0x4d0] sm:$0xff]
      %v395 = vld [vmem:[%s228 + $0x4d8] sm:$0xff]
      %v396 = vld [vmem:[%s228 + $0x4e0] sm:$0xff]
      %v397 = vld [vmem:[%s228 + $0x4e8] sm:$0xff]
      %v398 = vld [vmem:[%s228 + $0x4f0] sm:$0xff]
      %v399 = vld [vmem:[%s228 + $0x4f8] sm:$0xff]
      %v400 = vld [vmem:[%s1] sm:$0xff]
      %v401 = vld [vmem:[%s1 + $0x8] sm:$0xff]
      %v402 = vld [vmem:[%s1 + $0x10] sm:$0xff]
      %v403 = vld [vmem:[%s1 + $0x18] sm:$0xff]
      %v404 = vld [vmem:[%s1 + $0x20] sm:$0xff]
      %v405 = vld [vmem:[%s1 + $0x28] sm:$0xff]
      %v406 = vld [vmem:[%s1 + $0x30] sm:$0xff]
      %v407 = vld [vmem:[%s1 + $0x38] sm:$0xff]
      %v408 = vld [vmem:[%s1 + $0x40] sm:$0xff]
      %v409 = vld [vmem:[%s1 + $0x48] sm:$0xff]
      %v410 = vld [vmem:[%s1 + $0x50] sm:$0xff]
      %v411 = vld [vmem:[%s1 + $0x58] sm:$0xff]
      %v412 = vld [vmem:[%s1 + $0x60] sm:$0xff]
      %v413 = vld [vmem:[%s1 + $0x68] sm:$0xff]
      %v414 = vld [vmem:[%s1 + $0x70] sm:$0xff]
      %v415 = vld [vmem:[%s1 + $0x78] sm:$0xff]
      %v416 = vld [vmem:[%s1 + $0x80] sm:$0xff]
      %v417 = vld [vmem:[%s1 + $0x88] sm:$0xff]
      %v418 = vld [vmem:[%s1 + $0x90] sm:$0xff]
      %v419 = vld [vmem:[%s1 + $0x98] sm:$0xff]
      %v420 = vld [vmem:[%s1 + $0xa0] sm:$0xff]
      %v421 = vld [vmem:[%s1 + $0xa8] sm:$0xff]
      %v422 = vld [vmem:[%s1 + $0xb0] sm:$0xff]
      %v423 = vld [vmem:[%s1 + $0xb8] sm:$0xff]
      %v424 = vld [vmem:[%s1 + $0xc0] sm:$0xff]
      %v425 = vld [vmem:[%s1 + $0xc8] sm:$0xff]
      %v426 = vld [vmem:[%s1 + $0xd0] sm:$0xff]
      %v427 = vld [vmem:[%s1 + $0xd8] sm:$0xff]
      %v428 = vld [vmem:[%s1 + $0xe0] sm:$0xff]
      %v429 = vld [vmem:[%s1 + $0xe8] sm:$0xff]
      %v430 = vld [vmem:[%s1 + $0xf0] sm:$0xff]
      %v431 = vld [vmem:[%s1 + $0xf8] sm:$0xff]
      %v432 = vld [vmem:[%s1 + $0x100] sm:$0xff]
      %v433 = vld [vmem:[%s1 + $0x108] sm:$0xff]
      %v434 = vld [vmem:[%s1 + $0x110] sm:$0xff]
      %v435 = vld [vmem:[%s1 + $0x118] sm:$0xff]
      %v436 = vld [vmem:[%s1 + $0x120] sm:$0xff]
      %v437 = vld [vmem:[%s1 + $0x128] sm:$0xff]
      %v438 = vld [vmem:[%s1 + $0x130] sm:$0xff]
      %v439 = vld [vmem:[%s1 + $0x138] sm:$0xff]
      %v440 = vld [vmem:[%s1 + $0x140] sm:$0xff]
      %v441 = vld [vmem:[%s1 + $0x148] sm:$0xff]
      %v442 = vld [vmem:[%s1 + $0x150] sm:$0xff]
      %v443 = vld [vmem:[%s1 + $0x158] sm:$0xff]
      %v444 = vld [vmem:[%s1 + $0x160] sm:$0xff]
      %v445 = vld [vmem:[%s1 + $0x168] sm:$0xff]
      %v446 = vld [vmem:[%s1 + $0x170] sm:$0xff]
      %v447 = vld [vmem:[%s1 + $0x178] sm:$0xff]
      %v448 = vld [vmem:[%s1 + $0x180] sm:$0xff]
      %v449 = vld [vmem:[%s1 + $0x188] sm:$0xff]
      %v450 = vld [vmem:[%s1 + $0x190] sm:$0xff]
      %v451 = vld [vmem:[%s1 + $0x198] sm:$0xff]
      %v452 = vld [vmem:[%s1 + $0x1a0] sm:$0xff]
      %v453 = vld [vmem:[%s1 + $0x1a8] sm:$0xff]
      %v454 = vld [vmem:[%s1 + $0x1b0] sm:$0xff]
      %v455 = vld [vmem:[%s1 + $0x1b8] sm:$0xff]
      %v456 = vld [vmem:[%s1 + $0x1c0] sm:$0xff]
      %v457 = vld [vmem:[%s1 + $0x1c8] sm:$0xff]
      %v458 = vld [vmem:[%s1 + $0x1d0] sm:$0xff]
      %v459 = vld [vmem:[%s1 + $0x1d8] sm:$0xff]
      %v460 = vld [vmem:[%s1 + $0x1e0] sm:$0xff]
      %v461 = vld [vmem:[%s1 + $0x1e8] sm:$0xff]
      %v462 = vld [vmem:[%s1 + $0x1f0] sm:$0xff]
      %v463 = vld [vmem:[%s1 + $0x1f8] sm:$0xff]
      %v464 = vld [vmem:[%s1 + $0x200] sm:$0xff]
      %v465 = vld [vmem:[%s1 + $0x208] sm:$0xff]
      %v466 = vld [vmem:[%s1 + $0x210] sm:$0xff]
      %v467 = vld [vmem:[%s1 + $0x218] sm:$0xff]
      %v468 = vld [vmem:[%s1 + $0x220] sm:$0xff]
      %v469 = vld [vmem:[%s1 + $0x228] sm:$0xff]
      %v470 = vld [vmem:[%s1 + $0x230] sm:$0xff]
      %v471 = vld [vmem:[%s1 + $0x238] sm:$0xff]
      %vm472 = vcmask 523264
      %v474 = vsel %vm472, %v244, 0
      %v477 = vsel %vm472, %v249, 0
      %v480 = vsel %vm472, %v254, 0
      %v483 = vsel %vm472, %v259, 0
      %v486 = vsel %vm472, %v264, 0
      %v489 = vsel %vm472, %v269, 0
      %v492 = vsel %vm472, %v274, 0
      %v495 = vsel %vm472, %v279, 0
      %v498 = vsel %vm472, %v284, 0
      %v501 = vsel %vm472, %v289, 0
      %v504 = vsel %vm472, %v294, 0
      %v507 = vsel %vm472, %v299, 0
      %v510 = vsel %vm472, %v304, 0
      %v513 = vsel %vm472, %v309, 0
      %v516 = vsel %vm472, %v314, 0
      %v519 = vsel %vm472, %v319, 0
      %v522 = vsel %vm472, %v324, 0
      %v525 = vsel %vm472, %v329, 0
      %v528 = vsel %vm472, %v334, 0
      %v531 = vsel %vm472, %v339, 0
      %v534 = vsel %vm472, %v344, 0
      %v537 = vsel %vm472, %v349, 0
      %v540 = vsel %vm472, %v354, 0
      %v543 = vsel %vm472, %v359, 0
      %v546 = vsel %vm472, %v364, 0
      %v549 = vsel %vm472, %v369, 0
      %v552 = vsel %vm472, %v374, 0
      %v555 = vsel %vm472, %v379, 0
      %v558 = vsel %vm472, %v384, 0
      %v561 = vsel %vm472, %v389, 0
      %v564 = vsel %vm472, %v394, 0
      %v567 = vsel %vm472, %v399, 0
      %569 = vmatprep.subr.mxu0 0.0
      %570 = vmatpush1.msra.mxu0 %v400
      %571 = vmatprep.subr.mxu0 0.0
      %572 = vmatpush1.msra.mxu0 %v401
      %573 = vmatprep.subr.mxu0 0.0
      %574 = vmatpush1.msra.mxu0 %v402
      %575 = vmatprep.subr.mxu0 0.0
      %576 = vmatpush1.msra.mxu0 %v403
      %577 = vmatprep.subr.mxu0 0.0
      %578 = vmatpush1.msra.mxu0 %v404
      %579 = vmatprep.subr.mxu0 0.0
      %580 = vmatpush1.msra.mxu0 %v405
      %581 = vmatprep.subr.mxu0 0.0
      %582 = vmatpush1.msra.mxu0 %v406
      %583 = vmatprep.subr.mxu0 0.0
      %584 = vmatpush1.msra.mxu0 %v407
      %585 = vmatprep.subr.mxu0 0.0
      %586 = vmatpush1.msra.mxu0 %v408
      %587 = vmatprep.subr.mxu0 0.0
      %588 = vmatpush1.msra.mxu0 %v409
      %589 = vmatprep.subr.mxu0 0.0
      %590 = vmatpush1.msra.mxu0 %v410
      %591 = vmatprep.subr.mxu0 0.0
      %592 = vmatpush1.msra.mxu0 %v411
      %593 = vmatprep.subr.mxu0 0.0
      %594 = vmatpush1.msra.mxu0 %v412
      %595 = vmatprep.subr.mxu0 0.0
      %596 = vmatpush1.msra.mxu0 %v413
      %597 = vmatprep.subr.mxu0 0.0
      %598 = vmatpush1.msra.mxu0 %v414
      %599 = vmatprep.subr.mxu0 0.0
      %600 = vmatpush1.msra.mxu0 %v415
      %601 = vmatprep.subr.mxu0 0.0
      %602 = vmatpush1.msra.mxu0 %v416
      %603 = vmatprep.subr.mxu0 0.0
      %604 = vmatpush1.msra.mxu0 %v417
      %605 = vmatprep.subr.mxu0 0.0
      %606 = vmatpush1.msra.mxu0 %v418
      %607 = vmatprep.subr.mxu0 0.0
      %608 = vmatpush1.msra.mxu0 %v419
      %609 = vmatprep.subr.mxu0 0.0
      %610 = vmatpush1.msra.mxu0 %v420
      %611 = vmatprep.subr.mxu0 0.0
      %612 = vmatpush1.msra.mxu0 %v421
      %613 = vmatprep.subr.mxu0 0.0
      %614 = vmatpush1.msra.mxu0 %v422
      %615 = vmatprep.subr.mxu0 0.0
      %616 = vmatpush1.msra.mxu0 %v423
      %617 = vmatprep.subr.mxu0 0.0
      %618 = vmatpush1.msra.mxu0 %v424
      %619 = vmatprep.subr.mxu0 0.0
      %620 = vmatpush1.msra.mxu0 %v425
      %621 = vmatprep.subr.mxu0 0.0
      %622 = vmatpush1.msra.mxu0 %v426
      %623 = vmatprep.subr.mxu0 0.0
      %624 = vmatpush1.msra.mxu0 %v427
      %625 = vmatprep.subr.mxu0 0.0
      %626 = vmatpush1.msra.mxu0 %v428
      %627 = vmatprep.subr.mxu0 0.0
      %628 = vmatpush1.msra.mxu0 %v429
      %629 = vmatprep.subr.mxu0 0.0
      %630 = vmatpush1.msra.mxu0 %v430
      %631 = vmatprep.subr.mxu0 0.0
      %632 = vmatpush1.msra.mxu0 %v431
      %633 = vmatprep.mubr.f32.mxu0 %v241
      %634 = vmatmul.mubr.f32.gmra.mrb[0].mxu0 %v240
      %v635 = vpop.f32.mrb[0].mxu0
      %v636 = vadd.f32 0.0, %v635
      %v637 = vpop.f32.mrb[0].mxu0
      %638 = vmatprep.mubr.f32.mxu0 %v246
      %639 = vmatmul.mubr.f32.gmra.mrb[0].mxu0 %v245
      %v640 = vpop.f32.mrb[0].mxu0
      %v641 = vadd.f32 0.0, %v640
      %v642 = vpop.f32.mrb[0].mxu0
      %643 = vmatprep.mubr.f32.mxu0 %v251
      %644 = vmatmul.mubr.f32.gmra.mrb[0].mxu0 %v250
      %v645 = vpop.f32.mrb[0].mxu0
      %v646 = vadd.f32 0.0, %v645
      %v647 = vpop.f32.mrb[0].mxu0
      %648 = vmatprep.mubr.f32.mxu0 %v256
      %649 = vmatmul.mubr.f32.gmra.mrb[0].mxu0 %v255
      %v650 = vpop.f32.mrb[0].mxu0
      %v651 = vadd.f32 0.0, %v650
      %v652 = vpop.f32.mrb[0].mxu0
      %653 = vmatprep.mubr.f32.mxu0 %v261
      %654 = vmatmul.mubr.f32.gmra.mrb[0].mxu0 %v260
      %v655 = vpop.f32.mrb[0].mxu0
      %v656 = vadd.f32 0.0, %v655
      %v657 = vpop.f32.mrb[0].mxu0
      %658 = vmatprep.mubr.f32.mxu0 %v266
      %659 = vmatmul.mubr.f32.gmra.mrb[0].mxu0 %v265
      %v660 = vpop.f32.mrb[0].mxu0
      %v661 = vadd.f32 0.0, %v660
      %v662 = vpop.f32.mrb[0].mxu0
      %663 = vmatprep.mubr.f32.mxu0 %v271
      %664 = vmatmul.mubr.f32.gmra.mrb[0].mxu0 %v270
      %v665 = vpop.f32.mrb[0].mxu0
      %v666 = vadd.f32 0.0, %v665
      %v667 = vpop.f32.mrb[0].mxu0
      %668 = vmatprep.mubr.f32.mxu0 %v276
      %669 = vmatmul.mubr.f32.gmra.mrb[0].mxu0 %v275
      %v670 = vpop.f32.mrb[0].mxu0
      %v671 = vadd.f32 0.0, %v670
      %v672 = vpop.f32.mrb[0].mxu0
      %673 = vmatprep.mubr.f32.mxu0 %v281
      %674 = vmatmul.mubr.f32.gmra.mrb[0].mxu0 %v280
      %v675 = vpop.f32.mrb[0].mxu0
      %v676 = vadd.f32 0.0, %v675
      %v677 = vpop.f32.mrb[0].mxu0
      %678 = vmatprep.mubr.f32.mxu0 %v286
      %679 = vmatmul.mubr.f32.gmra.mrb[0].mxu0 %v285
      %v680 = vpop.f32.mrb[0].mxu0
      %v681 = vadd.f32 0.0, %v680
      %v682 = vpop.f32.mrb[0].mxu0
      %683 = vmatprep.mubr.f32.mxu0 %v291
      %684 = vmatmul.mubr.f32.gmra.mrb[0].mxu0 %v290
      %v685 = vpop.f32.mrb[0].mxu0
      %v686 = vadd.f32 0.0, %v685
      %v687 = vpop.f32.mrb[0].mxu0
      %688 = vmatprep.mubr.f32.mxu0 %v296
      %689 = vmatmul.mubr.f32.gmra.mrb[0].mxu0 %v295
      %v690 = vpop.f32.mrb[0].mxu0
      %v691 = vadd.f32 0.0, %v690
      %v692 = vpop.f32.mrb[0].mxu0
      %693 = vmatprep.mubr.f32.mxu0 %v301
      %694 = vmatmul.mubr.f32.gmra.mrb[0].mxu0 %v300
      %v695 = vpop.f32.mrb[0].mxu0
      %v696 = vadd.f32 0.0, %v695
      %v697 = vpop.f32.mrb[0].mxu0
      %698 = vmatprep.mubr.f32.mxu0 %v306
      %699 = vmatmul.mubr.f32.gmra.mrb[0].mxu0 %v305
      %v700 = vpop.f32.mrb[0].mxu0
      %v701 = vadd.f32 0.0, %v700
      %v702 = vpop.f32.mrb[0].mxu0
      %703 = vmatprep.mubr.f32.mxu0 %v311
      %704 = vmatmul.mubr.f32.gmra.mrb[0].mxu0 %v310
      %v705 = vpop.f32.mrb[0].mxu0
      %v706 = vadd.f32 0.0, %v705
      %v707 = vpop.f32.mrb[0].mxu0
      %708 = vmatprep.mubr.f32.mxu0 %v316
      %709 = vmatmul.mubr.f32.gmra.mrb[0].mxu0 %v315
      %v710 = vpop.f32.mrb[0].mxu0
      %v711 = vadd.f32 0.0, %v710
      %v712 = vpop.f32.mrb[0].mxu0
      %713 = vmatprep.mubr.f32.mxu0 %v321
      %714 = vmatmul.mubr.f32.gmra.mrb[0].mxu0 %v320
      %v715 = vpop.f32.mrb[0].mxu0
      %v716 = vadd.f32 0.0, %v715
      %v717 = vpop.f32.mrb[0].mxu0
      %718 = vmatprep.mubr.f32.mxu0 %v326
      %719 = vmatmul.mubr.f32.gmra.mrb[0].mxu0 %v325
      %v720 = vpop.f32.mrb[0].mxu0
      %v721 = vadd.f32 0.0, %v720
      %v722 = vpop.f32.mrb[0].mxu0
      %723 = vmatprep.mubr.f32.mxu0 %v331
      %724 = vmatmul.mubr.f32.gmra.mrb[0].mxu0 %v330
      %v725 = vpop.f32.mrb[0].mxu0
      %v726 = vadd.f32 0.0, %v725
      %v727 = vpop.f32.mrb[0].mxu0
      %728 = vmatprep.mubr.f32.mxu0 %v336
      %729 = vmatmul.mubr.f32.gmra.mrb[0].mxu0 %v335
      %v730 = vpop.f32.mrb[0].mxu0
      %v731 = vadd.f32 0.0, %v730
      %v732 = vpop.f32.mrb[0].mxu0
      %733 = vmatprep.mubr.f32.mxu0 %v341
      %734 = vmatmul.mubr.f32.gmra.mrb[0].mxu0 %v340
      %v735 = vpop.f32.mrb[0].mxu0
      %v736 = vadd.f32 0.0, %v735
      %v737 = vpop.f32.mrb[0].mxu0
      %738 = vmatprep.mubr.f32.mxu0 %v346
      %739 = vmatmul.mubr.f32.gmra.mrb[0].mxu0 %v345
      %v740 = vpop.f32.mrb[0].mxu0
      %v741 = vadd.f32 0.0, %v740
      %v742 = vpop.f32.mrb[0].mxu0
      %743 = vmatprep.mubr.f32.mxu0 %v351
      %744 = vmatmul.mubr.f32.gmra.mrb[0].mxu0 %v350
      %v745 = vpop.f32.mrb[0].mxu0
      %v746 = vadd.f32 0.0, %v745
      %v747 = vpop.f32.mrb[0].mxu0
      %748 = vmatprep.mubr.f32.mxu0 %v356
      %749 = vmatmul.mubr.f32.gmra.mrb[0].mxu0 %v355
      %v750 = vpop.f32.mrb[0].mxu0
      %v751 = vadd.f32 0.0, %v750
      %v752 = vpop.f32.mrb[0].mxu0
      %753 = vmatprep.mubr.f32.mxu0 %v361
      %754 = vmatmul.mubr.f32.gmra.mrb[0].mxu0 %v360
      %v755 = vpop.f32.mrb[0].mxu0
      %v756 = vadd.f32 0.0, %v755
      %v757 = vpop.f32.mrb[0].mxu0
      %758 = vmatprep.mubr.f32.mxu0 %v366
      %759 = vmatmul.mubr.f32.gmra.mrb[0].mxu0 %v365
      %v760 = vpop.f32.mrb[0].mxu0
      %v761 = vadd.f32 0.0, %v760
      %v762 = vpop.f32.mrb[0].mxu0
      %763 = vmatprep.mubr.f32.mxu0 %v371
      %764 = vmatmul.mubr.f32.gmra.mrb[0].mxu0 %v370
      %v765 = vpop.f32.mrb[0].mxu0
      %v766 = vadd.f32 0.0, %v765
      %v767 = vpop.f32.mrb[0].mxu0
      %768 = vmatprep.mubr.f32.mxu0 %v376
      %769 = vmatmul.mubr.f32.gmra.mrb[0].mxu0 %v375
      %v770 = vpop.f32.mrb[0].mxu0
      %v771 = vadd.f32 0.0, %v770
      %v772 = vpop.f32.mrb[0].mxu0
      %773 = vmatprep.mubr.f32.mxu0 %v381
      %774 = vmatmul.mubr.f32.gmra.mrb[0].mxu0 %v380
      %v775 = vpop.f32.mrb[0].mxu0
      %v776 = vadd.f32 0.0, %v775
      %v777 = vpop.f32.mrb[0].mxu0
      %778 = vmatprep.mubr.f32.mxu0 %v386
      %779 = vmatmul.mubr.f32.gmra.mrb[0].mxu0 %v385
      %v780 = vpop.f32.mrb[0].mxu0
      %v781 = vadd.f32 0.0, %v780
      %v782 = vpop.f32.mrb[0].mxu0
      %783 = vmatprep.mubr.f32.mxu0 %v391
      %784 = vmatmul.mubr.f32.gmra.mrb[0].mxu0 %v390
      %v785 = vpop.f32.mrb[0].mxu0
      %v786 = vadd.f32 0.0, %v785
      %v787 = vpop.f32.mrb[0].mxu0
      %788 = vmatprep.mubr.f32.mxu0 %v396
      %789 = vmatmul.mubr.f32.gmra.mrb[0].mxu0 %v395
      %v790 = vpop.f32.mrb[0].mxu0
      %v791 = vadd.f32 0.0, %v790
      %v792 = vpop.f32.mrb[0].mxu0
      %793 = vdwg.mxu0
      %794 = vmatprep.subr.mxu0 0.0
      %795 = vmatpush1.msra.mxu0 %v432
      %796 = vmatprep.subr.mxu0 0.0
      %797 = vmatpush1.msra.mxu0 %v433
      %798 = vmatprep.subr.mxu0 0.0
      %799 = vmatpush1.msra.mxu0 %v434
      %800 = vmatprep.subr.mxu0 0.0
      %801 = vmatpush1.msra.mxu0 %v435
      %802 = vmatprep.subr.mxu0 0.0
      %803 = vmatpush1.msra.mxu0 %v436
      %804 = vmatprep.subr.mxu0 0.0
      %805 = vmatpush1.msra.mxu0 %v437
      %806 = vmatprep.subr.mxu0 0.0
      %807 = vmatpush1.msra.mxu0 %v438
      %808 = vmatprep.subr.mxu0 0.0
      %809 = vmatpush1.msra.mxu0 %v439
      %810 = vmatprep.subr.mxu0 0.0
      %811 = vmatpush1.msra.mxu0 %v440
      %812 = vmatprep.subr.mxu0 0.0
      %813 = vmatpush1.msra.mxu0 %v441
      %814 = vmatprep.subr.mxu0 0.0
      %815 = vmatpush1.msra.mxu0 %v442
      %816 = vmatprep.subr.mxu0 0.0
      %817 = vmatpush1.msra.mxu0 %v443
      %818 = vmatprep.subr.mxu0 0.0
      %819 = vmatpush1.msra.mxu0 %v444
      %820 = vmatprep.subr.mxu0 0.0
      %821 = vmatpush1.msra.mxu0 %v445
      %822 = vmatprep.subr.mxu0 0.0
      %823 = vmatpush1.msra.mxu0 %v446
      %824 = vmatprep.subr.mxu0 0.0
      %825 = vmatpush1.msra.mxu0 %v447
      %826 = vmatprep.subr.mxu0 0.0
      %827 = vmatpush1.msra.mxu0 %v448
      %828 = vmatprep.subr.mxu0 0.0
      %829 = vmatpush1.msra.mxu0 %v449
      %830 = vmatprep.subr.mxu0 0.0
      %831 = vmatpush1.msra.mxu0 %v450
      %832 = vmatprep.subr.mxu0 0.0
      %833 = vmatpush1.msra.mxu0 %v451
      %834 = vmatprep.subr.mxu0 0.0
      %835 = vmatpush1.msra.mxu0 %v452
      %836 = vmatprep.subr.mxu0 0.0
      %837 = vmatpush1.msra.mxu0 %v453
      %838 = vmatprep.subr.mxu0 0.0
      %839 = vmatpush1.msra.mxu0 %v454
      %840 = vmatprep.subr.mxu0 0.0
      %841 = vmatpush1.msra.mxu0 %v455
      %842 = vmatprep.subr.mxu0 0.0
      %843 = vmatpush1.msra.mxu0 %v456
      %844 = vmatprep.subr.mxu0 0.0
      %845 = vmatpush1.msra.mxu0 %v457
      %846 = vmatprep.subr.mxu0 0.0
      %847 = vmatpush1.msra.mxu0 %v458
      %848 = vmatprep.subr.mxu0 0.0
      %849 = vmatpush1.msra.mxu0 %v459
      %850 = vmatprep.subr.mxu0 0.0
      %851 = vmatpush1.msra.mxu0 %v460
      %852 = vmatprep.subr.mxu0 0.0
      %853 = vmatpush1.msra.mxu0 %v461
      %854 = vmatprep.subr.mxu0 0.0
      %855 = vmatpush1.msra.mxu0 %v462
      %856 = vmatprep.subr.mxu0 0.0
      %857 = vmatpush1.msra.mxu0 %v463
      %858 = vmatprep.mubr.f32.mxu0 %v243
      %859 = vmatmul.mubr.f32.gmra.mrb[0].mxu0 %v242
      %v860 = vpop.f32.mrb[0].mxu0
      %v861 = vadd.f32 %v636, %v860
      %v862 = vpop.f32.mrb[0].mxu0
      %863 = vmatprep.mubr.f32.mxu0 %v248
      %864 = vmatmul.mubr.f32.gmra.mrb[0].mxu0 %v247
      %v865 = vpop.f32.mrb[0].mxu0
      %v866 = vadd.f32 %v641, %v865
      %v867 = vpop.f32.mrb[0].mxu0
      %868 = vmatprep.mubr.f32.mxu0 %v253
      %869 = vmatmul.mubr.f32.gmra.mrb[0].mxu0 %v252
      %v870 = vpop.f32.mrb[0].mxu0
      %v871 = vadd.f32 %v646, %v870
      %v872 = vpop.f32.mrb[0].mxu0
      %873 = vmatprep.mubr.f32.mxu0 %v258
      %874 = vmatmul.mubr.f32.gmra.mrb[0].mxu0 %v257
      %v875 = vpop.f32.mrb[0].mxu0
      %v876 = vadd.f32 %v651, %v875
      %v877 = vpop.f32.mrb[0].mxu0
      %878 = vmatprep.mubr.f32.mxu0 %v263
      %879 = vmatmul.mubr.f32.gmra.mrb[0].mxu0 %v262
      %v880 = vpop.f32.mrb[0].mxu0
      %v881 = vadd.f32 %v656, %v880
      %v882 = vpop.f32.mrb[0].mxu0
      %883 = vmatprep.mubr.f32.mxu0 %v268
      %884 = vmatmul.mubr.f32.gmra.mrb[0].mxu0 %v267
      %v885 = vpop.f32.mrb[0].mxu0
      %v886 = vadd.f32 %v661, %v885
      %v887 = vpop.f32.mrb[0].mxu0
      %888 = vmatprep.mubr.f32.mxu0 %v273
      %889 = vmatmul.mubr.f32.gmra.mrb[0].mxu0 %v272
      %v890 = vpop.f32.mrb[0].mxu0
      %v891 = vadd.f32 %v666, %v890
      %v892 = vpop.f32.mrb[0].mxu0
      %893 = vmatprep.mubr.f32.mxu0 %v278
      %894 = vmatmul.mubr.f32.gmra.mrb[0].mxu0 %v277
      %v895 = vpop.f32.mrb[0].mxu0
      %v896 = vadd.f32 %v671, %v895
      %v897 = vpop.f32.mrb[0].mxu0
      %898 = vmatprep.mubr.f32.mxu0 %v283
      %899 = vmatmul.mubr.f32.gmra.mrb[0].mxu0 %v282
      %v900 = vpop.f32.mrb[0].mxu0
      %v901 = vadd.f32 %v676, %v900
      %v902 = vpop.f32.mrb[0].mxu0
      %903 = vmatprep.mubr.f32.mxu0 %v288
      %904 = vmatmul.mubr.f32.gmra.mrb[0].mxu0 %v287
      %v905 = vpop.f32.mrb[0].mxu0
      %v906 = vadd.f32 %v681, %v905
      %v907 = vpop.f32.mrb[0].mxu0
      %908 = vmatprep.mubr.f32.mxu0 %v293
      %909 = vmatmul.mubr.f32.gmra.mrb[0].mxu0 %v292
      %v910 = vpop.f32.mrb[0].mxu0
      %v911 = vadd.f32 %v686, %v910
      %v912 = vpop.f32.mrb[0].mxu0
      %913 = vmatprep.mubr.f32.mxu0 %v298
      %914 = vmatmul.mubr.f32.gmra.mrb[0].mxu0 %v297
      %v915 = vpop.f32.mrb[0].mxu0
      %v916 = vadd.f32 %v691, %v915
      %v917 = vpop.f32.mrb[0].mxu0
      %918 = vmatprep.mubr.f32.mxu0 %v303
      %919 = vmatmul.mubr.f32.gmra.mrb[0].mxu0 %v302
      %v920 = vpop.f32.mrb[0].mxu0
      %v921 = vadd.f32 %v696, %v920
      %v922 = vpop.f32.mrb[0].mxu0
      %923 = vmatprep.mubr.f32.mxu0 %v308
      %924 = vmatmul.mubr.f32.gmra.mrb[0].mxu0 %v307
      %v925 = vpop.f32.mrb[0].mxu0
      %v926 = vadd.f32 %v701, %v925
      %v927 = vpop.f32.mrb[0].mxu0
      %928 = vmatprep.mubr.f32.mxu0 %v313
      %929 = vmatmul.mubr.f32.gmra.mrb[0].mxu0 %v312
      %v930 = vpop.f32.mrb[0].mxu0
      %v931 = vadd.f32 %v706, %v930
      %v932 = vpop.f32.mrb[0].mxu0
      %933 = vmatprep.mubr.f32.mxu0 %v318
      %934 = vmatmul.mubr.f32.gmra.mrb[0].mxu0 %v317
      %v935 = vpop.f32.mrb[0].mxu0
      %v936 = vadd.f32 %v711, %v935
      %v937 = vpop.f32.mrb[0].mxu0
      %938 = vmatprep.mubr.f32.mxu0 %v323
      %939 = vmatmul.mubr.f32.gmra.mrb[0].mxu0 %v322
      %v940 = vpop.f32.mrb[0].mxu0
      %v941 = vadd.f32 %v716, %v940
      %v942 = vpop.f32.mrb[0].mxu0
      %943 = vmatprep.mubr.f32.mxu0 %v328
      %944 = vmatmul.mubr.f32.gmra.mrb[0].mxu0 %v327
      %v945 = vpop.f32.mrb[0].mxu0
      %v946 = vadd.f32 %v721, %v945
      %v947 = vpop.f32.mrb[0].mxu0
      %948 = vmatprep.mubr.f32.mxu0 %v333
      %949 = vmatmul.mubr.f32.gmra.mrb[0].mxu0 %v332
      %v950 = vpop.f32.mrb[0].mxu0
      %v951 = vadd.f32 %v726, %v950
      %v952 = vpop.f32.mrb[0].mxu0
      %953 = vmatprep.mubr.f32.mxu0 %v338
      %954 = vmatmul.mubr.f32.gmra.mrb[0].mxu0 %v337
      %v955 = vpop.f32.mrb[0].mxu0
      %v956 = vadd.f32 %v731, %v955
      %v957 = vpop.f32.mrb[0].mxu0
      %958 = vmatprep.mubr.f32.mxu0 %v343
      %959 = vmatmul.mubr.f32.gmra.mrb[0].mxu0 %v342
      %v960 = vpop.f32.mrb[0].mxu0
      %v961 = vadd.f32 %v736, %v960
      %v962 = vpop.f32.mrb[0].mxu0
      %963 = vmatprep.mubr.f32.mxu0 %v348
      %964 = vmatmul.mubr.f32.gmra.mrb[0].mxu0 %v347
      %v965 = vpop.f32.mrb[0].mxu0
      %v966 = vadd.f32 %v741, %v965
      %v967 = vpop.f32.mrb[0].mxu0
      %968 = vmatprep.mubr.f32.mxu0 %v353
      %969 = vmatmul.mubr.f32.gmra.mrb[0].mxu0 %v352
      %v970 = vpop.f32.mrb[0].mxu0
      %v971 = vadd.f32 %v746, %v970
      %v972 = vpop.f32.mrb[0].mxu0
      %973 = vmatprep.mubr.f32.mxu0 %v358
      %974 = vmatmul.mubr.f32.gmra.mrb[0].mxu0 %v357
      %v975 = vpop.f32.mrb[0].mxu0
      %v976 = vadd.f32 %v751, %v975
      %v977 = vpop.f32.mrb[0].mxu0
      %978 = vmatprep.mubr.f32.mxu0 %v363
      %979 = vmatmul.mubr.f32.gmra.mrb[0].mxu0 %v362
      %v980 = vpop.f32.mrb[0].mxu0
      %v981 = vadd.f32 %v756, %v980
      %v982 = vpop.f32.mrb[0].mxu0
      %983 = vmatprep.mubr.f32.mxu0 %v368
      %984 = vmatmul.mubr.f32.gmra.mrb[0].mxu0 %v367
      %v985 = vpop.f32.mrb[0].mxu0
      %v986 = vadd.f32 %v761, %v985
      %v987 = vpop.f32.mrb[0].mxu0
      %988 = vmatprep.mubr.f32.mxu0 %v373
      %989 = vmatmul.mubr.f32.gmra.mrb[0].mxu0 %v372
      %v990 = vpop.f32.mrb[0].mxu0
      %v991 = vadd.f32 %v766, %v990
      %v992 = vpop.f32.mrb[0].mxu0
      %993 = vmatprep.mubr.f32.mxu0 %v378
      %994 = vmatmul.mubr.f32.gmra.mrb[0].mxu0 %v377
      %v995 = vpop.f32.mrb[0].mxu0
      %v996 = vadd.f32 %v771, %v995
      %v997 = vpop.f32.mrb[0].mxu0
      %998 = vmatprep.mubr.f32.mxu0 %v383
      %999 = vmatmul.mubr.f32.gmra.mrb[0].mxu0 %v382
      %v1000 = vpop.f32.mrb[0].mxu0
      %v1001 = vadd.f32 %v776, %v1000
      %v1002 = vpop.f32.mrb[0].mxu0
      %1003 = vmatprep.mubr.f32.mxu0 %v388
      %1004 = vmatmul.mubr.f32.gmra.mrb[0].mxu0 %v387
      %v1005 = vpop.f32.mrb[0].mxu0
      %v1006 = vadd.f32 %v781, %v1005
      %v1007 = vpop.f32.mrb[0].mxu0
      %1008 = vmatprep.mubr.f32.mxu0 %v393
      %1009 = vmatmul.mubr.f32.gmra.mrb[0].mxu0 %v392
      %v1010 = vpop.f32.mrb[0].mxu0
      %v1011 = vadd.f32 %v786, %v1010
      %v1012 = vpop.f32.mrb[0].mxu0
      %1013 = vmatprep.mubr.f32.mxu0 %v398
      %1014 = vmatmul.mubr.f32.gmra.mrb[0].mxu0 %v397
      %v1015 = vpop.f32.mrb[0].mxu0
      %v1016 = vadd.f32 %v791, %v1015
      %v1017 = vpop.f32.mrb[0].mxu0
      %1018 = vdwg.mxu0
      %1019 = vmatprep.subr.mxu0 0.0
      %1020 = vmatpush1.msra.mxu0 %v464
      %1021 = vmatprep.subr.mxu0 0.0
      %1022 = vmatpush1.msra.mxu0 %v465
      %1023 = vmatprep.subr.mxu0 0.0
      %1024 = vmatpush1.msra.mxu0 %v466
      %1025 = vmatprep.subr.mxu0 0.0
      %1026 = vmatpush1.msra.mxu0 %v467
      %1027 = vmatprep.subr.mxu0 0.0
      %1028 = vmatpush1.msra.mxu0 %v468
      %1029 = vmatprep.subr.mxu0 0.0
      %1030 = vmatpush1.msra.mxu0 %v469
      %1031 = vmatprep.subr.mxu0 0.0
      %1032 = vmatpush1.msra.mxu0 %v470
      %1033 = vmatprep.subr.mxu0 0.0
      %1034 = vmatpush1.msra.mxu0 %v471
      %1035 = vmatprep.subr.mxu0 0.0
      %1036 = vmatpush1.msra.mxu0 0.0
      %1037 = vmatprep.subr.mxu0 0.0
      %1038 = vmatpush1.msra.mxu0 0.0
      %1039 = vmatprep.subr.mxu0 0.0
      %1040 = vmatpush1.msra.mxu0 0.0
      %1041 = vmatprep.subr.mxu0 0.0
      %1042 = vmatpush1.msra.mxu0 0.0
      %1043 = vmatprep.subr.mxu0 0.0
      %1044 = vmatpush1.msra.mxu0 0.0
      %1045 = vmatprep.subr.mxu0 0.0
      %1046 = vmatpush1.msra.mxu0 0.0
      %1047 = vmatprep.subr.mxu0 0.0
      %1048 = vmatpush1.msra.mxu0 0.0
      %1049 = vmatprep.subr.mxu0 0.0
      %1050 = vmatpush1.msra.mxu0 0.0
      %1051 = vmatprep.subr.mxu0 0.0
      %1052 = vmatpush1.msra.mxu0 0.0
      %1053 = vmatprep.subr.mxu0 0.0
      %1054 = vmatpush1.msra.mxu0 0.0
      %1055 = vmatprep.subr.mxu0 0.0
      %1056 = vmatpush1.msra.mxu0 0.0
      %1057 = vmatprep.subr.mxu0 0.0
      %1058 = vmatpush1.msra.mxu0 0.0
      %1059 = vmatprep.subr.mxu0 0.0
      %1060 = vmatpush1.msra.mxu0 0.0
      %1061 = vmatprep.subr.mxu0 0.0
      %1062 = vmatpush1.msra.mxu0 0.0
      %1063 = vmatprep.subr.mxu0 0.0
      %1064 = vmatpush1.msra.mxu0 0.0
      %1065 = vmatprep.subr.mxu0 0.0
      %1066 = vmatpush1.msra.mxu0 0.0
      %1067 = vmatprep.subr.mxu0 0.0
      %1068 = vmatpush1.msra.mxu0 0.0
      %1069 = vmatprep.subr.mxu0 0.0
      %1070 = vmatpush1.msra.mxu0 0.0
      %1071 = vmatprep.subr.mxu0 0.0
      %1072 = vmatpush1.msra.mxu0 0.0
      %1073 = vmatprep.subr.mxu0 0.0
      %1074 = vmatpush1.msra.mxu0 0.0
      %1075 = vmatprep.subr.mxu0 0.0
      %1076 = vmatpush1.msra.mxu0 0.0
      %1077 = vmatprep.subr.mxu0 0.0
      %1078 = vmatpush1.msra.mxu0 0.0
      %1079 = vmatprep.subr.mxu0 0.0
      %1080 = vmatpush1.msra.mxu0 0.0
      %1081 = vmatprep.subr.mxu0 0.0
      %1082 = vmatpush1.msra.mxu0 0.0
      %1083 = vmatprep.mubr.f32.mxu0 0.0
      %1084 = vmatmul.mubr.f32.gmra.mrb[0].mxu0 %v474
      %v1085 = vpop.f32.mrb[0].mxu0
      %v1086 = vadd.f32 %v861, %v1085
      %v1087 = vpop.f32.mrb[0].mxu0
      %1088 = vmatprep.mubr.f32.mxu0 0.0
      %1089 = vmatmul.mubr.f32.gmra.mrb[0].mxu0 %v477
      %v1090 = vpop.f32.mrb[0].mxu0
      %v1091 = vadd.f32 %v866, %v1090
      %v1092 = vpop.f32.mrb[0].mxu0
      %1093 = vmatprep.mubr.f32.mxu0 0.0
      %1094 = vmatmul.mubr.f32.gmra.mrb[0].mxu0 %v480
      %v1095 = vpop.f32.mrb[0].mxu0
      %v1096 = vadd.f32 %v871, %v1095
      %v1097 = vpop.f32.mrb[0].mxu0
      %1098 = vmatprep.mubr.f32.mxu0 0.0
      %1099 = vmatmul.mubr.f32.gmra.mrb[0].mxu0 %v483
      %v1100 = vpop.f32.mrb[0].mxu0
      %v1101 = vadd.f32 %v876, %v1100
      %v1102 = vpop.f32.mrb[0].mxu0
      %1103 = vmatprep.mubr.f32.mxu0 0.0
      %1104 = vmatmul.mubr.f32.gmra.mrb[0].mxu0 %v486
      %v1105 = vpop.f32.mrb[0].mxu0
      %v1106 = vadd.f32 %v881, %v1105
      %v1107 = vpop.f32.mrb[0].mxu0
      %1108 = vmatprep.mubr.f32.mxu0 0.0
      %1109 = vmatmul.mubr.f32.gmra.mrb[0].mxu0 %v489
      %v1110 = vpop.f32.mrb[0].mxu0
      %v1111 = vadd.f32 %v886, %v1110
      %v1112 = vpop.f32.mrb[0].mxu0
      %1113 = vmatprep.mubr.f32.mxu0 0.0
      %1114 = vmatmul.mubr.f32.gmra.mrb[0].mxu0 %v492
      %v1115 = vpop.f32.mrb[0].mxu0
      %v1116 = vadd.f32 %v891, %v1115
      %v1117 = vpop.f32.mrb[0].mxu0
      %1118 = vmatprep.mubr.f32.mxu0 0.0
      %1119 = vmatmul.mubr.f32.gmra.mrb[0].mxu0 %v495
      %v1120 = vpop.f32.mrb[0].mxu0
      %v1121 = vadd.f32 %v896, %v1120
      %v1122 = vpop.f32.mrb[0].mxu0
      %1123 = vmatprep.mubr.f32.mxu0 0.0
      %1124 = vmatmul.mubr.f32.gmra.mrb[0].mxu0 %v498
      %v1125 = vpop.f32.mrb[0].mxu0
      %v1126 = vadd.f32 %v901, %v1125
      %v1127 = vpop.f32.mrb[0].mxu0
      %1128 = vmatprep.mubr.f32.mxu0 0.0
      %1129 = vmatmul.mubr.f32.gmra.mrb[0].mxu0 %v501
      %v1130 = vpop.f32.mrb[0].mxu0
      %v1131 = vadd.f32 %v906, %v1130
      %v1132 = vpop.f32.mrb[0].mxu0
      %1133 = vmatprep.mubr.f32.mxu0 0.0
      %1134 = vmatmul.mubr.f32.gmra.mrb[0].mxu0 %v504
      %v1135 = vpop.f32.mrb[0].mxu0
      %v1136 = vadd.f32 %v911, %v1135
      %v1137 = vpop.f32.mrb[0].mxu0
      %1138 = vmatprep.mubr.f32.mxu0 0.0
      %1139 = vmatmul.mubr.f32.gmra.mrb[0].mxu0 %v507
      %v1140 = vpop.f32.mrb[0].mxu0
      %v1141 = vadd.f32 %v916, %v1140
      %v1142 = vpop.f32.mrb[0].mxu0
      %1143 = vmatprep.mubr.f32.mxu0 0.0
      %1144 = vmatmul.mubr.f32.gmra.mrb[0].mxu0 %v510
      %v1145 = vpop.f32.mrb[0].mxu0
      %v1146 = vadd.f32 %v921, %v1145
      %v1147 = vpop.f32.mrb[0].mxu0
      %1148 = vmatprep.mubr.f32.mxu0 0.0
      %1149 = vmatmul.mubr.f32.gmra.mrb[0].mxu0 %v513
      %v1150 = vpop.f32.mrb[0].mxu0
      %v1151 = vadd.f32 %v926, %v1150
      %v1152 = vpop.f32.mrb[0].mxu0
      %1153 = vmatprep.mubr.f32.mxu0 0.0
      %1154 = vmatmul.mubr.f32.gmra.mrb[0].mxu0 %v516
      %v1155 = vpop.f32.mrb[0].mxu0
      %v1156 = vadd.f32 %v931, %v1155
      %v1157 = vpop.f32.mrb[0].mxu0
      %1158 = vmatprep.mubr.f32.mxu0 0.0
      %1159 = vmatmul.mubr.f32.gmra.mrb[0].mxu0 %v519
      %v1160 = vpop.f32.mrb[0].mxu0
      %v1161 = vadd.f32 %v936, %v1160
      %v1162 = vpop.f32.mrb[0].mxu0
      %1163 = vmatprep.mubr.f32.mxu0 0.0
      %1164 = vmatmul.mubr.f32.gmra.mrb[0].mxu0 %v522
      %v1165 = vpop.f32.mrb[0].mxu0
      %v1166 = vadd.f32 %v941, %v1165
      %v1167 = vpop.f32.mrb[0].mxu0
      %1168 = vmatprep.mubr.f32.mxu0 0.0
      %1169 = vmatmul.mubr.f32.gmra.mrb[0].mxu0 %v525
      %v1170 = vpop.f32.mrb[0].mxu0
      %v1171 = vadd.f32 %v946, %v1170
      %v1172 = vpop.f32.mrb[0].mxu0
      %1173 = vmatprep.mubr.f32.mxu0 0.0
      %1174 = vmatmul.mubr.f32.gmra.mrb[0].mxu0 %v528
      %v1175 = vpop.f32.mrb[0].mxu0
      %v1176 = vadd.f32 %v951, %v1175
      %v1177 = vpop.f32.mrb[0].mxu0
      %1178 = vmatprep.mubr.f32.mxu0 0.0
      %1179 = vmatmul.mubr.f32.gmra.mrb[0].mxu0 %v531
      %v1180 = vpop.f32.mrb[0].mxu0
      %v1181 = vadd.f32 %v956, %v1180
      %v1182 = vpop.f32.mrb[0].mxu0
      %1183 = vmatprep.mubr.f32.mxu0 0.0
      %1184 = vmatmul.mubr.f32.gmra.mrb[0].mxu0 %v534
      %v1185 = vpop.f32.mrb[0].mxu0
      %v1186 = vadd.f32 %v961, %v1185
      %v1187 = vpop.f32.mrb[0].mxu0
      %1188 = vmatprep.mubr.f32.mxu0 0.0
      %1189 = vmatmul.mubr.f32.gmra.mrb[0].mxu0 %v537
      %v1190 = vpop.f32.mrb[0].mxu0
      %v1191 = vadd.f32 %v966, %v1190
      %v1192 = vpop.f32.mrb[0].mxu0
      %1193 = vmatprep.mubr.f32.mxu0 0.0
      %1194 = vmatmul.mubr.f32.gmra.mrb[0].mxu0 %v540
      %v1195 = vpop.f32.mrb[0].mxu0
      %v1196 = vadd.f32 %v971, %v1195
      %v1197 = vpop.f32.mrb[0].mxu0
      %1198 = vmatprep.mubr.f32.mxu0 0.0
      %1199 = vmatmul.mubr.f32.gmra.mrb[0].mxu0 %v543
      %v1200 = vpop.f32.mrb[0].mxu0
      %v1201 = vadd.f32 %v976, %v1200
      %v1202 = vpop.f32.mrb[0].mxu0
      %1203 = vmatprep.mubr.f32.mxu0 0.0
      %1204 = vmatmul.mubr.f32.gmra.mrb[0].mxu0 %v546
      %v1205 = vpop.f32.mrb[0].mxu0
      %v1206 = vadd.f32 %v981, %v1205
      %v1207 = vpop.f32.mrb[0].mxu0
      %1208 = vmatprep.mubr.f32.mxu0 0.0
      %1209 = vmatmul.mubr.f32.gmra.mrb[0].mxu0 %v549
      %v1210 = vpop.f32.mrb[0].mxu0
      %v1211 = vadd.f32 %v986, %v1210
      %v1212 = vpop.f32.mrb[0].mxu0
      %1213 = vmatprep.mubr.f32.mxu0 0.0
      %1214 = vmatmul.mubr.f32.gmra.mrb[0].mxu0 %v552
      %v1215 = vpop.f32.mrb[0].mxu0
      %v1216 = vadd.f32 %v991, %v1215
      %v1217 = vpop.f32.mrb[0].mxu0
      %1218 = vmatprep.mubr.f32.mxu0 0.0
      %1219 = vmatmul.mubr.f32.gmra.mrb[0].mxu0 %v555
      %v1220 = vpop.f32.mrb[0].mxu0
      %v1221 = vadd.f32 %v996, %v1220
      %v1222 = vpop.f32.mrb[0].mxu0
      %1223 = vmatprep.mubr.f32.mxu0 0.0
      %1224 = vmatmul.mubr.f32.gmra.mrb[0].mxu0 %v558
      %v1225 = vpop.f32.mrb[0].mxu0
      %v1226 = vadd.f32 %v1001, %v1225
      %v1227 = vpop.f32.mrb[0].mxu0
      %1228 = vmatprep.mubr.f32.mxu0 0.0
      %1229 = vmatmul.mubr.f32.gmra.mrb[0].mxu0 %v561
      %v1230 = vpop.f32.mrb[0].mxu0
      %v1231 = vadd.f32 %v1006, %v1230
      %v1232 = vpop.f32.mrb[0].mxu0
      %1233 = vmatprep.mubr.f32.mxu0 0.0
      %1234 = vmatmul.mubr.f32.gmra.mrb[0].mxu0 %v564
      %v1235 = vpop.f32.mrb[0].mxu0
      %v1236 = vadd.f32 %v1011, %v1235
      %v1237 = vpop.f32.mrb[0].mxu0
      %1238 = vmatprep.mubr.f32.mxu0 0.0
      %1239 = vmatmul.mubr.f32.gmra.mrb[0].mxu0 %v567
      %v1240 = vpop.f32.mrb[0].mxu0
      %v1241 = vadd.f32 %v1016, %v1240
      %v1242 = vpop.f32.mrb[0].mxu0
      %1243 = vdwg.mxu0
      %v1244 = vld [vmem:[%s2] sm:$0x1]
      %v1246 = vlaneseq
      %v1247 = vshrl.u32 %v1246, 7
      %v1248 = vsub.s32 0, %v1247
      %v1249 = vrot.slane %v1244, %v1248
      %v1251 = vmul.f32 %v1086, %v1249
      %v1252 = vmul.f32 %v1091, %v1249
      %v1253 = vmul.f32 %v1096, %v1249
      %v1254 = vmul.f32 %v1101, %v1249
      %v1255 = vmul.f32 %v1106, %v1249
      %v1256 = vmul.f32 %v1111, %v1249
      %v1257 = vmul.f32 %v1116, %v1249
      %v1258 = vmul.f32 %v1121, %v1249
      %v1259 = vmul.f32 %v1126, %v1249
      %v1260 = vmul.f32 %v1131, %v1249
      %v1261 = vmul.f32 %v1136, %v1249
      %v1262 = vmul.f32 %v1141, %v1249
      %v1263 = vmul.f32 %v1146, %v1249
      %v1264 = vmul.f32 %v1151, %v1249
      %v1265 = vmul.f32 %v1156, %v1249
      %v1266 = vmul.f32 %v1161, %v1249
      %v1267 = vmul.f32 %v1166, %v1249
      %v1268 = vmul.f32 %v1171, %v1249
      %v1269 = vmul.f32 %v1176, %v1249
      %v1270 = vmul.f32 %v1181, %v1249
      %v1271 = vmul.f32 %v1186, %v1249
      %v1272 = vmul.f32 %v1191, %v1249
      %v1273 = vmul.f32 %v1196, %v1249
      %v1274 = vmul.f32 %v1201, %v1249
      %v1275 = vmul.f32 %v1206, %v1249
      %v1276 = vmul.f32 %v1211, %v1249
      %v1277 = vmul.f32 %v1216, %v1249
      %v1278 = vmul.f32 %v1221, %v1249
      %v1279 = vmul.f32 %v1226, %v1249
      %v1280 = vmul.f32 %v1231, %v1249
      %v1281 = vmul.f32 %v1236, %v1249
      %v1282 = vmul.f32 %v1241, %v1249
      %v1283 = vld [vmem:[%s3] sm:$0x1]
      %v1285 = vlaneseq
      %v1286 = vshrl.u32 %v1285, 7
      %v1287 = vsub.s32 0, %v1286
      %v1288 = vrot.slane %v1283, %v1287
      %v1290 = vadd.f32 %v1251, %v1288
      %v1291 = vadd.f32 %v1252, %v1288
      %v1292 = vadd.f32 %v1253, %v1288
      %v1293 = vadd.f32 %v1254, %v1288
      %v1294 = vadd.f32 %v1255, %v1288
      %v1295 = vadd.f32 %v1256, %v1288
      %v1296 = vadd.f32 %v1257, %v1288
      %v1297 = vadd.f32 %v1258, %v1288
      %v1298 = vadd.f32 %v1259, %v1288
      %v1299 = vadd.f32 %v1260, %v1288
      %v1300 = vadd.f32 %v1261, %v1288
      %v1301 = vadd.f32 %v1262, %v1288
      %v1302 = vadd.f32 %v1263, %v1288
      %v1303 = vadd.f32 %v1264, %v1288
      %v1304 = vadd.f32 %v1265, %v1288
      %v1305 = vadd.f32 %v1266, %v1288
      %v1306 = vadd.f32 %v1267, %v1288
      %v1307 = vadd.f32 %v1268, %v1288
      %v1308 = vadd.f32 %v1269, %v1288
      %v1309 = vadd.f32 %v1270, %v1288
      %v1310 = vadd.f32 %v1271, %v1288
      %v1311 = vadd.f32 %v1272, %v1288
      %v1312 = vadd.f32 %v1273, %v1288
      %v1313 = vadd.f32 %v1274, %v1288
      %v1314 = vadd.f32 %v1275, %v1288
      %v1315 = vadd.f32 %v1276, %v1288
      %v1316 = vadd.f32 %v1277, %v1288
      %v1317 = vadd.f32 %v1278, %v1288
      %v1318 = vadd.f32 %v1279, %v1288
      %v1319 = vadd.f32 %v1280, %v1288
      %v1320 = vadd.f32 %v1281, %v1288
      %v1321 = vadd.f32 %v1282, %v1288
      %v1322 = vmax.f32 %v1290, 0.0
      %v1323 = vmax.f32 %v1291, 0.0
      %v1324 = vmax.f32 %v1292, 0.0
      %v1325 = vmax.f32 %v1293, 0.0
      %v1326 = vmax.f32 %v1294, 0.0
      %v1327 = vmax.f32 %v1295, 0.0
      %v1328 = vmax.f32 %v1296, 0.0
      %v1329 = vmax.f32 %v1297, 0.0
      %v1330 = vmax.f32 %v1298, 0.0
      %v1331 = vmax.f32 %v1299, 0.0
      %v1332 = vmax.f32 %v1300, 0.0
      %v1333 = vmax.f32 %v1301, 0.0
      %v1334 = vmax.f32 %v1302, 0.0
      %v1335 = vmax.f32 %v1303, 0.0
      %v1336 = vmax.f32 %v1304, 0.0
      %v1337 = vmax.f32 %v1305, 0.0
      %v1338 = vmax.f32 %v1306, 0.0
      %v1339 = vmax.f32 %v1307, 0.0
      %v1340 = vmax.f32 %v1308, 0.0
      %v1341 = vmax.f32 %v1309, 0.0
      %v1342 = vmax.f32 %v1310, 0.0
      %v1343 = vmax.f32 %v1311, 0.0
      %v1344 = vmax.f32 %v1312, 0.0
      %v1345 = vmax.f32 %v1313, 0.0
      %v1346 = vmax.f32 %v1314, 0.0
      %v1347 = vmax.f32 %v1315, 0.0
      %v1348 = vmax.f32 %v1316, 0.0
      %v1349 = vmax.f32 %v1317, 0.0
      %v1350 = vmax.f32 %v1318, 0.0
      %v1351 = vmax.f32 %v1319, 0.0
      %v1352 = vmax.f32 %v1320, 0.0
      %v1353 = vmax.f32 %v1321, 0.0
      %v1354 = vsel %vm472, %v1322, -inf
      %v1355 = vsel %vm472, %v1323, -inf
      %v1356 = vmax.f32 %v1354, %v1355
      %v1357 = vsel %vm472, %v1324, -inf
      %v1358 = vmax.f32 %v1356, %v1357
      %v1359 = vsel %vm472, %v1325, -inf
      %v1360 = vmax.f32 %v1358, %v1359
      %v1361 = vsel %vm472, %v1326, -inf
      %v1362 = vmax.f32 %v1360, %v1361
      %v1363 = vsel %vm472, %v1327, -inf
      %v1364 = vmax.f32 %v1362, %v1363
      %v1365 = vsel %vm472, %v1328, -inf
      %v1366 = vmax.f32 %v1364, %v1365
      %v1367 = vsel %vm472, %v1329, -inf
      %v1368 = vmax.f32 %v1366, %v1367
      %v1369 = vsel %vm472, %v1330, -inf
      %v1370 = vsel %vm472, %v1331, -inf
      %v1371 = vmax.f32 %v1369, %v1370
      %v1372 = vsel %vm472, %v1332, -inf
      %v1373 = vmax.f32 %v1371, %v1372
      %v1374 = vsel %vm472, %v1333, -inf
      %v1375 = vmax.f32 %v1373, %v1374
      %v1376 = vsel %vm472, %v1334, -inf
      %v1377 = vmax.f32 %v1375, %v1376
      %v1378 = vsel %vm472, %v1335, -inf
      %v1379 = vmax.f32 %v1377, %v1378
      %v1380 = vsel %vm472, %v1336, -inf
      %v1381 = vmax.f32 %v1379, %v1380
      %v1382 = vsel %vm472, %v1337, -inf
      %v1383 = vmax.f32 %v1381, %v1382
      %v1384 = vsel %vm472, %v1338, -inf
      %v1385 = vsel %vm472, %v1339, -inf
      %v1386 = vmax.f32 %v1384, %v1385
      %v1387 = vsel %vm472, %v1340, -inf
      %v1388 = vmax.f32 %v1386, %v1387
      %v1389 = vsel %vm472, %v1341, -inf
      %v1390 = vmax.f32 %v1388, %v1389
      %v1391 = vsel %vm472, %v1342, -inf
      %v1392 = vmax.f32 %v1390, %v1391
      %v1393 = vsel %vm472, %v1343, -inf
      %v1394 = vmax.f32 %v1392, %v1393
      %v1395 = vsel %vm472, %v1344, -inf
      %v1396 = vmax.f32 %v1394, %v1395
      %v1397 = vsel %vm472, %v1345, -inf
      %v1398 = vmax.f32 %v1396, %v1397
      %v1399 = vsel %vm472, %v1346, -inf
      %v1400 = vsel %vm472, %v1347, -inf
      %v1401 = vmax.f32 %v1399, %v1400
      %v1402 = vsel %vm472, %v1348, -inf
      %v1403 = vmax.f32 %v1401, %v1402
      %v1404 = vsel %vm472, %v1349, -inf
      %v1405 = vmax.f32 %v1403, %v1404
      %v1406 = vsel %vm472, %v1350, -inf
      %v1407 = vmax.f32 %v1405, %v1406
      %v1408 = vsel %vm472, %v1351, -inf
      %v1409 = vmax.f32 %v1407, %v1408
      %v1410 = vsel %vm472, %v1352, -inf
      %v1411 = vmax.f32 %v1409, %v1410
      %v1412 = vsel %vm472, %v1353, -inf
      %v1413 = vmax.f32 %v1411, %v1412
      %1414 = vst.msk [vmem:[%s238] sm:$0xff] %vm472, %v1368
      %1415 = vst.msk [vmem:[%s238 + $0x8] sm:$0xff] %vm472, %v1383
      %1416 = vst.msk [vmem:[%s238 + $0x10] sm:$0xff] %vm472, %v1398
      %1417 = vst.msk [vmem:[%s238 + $0x18] sm:$0xff] %vm472, %v1413
      %s1418 = smul.u32 4, %s20
      %p1419 = scmp.lt.s32.totalorder %s19, 1
      %s1420 = scalar_select %p1419, %s19, 1
      %p1421 = scmp.lt.s32.totalorder %s1418, 15
      %s1422 = scalar_select %p1421, %s1418, 15
      %s1423 = smul.addr %s1420, 16
      %s1424 = sadd.s32 %s1422, %s1423
      %s1425 = smul.addr %s1424, 8
      %s1426 = scalar_lea.vmem %s4, %s1425
      // Predicated region
      $region37: #{conventional_net_forward.7} parent=35 // pred_check
        %p1427 = pneg %p138
      $region38: #{conventional_net_forward.7} parent=35 // pred_check_branch
        %1429 = sbr.rel (%p1427) target = $region40
      $region39: #{conventional_net_forward.7} parent=35 // pred_region
        %s1430 = smul.u32 4, %s20
      $region40: #{conventional_net_forward.7} parent=35 // pred_fallthru
        _
    $region36: #{conventional_net_forward.7} parent=5 // pred_fallthru
      _
    %p1431 = scmp.le.s32.totalorder 2, %s10
    // Predicated region
    $region41: #{conventional_net_forward.7} parent=5 // pred_check
      %p1432 = pneg %p1431
    $region42: #{conventional_net_forward.7} parent=5 // pred_check_branch
      %1434 = sbr.rel (%p1432) target = $region44
    $region43: #{conventional_net_forward.7} parent=5 // pred_region
      %s1435 = ssub.s32 %s10, 2
      // Predicated region
      $region45: #{conventional_net_forward.7} parent=43 // pred_check
        %p1436 = pneg %p144
      $region46: #{conventional_net_forward.7} parent=43 // pred_check_branch
        %1438 = sbr.rel (%p1436) target = $region48
      $region47: #{conventional_net_forward.7} parent=43 // pred_region
        %s1439 = smul.u32 4, %s22
        %p1440 = scmp.lt.s32.totalorder %s21, 1
        %s1441 = scalar_select %p1440, %s21, 1
        %p1442 = scmp.lt.s32.totalorder %s1439, 15
        %s1443 = scalar_select %p1442, %s1439, 15
        %s1444 = smul.addr %s1441, 16
        %s1445 = sadd.s32 %s1443, %s1444
        %s1446 = smul.addr %s1445, 8
        %s1447 = scalar_lea.vmem %s4, %s1446
      $region48: #{conventional_net_forward.7} parent=43 // pred_fallthru
        _
    $region44: #{conventional_net_forward.7} parent=5 // pred_fallthru
      _
  $region6: #{conventional_net_forward.7} parent=0 // loop_footer
    %s14 = sadd.s32 1, %s10
  $region7: #{conventional_net_forward.7} parent=0 // loop_footer_branch
    %9 = sbr.rel target = $region3
  $region8: #{conventional_net_forward.7} parent=0 // loop_exit
    _

// kernel: conventional_net_forward.8
$region0: #{conventional_net_forward.8}
  #allocation0 [shape = 'u32[]', space=smem, size = 0x4, offset = 0x4, fixed_abs, tag = 'smem constant byte address 0x4 - core index']
  #allocation1 [shape = 'u32[144,128]{1,0:T(1,128)}', space=vmem, size = 0x12000, scoped, tag = 'internal scratch']
  %s0 = inlined_call_operand.vmem [shape: f32[2,16,8,576], index: 0, kind: input, shape index: {}]
  %s1 = inlined_call_operand.vmem [shape: f32[576,64], index: 1, kind: input, shape index: {}]
  %s2 = inlined_call_operand.vmem [shape: f32[1,64], index: 2, kind: input, shape index: {}]
  %s3 = inlined_call_operand.vmem [shape: f32[1,64], index: 3, kind: input, shape index: {}]
  %s4 = inlined_call_operand.vmem [shape: f32[2,4,8,64], index: 4, kind: output, shape index: {}]
  %s5 = sld [smem:[#allocation0]]
  $region49: #{conventional_net_forward.8} parent=0
    _
  %s7 = ssub.s32 1, %s5
  %s8 = scalar_select 0, %s7, %s5
  loop: start=0, step=1, limit=4
  $region2: #{conventional_net_forward.8} parent=0 // loop_pre_header
    _
  $region3: #{conventional_net_forward.8} parent=0 // loop_header
    %s10 = sphi 0, %s14
    %p11 = scmp.ge.s32.totalorder %s10, 4
    %s17 = sphi 0, %s29
    %s18 = sphi 0, %s25
    %s19 = sphi 0, %s17
    %s20 = sphi 0, %s18
    %s21 = sphi 0, %s19
    %s22 = sphi 0, %s20
    %s34 = sphi 0, %s36
    %s37 = sphi 0, %s34
    %s38 = sphi 0, %s37
    %s54 = sphi 0, %s38
    %s58 = sphi 0, %s58
    %s60 = sphi 0, %s58
    %s61 = sphi 0, %s60
    %s75 = sphi 0, %s61
    %s79 = sphi 0, %s79
    %s81 = sphi 0, %s79
    %s82 = sphi 0, %s81
    %s96 = sphi 0, %s82
    %s100 = sphi 0, %s100
    %s102 = sphi 0, %s100
    %s103 = sphi 0, %s102
    %s117 = sphi 0, %s103
    %s125 = sphi 0, %s127
    %s128 = sphi 0, %s125
    %s129 = sphi 0, %s128
    %s145 = sphi 0, %s129
  $region4: #{conventional_net_forward.8} parent=0 // loop_header_branch
    %13 = sbr.rel (%p11) target = $region8
  $region5: #{conventional_net_forward.8} parent=0 // loop_body
    %s15 = ssub.s32 %s10, 1
    %s16 = ssub.s32 %s10, 2
    %s23 = sadd.s32 1, %s18
    %p24 = scmp.ge.s32.totalorder %s23, 1
    %s25 = scalar_select %p24, 0, %s23
    %s26 = sadd.s32 1, %s17
    %s27 = scalar_select %p24, %s26, %s17
    %p28 = scmp.ge.s32.totalorder %s27, 2
    %s29 = scalar_select %p28, 0, %s27
    %s30 = ssub.s32 %s17, %s29
    %s31 = ssub.s32 %s18, %s25
    %s32 = sor.u32 %s30, %s31
    %p33 = scmp.eq.s32.totalorder %s32, 0
    %s35 = sadd.s32 %s34, 1
    %s36 = scalar_select %p33, %s34, %s35
    %p39 = pneg %p33
    %p40 = scmp.eq.s32.totalorder %s10, 1
    %p41 = por %p39, %p40
    %p42 = scmp.ne.s32.totalorder %s34, %s37
    %p43 = scmp.eq.s32.totalorder %s10, 0
    %p44 = por %p42, %p43
    %p45 = scmp.ne.s32.totalorder %s34, %s37
    %p46 = scmp.eq.s32.totalorder %s15, 1
    %p47 = por %p45, %p46
    %p48 = scmp.ne.s32.totalorder %s37, %s38
    %p49 = scmp.eq.s32.totalorder %s15, 0
    %p50 = por %p48, %p49
    %p51 = scmp.ne.s32.totalorder %s37, %s38
    %p52 = scmp.eq.s32.totalorder %s16, 1
    %p53 = por %p51, %p52
    %p55 = scmp.ne.s32.totalorder %s38, %s54
    %p56 = scmp.eq.s32.totalorder %s16, 0
    %p57 = por %p55, %p56
    %s59 = sadd.s32 %s58, 1
    %p62 = scmp.eq.s32.totalorder %s10, 1
    %p63 = scmp.ne.s32.totalorder %s58, %s60
    %p64 = scmp.eq.s32.totalorder %s10, 0
    %p65 = por %p63, %p64
    %p66 = scmp.ne.s32.totalorder %s58, %s60
    %p67 = scmp.eq.s32.totalorder %s15, 1
    %p68 = por %p66, %p67
    %p69 = scmp.ne.s32.totalorder %s60, %s61
    %p70 = scmp.eq.s32.totalorder %s15, 0
    %p71 = por %p69, %p70
    %p72 = scmp.ne.s32.totalorder %s60, %s61
    %p73 = scmp.eq.s32.totalorder %s16, 1
    %p74 = por %p72, %p73
    %p76 = scmp.ne.s32.totalorder %s61, %s75
    %p77 = scmp.eq.s32.totalorder %s16, 0
    %p78 = por %p76, %p77
    %s80 = sadd.s32 %s79, 1
    %p83 = scmp.eq.s32.totalorder %s10, 1
    %p84 = scmp.ne.s32.totalorder %s79, %s81
    %p85 = scmp.eq.s32.totalorder %s10, 0
    %p86 = por %p84, %p85
    %p87 = scmp.ne.s32.totalorder %s79, %s81
    %p88 = scmp.eq.s32.totalorder %s15, 1
    %p89 = por %p87, %p88
    %p90 = scmp.ne.s32.totalorder %s81, %s82
    %p91 = scmp.eq.s32.totalorder %s15, 0
    %p92 = por %p90, %p91
    %p93 = scmp.ne.s32.totalorder %s81, %s82
    %p94 = scmp.eq.s32.totalorder %s16, 1
    %p95 = por %p93, %p94
    %p97 = scmp.ne.s32.totalorder %s82, %s96
    %p98 = scmp.eq.s32.totalorder %s16, 0
    %p99 = por %p97, %p98
    %s101 = sadd.s32 %s100, 1
    %p104 = scmp.eq.s32.totalorder %s10, 1
    %p105 = scmp.ne.s32.totalorder %s100, %s102
    %p106 = scmp.eq.s32.totalorder %s10, 0
    %p107 = por %p105, %p106
    %p108 = scmp.ne.s32.totalorder %s100, %s102
    %p109 = scmp.eq.s32.totalorder %s15, 1
    %p110 = por %p108, %p109
    %p111 = scmp.ne.s32.totalorder %s102, %s103
    %p112 = scmp.eq.s32.totalorder %s15, 0
    %p113 = por %p111, %p112
    %p114 = scmp.ne.s32.totalorder %s102, %s103
    %p115 = scmp.eq.s32.totalorder %s16, 1
    %p116 = por %p114, %p115
    %p118 = scmp.ne.s32.totalorder %s103, %s117
    %p119 = scmp.eq.s32.totalorder %s16, 0
    %p120 = por %p118, %p119
    %s121 = ssub.s32 %s17, %s29
    %s122 = ssub.s32 %s18, %s25
    %s123 = sor.u32 %s121, %s122
    %p124 = scmp.eq.s32.totalorder %s123, 0
    %s126 = sadd.s32 %s125, 1
    %s127 = scalar_select %p124, %s125, %s126
    %p130 = pneg %p124
    %p131 = scmp.eq.s32.totalorder %s10, 1
    %p132 = por %p130, %p131
    %p133 = scmp.ne.s32.totalorder %s125, %s128
    %p134 = scmp.eq.s32.totalorder %s10, 0
    %p135 = por %p133, %p134
    %p136 = scmp.ne.s32.totalorder %s125, %s128
    %p137 = scmp.eq.s32.totalorder %s15, 1
    %p138 = por %p136, %p137
    %p139 = scmp.ne.s32.totalorder %s128, %s129
    %p140 = scmp.eq.s32.totalorder %s15, 0
    %p141 = por %p139, %p140
    %p142 = scmp.ne.s32.totalorder %s128, %s129
    %p143 = scmp.eq.s32.totalorder %s16, 1
    %p144 = por %p142, %p143
    %p146 = scmp.ne.s32.totalorder %s129, %s145
    %p147 = scmp.eq.s32.totalorder %s16, 0
    %p148 = por %p146, %p147
    %p149 = scmp.le.s32.totalorder 1, %s10
    %p150 = scmp.lt.s32.totalorder %s10, 3
    %p151 = pnand %p149, %p150
    %p152 = pneg %p151
    // Predicated region
    $region9: #{conventional_net_forward.8} parent=5 // pred_check
      _
    $region10: #{conventional_net_forward.8} parent=5 // pred_check_branch
      %154 = sbr.rel (%p151) target = $region12
    $region11: #{conventional_net_forward.8} parent=5 // pred_region
      %s155 = ssub.s32 %s10, 1
      // Predicated region
      $region13: #{conventional_net_forward.8} parent=11 // pred_check
        %p156 = pneg %p71
      $region14: #{conventional_net_forward.8} parent=11 // pred_check_branch
        %158 = sbr.rel (%p156) target = $region16
      $region15: #{conventional_net_forward.8} parent=11 // pred_region
        _
      $region16: #{conventional_net_forward.8} parent=11 // pred_fallthru
        _
      // Predicated region
      $region17: #{conventional_net_forward.8} parent=11 // pred_check
        %p159 = pneg %p92
      $region18: #{conventional_net_forward.8} parent=11 // pred_check_branch
        %161 = sbr.rel (%p159) target = $region20
      $region19: #{conventional_net_forward.8} parent=11 // pred_region
        _
      $region20: #{conventional_net_forward.8} parent=11 // pred_fallthru
        _
      // Predicated region
      $region21: #{conventional_net_forward.8} parent=11 // pred_check
        %p162 = pneg %p113
      $region22: #{conventional_net_forward.8} parent=11 // pred_check_branch
        %164 = sbr.rel (%p162) target = $region24
      $region23: #{conventional_net_forward.8} parent=11 // pred_region
        _
      $region24: #{conventional_net_forward.8} parent=11 // pred_fallthru
        _
    $region12: #{conventional_net_forward.8} parent=5 // pred_fallthru
      _
    %p165 = scmp.lt.s32.totalorder %s10, 2
    // Predicated region
    $region25: #{conventional_net_forward.8} parent=5 // pred_check
      %p166 = pneg %p165
    $region26: #{conventional_net_forward.8} parent=5 // pred_check_branch
      %168 = sbr.rel (%p166) target = $region28
    $region27: #{conventional_net_forward.8} parent=5 // pred_region
      // Predicated region
      $region29: #{conventional_net_forward.8} parent=27 // pred_check
        %p169 = pneg %p44
      $region30: #{conventional_net_forward.8} parent=27 // pred_check_branch
        %171 = sbr.rel (%p169) target = $region32
      $region31: #{conventional_net_forward.8} parent=27 // pred_region
        %s172 = smul.u32 16, %s18
        %p173 = scmp.lt.s32.totalorder %s17, 1
        %s174 = scalar_select %p173, %s17, 1
        %p175 = scmp.lt.s32.totalorder %s172, 15
        %s176 = scalar_select %p175, %s172, 15
        %s177 = smul.addr %s176, 5
        %s178 = smul.addr %s174, 80
        %s179 = sadd.s32 %s177, %s178
        %s180 = smul.addr %s179, 8
        %s181 = scalar_lea.vmem %s0, %s180
        %s182 = smul.u32 16, %s18
      $region32: #{conventional_net_forward.8} parent=27 // pred_fallthru
        _
    $region28: #{conventional_net_forward.8} parent=5 // pred_fallthru
      _
    %p183 = scmp.le.s32.totalorder 1, %s10
    %p184 = scmp.lt.s32.totalorder %s10, 3
    %p185 = pnand %p183, %p184
    %p186 = pneg %p185
    // Predicated region
    $region33: #{conventional_net_forward.8} parent=5 // pred_check
      _
    $region34: #{conventional_net_forward.8} parent=5 // pred_check_branch
      %188 = sbr.rel (%p185) target = $region36
    $region35: #{conventional_net_forward.8} parent=5 // pred_region
      %s189 = ssub.s32 %s10, 1
      %s190 = smul.u32 16, %s20
      %p191 = scmp.lt.s32.totalorder %s19, 1
      %s192 = scalar_select %p191, %s19, 1
      %p193 = scmp.lt.s32.totalorder %s190, 15
      %s194 = scalar_select %p193, %s190, 15
      %s195 = smul.addr %s194, 5
      %s196 = smul.addr %s192, 80
      %s197 = sadd.s32 %s195, %s196
      %s198 = smul.addr %s197, 8
      %s199 = scalar_lea.vmem %s0, %s198
      %p200 = pneg %p50
      %p201 = pneg %p47
      %p202 = pneg %p71
      %p203 = pneg %p68
      %p204 = pneg %p92
      %p205 = pneg %p89
      %p206 = pneg %p113
      %p207 = pneg %p110
      %p208 = pneg %p141
      %p209 = pneg %p138
      %s210 = smul.u32 4, %s20
      %p211 = scmp.lt.s32.totalorder %s19, 1
      %s212 = scalar_select %p211, %s19, 1
      %p213 = scmp.lt.s32.totalorder %s210, 3
      %s214 = scalar_select %p213, %s210, 3
      %s215 = smul.addr %s212, 4
      %s216 = sadd.s32 %s214, %s215
      %s217 = smul.addr %s216, 8
      %s218 = scalar_lea.vmem %s4, %s217
      %s219 = smul.u32 16, %s20
      %p220 = scmp.lt.s32.totalorder %s19, 1
      %s221 = scalar_select %p220, %s19, 1
      %p222 = scmp.lt.s32.totalorder %s219, 15
      %s223 = scalar_select %p222, %s219, 15
      %s224 = smul.addr %s223, 5
      %s225 = smul.addr %s221, 80
      %s226 = sadd.s32 %s224, %s225
      %s227 = smul.addr %s226, 8
      %s228 = scalar_lea.vmem %s0, %s227
      %s229 = smul.u32 16, %s20
      %s230 = smul.u32 4, %s20
      %p231 = scmp.lt.s32.totalorder %s19, 1
      %s232 = scalar_select %p231, %s19, 1
      %p233 = scmp.lt.s32.totalorder %s230, 3
      %s234 = scalar_select %p233, %s230, 3
      %s235 = smul.addr %s232, 4
      %s236 = sadd.s32 %s234, %s235
      %s237 = smul.addr %s236, 8
      %s238 = scalar_lea.vmem %s4, %s237
      %s239 = smul.u32 4, %s20
      %v240 = vld [vmem:[%s228] sm:$0xff]
      %v241 = vld [vmem:[%s228 + $0x8] sm:$0xff]
      %v242 = vld [vmem:[%s228 + $0x10] sm:$0xff]
      %v243 = vld [vmem:[%s228 + $0x18] sm:$0xff]
      %v244 = vld [vmem:[%s228 + $0x20] sm:$0xff]
      %v245 = vld [vmem:[%s228 + $0x28] sm:$0xff]
      %v246 = vld [vmem:[%s228 + $0x30] sm:$0xff]
      %v247 = vld [vmem:[%s228 + $0x38] sm:$0xff]
      %v248 = vld [vmem:[%s228 + $0x40] sm:$0xff]
      %v249 = vld [vmem:[%s228 + $0x48] sm:$0xff]
      %v250 = vld [vmem:[%s228 + $0x50] sm:$0xff]
      %v251 = vld [vmem:[%s228 + $0x58] sm:$0xff]
      %v252 = vld [vmem:[%s228 + $0x60] sm:$0xff]
      %v253 = vld [vmem:[%s228 + $0x68] sm:$0xff]
      %v254 = vld [vmem:[%s228 + $0x70] sm:$0xff]
      %v255 = vld [vmem:[%s228 + $0x78] sm:$0xff]
      %v256 = vld [vmem:[%s228 + $0x80] sm:$0xff]
      %v257 = vld [vmem:[%s228 + $0x88] sm:$0xff]
      %v258 = vld [vmem:[%s228 + $0x90] sm:$0xff]
      %v259 = vld [vmem:[%s228 + $0x98] sm:$0xff]
      %v260 = vld [vmem:[%s228 + $0xa0] sm:$0xff]
      %v261 = vld [vmem:[%s228 + $0xa8] sm:$0xff]
      %v262 = vld [vmem:[%s228 + $0xb0] sm:$0xff]
      %v263 = vld [vmem:[%s228 + $0xb8] sm:$0xff]
      %v264 = vld [vmem:[%s228 + $0xc0] sm:$0xff]
      %v265 = vld [vmem:[%s228 + $0xc8] sm:$0xff]
      %v266 = vld [vmem:[%s228 + $0xd0] sm:$0xff]
      %v267 = vld [vmem:[%s228 + $0xd8] sm:$0xff]
      %v268 = vld [vmem:[%s228 + $0xe0] sm:$0xff]
      %v269 = vld [vmem:[%s228 + $0xe8] sm:$0xff]
      %v270 = vld [vmem:[%s228 + $0xf0] sm:$0xff]
      %v271 = vld [vmem:[%s228 + $0xf8] sm:$0xff]
      %v272 = vld [vmem:[%s228 + $0x100] sm:$0xff]
      %v273 = vld [vmem:[%s228 + $0x108] sm:$0xff]
      %v274 = vld [vmem:[%s228 + $0x110] sm:$0xff]
      %v275 = vld [vmem:[%s228 + $0x118] sm:$0xff]
      %v276 = vld [vmem:[%s228 + $0x120] sm:$0xff]
      %v277 = vld [vmem:[%s228 + $0x128] sm:$0xff]
      %v278 = vld [vmem:[%s228 + $0x130] sm:$0xff]
      %v279 = vld [vmem:[%s228 + $0x138] sm:$0xff]
      %v280 = vld [vmem:[%s228 + $0x140] sm:$0xff]
      %v281 = vld [vmem:[%s228 + $0x148] sm:$0xff]
      %v282 = vld [vmem:[%s228 + $0x150] sm:$0xff]
      %v283 = vld [vmem:[%s228 + $0x158] sm:$0xff]
      %v284 = vld [vmem:[%s228 + $0x160] sm:$0xff]
      %v285 = vld [vmem:[%s228 + $0x168] sm:$0xff]
      %v286 = vld [vmem:[%s228 + $0x170] sm:$0xff]
      %v287 = vld [vmem:[%s228 + $0x178] sm:$0xff]
      %v288 = vld [vmem:[%s228 + $0x180] sm:$0xff]
      %v289 = vld [vmem:[%s228 + $0x188] sm:$0xff]
      %v290 = vld [vmem:[%s228 + $0x190] sm:$0xff]
      %v291 = vld [vmem:[%s228 + $0x198] sm:$0xff]
      %v292 = vld [vmem:[%s228 + $0x1a0] sm:$0xff]
      %v293 = vld [vmem:[%s228 + $0x1a8] sm:$0xff]
      %v294 = vld [vmem:[%s228 + $0x1b0] sm:$0xff]
      %v295 = vld [vmem:[%s228 + $0x1b8] sm:$0xff]
      %v296 = vld [vmem:[%s228 + $0x1c0] sm:$0xff]
      %v297 = vld [vmem:[%s228 + $0x1c8] sm:$0xff]
      %v298 = vld [vmem:[%s228 + $0x1d0] sm:$0xff]
      %v299 = vld [vmem:[%s228 + $0x1d8] sm:$0xff]
      %v300 = vld [vmem:[%s228 + $0x1e0] sm:$0xff]
      %v301 = vld [vmem:[%s228 + $0x1e8] sm:$0xff]
      %v302 = vld [vmem:[%s228 + $0x1f0] sm:$0xff]
      %v303 = vld [vmem:[%s228 + $0x1f8] sm:$0xff]
      %v304 = vld [vmem:[%s228 + $0x200] sm:$0xff]
      %v305 = vld [vmem:[%s228 + $0x208] sm:$0xff]
      %v306 = vld [vmem:[%s228 + $0x210] sm:$0xff]
      %v307 = vld [vmem:[%s228 + $0x218] sm:$0xff]
      %v308 = vld [vmem:[%s228 + $0x220] sm:$0xff]
      %v309 = vld [vmem:[%s228 + $0x228] sm:$0xff]
      %v310 = vld [vmem:[%s228 + $0x230] sm:$0xff]
      %v311 = vld [vmem:[%s228 + $0x238] sm:$0xff]
      %v312 = vld [vmem:[%s228 + $0x240] sm:$0xff]
      %v313 = vld [vmem:[%s228 + $0x248] sm:$0xff]
      %v314 = vld [vmem:[%s228 + $0x250] sm:$0xff]
      %v315 = vld [vmem:[%s228 + $0x258] sm:$0xff]
      %v316 = vld [vmem:[%s228 + $0x260] sm:$0xff]
      %v317 = vld [vmem:[%s228 + $0x268] sm:$0xff]
      %v318 = vld [vmem:[%s228 + $0x270] sm:$0xff]
      %v319 = vld [vmem:[%s228 + $0x278] sm:$0xff]
      %v320 = vld [vmem:[%s1] sm:$0xff]
      %v321 = vld [vmem:[%s1 + $0x8] sm:$0xff]
      %v322 = vld [vmem:[%s1 + $0x10] sm:$0xff]
      %v323 = vld [vmem:[%s1 + $0x18] sm:$0xff]
      %v324 = vld [vmem:[%s1 + $0x20] sm:$0xff]
      %v325 = vld [vmem:[%s1 + $0x28] sm:$0xff]
      %v326 = vld [vmem:[%s1 + $0x30] sm:$0xff]
      %v327 = vld [vmem:[%s1 + $0x38] sm:$0xff]
      %v328 = vld [vmem:[%s1 + $0x40] sm:$0xff]
      %v329 = vld [vmem:[%s1 + $0x48] sm:$0xff]
      %v330 = vld [vmem:[%s1 + $0x50] sm:$0xff]
      %v331 = vld [vmem:[%s1 + $0x58] sm:$0xff]
      %v332 = vld [vmem:[%s1 + $0x60] sm:$0xff]
      %v333 = vld [vmem:[%s1 + $0x68] sm:$0xff]
      %v334 = vld [vmem:[%s1 + $0x70] sm:$0xff]
      %v335 = vld [vmem:[%s1 + $0x78] sm:$0xff]
      %v336 = vld [vmem:[%s1 + $0x80] sm:$0xff]
      %v337 = vld [vmem:[%s1 + $0x88] sm:$0xff]
      %v338 = vld [vmem:[%s1 + $0x90] sm:$0xff]
      %v339 = vld [vmem:[%s1 + $0x98] sm:$0xff]
      %v340 = vld [vmem:[%s1 + $0xa0] sm:$0xff]
      %v341 = vld [vmem:[%s1 + $0xa8] sm:$0xff]
      %v342 = vld [vmem:[%s1 + $0xb0] sm:$0xff]
      %v343 = vld [vmem:[%s1 + $0xb8] sm:$0xff]
      %v344 = vld [vmem:[%s1 + $0xc0] sm:$0xff]
      %v345 = vld [vmem:[%s1 + $0xc8] sm:$0xff]
      %v346 = vld [vmem:[%s1 + $0xd0] sm:$0xff]
      %v347 = vld [vmem:[%s1 + $0xd8] sm:$0xff]
      %v348 = vld [vmem:[%s1 + $0xe0] sm:$0xff]
      %v349 = vld [vmem:[%s1 + $0xe8] sm:$0xff]
      %v350 = vld [vmem:[%s1 + $0xf0] sm:$0xff]
      %v351 = vld [vmem:[%s1 + $0xf8] sm:$0xff]
      %v352 = vld [vmem:[%s1 + $0x100] sm:$0xff]
      %v353 = vld [vmem:[%s1 + $0x108] sm:$0xff]
      %v354 = vld [vmem:[%s1 + $0x110] sm:$0xff]
      %v355 = vld [vmem:[%s1 + $0x118] sm:$0xff]
      %v356 = vld [vmem:[%s1 + $0x120] sm:$0xff]
      %v357 = vld [vmem:[%s1 + $0x128] sm:$0xff]
      %v358 = vld [vmem:[%s1 + $0x130] sm:$0xff]
      %v359 = vld [vmem:[%s1 + $0x138] sm:$0xff]
      %v360 = vld [vmem:[%s1 + $0x140] sm:$0xff]
      %v361 = vld [vmem:[%s1 + $0x148] sm:$0xff]
      %v362 = vld [vmem:[%s1 + $0x150] sm:$0xff]
      %v363 = vld [vmem:[%s1 + $0x158] sm:$0xff]
      %v364 = vld [vmem:[%s1 + $0x160] sm:$0xff]
      %v365 = vld [vmem:[%s1 + $0x168] sm:$0xff]
      %v366 = vld [vmem:[%s1 + $0x170] sm:$0xff]
      %v367 = vld [vmem:[%s1 + $0x178] sm:$0xff]
      %v368 = vld [vmem:[%s1 + $0x180] sm:$0xff]
      %v369 = vld [vmem:[%s1 + $0x188] sm:$0xff]
      %v370 = vld [vmem:[%s1 + $0x190] sm:$0xff]
      %v371 = vld [vmem:[%s1 + $0x198] sm:$0xff]
      %v372 = vld [vmem:[%s1 + $0x1a0] sm:$0xff]
      %v373 = vld [vmem:[%s1 + $0x1a8] sm:$0xff]
      %v374 = vld [vmem:[%s1 + $0x1b0] sm:$0xff]
      %v375 = vld [vmem:[%s1 + $0x1b8] sm:$0xff]
      %v376 = vld [vmem:[%s1 + $0x1c0] sm:$0xff]
      %v377 = vld [vmem:[%s1 + $0x1c8] sm:$0xff]
      %v378 = vld [vmem:[%s1 + $0x1d0] sm:$0xff]
      %v379 = vld [vmem:[%s1 + $0x1d8] sm:$0xff]
      %v380 = vld [vmem:[%s1 + $0x1e0] sm:$0xff]
      %v381 = vld [vmem:[%s1 + $0x1e8] sm:$0xff]
      %v382 = vld [vmem:[%s1 + $0x1f0] sm:$0xff]
      %v383 = vld [vmem:[%s1 + $0x1f8] sm:$0xff]
      %v384 = vld [vmem:[%s1 + $0x200] sm:$0xff]
      %v385 = vld [vmem:[%s1 + $0x208] sm:$0xff]
      %v386 = vld [vmem:[%s1 + $0x210] sm:$0xff]
      %v387 = vld [vmem:[%s1 + $0x218] sm:$0xff]
      %v388 = vld [vmem:[%s1 + $0x220] sm:$0xff]
      %v389 = vld [vmem:[%s1 + $0x228] sm:$0xff]
      %v390 = vld [vmem:[%s1 + $0x230] sm:$0xff]
      %v391 = vld [vmem:[%s1 + $0x238] sm:$0xff]
      %vm392 = vcmask 523264
      %v394 = vsel %vm392, %v244, 0
      %v397 = vsel %vm392, %v249, 0
      %v400 = vsel %vm392, %v254, 0
      %v403 = vsel %vm392, %v259, 0
      %v406 = vsel %vm392, %v264, 0
      %v409 = vsel %vm392, %v269, 0
      %v412 = vsel %vm392, %v274, 0
      %v415 = vsel %vm392, %v279, 0
      %v418 = vsel %vm392, %v284, 0
      %v421 = vsel %vm392, %v289, 0
      %v424 = vsel %vm392, %v294, 0
      %v427 = vsel %vm392, %v299, 0
      %v430 = vsel %vm392, %v304, 0
      %v433 = vsel %vm392, %v309, 0
      %v436 = vsel %vm392, %v314, 0
      %v439 = vsel %vm392, %v319, 0
      %441 = vmatprep.subr.mxu0 0.0
      %442 = vmatpush1.msra.mxu0 %v320
      %443 = vmatprep.subr.mxu0 0.0
      %444 = vmatpush1.msra.mxu0 %v321
      %445 = vmatprep.subr.mxu0 0.0
      %446 = vmatpush1.msra.mxu0 %v322
      %447 = vmatprep.subr.mxu0 0.0
      %448 = vmatpush1.msra.mxu0 %v323
      %449 = vmatprep.subr.mxu0 0.0
      %450 = vmatpush1.msra.mxu0 %v324
      %451 = vmatprep.subr.mxu0 0.0
      %452 = vmatpush1.msra.mxu0 %v325
      %453 = vmatprep.subr.mxu0 0.0
      %454 = vmatpush1.msra.mxu0 %v326
      %455 = vmatprep.subr.mxu0 0.0
      %456 = vmatpush1.msra.mxu0 %v327
      %457 = vmatprep.subr.mxu0 0.0
      %458 = vmatpush1.msra.mxu0 %v328
      %459 = vmatprep.subr.mxu0 0.0
      %460 = vmatpush1.msra.mxu0 %v329
      %461 = vmatprep.subr.mxu0 0.0
      %462 = vmatpush1.msra.mxu0 %v330
      %463 = vmatprep.subr.mxu0 0.0
      %464 = vmatpush1.msra.mxu0 %v331
      %465 = vmatprep.subr.mxu0 0.0
      %466 = vmatpush1.msra.mxu0 %v332
      %467 = vmatprep.subr.mxu0 0.0
      %468 = vmatpush1.msra.mxu0 %v333
      %469 = vmatprep.subr.mxu0 0.0
      %470 = vmatpush1.msra.mxu0 %v334
      %471 = vmatprep.subr.mxu0 0.0
      %472 = vmatpush1.msra.mxu0 %v335
      %473 = vmatprep.subr.mxu0 0.0
      %474 = vmatpush1.msra.mxu0 %v336
      %475 = vmatprep.subr.mxu0 0.0
      %476 = vmatpush1.msra.mxu0 %v337
      %477 = vmatprep.subr.mxu0 0.0
      %478 = vmatpush1.msra.mxu0 %v338
      %479 = vmatprep.subr.mxu0 0.0
      %480 = vmatpush1.msra.mxu0 %v339
      %481 = vmatprep.subr.mxu0 0.0
      %482 = vmatpush1.msra.mxu0 %v340
      %483 = vmatprep.subr.mxu0 0.0
      %484 = vmatpush1.msra.mxu0 %v341
      %485 = vmatprep.subr.mxu0 0.0
      %486 = vmatpush1.msra.mxu0 %v342
      %487 = vmatprep.subr.mxu0 0.0
      %488 = vmatpush1.msra.mxu0 %v343
      %489 = vmatprep.subr.mxu0 0.0
      %490 = vmatpush1.msra.mxu0 %v344
      %491 = vmatprep.subr.mxu0 0.0
      %492 = vmatpush1.msra.mxu0 %v345
      %493 = vmatprep.subr.mxu0 0.0
      %494 = vmatpush1.msra.mxu0 %v346
      %495 = vmatprep.subr.mxu0 0.0
      %496 = vmatpush1.msra.mxu0 %v347
      %497 = vmatprep.subr.mxu0 0.0
      %498 = vmatpush1.msra.mxu0 %v348
      %499 = vmatprep.subr.mxu0 0.0
      %500 = vmatpush1.msra.mxu0 %v349
      %501 = vmatprep.subr.mxu0 0.0
      %502 = vmatpush1.msra.mxu0 %v350
      %503 = vmatprep.subr.mxu0 0.0
      %504 = vmatpush1.msra.mxu0 %v351
      %505 = vmatprep.mubr.f32.mxu0 %v241
      %506 = vmatmul.mubr.f32.gmra.mrb[0].mxu0 %v240
      %v507 = vpop.f32.mrb[0].mxu0
      %v508 = vadd.f32 0.0, %v507
      %v509 = vpop.f32.mrb[0].mxu0
      %510 = vmatprep.mubr.f32.mxu0 %v246
      %511 = vmatmul.mubr.f32.gmra.mrb[0].mxu0 %v245
      %v512 = vpop.f32.mrb[0].mxu0
      %v513 = vadd.f32 0.0, %v512
      %v514 = vpop.f32.mrb[0].mxu0
      %515 = vmatprep.mubr.f32.mxu0 %v251
      %516 = vmatmul.mubr.f32.gmra.mrb[0].mxu0 %v250
      %v517 = vpop.f32.mrb[0].mxu0
      %v518 = vadd.f32 0.0, %v517
      %v519 = vpop.f32.mrb[0].mxu0
      %520 = vmatprep.mubr.f32.mxu0 %v256
      %521 = vmatmul.mubr.f32.gmra.mrb[0].mxu0 %v255
      %v522 = vpop.f32.mrb[0].mxu0
      %v523 = vadd.f32 0.0, %v522
      %v524 = vpop.f32.mrb[0].mxu0
      %525 = vmatprep.mubr.f32.mxu0 %v261
      %526 = vmatmul.mubr.f32.gmra.mrb[0].mxu0 %v260
      %v527 = vpop.f32.mrb[0].mxu0
      %v528 = vadd.f32 0.0, %v527
      %v529 = vpop.f32.mrb[0].mxu0
      %530 = vmatprep.mubr.f32.mxu0 %v266
      %531 = vmatmul.mubr.f32.gmra.mrb[0].mxu0 %v265
      %v532 = vpop.f32.mrb[0].mxu0
      %v533 = vadd.f32 0.0, %v532
      %v534 = vpop.f32.mrb[0].mxu0
      %535 = vmatprep.mubr.f32.mxu0 %v271
      %536 = vmatmul.mubr.f32.gmra.mrb[0].mxu0 %v270
      %v537 = vpop.f32.mrb[0].mxu0
      %v538 = vadd.f32 0.0, %v537
      %v539 = vpop.f32.mrb[0].mxu0
      %540 = vmatprep.mubr.f32.mxu0 %v276
      %541 = vmatmul.mubr.f32.gmra.mrb[0].mxu0 %v275
      %v542 = vpop.f32.mrb[0].mxu0
      %v543 = vadd.f32 0.0, %v542
      %v544 = vpop.f32.mrb[0].mxu0
      %545 = vmatprep.mubr.f32.mxu0 %v281
      %546 = vmatmul.mubr.f32.gmra.mrb[0].mxu0 %v280
      %v547 = vpop.f32.mrb[0].mxu0
      %v548 = vadd.f32 0.0, %v547
      %v549 = vpop.f32.mrb[0].mxu0
      %550 = vmatprep.mubr.f32.mxu0 %v286
      %551 = vmatmul.mubr.f32.gmra.mrb[0].mxu0 %v285
      %v552 = vpop.f32.mrb[0].mxu0
      %v553 = vadd.f32 0.0, %v552
      %v554 = vpop.f32.mrb[0].mxu0
      %555 = vmatprep.mubr.f32.mxu0 %v291
      %556 = vmatmul.mubr.f32.gmra.mrb[0].mxu0 %v290
      %v557 = vpop.f32.mrb[0].mxu0
      %v558 = vadd.f32 0.0, %v557
      %v559 = vpop.f32.mrb[0].mxu0
      %560 = vmatprep.mubr.f32.mxu0 %v296
      %561 = vmatmul.mubr.f32.gmra.mrb[0].mxu0 %v295
      %v562 = vpop.f32.mrb[0].mxu0
      %v563 = vadd.f32 0.0, %v562
      %v564 = vpop.f32.mrb[0].mxu0
      %565 = vmatprep.mubr.f32.mxu0 %v301
      %566 = vmatmul.mubr.f32.gmra.mrb[0].mxu0 %v300
      %v567 = vpop.f32.mrb[0].mxu0
      %v568 = vadd.f32 0.0, %v567
      %v569 = vpop.f32.mrb[0].mxu0
      %570 = vmatprep.mubr.f32.mxu0 %v306
      %571 = vmatmul.mubr.f32.gmra.mrb[0].mxu0 %v305
      %v572 = vpop.f32.mrb[0].mxu0
      %v573 = vadd.f32 0.0, %v572
      %v574 = vpop.f32.mrb[0].mxu0
      %575 = vmatprep.mubr.f32.mxu0 %v311
      %576 = vmatmul.mubr.f32.gmra.mrb[0].mxu0 %v310
      %v577 = vpop.f32.mrb[0].mxu0
      %v578 = vadd.f32 0.0, %v577
      %v579 = vpop.f32.mrb[0].mxu0
      %580 = vmatprep.mubr.f32.mxu0 %v316
      %581 = vmatmul.mubr.f32.gmra.mrb[0].mxu0 %v315
      %v582 = vpop.f32.mrb[0].mxu0
      %v583 = vadd.f32 0.0, %v582
      %v584 = vpop.f32.mrb[0].mxu0
      %585 = vdwg.mxu0
      %586 = vmatprep.subr.mxu0 0.0
      %587 = vmatpush1.msra.mxu0 %v352
      %588 = vmatprep.subr.mxu0 0.0
      %589 = vmatpush1.msra.mxu0 %v353
      %590 = vmatprep.subr.mxu0 0.0
      %591 = vmatpush1.msra.mxu0 %v354
      %592 = vmatprep.subr.mxu0 0.0
      %593 = vmatpush1.msra.mxu0 %v355
      %594 = vmatprep.subr.mxu0 0.0
      %595 = vmatpush1.msra.mxu0 %v356
      %596 = vmatprep.subr.mxu0 0.0
      %597 = vmatpush1.msra.mxu0 %v357
      %598 = vmatprep.subr.mxu0 0.0
      %599 = vmatpush1.msra.mxu0 %v358
      %600 = vmatprep.subr.mxu0 0.0
      %601 = vmatpush1.msra.mxu0 %v359
      %602 = vmatprep.subr.mxu0 0.0
      %603 = vmatpush1.msra.mxu0 %v360
      %604 = vmatprep.subr.mxu0 0.0
      %605 = vmatpush1.msra.mxu0 %v361
      %606 = vmatprep.subr.mxu0 0.0
      %607 = vmatpush1.msra.mxu0 %v362
      %608 = vmatprep.subr.mxu0 0.0
      %609 = vmatpush1.msra.mxu0 %v363
      %610 = vmatprep.subr.mxu0 0.0
      %611 = vmatpush1.msra.mxu0 %v364
      %612 = vmatprep.subr.mxu0 0.0
      %613 = vmatpush1.msra.mxu0 %v365
      %614 = vmatprep.subr.mxu0 0.0
      %615 = vmatpush1.msra.mxu0 %v366
      %616 = vmatprep.subr.mxu0 0.0
      %617 = vmatpush1.msra.mxu0 %v367
      %618 = vmatprep.subr.mxu0 0.0
      %619 = vmatpush1.msra.mxu0 %v368
      %620 = vmatprep.subr.mxu0 0.0
      %621 = vmatpush1.msra.mxu0 %v369
      %622 = vmatprep.subr.mxu0 0.0
      %623 = vmatpush1.msra.mxu0 %v370
      %624 = vmatprep.subr.mxu0 0.0
      %625 = vmatpush1.msra.mxu0 %v371
      %626 = vmatprep.subr.mxu0 0.0
      %627 = vmatpush1.msra.mxu0 %v372
      %628 = vmatprep.subr.mxu0 0.0
      %629 = vmatpush1.msra.mxu0 %v373
      %630 = vmatprep.subr.mxu0 0.0
      %631 = vmatpush1.msra.mxu0 %v374
      %632 = vmatprep.subr.mxu0 0.0
      %633 = vmatpush1.msra.mxu0 %v375
      %634 = vmatprep.subr.mxu0 0.0
      %635 = vmatpush1.msra.mxu0 %v376
      %636 = vmatprep.subr.mxu0 0.0
      %637 = vmatpush1.msra.mxu0 %v377
      %638 = vmatprep.subr.mxu0 0.0
      %639 = vmatpush1.msra.mxu0 %v378
      %640 = vmatprep.subr.mxu0 0.0
      %641 = vmatpush1.msra.mxu0 %v379
      %642 = vmatprep.subr.mxu0 0.0
      %643 = vmatpush1.msra.mxu0 %v380
      %644 = vmatprep.subr.mxu0 0.0
      %645 = vmatpush1.msra.mxu0 %v381
      %646 = vmatprep.subr.mxu0 0.0
      %647 = vmatpush1.msra.mxu0 %v382
      %648 = vmatprep.subr.mxu0 0.0
      %649 = vmatpush1.msra.mxu0 %v383
      %650 = vmatprep.mubr.f32.mxu0 %v243
      %651 = vmatmul.mubr.f32.gmra.mrb[0].mxu0 %v242
      %v652 = vpop.f32.mrb[0].mxu0
      %v653 = vadd.f32 %v508, %v652
      %v654 = vpop.f32.mrb[0].mxu0
      %655 = vmatprep.mubr.f32.mxu0 %v248
      %656 = vmatmul.mubr.f32.gmra.mrb[0].mxu0 %v247
      %v657 = vpop.f32.mrb[0].mxu0
      %v658 = vadd.f32 %v513, %v657
      %v659 = vpop.f32.mrb[0].mxu0
      %660 = vmatprep.mubr.f32.mxu0 %v253
      %661 = vmatmul.mubr.f32.gmra.mrb[0].mxu0 %v252
      %v662 = vpop.f32.mrb[0].mxu0
      %v663 = vadd.f32 %v518, %v662
      %v664 = vpop.f32.mrb[0].mxu0
      %665 = vmatprep.mubr.f32.mxu0 %v258
      %666 = vmatmul.mubr.f32.gmra.mrb[0].mxu0 %v257
      %v667 = vpop.f32.mrb[0].mxu0
      %v668 = vadd.f32 %v523, %v667
      %v669 = vpop.f32.mrb[0].mxu0
      %670 = vmatprep.mubr.f32.mxu0 %v263
      %671 = vmatmul.mubr.f32.gmra.mrb[0].mxu0 %v262
      %v672 = vpop.f32.mrb[0].mxu0
      %v673 = vadd.f32 %v528, %v672
      %v674 = vpop.f32.mrb[0].mxu0
      %675 = vmatprep.mubr.f32.mxu0 %v268
      %676 = vmatmul.mubr.f32.gmra.mrb[0].mxu0 %v267
      %v677 = vpop.f32.mrb[0].mxu0
      %v678 = vadd.f32 %v533, %v677
      %v679 = vpop.f32.mrb[0].mxu0
      %680 = vmatprep.mubr.f32.mxu0 %v273
      %681 = vmatmul.mubr.f32.gmra.mrb[0].mxu0 %v272
      %v682 = vpop.f32.mrb[0].mxu0
      %v683 = vadd.f32 %v538, %v682
      %v684 = vpop.f32.mrb[0].mxu0
      %685 = vmatprep.mubr.f32.mxu0 %v278
      %686 = vmatmul.mubr.f32.gmra.mrb[0].mxu0 %v277
      %v687 = vpop.f32.mrb[0].mxu0
      %v688 = vadd.f32 %v543, %v687
      %v689 = vpop.f32.mrb[0].mxu0
      %690 = vmatprep.mubr.f32.mxu0 %v283
      %691 = vmatmul.mubr.f32.gmra.mrb[0].mxu0 %v282
      %v692 = vpop.f32.mrb[0].mxu0
      %v693 = vadd.f32 %v548, %v692
      %v694 = vpop.f32.mrb[0].mxu0
      %695 = vmatprep.mubr.f32.mxu0 %v288
      %696 = vmatmul.mubr.f32.gmra.mrb[0].mxu0 %v287
      %v697 = vpop.f32.mrb[0].mxu0
      %v698 = vadd.f32 %v553, %v697
      %v699 = vpop.f32.mrb[0].mxu0
      %700 = vmatprep.mubr.f32.mxu0 %v293
      %701 = vmatmul.mubr.f32.gmra.mrb[0].mxu0 %v292
      %v702 = vpop.f32.mrb[0].mxu0
      %v703 = vadd.f32 %v558, %v702
      %v704 = vpop.f32.mrb[0].mxu0
      %705 = vmatprep.mubr.f32.mxu0 %v298
      %706 = vmatmul.mubr.f32.gmra.mrb[0].mxu0 %v297
      %v707 = vpop.f32.mrb[0].mxu0
      %v708 = vadd.f32 %v563, %v707
      %v709 = vpop.f32.mrb[0].mxu0
      %710 = vmatprep.mubr.f32.mxu0 %v303
      %711 = vmatmul.mubr.f32.gmra.mrb[0].mxu0 %v302
      %v712 = vpop.f32.mrb[0].mxu0
      %v713 = vadd.f32 %v568, %v712
      %v714 = vpop.f32.mrb[0].mxu0
      %715 = vmatprep.mubr.f32.mxu0 %v308
      %716 = vmatmul.mubr.f32.gmra.mrb[0].mxu0 %v307
      %v717 = vpop.f32.mrb[0].mxu0
      %v718 = vadd.f32 %v573, %v717
      %v719 = vpop.f32.mrb[0].mxu0
      %720 = vmatprep.mubr.f32.mxu0 %v313
      %721 = vmatmul.mubr.f32.gmra.mrb[0].mxu0 %v312
      %v722 = vpop.f32.mrb[0].mxu0
      %v723 = vadd.f32 %v578, %v722
      %v724 = vpop.f32.mrb[0].mxu0
      %725 = vmatprep.mubr.f32.mxu0 %v318
      %726 = vmatmul.mubr.f32.gmra.mrb[0].mxu0 %v317
      %v727 = vpop.f32.mrb[0].mxu0
      %v728 = vadd.f32 %v583, %v727
      %v729 = vpop.f32.mrb[0].mxu0
      %730 = vdwg.mxu0
      %731 = vmatprep.subr.mxu0 0.0
      %732 = vmatpush1.msra.mxu0 %v384
      %733 = vmatprep.subr.mxu0 0.0
      %734 = vmatpush1.msra.mxu0 %v385
      %735 = vmatprep.subr.mxu0 0.0
      %736 = vmatpush1.msra.mxu0 %v386
      %737 = vmatprep.subr.mxu0 0.0
      %738 = vmatpush1.msra.mxu0 %v387
      %739 = vmatprep.subr.mxu0 0.0
      %740 = vmatpush1.msra.mxu0 %v388
      %741 = vmatprep.subr.mxu0 0.0
      %742 = vmatpush1.msra.mxu0 %v389
      %743 = vmatprep.subr.mxu0 0.0
      %744 = vmatpush1.msra.mxu0 %v390
      %745 = vmatprep.subr.mxu0 0.0
      %746 = vmatpush1.msra.mxu0 %v391
      %747 = vmatprep.subr.mxu0 0.0
      %748 = vmatpush1.msra.mxu0 0.0
      %749 = vmatprep.subr.mxu0 0.0
      %750 = vmatpush1.msra.mxu0 0.0
      %751 = vmatprep.subr.mxu0 0.0
      %752 = vmatpush1.msra.mxu0 0.0
      %753 = vmatprep.subr.mxu0 0.0
      %754 = vmatpush1.msra.mxu0 0.0
      %755 = vmatprep.subr.mxu0 0.0
      %756 = vmatpush1.msra.mxu0 0.0
      %757 = vmatprep.subr.mxu0 0.0
      %758 = vmatpush1.msra.mxu0 0.0
      %759 = vmatprep.subr.mxu0 0.0
      %760 = vmatpush1.msra.mxu0 0.0
      %761 = vmatprep.subr.mxu0 0.0
      %762 = vmatpush1.msra.mxu0 0.0
      %763 = vmatprep.subr.mxu0 0.0
      %764 = vmatpush1.msra.mxu0 0.0
      %765 = vmatprep.subr.mxu0 0.0
      %766 = vmatpush1.msra.mxu0 0.0
      %767 = vmatprep.subr.mxu0 0.0
      %768 = vmatpush1.msra.mxu0 0.0
      %769 = vmatprep.subr.mxu0 0.0
      %770 = vmatpush1.msra.mxu0 0.0
      %771 = vmatprep.subr.mxu0 0.0
      %772 = vmatpush1.msra.mxu0 0.0
      %773 = vmatprep.subr.mxu0 0.0
      %774 = vmatpush1.msra.mxu0 0.0
      %775 = vmatprep.subr.mxu0 0.0
      %776 = vmatpush1.msra.mxu0 0.0
      %777 = vmatprep.subr.mxu0 0.0
      %778 = vmatpush1.msra.mxu0 0.0
      %779 = vmatprep.subr.mxu0 0.0
      %780 = vmatpush1.msra.mxu0 0.0
      %781 = vmatprep.subr.mxu0 0.0
      %782 = vmatpush1.msra.mxu0 0.0
      %783 = vmatprep.subr.mxu0 0.0
      %784 = vmatpush1.msra.mxu0 0.0
      %785 = vmatprep.subr.mxu0 0.0
      %786 = vmatpush1.msra.mxu0 0.0
      %787 = vmatprep.subr.mxu0 0.0
      %788 = vmatpush1.msra.mxu0 0.0
      %789 = vmatprep.subr.mxu0 0.0
      %790 = vmatpush1.msra.mxu0 0.0
      %791 = vmatprep.subr.mxu0 0.0
      %792 = vmatpush1.msra.mxu0 0.0
      %793 = vmatprep.subr.mxu0 0.0
      %794 = vmatpush1.msra.mxu0 0.0
      %795 = vmatprep.mubr.f32.mxu0 0.0
      %796 = vmatmul.mubr.f32.gmra.mrb[0].mxu0 %v394
      %v797 = vpop.f32.mrb[0].mxu0
      %v798 = vadd.f32 %v653, %v797
      %v799 = vpop.f32.mrb[0].mxu0
      %800 = vmatprep.mubr.f32.mxu0 0.0
      %801 = vmatmul.mubr.f32.gmra.mrb[0].mxu0 %v397
      %v802 = vpop.f32.mrb[0].mxu0
      %v803 = vadd.f32 %v658, %v802
      %v804 = vpop.f32.mrb[0].mxu0
      %805 = vmatprep.mubr.f32.mxu0 0.0
      %806 = vmatmul.mubr.f32.gmra.mrb[0].mxu0 %v400
      %v807 = vpop.f32.mrb[0].mxu0
      %v808 = vadd.f32 %v663, %v807
      %v809 = vpop.f32.mrb[0].mxu0
      %810 = vmatprep.mubr.f32.mxu0 0.0
      %811 = vmatmul.mubr.f32.gmra.mrb[0].mxu0 %v403
      %v812 = vpop.f32.mrb[0].mxu0
      %v813 = vadd.f32 %v668, %v812
      %v814 = vpop.f32.mrb[0].mxu0
      %815 = vmatprep.mubr.f32.mxu0 0.0
      %816 = vmatmul.mubr.f32.gmra.mrb[0].mxu0 %v406
      %v817 = vpop.f32.mrb[0].mxu0
      %v818 = vadd.f32 %v673, %v817
      %v819 = vpop.f32.mrb[0].mxu0
      %820 = vmatprep.mubr.f32.mxu0 0.0
      %821 = vmatmul.mubr.f32.gmra.mrb[0].mxu0 %v409
      %v822 = vpop.f32.mrb[0].mxu0
      %v823 = vadd.f32 %v678, %v822
      %v824 = vpop.f32.mrb[0].mxu0
      %825 = vmatprep.mubr.f32.mxu0 0.0
      %826 = vmatmul.mubr.f32.gmra.mrb[0].mxu0 %v412
      %v827 = vpop.f32.mrb[0].mxu0
      %v828 = vadd.f32 %v683, %v827
      %v829 = vpop.f32.mrb[0].mxu0
      %830 = vmatprep.mubr.f32.mxu0 0.0
      %831 = vmatmul.mubr.f32.gmra.mrb[0].mxu0 %v415
      %v832 = vpop.f32.mrb[0].mxu0
      %v833 = vadd.f32 %v688, %v832
      %v834 = vpop.f32.mrb[0].mxu0
      %835 = vmatprep.mubr.f32.mxu0 0.0
      %836 = vmatmul.mubr.f32.gmra.mrb[0].mxu0 %v418
      %v837 = vpop.f32.mrb[0].mxu0
      %v838 = vadd.f32 %v693, %v837
      %v839 = vpop.f32.mrb[0].mxu0
      %840 = vmatprep.mubr.f32.mxu0 0.0
      %841 = vmatmul.mubr.f32.gmra.mrb[0].mxu0 %v421
      %v842 = vpop.f32.mrb[0].mxu0
      %v843 = vadd.f32 %v698, %v842
      %v844 = vpop.f32.mrb[0].mxu0
      %845 = vmatprep.mubr.f32.mxu0 0.0
      %846 = vmatmul.mubr.f32.gmra.mrb[0].mxu0 %v424
      %v847 = vpop.f32.mrb[0].mxu0
      %v848 = vadd.f32 %v703, %v847
      %v849 = vpop.f32.mrb[0].mxu0
      %850 = vmatprep.mubr.f32.mxu0 0.0
      %851 = vmatmul.mubr.f32.gmra.mrb[0].mxu0 %v427
      %v852 = vpop.f32.mrb[0].mxu0
      %v853 = vadd.f32 %v708, %v852
      %v854 = vpop.f32.mrb[0].mxu0
      %855 = vmatprep.mubr.f32.mxu0 0.0
      %856 = vmatmul.mubr.f32.gmra.mrb[0].mxu0 %v430
      %v857 = vpop.f32.mrb[0].mxu0
      %v858 = vadd.f32 %v713, %v857
      %v859 = vpop.f32.mrb[0].mxu0
      %860 = vmatprep.mubr.f32.mxu0 0.0
      %861 = vmatmul.mubr.f32.gmra.mrb[0].mxu0 %v433
      %v862 = vpop.f32.mrb[0].mxu0
      %v863 = vadd.f32 %v718, %v862
      %v864 = vpop.f32.mrb[0].mxu0
      %865 = vmatprep.mubr.f32.mxu0 0.0
      %866 = vmatmul.mubr.f32.gmra.mrb[0].mxu0 %v436
      %v867 = vpop.f32.mrb[0].mxu0
      %v868 = vadd.f32 %v723, %v867
      %v869 = vpop.f32.mrb[0].mxu0
      %870 = vmatprep.mubr.f32.mxu0 0.0
      %871 = vmatmul.mubr.f32.gmra.mrb[0].mxu0 %v439
      %v872 = vpop.f32.mrb[0].mxu0
      %v873 = vadd.f32 %v728, %v872
      %v874 = vpop.f32.mrb[0].mxu0
      %875 = vdwg.mxu0
      %v876 = vld [vmem:[%s2] sm:$0x1]
      %v878 = vlaneseq
      %v879 = vshrl.u32 %v878, 7
      %v880 = vsub.s32 0, %v879
      %v881 = vrot.slane %v876, %v880
      %v883 = vmul.f32 %v798, %v881
      %v884 = vmul.f32 %v803, %v881
      %v885 = vmul.f32 %v808, %v881
      %v886 = vmul.f32 %v813, %v881
      %v887 = vmul.f32 %v818, %v881
      %v888 = vmul.f32 %v823, %v881
      %v889 = vmul.f32 %v828, %v881
      %v890 = vmul.f32 %v833, %v881
      %v891 = vmul.f32 %v838, %v881
      %v892 = vmul.f32 %v843, %v881
      %v893 = vmul.f32 %v848, %v881
      %v894 = vmul.f32 %v853, %v881
      %v895 = vmul.f32 %v858, %v881
      %v896 = vmul.f32 %v863, %v881
      %v897 = vmul.f32 %v868, %v881
      %v898 = vmul.f32 %v873, %v881
      %v899 = vld [vmem:[%s3] sm:$0x1]
      %v901 = vlaneseq
      %v902 = vshrl.u32 %v901, 7
      %v903 = vsub.s32 0, %v902
      %v904 = vrot.slane %v899, %v903
      %v906 = vadd.f32 %v883, %v904
      %v907 = vadd.f32 %v884, %v904
      %v908 = vadd.f32 %v885, %v904
      %v909 = vadd.f32 %v886, %v904
      %v910 = vadd.f32 %v887, %v904
      %v911 = vadd.f32 %v888, %v904
      %v912 = vadd.f32 %v889, %v904
      %v913 = vadd.f32 %v890, %v904
      %v914 = vadd.f32 %v891, %v904
      %v915 = vadd.f32 %v892, %v904
      %v916 = vadd.f32 %v893, %v904
      %v917 = vadd.f32 %v894, %v904
      %v918 = vadd.f32 %v895, %v904
      %v919 = vadd.f32 %v896, %v904
      %v920 = vadd.f32 %v897, %v904
      %v921 = vadd.f32 %v898, %v904
      %v922 = vmax.f32 %v906, 0.0
      %v923 = vmax.f32 %v907, 0.0
      %v924 = vmax.f32 %v908, 0.0
      %v925 = vmax.f32 %v909, 0.0
      %v926 = vmax.f32 %v910, 0.0
      %v927 = vmax.f32 %v911, 0.0
      %v928 = vmax.f32 %v912, 0.0
      %v929 = vmax.f32 %v913, 0.0
      %v930 = vmax.f32 %v914, 0.0
      %v931 = vmax.f32 %v915, 0.0
      %v932 = vmax.f32 %v916, 0.0
      %v933 = vmax.f32 %v917, 0.0
      %v934 = vmax.f32 %v918, 0.0
      %v935 = vmax.f32 %v919, 0.0
      %v936 = vmax.f32 %v920, 0.0
      %v937 = vmax.f32 %v921, 0.0
      %v938 = vsel %vm392, %v922, -inf
      %v939 = vsel %vm392, %v923, -inf
      %v940 = vmax.f32 %v938, %v939
      %v941 = vsel %vm392, %v924, -inf
      %v942 = vmax.f32 %v940, %v941
      %v943 = vsel %vm392, %v925, -inf
      %v944 = vmax.f32 %v942, %v943
      %v945 = vsel %vm392, %v926, -inf
      %v946 = vsel %vm392, %v927, -inf
      %v947 = vmax.f32 %v945, %v946
      %v948 = vsel %vm392, %v928, -inf
      %v949 = vmax.f32 %v947, %v948
      %v950 = vsel %vm392, %v929, -inf
      %v951 = vmax.f32 %v949, %v950
      %v952 = vsel %vm392, %v930, -inf
      %v953 = vsel %vm392, %v931, -inf
      %v954 = vmax.f32 %v952, %v953
      %v955 = vsel %vm392, %v932, -inf
      %v956 = vmax.f32 %v954, %v955
      %v957 = vsel %vm392, %v933, -inf
      %v958 = vmax.f32 %v956, %v957
      %v959 = vsel %vm392, %v934, -inf
      %v960 = vsel %vm392, %v935, -inf
      %v961 = vmax.f32 %v959, %v960
      %v962 = vsel %vm392, %v936, -inf
      %v963 = vmax.f32 %v961, %v962
      %v964 = vsel %vm392, %v937, -inf
      %v965 = vmax.f32 %v963, %v964
      %966 = vst.msk [vmem:[%s238] sm:$0xff] %vm392, %v944
      %967 = vst.msk [vmem:[%s238 + $0x8] sm:$0xff] %vm392, %v951
      %968 = vst.msk [vmem:[%s238 + $0x10] sm:$0xff] %vm392, %v958
      %969 = vst.msk [vmem:[%s238 + $0x18] sm:$0xff] %vm392, %v965
      %s970 = smul.u32 4, %s20
      %p971 = scmp.lt.s32.totalorder %s19, 1
      %s972 = scalar_select %p971, %s19, 1
      %p973 = scmp.lt.s32.totalorder %s970, 3
      %s974 = scalar_select %p973, %s970, 3
      %s975 = smul.addr %s972, 4
      %s976 = sadd.s32 %s974, %s975
      %s977 = smul.addr %s976, 8
      %s978 = scalar_lea.vmem %s4, %s977
      // Predicated region
      $region37: #{conventional_net_forward.8} parent=35 // pred_check
        %p979 = pneg %p138
      $region38: #{conventional_net_forward.8} parent=35 // pred_check_branch
        %981 = sbr.rel (%p979) target = $region40
      $region39: #{conventional_net_forward.8} parent=35 // pred_region
        %s982 = smul.u32 4, %s20
      $region40: #{conventional_net_forward.8} parent=35 // pred_fallthru
        _
    $region36: #{conventional_net_forward.8} parent=5 // pred_fallthru
      _
    %p983 = scmp.le.s32.totalorder 2, %s10
    // Predicated region
    $region41: #{conventional_net_forward.8} parent=5 // pred_check
      %p984 = pneg %p983
    $region42: #{conventional_net_forward.8} parent=5 // pred_check_branch
      %986 = sbr.rel (%p984) target = $region44
    $region43: #{conventional_net_forward.8} parent=5 // pred_region
      %s987 = ssub.s32 %s10, 2
      // Predicated region
      $region45: #{conventional_net_forward.8} parent=43 // pred_check
        %p988 = pneg %p144
      $region46: #{conventional_net_forward.8} parent=43 // pred_check_branch
        %990 = sbr.rel (%p988) target = $region48
      $region47: #{conventional_net_forward.8} parent=43 // pred_region
        %s991 = smul.u32 4, %s22
        %p992 = scmp.lt.s32.totalorder %s21, 1
        %s993 = scalar_select %p992, %s21, 1
        %p994 = scmp.lt.s32.totalorder %s991, 3
        %s995 = scalar_select %p994, %s991, 3
        %s996 = smul.addr %s993, 4
        %s997 = sadd.s32 %s995, %s996
        %s998 = smul.addr %s997, 8
        %s999 = scalar_lea.vmem %s4, %s998
      $region48: #{conventional_net_forward.8} parent=43 // pred_fallthru
        _
    $region44: #{conventional_net_forward.8} parent=5 // pred_fallthru
      _
  $region6: #{conventional_net_forward.8} parent=0 // loop_footer
    %s14 = sadd.s32 1, %s10
  $region7: #{conventional_net_forward.8} parent=0 // loop_footer_branch
    %9 = sbr.rel target = $region3
  $region8: #{conventional_net_forward.8} parent=0 // loop_exit
    _

// kernel: conventional_net_forward.11
$region0: #{conventional_net_forward.11}
  #allocation0 [shape = 'u32[]', space=smem, size = 0x4, offset = 0x4, fixed_abs, tag = 'smem constant byte address 0x4 - core index']
  #allocation1 [shape = 'u32[144,128]{1,0:T(1,128)}', space=vmem, size = 0x12000, scoped, tag = 'internal scratch']
  %s0 = inlined_call_operand.vmem [shape: f32[16,256], index: 0, kind: input, shape index: {}]
  %s1 = inlined_call_operand.vmem [shape: f32[256,256], index: 1, kind: input, shape index: {}]
  %s2 = inlined_call_operand.vmem [shape: f32[1,256], index: 2, kind: input, shape index: {}]
  %s3 = inlined_call_operand.vmem [shape: f32[128,12], index: 3, kind: input, shape index: {}]
  %s4 = inlined_call_operand.vmem [shape: f32[1,12], index: 4, kind: input, shape index: {}]
  %s5 = inlined_call_operand.vmem [shape: f32[128,12], index: 5, kind: input, shape index: {}]
  %s6 = inlined_call_operand.vmem [shape: f32[1,12], index: 6, kind: input, shape index: {}]
  %s7 = inlined_call_operand.vmem [shape: f32[128,12], index: 7, kind: input, shape index: {}]
  %s8 = inlined_call_operand.vmem [shape: f32[1,12], index: 8, kind: input, shape index: {}]
  %s9 = inlined_call_operand.vmem [shape: f32[128,12], index: 9, kind: input, shape index: {}]
  %s10 = inlined_call_operand.vmem [shape: f32[1,12], index: 10, kind: input, shape index: {}]
  %s11 = inlined_call_operand.hbm [shape: f32[16,12], index: 11, kind: output, shape index: {0}]
  %s12 = inlined_call_operand.vmem [shape: f32[3,16,12], index: 12, kind: output, shape index: {1}]
  %13 = xla_tuple %s11, %s12
  %s14 = sld [smem:[#allocation0]]
  $region62: #{conventional_net_forward.11} parent=0
    _
  %s16 = ssub.s32 1, %s14
  %s17 = scalar_select 0, %s16, %s14
  $region1: #{conventional_net_forward.11} parent=0
    #allocation2 [shape = 'u8[8192]{0}', space=vmem, size = 0x2000, scoped, tag = 'output window, operand 0, single buffered']
    #allocation3 [shape = 's32[1]{0}', space=sflag, size = 0x4, scoped, tag = 'scoped memory for conventional_net_forward.11']
    %18 = vsyncpa [#allocation3], 0
    // Predicated region
    $region2: #{conventional_net_forward.11} parent=1 // pred_check
      _
    $region3: #{conventional_net_forward.11} parent=1 // pred_check_branch
      %20 = sbr.rel (0) target = $region5
    $region4: #{conventional_net_forward.11} parent=1 // pred_region
      _
    $region5: #{conventional_net_forward.11} parent=1 // pred_fallthru
      _
    // Predicated region
    $region6: #{conventional_net_forward.11} parent=1 // pred_check
      _
    $region7: #{conventional_net_forward.11} parent=1 // pred_check_branch
      %22 = sbr.rel (0) target = $region9
    $region8: #{conventional_net_forward.11} parent=1 // pred_region
      _
    $region9: #{conventional_net_forward.11} parent=1 // pred_fallthru
      _
    // Predicated region
    $region10: #{conventional_net_forward.11} parent=1 // pred_check
      _
    $region11: #{conventional_net_forward.11} parent=1 // pred_check_branch
      %24 = sbr.rel (0) target = $region13
    $region12: #{conventional_net_forward.11} parent=1 // pred_region
      _
    $region13: #{conventional_net_forward.11} parent=1 // pred_fallthru
      _
    // Predicated region
    $region14: #{conventional_net_forward.11} parent=1 // pred_check
      _
    $region15: #{conventional_net_forward.11} parent=1 // pred_check_branch
      %26 = sbr.rel (0) target = $region17
    $region16: #{conventional_net_forward.11} parent=1 // pred_region
      _
    $region17: #{conventional_net_forward.11} parent=1 // pred_fallthru
      _
    // Predicated region
    $region18: #{conventional_net_forward.11} parent=1 // pred_check
      _
    $region19: #{conventional_net_forward.11} parent=1 // pred_check_branch
      %28 = sbr.rel (0) target = $region21
    $region20: #{conventional_net_forward.11} parent=1 // pred_region
      _
    $region21: #{conventional_net_forward.11} parent=1 // pred_fallthru
      _
    // Predicated region
    $region22: #{conventional_net_forward.11} parent=1 // pred_check
      _
    $region23: #{conventional_net_forward.11} parent=1 // pred_check_branch
      %30 = sbr.rel (0) target = $region25
    $region24: #{conventional_net_forward.11} parent=1 // pred_region
      _
    $region25: #{conventional_net_forward.11} parent=1 // pred_fallthru
      _
    // Predicated region
    $region26: #{conventional_net_forward.11} parent=1 // pred_check
      _
    $region27: #{conventional_net_forward.11} parent=1 // pred_check_branch
      %32 = sbr.rel (0) target = $region29
    $region28: #{conventional_net_forward.11} parent=1 // pred_region
      _
    $region29: #{conventional_net_forward.11} parent=1 // pred_fallthru
      _
    // Predicated region
    $region30: #{conventional_net_forward.11} parent=1 // pred_check
      _
    $region31: #{conventional_net_forward.11} parent=1 // pred_check_branch
      %34 = sbr.rel (0) target = $region33
    $region32: #{conventional_net_forward.11} parent=1 // pred_region
      _
    $region33: #{conventional_net_forward.11} parent=1 // pred_fallthru
      _
    // Predicated region
    $region34: #{conventional_net_forward.11} parent=1 // pred_check
      _
    $region35: #{conventional_net_forward.11} parent=1 // pred_check_branch
      %36 = sbr.rel (0) target = $region37
    $region36: #{conventional_net_forward.11} parent=1 // pred_region
      _
    $region37: #{conventional_net_forward.11} parent=1 // pred_fallthru
      _
    // Predicated region
    $region38: #{conventional_net_forward.11} parent=1 // pred_check
      _
    $region39: #{conventional_net_forward.11} parent=1 // pred_check_branch
      %38 = sbr.rel (0) target = $region41
    $region40: #{conventional_net_forward.11} parent=1 // pred_region
      _
    $region41: #{conventional_net_forward.11} parent=1 // pred_fallthru
      _
    // Predicated region
    $region42: #{conventional_net_forward.11} parent=1 // pred_check
      _
    $region43: #{conventional_net_forward.11} parent=1 // pred_check_branch
      %40 = sbr.rel (0) target = $region45
    $region44: #{conventional_net_forward.11} parent=1 // pred_region
      _
    $region45: #{conventional_net_forward.11} parent=1 // pred_fallthru
      _
    %v41 = vld [vmem:[%s0] sm:$0xff]
    %v42 = vld [vmem:[%s0 + $0x8] sm:$0xff]
    %v43 = vld [vmem:[%s0 + $0x10] sm:$0xff]
    %v44 = vld [vmem:[%s0 + $0x18] sm:$0xff]
    %v45 = vld [vmem:[%s1] sm:$0xff]
    %v46 = vld [vmem:[%s1 + $0x8] sm:$0xff]
    %v47 = vld [vmem:[%s1 + $0x10] sm:$0xff]
    %v48 = vld [vmem:[%s1 + $0x18] sm:$0xff]
    %v49 = vld [vmem:[%s1 + $0x20] sm:$0xff]
    %v50 = vld [vmem:[%s1 + $0x28] sm:$0xff]
    %v51 = vld [vmem:[%s1 + $0x30] sm:$0xff]
    %v52 = vld [vmem:[%s1 + $0x38] sm:$0xff]
    %v53 = vld [vmem:[%s1 + $0x40] sm:$0xff]
    %v54 = vld [vmem:[%s1 + $0x48] sm:$0xff]
    %v55 = vld [vmem:[%s1 + $0x50] sm:$0xff]
    %v56 = vld [vmem:[%s1 + $0x58] sm:$0xff]
    %v57 = vld [vmem:[%s1 + $0x60] sm:$0xff]
    %v58 = vld [vmem:[%s1 + $0x68] sm:$0xff]
    %v59 = vld [vmem:[%s1 + $0x70] sm:$0xff]
    %v60 = vld [vmem:[%s1 + $0x78] sm:$0xff]
    %v61 = vld [vmem:[%s1 + $0x80] sm:$0xff]
    %v62 = vld [vmem:[%s1 + $0x88] sm:$0xff]
    %v63 = vld [vmem:[%s1 + $0x90] sm:$0xff]
    %v64 = vld [vmem:[%s1 + $0x98] sm:$0xff]
    %v65 = vld [vmem:[%s1 + $0xa0] sm:$0xff]
    %v66 = vld [vmem:[%s1 + $0xa8] sm:$0xff]
    %v67 = vld [vmem:[%s1 + $0xb0] sm:$0xff]
    %v68 = vld [vmem:[%s1 + $0xb8] sm:$0xff]
    %v69 = vld [vmem:[%s1 + $0xc0] sm:$0xff]
    %v70 = vld [vmem:[%s1 + $0xc8] sm:$0xff]
    %v71 = vld [vmem:[%s1 + $0xd0] sm:$0xff]
    %v72 = vld [vmem:[%s1 + $0xd8] sm:$0xff]
    %v73 = vld [vmem:[%s1 + $0xe0] sm:$0xff]
    %v74 = vld [vmem:[%s1 + $0xe8] sm:$0xff]
    %v75 = vld [vmem:[%s1 + $0xf0] sm:$0xff]
    %v76 = vld [vmem:[%s1 + $0xf8] sm:$0xff]
    %v77 = vld [vmem:[%s1 + $0x100] sm:$0xff]
    %v78 = vld [vmem:[%s1 + $0x108] sm:$0xff]
    %v79 = vld [vmem:[%s1 + $0x110] sm:$0xff]
    %v80 = vld [vmem:[%s1 + $0x118] sm:$0xff]
    %v81 = vld [vmem:[%s1 + $0x120] sm:$0xff]
    %v82 = vld [vmem:[%s1 + $0x128] sm:$0xff]
    %v83 = vld [vmem:[%s1 + $0x130] sm:$0xff]
    %v84 = vld [vmem:[%s1 + $0x138] sm:$0xff]
    %v85 = vld [vmem:[%s1 + $0x140] sm:$0xff]
    %v86 = vld [vmem:[%s1 + $0x148] sm:$0xff]
    %v87 = vld [vmem:[%s1 + $0x150] sm:$0xff]
    %v88 = vld [vmem:[%s1 + $0x158] sm:$0xff]
    %v89 = vld [vmem:[%s1 + $0x160] sm:$0xff]
    %v90 = vld [vmem:[%s1 + $0x168] sm:$0xff]
    %v91 = vld [vmem:[%s1 + $0x170] sm:$0xff]
    %v92 = vld [vmem:[%s1 + $0x178] sm:$0xff]
    %v93 = vld [vmem:[%s1 + $0x180] sm:$0xff]
    %v94 = vld [vmem:[%s1 + $0x188] sm:$0xff]
    %v95 = vld [vmem:[%s1 + $0x190] sm:$0xff]
    %v96 = vld [vmem:[%s1 + $0x198] sm:$0xff]
    %v97 = vld [vmem:[%s1 + $0x1a0] sm:$0xff]
    %v98 = vld [vmem:[%s1 + $0x1a8] sm:$0xff]
    %v99 = vld [vmem:[%s1 + $0x1b0] sm:$0xff]
    %v100 = vld [vmem:[%s1 + $0x1b8] sm:$0xff]
    %v101 = vld [vmem:[%s1 + $0x1c0] sm:$0xff]
    %v102 = vld [vmem:[%s1 + $0x1c8] sm:$0xff]
    %v103 = vld [vmem:[%s1 + $0x1d0] sm:$0xff]
    %v104 = vld [vmem:[%s1 + $0x1d8] sm:$0xff]
    %v105 = vld [vmem:[%s1 + $0x1e0] sm:$0xff]
    %v106 = vld [vmem:[%s1 + $0x1e8] sm:$0xff]
    %v107 = vld [vmem:[%s1 + $0x1f0] sm:$0xff]
    %v108 = vld [vmem:[%s1 + $0x1f8] sm:$0xff]
    %v109 = vld [vmem:[%s2] sm:$0x3]
    %v111 = vlaneseq
    %v112 = vshrl.u32 %v111, 7
    %v113 = vsub.s32 0, %v112
    %v114 = vrot.slane %v109, %v113
    %v115 = vlaneseq
    %v116 = vshrl.u32 %v115, 7
    %v117 = vsub.s32 1, %v116
    %v118 = vrot.slane %v109, %v117
    %121 = vmatprep.subr.mxu0 %v46
    %122 = vmatpush1.msra.mxu0 %v45
    %123 = vmatprep.subr.mxu0 %v48
    %124 = vmatpush1.msra.mxu0 %v47
    %125 = vmatprep.subr.mxu0 %v50
    %126 = vmatpush1.msra.mxu0 %v49
    %127 = vmatprep.subr.mxu0 %v52
    %128 = vmatpush1.msra.mxu0 %v51
    %129 = vmatprep.subr.mxu0 %v54
    %130 = vmatpush1.msra.mxu0 %v53
    %131 = vmatprep.subr.mxu0 %v56
    %132 = vmatpush1.msra.mxu0 %v55
    %133 = vmatprep.subr.mxu0 %v58
    %134 = vmatpush1.msra.mxu0 %v57
    %135 = vmatprep.subr.mxu0 %v60
    %136 = vmatpush1.msra.mxu0 %v59
    %137 = vmatprep.subr.mxu0 %v62
    %138 = vmatpush1.msra.mxu0 %v61
    %139 = vmatprep.subr.mxu0 %v64
    %140 = vmatpush1.msra.mxu0 %v63
    %141 = vmatprep.subr.mxu0 %v66
    %142 = vmatpush1.msra.mxu0 %v65
    %143 = vmatprep.subr.mxu0 %v68
    %144 = vmatpush1.msra.mxu0 %v67
    %145 = vmatprep.subr.mxu0 %v70
    %146 = vmatpush1.msra.mxu0 %v69
    %147 = vmatprep.subr.mxu0 %v72
    %148 = vmatpush1.msra.mxu0 %v71
    %149 = vmatprep.subr.mxu0 %v74
    %150 = vmatpush1.msra.mxu0 %v73
    %151 = vmatprep.subr.mxu0 %v76
    %152 = vmatpush1.msra.mxu0 %v75
    %153 = vmatprep.subr.mxu0 %v78
    %154 = vmatpush1.msra.mxu0 %v77
    %155 = vmatprep.subr.mxu0 %v80
    %156 = vmatpush1.msra.mxu0 %v79
    %157 = vmatprep.subr.mxu0 %v82
    %158 = vmatpush1.msra.mxu0 %v81
    %159 = vmatprep.subr.mxu0 %v84
    %160 = vmatpush1.msra.mxu0 %v83
    %161 = vmatprep.subr.mxu0 %v86
    %162 = vmatpush1.msra.mxu0 %v85
    %163 = vmatprep.subr.mxu0 %v88
    %164 = vmatpush1.msra.mxu0 %v87
    %165 = vmatprep.subr.mxu0 %v90
    %166 = vmatpush1.msra.mxu0 %v89
    %167 = vmatprep.subr.mxu0 %v92
    %168 = vmatpush1.msra.mxu0 %v91
    %169 = vmatprep.subr.mxu0 %v94
    %170 = vmatpush1.msra.mxu0 %v93
    %171 = vmatprep.subr.mxu0 %v96
    %172 = vmatpush1.msra.mxu0 %v95
    %173 = vmatprep.subr.mxu0 %v98
    %174 = vmatpush1.msra.mxu0 %v97
    %175 = vmatprep.subr.mxu0 %v100
    %176 = vmatpush1.msra.mxu0 %v99
    %177 = vmatprep.subr.mxu0 %v102
    %178 = vmatpush1.msra.mxu0 %v101
    %179 = vmatprep.subr.mxu0 %v104
    %180 = vmatpush1.msra.mxu0 %v103
    %181 = vmatprep.subr.mxu0 %v106
    %182 = vmatpush1.msra.mxu0 %v105
    %183 = vmatprep.subr.mxu0 %v108
    %184 = vmatpush1.msra.mxu0 %v107
    %185 = vmatprep.mubr.f32.mxu0 %v42
    %186 = vmatmul.mubr.f32.gmra.mrb[0].mxu0 %v41
    %v187 = vpop.f32.mrb[0].mxu0
    %v188 = vadd.f32 %v114, %v187
    %v189 = vpop.f32.mrb[0].mxu0
    %v190 = vadd.f32 %v118, %v189
    %191 = vmatprep.mubr.f32.mxu0 %v44
    %192 = vmatmul.mubr.f32.gmra.mrb[0].mxu0 %v43
    %v193 = vpop.f32.mrb[0].mxu0
    %v194 = vadd.f32 %v114, %v193
    %v195 = vpop.f32.mrb[0].mxu0
    %v196 = vadd.f32 %v118, %v195
    %197 = vdwg.mxu0
    %v198 = vld [vmem:[%s3] sm:$0xff]
    %v199 = vld [vmem:[%s3 + $0x8] sm:$0xff]
    %v200 = vld [vmem:[%s3 + $0x10] sm:$0xff]
    %v201 = vld [vmem:[%s3 + $0x18] sm:$0xff]
    %v202 = vld [vmem:[%s3 + $0x20] sm:$0xff]
    %v203 = vld [vmem:[%s3 + $0x28] sm:$0xff]
    %v204 = vld [vmem:[%s3 + $0x30] sm:$0xff]
    %v205 = vld [vmem:[%s3 + $0x38] sm:$0xff]
    %v206 = vld [vmem:[%s3 + $0x40] sm:$0xff]
    %v207 = vld [vmem:[%s3 + $0x48] sm:$0xff]
    %v208 = vld [vmem:[%s3 + $0x50] sm:$0xff]
    %v209 = vld [vmem:[%s3 + $0x58] sm:$0xff]
    %v210 = vld [vmem:[%s3 + $0x60] sm:$0xff]
    %v211 = vld [vmem:[%s3 + $0x68] sm:$0xff]
    %v212 = vld [vmem:[%s3 + $0x70] sm:$0xff]
    %v213 = vld [vmem:[%s3 + $0x78] sm:$0xff]
    %v214 = vld [vmem:[%s4] sm:$0x1]
    %v216 = vlaneseq
    %v217 = vshrl.u32 %v216, 7
    %v218 = vsub.s32 0, %v217
    %v219 = vrot.slane %v214, %v218
    %221 = vmatprep.subr.mxu0 0.0
    %222 = vmatpush1.msra.mxu0 %v198
    %223 = vmatprep.subr.mxu0 0.0
    %224 = vmatpush1.msra.mxu0 %v199
    %225 = vmatprep.subr.mxu0 0.0
    %226 = vmatpush1.msra.mxu0 %v200
    %227 = vmatprep.subr.mxu0 0.0
    %228 = vmatpush1.msra.mxu0 %v201
    %229 = vmatprep.subr.mxu0 0.0
    %230 = vmatpush1.msra.mxu0 %v202
    %231 = vmatprep.subr.mxu0 0.0
    %232 = vmatpush1.msra.mxu0 %v203
    %233 = vmatprep.subr.mxu0 0.0
    %234 = vmatpush1.msra.mxu0 %v204
    %235 = vmatprep.subr.mxu0 0.0
    %236 = vmatpush1.msra.mxu0 %v205
    %237 = vmatprep.subr.mxu0 0.0
    %238 = vmatpush1.msra.mxu0 %v206
    %239 = vmatprep.subr.mxu0 0.0
    %240 = vmatpush1.msra.mxu0 %v207
    %241 = vmatprep.subr.mxu0 0.0
    %242 = vmatpush1.msra.mxu0 %v208
    %243 = vmatprep.subr.mxu0 0.0
    %244 = vmatpush1.msra.mxu0 %v209
    %245 = vmatprep.subr.mxu0 0.0
    %246 = vmatpush1.msra.mxu0 %v210
    %247 = vmatprep.subr.mxu0 0.0
    %248 = vmatpush1.msra.mxu0 %v211
    %249 = vmatprep.subr.mxu0 0.0
    %250 = vmatpush1.msra.mxu0 %v212
    %251 = vmatprep.subr.mxu0 0.0
    %252 = vmatpush1.msra.mxu0 %v213
    %253 = vmatprep.subr.mxu0 0.0
    %254 = vmatpush1.msra.mxu0 0.0
    %255 = vmatprep.subr.mxu0 0.0
    %256 = vmatpush1.msra.mxu0 0.0
    %257 = vmatprep.subr.mxu0 0.0
    %258 = vmatpush1.msra.mxu0 0.0
    %259 = vmatprep.subr.mxu0 0.0
    %260 = vmatpush1.msra.mxu0 0.0
    %261 = vmatprep.subr.mxu0 0.0
    %262 = vmatpush1.msra.mxu0 0.0
    %263 = vmatprep.subr.mxu0 0.0
    %264 = vmatpush1.msra.mxu0 0.0
    %265 = vmatprep.subr.mxu0 0.0
    %266 = vmatpush1.msra.mxu0 0.0
    %267 = vmatprep.subr.mxu0 0.0
    %268 = vmatpush1.msra.mxu0 0.0
    %269 = vmatprep.subr.mxu0 0.0
    %270 = vmatpush1.msra.mxu0 0.0
    %271 = vmatprep.subr.mxu0 0.0
    %272 = vmatpush1.msra.mxu0 0.0
    %273 = vmatprep.subr.mxu0 0.0
    %274 = vmatpush1.msra.mxu0 0.0
    %275 = vmatprep.subr.mxu0 0.0
    %276 = vmatpush1.msra.mxu0 0.0
    %277 = vmatprep.subr.mxu0 0.0
    %278 = vmatpush1.msra.mxu0 0.0
    %279 = vmatprep.subr.mxu0 0.0
    %280 = vmatpush1.msra.mxu0 0.0
    %281 = vmatprep.subr.mxu0 0.0
    %282 = vmatpush1.msra.mxu0 0.0
    %283 = vmatprep.subr.mxu0 0.0
    %284 = vmatpush1.msra.mxu0 0.0
    %285 = vmatprep.mubr.f32.mxu0 0.0
    %286 = vmatmul.mubr.f32.gmra.mrb[0].mxu0 %v188
    %v287 = vpop.f32.mrb[0].mxu0
    %v288 = vadd.f32 %v219, %v287
    %v289 = vpop.f32.mrb[0].mxu0
    %290 = vmatprep.mubr.f32.mxu0 0.0
    %291 = vmatmul.mubr.f32.gmra.mrb[0].mxu0 %v194
    %v292 = vpop.f32.mrb[0].mxu0
    %v293 = vadd.f32 %v219, %v292
    %v294 = vpop.f32.mrb[0].mxu0
    %295 = vdwg.mxu0
    %vm296 = vcmask 97280
    %297 = vst.msk [vmem:[#allocation2] sm:$0xff] %vm296, %v288
    %298 = vst.msk [vmem:[#allocation2 + $0x8] sm:$0xff] %vm296, %v293
    %v299 = vld [vmem:[%s5] sm:$0xff]
    %v300 = vld [vmem:[%s5 + $0x8] sm:$0xff]
    %v301 = vld [vmem:[%s5 + $0x10] sm:$0xff]
    %v302 = vld [vmem:[%s5 + $0x18] sm:$0xff]
    %v303 = vld [vmem:[%s5 + $0x20] sm:$0xff]
    %v304 = vld [vmem:[%s5 + $0x28] sm:$0xff]
    %v305 = vld [vmem:[%s5 + $0x30] sm:$0xff]
    %v306 = vld [vmem:[%s5 + $0x38] sm:$0xff]
    %v307 = vld [vmem:[%s5 + $0x40] sm:$0xff]
    %v308 = vld [vmem:[%s5 + $0x48] sm:$0xff]
    %v309 = vld [vmem:[%s5 + $0x50] sm:$0xff]
    %v310 = vld [vmem:[%s5 + $0x58] sm:$0xff]
    %v311 = vld [vmem:[%s5 + $0x60] sm:$0xff]
    %v312 = vld [vmem:[%s5 + $0x68] sm:$0xff]
    %v313 = vld [vmem:[%s5 + $0x70] sm:$0xff]
    %v314 = vld [vmem:[%s5 + $0x78] sm:$0xff]
    %v315 = vld [vmem:[%s6] sm:$0x1]
    %v317 = vlaneseq
    %v318 = vshrl.u32 %v317, 7
    %v319 = vsub.s32 0, %v318
    %v320 = vrot.slane %v315, %v319
    %322 = vmatprep.subr.mxu0 0.0
    %323 = vmatpush1.msra.mxu0 %v299
    %324 = vmatprep.subr.mxu0 0.0
    %325 = vmatpush1.msra.mxu0 %v300
    %326 = vmatprep.subr.mxu0 0.0
    %327 = vmatpush1.msra.mxu0 %v301
    %328 = vmatprep.subr.mxu0 0.0
    %329 = vmatpush1.msra.mxu0 %v302
    %330 = vmatprep.subr.mxu0 0.0
    %331 = vmatpush1.msra.mxu0 %v303
    %332 = vmatprep.subr.mxu0 0.0
    %333 = vmatpush1.msra.mxu0 %v304
    %334 = vmatprep.subr.mxu0 0.0
    %335 = vmatpush1.msra.mxu0 %v305
    %336 = vmatprep.subr.mxu0 0.0
    %337 = vmatpush1.msra.mxu0 %v306
    %338 = vmatprep.subr.mxu0 0.0
    %339 = vmatpush1.msra.mxu0 %v307
    %340 = vmatprep.subr.mxu0 0.0
    %341 = vmatpush1.msra.mxu0 %v308
    %342 = vmatprep.subr.mxu0 0.0
    %343 = vmatpush1.msra.mxu0 %v309
    %344 = vmatprep.subr.mxu0 0.0
    %345 = vmatpush1.msra.mxu0 %v310
    %346 = vmatprep.subr.mxu0 0.0
    %347 = vmatpush1.msra.mxu0 %v311
    %348 = vmatprep.subr.mxu0 0.0
    %349 = vmatpush1.msra.mxu0 %v312
    %350 = vmatprep.subr.mxu0 0.0
    %351 = vmatpush1.msra.mxu0 %v313
    %352 = vmatprep.subr.mxu0 0.0
    %353 = vmatpush1.msra.mxu0 %v314
    %354 = vmatprep.subr.mxu0 0.0
    %355 = vmatpush1.msra.mxu0 0.0
    %356 = vmatprep.subr.mxu0 0.0
    %357 = vmatpush1.msra.mxu0 0.0
    %358 = vmatprep.subr.mxu0 0.0
    %359 = vmatpush1.msra.mxu0 0.0
    %360 = vmatprep.subr.mxu0 0.0
    %361 = vmatpush1.msra.mxu0 0.0
    %362 = vmatprep.subr.mxu0 0.0
    %363 = vmatpush1.msra.mxu0 0.0
    %364 = vmatprep.subr.mxu0 0.0
    %365 = vmatpush1.msra.mxu0 0.0
    %366 = vmatprep.subr.mxu0 0.0
    %367 = vmatpush1.msra.mxu0 0.0
    %368 = vmatprep.subr.mxu0 0.0
    %369 = vmatpush1.msra.mxu0 0.0
    %370 = vmatprep.subr.mxu0 0.0
    %371 = vmatpush1.msra.mxu0 0.0
    %372 = vmatprep.subr.mxu0 0.0
    %373 = vmatpush1.msra.mxu0 0.0
    %374 = vmatprep.subr.mxu0 0.0
    %375 = vmatpush1.msra.mxu0 0.0
    %376 = vmatprep.subr.mxu0 0.0
    %377 = vmatpush1.msra.mxu0 0.0
    %378 = vmatprep.subr.mxu0 0.0
    %379 = vmatpush1.msra.mxu0 0.0
    %380 = vmatprep.subr.mxu0 0.0
    %381 = vmatpush1.msra.mxu0 0.0
    %382 = vmatprep.subr.mxu0 0.0
    %383 = vmatpush1.msra.mxu0 0.0
    %384 = vmatprep.subr.mxu0 0.0
    %385 = vmatpush1.msra.mxu0 0.0
    %386 = vmatprep.mubr.f32.mxu0 0.0
    %387 = vmatmul.mubr.f32.gmra.mrb[0].mxu0 %v190
    %v388 = vpop.f32.mrb[0].mxu0
    %v389 = vadd.f32 %v320, %v388
    %v390 = vpop.f32.mrb[0].mxu0
    %391 = vmatprep.mubr.f32.mxu0 0.0
    %392 = vmatmul.mubr.f32.gmra.mrb[0].mxu0 %v196
    %v393 = vpop.f32.mrb[0].mxu0
    %v394 = vadd.f32 %v320, %v393
    %v395 = vpop.f32.mrb[0].mxu0
    %396 = vdwg.mxu0
    %v397 = vld [vmem:[%s7] sm:$0xff]
    %v398 = vld [vmem:[%s7 + $0x8] sm:$0xff]
    %v399 = vld [vmem:[%s7 + $0x10] sm:$0xff]
    %v400 = vld [vmem:[%s7 + $0x18] sm:$0xff]
    %v401 = vld [vmem:[%s7 + $0x20] sm:$0xff]
    %v402 = vld [vmem:[%s7 + $0x28] sm:$0xff]
    %v403 = vld [vmem:[%s7 + $0x30] sm:$0xff]
    %v404 = vld [vmem:[%s7 + $0x38] sm:$0xff]
    %v405 = vld [vmem:[%s7 + $0x40] sm:$0xff]
    %v406 = vld [vmem:[%s7 + $0x48] sm:$0xff]
    %v407 = vld [vmem:[%s7 + $0x50] sm:$0xff]
    %v408 = vld [vmem:[%s7 + $0x58] sm:$0xff]
    %v409 = vld [vmem:[%s7 + $0x60] sm:$0xff]
    %v410 = vld [vmem:[%s7 + $0x68] sm:$0xff]
    %v411 = vld [vmem:[%s7 + $0x70] sm:$0xff]
    %v412 = vld [vmem:[%s7 + $0x78] sm:$0xff]
    %v413 = vld [vmem:[%s8] sm:$0x1]
    %v415 = vlaneseq
    %v416 = vshrl.u32 %v415, 7
    %v417 = vsub.s32 0, %v416
    %v418 = vrot.slane %v413, %v417
    %420 = vmatprep.subr.mxu0 0.0
    %421 = vmatpush1.msra.mxu0 %v397
    %422 = vmatprep.subr.mxu0 0.0
    %423 = vmatpush1.msra.mxu0 %v398
    %424 = vmatprep.subr.mxu0 0.0
    %425 = vmatpush1.msra.mxu0 %v399
    %426 = vmatprep.subr.mxu0 0.0
    %427 = vmatpush1.msra.mxu0 %v400
    %428 = vmatprep.subr.mxu0 0.0
    %429 = vmatpush1.msra.mxu0 %v401
    %430 = vmatprep.subr.mxu0 0.0
    %431 = vmatpush1.msra.mxu0 %v402
    %432 = vmatprep.subr.mxu0 0.0
    %433 = vmatpush1.msra.mxu0 %v403
    %434 = vmatprep.subr.mxu0 0.0
    %435 = vmatpush1.msra.mxu0 %v404
    %436 = vmatprep.subr.mxu0 0.0
    %437 = vmatpush1.msra.mxu0 %v405
    %438 = vmatprep.subr.mxu0 0.0
    %439 = vmatpush1.msra.mxu0 %v406
    %440 = vmatprep.subr.mxu0 0.0
    %441 = vmatpush1.msra.mxu0 %v407
    %442 = vmatprep.subr.mxu0 0.0
    %443 = vmatpush1.msra.mxu0 %v408
    %444 = vmatprep.subr.mxu0 0.0
    %445 = vmatpush1.msra.mxu0 %v409
    %446 = vmatprep.subr.mxu0 0.0
    %447 = vmatpush1.msra.mxu0 %v410
    %448 = vmatprep.subr.mxu0 0.0
    %449 = vmatpush1.msra.mxu0 %v411
    %450 = vmatprep.subr.mxu0 0.0
    %451 = vmatpush1.msra.mxu0 %v412
    %452 = vmatprep.subr.mxu0 0.0
    %453 = vmatpush1.msra.mxu0 0.0
    %454 = vmatprep.subr.mxu0 0.0
    %455 = vmatpush1.msra.mxu0 0.0
    %456 = vmatprep.subr.mxu0 0.0
    %457 = vmatpush1.msra.mxu0 0.0
    %458 = vmatprep.subr.mxu0 0.0
    %459 = vmatpush1.msra.mxu0 0.0
    %460 = vmatprep.subr.mxu0 0.0
    %461 = vmatpush1.msra.mxu0 0.0
    %462 = vmatprep.subr.mxu0 0.0
    %463 = vmatpush1.msra.mxu0 0.0
    %464 = vmatprep.subr.mxu0 0.0
    %465 = vmatpush1.msra.mxu0 0.0
    %466 = vmatprep.subr.mxu0 0.0
    %467 = vmatpush1.msra.mxu0 0.0
    %468 = vmatprep.subr.mxu0 0.0
    %469 = vmatpush1.msra.mxu0 0.0
    %470 = vmatprep.subr.mxu0 0.0
    %471 = vmatpush1.msra.mxu0 0.0
    %472 = vmatprep.subr.mxu0 0.0
    %473 = vmatpush1.msra.mxu0 0.0
    %474 = vmatprep.subr.mxu0 0.0
    %475 = vmatpush1.msra.mxu0 0.0
    %476 = vmatprep.subr.mxu0 0.0
    %477 = vmatpush1.msra.mxu0 0.0
    %478 = vmatprep.subr.mxu0 0.0
    %479 = vmatpush1.msra.mxu0 0.0
    %480 = vmatprep.subr.mxu0 0.0
    %481 = vmatpush1.msra.mxu0 0.0
    %482 = vmatprep.subr.mxu0 0.0
    %483 = vmatpush1.msra.mxu0 0.0
    %484 = vmatprep.mubr.f32.mxu0 0.0
    %485 = vmatmul.mubr.f32.gmra.mrb[0].mxu0 %v190
    %v486 = vpop.f32.mrb[0].mxu0
    %v487 = vadd.f32 %v418, %v486
    %v488 = vpop.f32.mrb[0].mxu0
    %489 = vmatprep.mubr.f32.mxu0 0.0
    %490 = vmatmul.mubr.f32.gmra.mrb[0].mxu0 %v196
    %v491 = vpop.f32.mrb[0].mxu0
    %v492 = vadd.f32 %v418, %v491
    %v493 = vpop.f32.mrb[0].mxu0
    %494 = vdwg.mxu0
    %v495 = vld [vmem:[%s9] sm:$0xff]
    %v496 = vld [vmem:[%s9 + $0x8] sm:$0xff]
    %v497 = vld [vmem:[%s9 + $0x10] sm:$0xff]
    %v498 = vld [vmem:[%s9 + $0x18] sm:$0xff]
    %v499 = vld [vmem:[%s9 + $0x20] sm:$0xff]
    %v500 = vld [vmem:[%s9 + $0x28] sm:$0xff]
    %v501 = vld [vmem:[%s9 + $0x30] sm:$0xff]
    %v502 = vld [vmem:[%s9 + $0x38] sm:$0xff]
    %v503 = vld [vmem:[%s9 + $0x40] sm:$0xff]
    %v504 = vld [vmem:[%s9 + $0x48] sm:$0xff]
    %v505 = vld [vmem:[%s9 + $0x50] sm:$0xff]
    %v506 = vld [vmem:[%s9 + $0x58] sm:$0xff]
    %v507 = vld [vmem:[%s9 + $0x60] sm:$0xff]
    %v508 = vld [vmem:[%s9 + $0x68] sm:$0xff]
    %v509 = vld [vmem:[%s9 + $0x70] sm:$0xff]
    %v510 = vld [vmem:[%s9 + $0x78] sm:$0xff]
    %v511 = vld [vmem:[%s10] sm:$0x1]
    %v513 = vlaneseq
    %v514 = vshrl.u32 %v513, 7
    %v515 = vsub.s32 0, %v514
    %v516 = vrot.slane %v511, %v515
    %518 = vmatprep.subr.mxu0 0.0
    %519 = vmatpush1.msra.mxu0 %v495
    %520 = vmatprep.subr.mxu0 0.0
    %521 = vmatpush1.msra.mxu0 %v496
    %522 = vmatprep.subr.mxu0 0.0
    %523 = vmatpush1.msra.mxu0 %v497
    %524 = vmatprep.subr.mxu0 0.0
    %525 = vmatpush1.msra.mxu0 %v498
    %526 = vmatprep.subr.mxu0 0.0
    %527 = vmatpush1.msra.mxu0 %v499
    %528 = vmatprep.subr.mxu0 0.0
    %529 = vmatpush1.msra.mxu0 %v500
    %530 = vmatprep.subr.mxu0 0.0
    %531 = vmatpush1.msra.mxu0 %v501
    %532 = vmatprep.subr.mxu0 0.0
    %533 = vmatpush1.msra.mxu0 %v502
    %534 = vmatprep.subr.mxu0 0.0
    %535 = vmatpush1.msra.mxu0 %v503
    %536 = vmatprep.subr.mxu0 0.0
    %537 = vmatpush1.msra.mxu0 %v504
    %538 = vmatprep.subr.mxu0 0.0
    %539 = vmatpush1.msra.mxu0 %v505
    %540 = vmatprep.subr.mxu0 0.0
    %541 = vmatpush1.msra.mxu0 %v506
    %542 = vmatprep.subr.mxu0 0.0
    %543 = vmatpush1.msra.mxu0 %v507
    %544 = vmatprep.subr.mxu0 0.0
    %545 = vmatpush1.msra.mxu0 %v508
    %546 = vmatprep.subr.mxu0 0.0
    %547 = vmatpush1.msra.mxu0 %v509
    %548 = vmatprep.subr.mxu0 0.0
    %549 = vmatpush1.msra.mxu0 %v510
    %550 = vmatprep.subr.mxu0 0.0
    %551 = vmatpush1.msra.mxu0 0.0
    %552 = vmatprep.subr.mxu0 0.0
    %553 = vmatpush1.msra.mxu0 0.0
    %554 = vmatprep.subr.mxu0 0.0
    %555 = vmatpush1.msra.mxu0 0.0
    %556 = vmatprep.subr.mxu0 0.0
    %557 = vmatpush1.msra.mxu0 0.0
    %558 = vmatprep.subr.mxu0 0.0
    %559 = vmatpush1.msra.mxu0 0.0
    %560 = vmatprep.subr.mxu0 0.0
    %561 = vmatpush1.msra.mxu0 0.0
    %562 = vmatprep.subr.mxu0 0.0
    %563 = vmatpush1.msra.mxu0 0.0
    %564 = vmatprep.subr.mxu0 0.0
    %565 = vmatpush1.msra.mxu0 0.0
    %566 = vmatprep.subr.mxu0 0.0
    %567 = vmatpush1.msra.mxu0 0.0
    %568 = vmatprep.subr.mxu0 0.0
    %569 = vmatpush1.msra.mxu0 0.0
    %570 = vmatprep.subr.mxu0 0.0
    %571 = vmatpush1.msra.mxu0 0.0
    %572 = vmatprep.subr.mxu0 0.0
    %573 = vmatpush1.msra.mxu0 0.0
    %574 = vmatprep.subr.mxu0 0.0
    %575 = vmatpush1.msra.mxu0 0.0
    %576 = vmatprep.subr.mxu0 0.0
    %577 = vmatpush1.msra.mxu0 0.0
    %578 = vmatprep.subr.mxu0 0.0
    %579 = vmatpush1.msra.mxu0 0.0
    %580 = vmatprep.subr.mxu0 0.0
    %581 = vmatpush1.msra.mxu0 0.0
    %582 = vmatprep.mubr.f32.mxu0 0.0
    %583 = vmatmul.mubr.f32.gmra.mrb[0].mxu0 %v190
    %v584 = vpop.f32.mrb[0].mxu0
    %v585 = vadd.f32 %v516, %v584
    %v586 = vpop.f32.mrb[0].mxu0
    %587 = vmatprep.mubr.f32.mxu0 0.0
    %588 = vmatmul.mubr.f32.gmra.mrb[0].mxu0 %v196
    %v589 = vpop.f32.mrb[0].mxu0
    %v590 = vadd.f32 %v516, %v589
    %v591 = vpop.f32.mrb[0].mxu0
    %592 = vdwg.mxu0
    %v593 = vmul.f32 %v389, %v389
    %v594 = vmul.f32 %v394, %v394
    %v595 = vmul.f32 %v487, %v487
    %v596 = vmul.f32 %v492, %v492
    %v597 = vadd.f32 %v593, %v595
    %v598 = vadd.f32 %v594, %v596
    %v599 = vmul.f32 %v585, %v585
    %v600 = vmul.f32 %v590, %v590
    %v601 = vadd.f32 %v597, %v599
    %v602 = vadd.f32 %v598, %v600
    %v603 = vrsqrt.pop %v601
    %v604 = vmul.f32 %v601, %v603
    %vm605 = vcmp.eq.f32.partialorder %v601, inf
    %v606 = vsel %vm605, %v601, %v604
    %vm607 = vcmp.eq.f32.partialorder %v601, 0.0
    %v608 = vand.u32 %v601, 2147483648
    %v609 = vsel %vm607, %v608, %v606
    %v610 = vrsqrt.pop %v602
    %v611 = vmul.f32 %v602, %v610
    %vm612 = vcmp.eq.f32.partialorder %v602, inf
    %v613 = vsel %vm612, %v602, %v611
    %vm614 = vcmp.eq.f32.partialorder %v602, 0.0
    %v615 = vand.u32 %v602, 2147483648
    %v616 = vsel %vm614, %v615, %v613
    %v617 = vadd.f32 %v609, 1e-12
    %v618 = vadd.f32 %v616, 1e-12
    %v619 = vrcp.pop %v617
    %v620 = vmul.f32 1.0, %v619
    %v621 = vrcp.pop %v618
    %v622 = vmul.f32 1.0, %v621
    %v623 = vmul.f32 %v389, %v620
    %v624 = vmul.f32 %v394, %v622
    %625 = vst.msk [vmem:[%s12] sm:$0xff] %vm296, %v623
    %626 = vst.msk [vmem:[%s12 + $0x8] sm:$0xff] %vm296, %v624
    %v627 = vmul.f32 %v487, %v620
    %v628 = vmul.f32 %v492, %v622
    %s629 = scalar_lea.vmem %s12, 16
    %630 = vst.msk [vmem:[%s629] sm:$0xff] %vm296, %v627
    %631 = vst.msk [vmem:[%s629 + $0x8] sm:$0xff] %vm296, %v628
    %v632 = vmul.f32 %v585, %v620
    %v633 = vmul.f32 %v590, %v622
    %s634 = scalar_lea.vmem %s12, 32
    %635 = vst.msk [vmem:[%s634] sm:$0xff] %vm296, %v632
    %636 = vst.msk [vmem:[%s634 + $0x8] sm:$0xff] %vm296, %v633
    // Predicated region
    $region46: #{conventional_net_forward.11} parent=1 // pred_check
      _
    $region47: #{conventional_net_forward.11} parent=1 // pred_check_branch
      %638 = sbr.rel (0) target = $region49
    $region48: #{conventional_net_forward.11} parent=1 // pred_region
      %s640 = ssub.s32 256, 256
      %641 = vsyncadd [#allocation3], %s640
      %s642 = sshll.u32 [#allocation2], 4
      %s643 = int_to_ptr.vmem [resolvable:$true] %s642
      %648 = dma.vmem_to_hbm [thread:$0]  %s643, 256, %s11, [#allocation3], 128, 128, 8
    $region49: #{conventional_net_forward.11} parent=1 // pred_fallthru
      _
    // Predicated region
    $region50: #{conventional_net_forward.11} parent=1 // pred_check
      _
    $region51: #{conventional_net_forward.11} parent=1 // pred_check_branch
      %650 = sbr.rel (0) target = $region53
    $region52: #{conventional_net_forward.11} parent=1 // pred_region
      _
    $region53: #{conventional_net_forward.11} parent=1 // pred_fallthru
      _
    // Predicated region
    $region54: #{conventional_net_forward.11} parent=1 // pred_check
      _
    $region55: #{conventional_net_forward.11} parent=1 // pred_check_branch
      %652 = sbr.rel (0) target = $region57
    $region56: #{conventional_net_forward.11} parent=1 // pred_region
      %653 = dma.done [#allocation3], 256
    $region57: #{conventional_net_forward.11} parent=1 // pred_fallthru
      _
    // Predicated region
    $region58: #{conventional_net_forward.11} parent=1 // pred_check
      _
    $region59: #{conventional_net_forward.11} parent=1 // pred_check_branch
      %655 = sbr.rel (0) target = $region61
    $region60: #{conventional_net_forward.11} parent=1 // pred_region
      _
    $region61: #{conventional_net_forward.11} parent=1 // pred_fallthru
      _
    %656 = vsyncpa [#allocation3], 1

// kernel: conventional_net_forward.9
$region0: #{conventional_net_forward.9}
  #allocation0 [shape = 'u32[]', space=smem, size = 0x4, offset = 0x4, fixed_abs, tag = 'smem constant byte address 0x4 - core index']
  #allocation1 [shape = 'u32[144,128]{1,0:T(1,128)}', space=vmem, size = 0x12000, scoped, tag = 'internal scratch']
  #allocation2 [shape = 'f32[8,8,384]{2,1,0:T(8,128)}', space=vmem, size = 0x18000, scoped, tag = 'scratch operand']
  %s0 = inlined_call_operand.vmem [shape: f32[8,8,512], index: 0, kind: input, shape index: {}]
  %s1 = inlined_call_operand.vmem [shape: f32[512,384], index: 1, kind: input, shape index: {}]
  %s2 = inlined_call_operand.vmem [shape: f32[8,384], index: 2, kind: input, shape index: {}]
  %s3 = inlined_call_operand.vmem [shape: f32[256,384], index: 3, kind: input, shape index: {}]
  %s4 = inlined_call_operand.vmem [shape: f32[8,384], index: 4, kind: input, shape index: {}]
  %s5 = inlined_call_operand.vmem [shape: f32[8,8,128], index: 5, kind: output, shape index: {}]
  %s6 = sld [smem:[#allocation0]]
  $region30: #{conventional_net_forward.9} parent=0
    _
  %s8 = ssub.s32 1, %s6
  %s9 = scalar_select 0, %s8, %s6
  // Predicated region
  $region2: #{conventional_net_forward.9} parent=0 // pred_check
    _
  $region3: #{conventional_net_forward.9} parent=0 // pred_check_branch
    %11 = sbr.rel (0) target = $region5
  $region4: #{conventional_net_forward.9} parent=0 // pred_region
    _
  $region5: #{conventional_net_forward.9} parent=0 // pred_fallthru
    _
  // Predicated region
  $region6: #{conventional_net_forward.9} parent=0 // pred_check
    _
  $region7: #{conventional_net_forward.9} parent=0 // pred_check_branch
    %13 = sbr.rel (0) target = $region9
  $region8: #{conventional_net_forward.9} parent=0 // pred_region
    _
  $region9: #{conventional_net_forward.9} parent=0 // pred_fallthru
    _
  // Predicated region
  $region10: #{conventional_net_forward.9} parent=0 // pred_check
    _
  $region11: #{conventional_net_forward.9} parent=0 // pred_check_branch
    %15 = sbr.rel (0) target = $region13
  $region12: #{conventional_net_forward.9} parent=0 // pred_region
    _
  $region13: #{conventional_net_forward.9} parent=0 // pred_fallthru
    _
  // Predicated region
  $region14: #{conventional_net_forward.9} parent=0 // pred_check
    _
  $region15: #{conventional_net_forward.9} parent=0 // pred_check_branch
    %17 = sbr.rel (0) target = $region17
  $region16: #{conventional_net_forward.9} parent=0 // pred_region
    _
  $region17: #{conventional_net_forward.9} parent=0 // pred_fallthru
    _
  // Predicated region
  $region18: #{conventional_net_forward.9} parent=0 // pred_check
    _
  $region19: #{conventional_net_forward.9} parent=0 // pred_check_branch
    %19 = sbr.rel (0) target = $region21
  $region20: #{conventional_net_forward.9} parent=0 // pred_region
    _
  $region21: #{conventional_net_forward.9} parent=0 // pred_fallthru
    _
  %v20 = vld [vmem:[%s0] sm:$0xff]
  %v21 = vld [vmem:[%s0 + $0x8] sm:$0xff]
  %v22 = vld [vmem:[%s0 + $0x10] sm:$0xff]
  %v23 = vld [vmem:[%s0 + $0x18] sm:$0xff]
  %v24 = vld [vmem:[%s0 + $0x20] sm:$0xff]
  %v25 = vld [vmem:[%s0 + $0x28] sm:$0xff]
  %v26 = vld [vmem:[%s0 + $0x30] sm:$0xff]
  %v27 = vld [vmem:[%s0 + $0x38] sm:$0xff]
  %v28 = vld [vmem:[%s0 + $0x40] sm:$0xff]
  %v29 = vld [vmem:[%s0 + $0x48] sm:$0xff]
  %v30 = vld [vmem:[%s0 + $0x50] sm:$0xff]
  %v31 = vld [vmem:[%s0 + $0x58] sm:$0xff]
  %v32 = vld [vmem:[%s0 + $0x60] sm:$0xff]
  %v33 = vld [vmem:[%s0 + $0x68] sm:$0xff]
  %v34 = vld [vmem:[%s0 + $0x70] sm:$0xff]
  %v35 = vld [vmem:[%s0 + $0x78] sm:$0xff]
  %v36 = vld [vmem:[%s0 + $0x80] sm:$0xff]
  %v37 = vld [vmem:[%s0 + $0x88] sm:$0xff]
  %v38 = vld [vmem:[%s0 + $0x90] sm:$0xff]
  %v39 = vld [vmem:[%s0 + $0x98] sm:$0xff]
  %v40 = vld [vmem:[%s0 + $0xa0] sm:$0xff]
  %v41 = vld [vmem:[%s0 + $0xa8] sm:$0xff]
  %v42 = vld [vmem:[%s0 + $0xb0] sm:$0xff]
  %v43 = vld [vmem:[%s0 + $0xb8] sm:$0xff]
  %v44 = vld [vmem:[%s0 + $0xc0] sm:$0xff]
  %v45 = vld [vmem:[%s0 + $0xc8] sm:$0xff]
  %v46 = vld [vmem:[%s0 + $0xd0] sm:$0xff]
  %v47 = vld [vmem:[%s0 + $0xd8] sm:$0xff]
  %v48 = vld [vmem:[%s0 + $0xe0] sm:$0xff]
  %v49 = vld [vmem:[%s0 + $0xe8] sm:$0xff]
  %v50 = vld [vmem:[%s0 + $0xf0] sm:$0xff]
  %v51 = vld [vmem:[%s0 + $0xf8] sm:$0xff]
  %v52 = vld [vmem:[%s1] sm:$0xff]
  %v53 = vld [vmem:[%s1 + $0x8] sm:$0xff]
  %v54 = vld [vmem:[%s1 + $0x10] sm:$0xff]
  %v55 = vld [vmem:[%s1 + $0x18] sm:$0xff]
  %v56 = vld [vmem:[%s1 + $0x20] sm:$0xff]
  %v57 = vld [vmem:[%s1 + $0x28] sm:$0xff]
  %v58 = vld [vmem:[%s1 + $0x30] sm:$0xff]
  %v59 = vld [vmem:[%s1 + $0x38] sm:$0xff]
  %v60 = vld [vmem:[%s1 + $0x40] sm:$0xff]
  %v61 = vld [vmem:[%s1 + $0x48] sm:$0xff]
  %v62 = vld [vmem:[%s1 + $0x50] sm:$0xff]
  %v63 = vld [vmem:[%s1 + $0x58] sm:$0xff]
  %v64 = vld [vmem:[%s1 + $0x60] sm:$0xff]
  %v65 = vld [vmem:[%s1 + $0x68] sm:$0xff]
  %v66 = vld [vmem:[%s1 + $0x70] sm:$0xff]
  %v67 = vld [vmem:[%s1 + $0x78] sm:$0xff]
  %v68 = vld [vmem:[%s1 + $0x80] sm:$0xff]
  %v69 = vld [vmem:[%s1 + $0x88] sm:$0xff]
  %v70 = vld [vmem:[%s1 + $0x90] sm:$0xff]
  %v71 = vld [vmem:[%s1 + $0x98] sm:$0xff]
  %v72 = vld [vmem:[%s1 + $0xa0] sm:$0xff]
  %v73 = vld [vmem:[%s1 + $0xa8] sm:$0xff]
  %v74 = vld [vmem:[%s1 + $0xb0] sm:$0xff]
  %v75 = vld [vmem:[%s1 + $0xb8] sm:$0xff]
  %v76 = vld [vmem:[%s1 + $0xc0] sm:$0xff]
  %v77 = vld [vmem:[%s1 + $0xc8] sm:$0xff]
  %v78 = vld [vmem:[%s1 + $0xd0] sm:$0xff]
  %v79 = vld [vmem:[%s1 + $0xd8] sm:$0xff]
  %v80 = vld [vmem:[%s1 + $0xe0] sm:$0xff]
  %v81 = vld [vmem:[%s1 + $0xe8] sm:$0xff]
  %v82 = vld [vmem:[%s1 + $0xf0] sm:$0xff]
  %v83 = vld [vmem:[%s1 + $0xf8] sm:$0xff]
  %v84 = vld [vmem:[%s1 + $0x100] sm:$0xff]
  %v85 = vld [vmem:[%s1 + $0x108] sm:$0xff]
  %v86 = vld [vmem:[%s1 + $0x110] sm:$0xff]
  %v87 = vld [vmem:[%s1 + $0x118] sm:$0xff]
  %v88 = vld [vmem:[%s1 + $0x120] sm:$0xff]
  %v89 = vld [vmem:[%s1 + $0x128] sm:$0xff]
  %v90 = vld [vmem:[%s1 + $0x130] sm:$0xff]
  %v91 = vld [vmem:[%s1 + $0x138] sm:$0xff]
  %v92 = vld [vmem:[%s1 + $0x140] sm:$0xff]
  %v93 = vld [vmem:[%s1 + $0x148] sm:$0xff]
  %v94 = vld [vmem:[%s1 + $0x150] sm:$0xff]
  %v95 = vld [vmem:[%s1 + $0x158] sm:$0xff]
  %v96 = vld [vmem:[%s1 + $0x160] sm:$0xff]
  %v97 = vld [vmem:[%s1 + $0x168] sm:$0xff]
  %v98 = vld [vmem:[%s1 + $0x170] sm:$0xff]
  %v99 = vld [vmem:[%s1 + $0x178] sm:$0xff]
  %v100 = vld [vmem:[%s1 + $0x180] sm:$0xff]
  %v101 = vld [vmem:[%s1 + $0x188] sm:$0xff]
  %v102 = vld [vmem:[%s1 + $0x190] sm:$0xff]
  %v103 = vld [vmem:[%s1 + $0x198] sm:$0xff]
  %v104 = vld [vmem:[%s1 + $0x1a0] sm:$0xff]
  %v105 = vld [vmem:[%s1 + $0x1a8] sm:$0xff]
  %v106 = vld [vmem:[%s1 + $0x1b0] sm:$0xff]
  %v107 = vld [vmem:[%s1 + $0x1b8] sm:$0xff]
  %v108 = vld [vmem:[%s1 + $0x1c0] sm:$0xff]
  %v109 = vld [vmem:[%s1 + $0x1c8] sm:$0xff]
  %v110 = vld [vmem:[%s1 + $0x1d0] sm:$0xff]
  %v111 = vld [vmem:[%s1 + $0x1d8] sm:$0xff]
  %v112 = vld [vmem:[%s1 + $0x1e0] sm:$0xff]
  %v113 = vld [vmem:[%s1 + $0x1e8] sm:$0xff]
  %v114 = vld [vmem:[%s1 + $0x1f0] sm:$0xff]
  %v115 = vld [vmem:[%s1 + $0x1f8] sm:$0xff]
  %v116 = vld [vmem:[%s1 + $0x200] sm:$0xff]
  %v117 = vld [vmem:[%s1 + $0x208] sm:$0xff]
  %v118 = vld [vmem:[%s1 + $0x210] sm:$0xff]
  %v119 = vld [vmem:[%s1 + $0x218] sm:$0xff]
  %v120 = vld [vmem:[%s1 + $0x220] sm:$0xff]
  %v121 = vld [vmem:[%s1 + $0x228] sm:$0xff]
  %v122 = vld [vmem:[%s1 + $0x230] sm:$0xff]
  %v123 = vld [vmem:[%s1 + $0x238] sm:$0xff]
  %v124 = vld [vmem:[%s1 + $0x240] sm:$0xff]
  %v125 = vld [vmem:[%s1 + $0x248] sm:$0xff]
  %v126 = vld [vmem:[%s1 + $0x250] sm:$0xff]
  %v127 = vld [vmem:[%s1 + $0x258] sm:$0xff]
  %v128 = vld [vmem:[%s1 + $0x260] sm:$0xff]
  %v129 = vld [vmem:[%s1 + $0x268] sm:$0xff]
  %v130 = vld [vmem:[%s1 + $0x270] sm:$0xff]
  %v131 = vld [vmem:[%s1 + $0x278] sm:$0xff]
  %v132 = vld [vmem:[%s1 + $0x280] sm:$0xff]
  %v133 = vld [vmem:[%s1 + $0x288] sm:$0xff]
  %v134 = vld [vmem:[%s1 + $0x290] sm:$0xff]
  %v135 = vld [vmem:[%s1 + $0x298] sm:$0xff]
  %v136 = vld [vmem:[%s1 + $0x2a0] sm:$0xff]
  %v137 = vld [vmem:[%s1 + $0x2a8] sm:$0xff]
  %v138 = vld [vmem:[%s1 + $0x2b0] sm:$0xff]
  %v139 = vld [vmem:[%s1 + $0x2b8] sm:$0xff]
  %v140 = vld [vmem:[%s1 + $0x2c0] sm:$0xff]
  %v141 = vld [vmem:[%s1 + $0x2c8] sm:$0xff]
  %v142 = vld [vmem:[%s1 + $0x2d0] sm:$0xff]
  %v143 = vld [vmem:[%s1 + $0x2d8] sm:$0xff]
  %v144 = vld [vmem:[%s1 + $0x2e0] sm:$0xff]
  %v145 = vld [vmem:[%s1 + $0x2e8] sm:$0xff]
  %v146 = vld [vmem:[%s1 + $0x2f0] sm:$0xff]
  %v147 = vld [vmem:[%s1 + $0x2f8] sm:$0xff]
  %v148 = vld [vmem:[%s1 + $0x300] sm:$0xff]
  %v149 = vld [vmem:[%s1 + $0x308] sm:$0xff]
  %v150 = vld [vmem:[%s1 + $0x310] sm:$0xff]
  %v151 = vld [vmem:[%s1 + $0x318] sm:$0xff]
  %v152 = vld [vmem:[%s1 + $0x320] sm:$0xff]
  %v153 = vld [vmem:[%s1 + $0x328] sm:$0xff]
  %v154 = vld [vmem:[%s1 + $0x330] sm:$0xff]
  %v155 = vld [vmem:[%s1 + $0x338] sm:$0xff]
  %v156 = vld [vmem:[%s1 + $0x340] sm:$0xff]
  %v157 = vld [vmem:[%s1 + $0x348] sm:$0xff]
  %v158 = vld [vmem:[%s1 + $0x350] sm:$0xff]
  %v159 = vld [vmem:[%s1 + $0x358] sm:$0xff]
  %v160 = vld [vmem:[%s1 + $0x360] sm:$0xff]
  %v161 = vld [vmem:[%s1 + $0x368] sm:$0xff]
  %v162 = vld [vmem:[%s1 + $0x370] sm:$0xff]
  %v163 = vld [vmem:[%s1 + $0x378] sm:$0xff]
  %v164 = vld [vmem:[%s1 + $0x380] sm:$0xff]
  %v165 = vld [vmem:[%s1 + $0x388] sm:$0xff]
  %v166 = vld [vmem:[%s1 + $0x390] sm:$0xff]
  %v167 = vld [vmem:[%s1 + $0x398] sm:$0xff]
  %v168 = vld [vmem:[%s1 + $0x3a0] sm:$0xff]
  %v169 = vld [vmem:[%s1 + $0x3a8] sm:$0xff]
  %v170 = vld [vmem:[%s1 + $0x3b0] sm:$0xff]
  %v171 = vld [vmem:[%s1 + $0x3b8] sm:$0xff]
  %v172 = vld [vmem:[%s1 + $0x3c0] sm:$0xff]
  %v173 = vld [vmem:[%s1 + $0x3c8] sm:$0xff]
  %v174 = vld [vmem:[%s1 + $0x3d0] sm:$0xff]
  %v175 = vld [vmem:[%s1 + $0x3d8] sm:$0xff]
  %v176 = vld [vmem:[%s1 + $0x3e0] sm:$0xff]
  %v177 = vld [vmem:[%s1 + $0x3e8] sm:$0xff]
  %v178 = vld [vmem:[%s1 + $0x3f0] sm:$0xff]
  %v179 = vld [vmem:[%s1 + $0x3f8] sm:$0xff]
  %v180 = vld [vmem:[%s1 + $0x400] sm:$0xff]
  %v181 = vld [vmem:[%s1 + $0x408] sm:$0xff]
  %v182 = vld [vmem:[%s1 + $0x410] sm:$0xff]
  %v183 = vld [vmem:[%s1 + $0x418] sm:$0xff]
  %v184 = vld [vmem:[%s1 + $0x420] sm:$0xff]
  %v185 = vld [vmem:[%s1 + $0x428] sm:$0xff]
  %v186 = vld [vmem:[%s1 + $0x430] sm:$0xff]
  %v187 = vld [vmem:[%s1 + $0x438] sm:$0xff]
  %v188 = vld [vmem:[%s1 + $0x440] sm:$0xff]
  %v189 = vld [vmem:[%s1 + $0x448] sm:$0xff]
  %v190 = vld [vmem:[%s1 + $0x450] sm:$0xff]
  %v191 = vld [vmem:[%s1 + $0x458] sm:$0xff]
  %v192 = vld [vmem:[%s1 + $0x460] sm:$0xff]
  %v193 = vld [vmem:[%s1 + $0x468] sm:$0xff]
  %v194 = vld [vmem:[%s1 + $0x470] sm:$0xff]
  %v195 = vld [vmem:[%s1 + $0x478] sm:$0xff]
  %v196 = vld [vmem:[%s1 + $0x480] sm:$0xff]
  %v197 = vld [vmem:[%s1 + $0x488] sm:$0xff]
  %v198 = vld [vmem:[%s1 + $0x490] sm:$0xff]
  %v199 = vld [vmem:[%s1 + $0x498] sm:$0xff]
  %v200 = vld [vmem:[%s1 + $0x4a0] sm:$0xff]
  %v201 = vld [vmem:[%s1 + $0x4a8] sm:$0xff]
  %v202 = vld [vmem:[%s1 + $0x4b0] sm:$0xff]
  %v203 = vld [vmem:[%s1 + $0x4b8] sm:$0xff]
  %v204 = vld [vmem:[%s1 + $0x4c0] sm:$0xff]
  %v205 = vld [vmem:[%s1 + $0x4c8] sm:$0xff]
  %v206 = vld [vmem:[%s1 + $0x4d0] sm:$0xff]
  %v207 = vld [vmem:[%s1 + $0x4d8] sm:$0xff]
  %v208 = vld [vmem:[%s1 + $0x4e0] sm:$0xff]
  %v209 = vld [vmem:[%s1 + $0x4e8] sm:$0xff]
  %v210 = vld [vmem:[%s1 + $0x4f0] sm:$0xff]
  %v211 = vld [vmem:[%s1 + $0x4f8] sm:$0xff]
  %v212 = vld [vmem:[%s1 + $0x500] sm:$0xff]
  %v213 = vld [vmem:[%s1 + $0x508] sm:$0xff]
  %v214 = vld [vmem:[%s1 + $0x510] sm:$0xff]
  %v215 = vld [vmem:[%s1 + $0x518] sm:$0xff]
  %v216 = vld [vmem:[%s1 + $0x520] sm:$0xff]
  %v217 = vld [vmem:[%s1 + $0x528] sm:$0xff]
  %v218 = vld [vmem:[%s1 + $0x530] sm:$0xff]
  %v219 = vld [vmem:[%s1 + $0x538] sm:$0xff]
  %v220 = vld [vmem:[%s1 + $0x540] sm:$0xff]
  %v221 = vld [vmem:[%s1 + $0x548] sm:$0xff]
  %v222 = vld [vmem:[%s1 + $0x550] sm:$0xff]
  %v223 = vld [vmem:[%s1 + $0x558] sm:$0xff]
  %v224 = vld [vmem:[%s1 + $0x560] sm:$0xff]
  %v225 = vld [vmem:[%s1 + $0x568] sm:$0xff]
  %v226 = vld [vmem:[%s1 + $0x570] sm:$0xff]
  %v227 = vld [vmem:[%s1 + $0x578] sm:$0xff]
  %v228 = vld [vmem:[%s1 + $0x580] sm:$0xff]
  %v229 = vld [vmem:[%s1 + $0x588] sm:$0xff]
  %v230 = vld [vmem:[%s1 + $0x590] sm:$0xff]
  %v231 = vld [vmem:[%s1 + $0x598] sm:$0xff]
  %v232 = vld [vmem:[%s1 + $0x5a0] sm:$0xff]
  %v233 = vld [vmem:[%s1 + $0x5a8] sm:$0xff]
  %v234 = vld [vmem:[%s1 + $0x5b0] sm:$0xff]
  %v235 = vld [vmem:[%s1 + $0x5b8] sm:$0xff]
  %v236 = vld [vmem:[%s1 + $0x5c0] sm:$0xff]
  %v237 = vld [vmem:[%s1 + $0x5c8] sm:$0xff]
  %v238 = vld [vmem:[%s1 + $0x5d0] sm:$0xff]
  %v239 = vld [vmem:[%s1 + $0x5d8] sm:$0xff]
  %v240 = vld [vmem:[%s1 + $0x5e0] sm:$0xff]
  %v241 = vld [vmem:[%s1 + $0x5e8] sm:$0xff]
  %v242 = vld [vmem:[%s1 + $0x5f0] sm:$0xff]
  %v243 = vld [vmem:[%s1 + $0x5f8] sm:$0xff]
  %244 = vmatprep.subr.mxu0 %v53
  %245 = vmatpush1.msra.mxu0 %v52
  %246 = vmatprep.subr.mxu0 %v56
  %247 = vmatpush1.msra.mxu0 %v55
  %248 = vmatprep.subr.mxu0 %v59
  %249 = vmatpush1.msra.mxu0 %v58
  %250 = vmatprep.subr.mxu0 %v62
  %251 = vmatpush1.msra.mxu0 %v61
  %252 = vmatprep.subr.mxu0 %v65
  %253 = vmatpush1.msra.mxu0 %v64
  %254 = vmatprep.subr.mxu0 %v68
  %255 = vmatpush1.msra.mxu0 %v67
  %256 = vmatprep.subr.mxu0 %v71
  %257 = vmatpush1.msra.mxu0 %v70
  %258 = vmatprep.subr.mxu0 %v74
  %259 = vmatpush1.msra.mxu0 %v73
  %260 = vmatprep.subr.mxu0 %v77
  %261 = vmatpush1.msra.mxu0 %v76
  %262 = vmatprep.subr.mxu0 %v80
  %263 = vmatpush1.msra.mxu0 %v79
  %264 = vmatprep.subr.mxu0 %v83
  %265 = vmatpush1.msra.mxu0 %v82
  %266 = vmatprep.subr.mxu0 %v86
  %267 = vmatpush1.msra.mxu0 %v85
  %268 = vmatprep.subr.mxu0 %v89
  %269 = vmatpush1.msra.mxu0 %v88
  %270 = vmatprep.subr.mxu0 %v92
  %271 = vmatpush1.msra.mxu0 %v91
  %272 = vmatprep.subr.mxu0 %v95
  %273 = vmatpush1.msra.mxu0 %v94
  %274 = vmatprep.subr.mxu0 %v98
  %275 = vmatpush1.msra.mxu0 %v97
  %276 = vmatprep.subr.mxu0 %v101
  %277 = vmatpush1.msra.mxu0 %v100
  %278 = vmatprep.subr.mxu0 %v104
  %279 = vmatpush1.msra.mxu0 %v103
  %280 = vmatprep.subr.mxu0 %v107
  %281 = vmatpush1.msra.mxu0 %v106
  %282 = vmatprep.subr.mxu0 %v110
  %283 = vmatpush1.msra.mxu0 %v109
  %284 = vmatprep.subr.mxu0 %v113
  %285 = vmatpush1.msra.mxu0 %v112
  %286 = vmatprep.subr.mxu0 %v116
  %287 = vmatpush1.msra.mxu0 %v115
  %288 = vmatprep.subr.mxu0 %v119
  %289 = vmatpush1.msra.mxu0 %v118
  %290 = vmatprep.subr.mxu0 %v122
  %291 = vmatpush1.msra.mxu0 %v121
  %292 = vmatprep.subr.mxu0 %v125
  %293 = vmatpush1.msra.mxu0 %v124
  %294 = vmatprep.subr.mxu0 %v128
  %295 = vmatpush1.msra.mxu0 %v127
  %296 = vmatprep.subr.mxu0 %v131
  %297 = vmatpush1.msra.mxu0 %v130
  %298 = vmatprep.subr.mxu0 %v134
  %299 = vmatpush1.msra.mxu0 %v133
  %300 = vmatprep.subr.mxu0 %v137
  %301 = vmatpush1.msra.mxu0 %v136
  %302 = vmatprep.subr.mxu0 %v140
  %303 = vmatpush1.msra.mxu0 %v139
  %304 = vmatprep.subr.mxu0 %v143
  %305 = vmatpush1.msra.mxu0 %v142
  %306 = vmatprep.subr.mxu0 %v146
  %307 = vmatpush1.msra.mxu0 %v145
  %308 = vmatprep.mubr.f32.mxu0 %v21
  %309 = vmatmul.mubr.f32.gmra.mrb[0].mxu0 %v20
  %v310 = vpop.f32.mrb[0].mxu0
  %v311 = vadd.f32 0.0, %v310
  %v312 = vpop.f32.mrb[0].mxu0
  %v313 = vadd.f32 0.0, %v312
  %314 = vmatprep.mubr.f32.mxu0 %v25
  %315 = vmatmul.mubr.f32.gmra.mrb[0].mxu0 %v24
  %v316 = vpop.f32.mrb[0].mxu0
  %v317 = vadd.f32 0.0, %v316
  %v318 = vpop.f32.mrb[0].mxu0
  %v319 = vadd.f32 0.0, %v318
  %320 = vmatprep.mubr.f32.mxu0 %v29
  %321 = vmatmul.mubr.f32.gmra.mrb[0].mxu0 %v28
  %v322 = vpop.f32.mrb[0].mxu0
  %v323 = vadd.f32 0.0, %v322
  %v324 = vpop.f32.mrb[0].mxu0
  %v325 = vadd.f32 0.0, %v324
  %326 = vmatprep.mubr.f32.mxu0 %v33
  %327 = vmatmul.mubr.f32.gmra.mrb[0].mxu0 %v32
  %v328 = vpop.f32.mrb[0].mxu0
  %v329 = vadd.f32 0.0, %v328
  %v330 = vpop.f32.mrb[0].mxu0
  %v331 = vadd.f32 0.0, %v330
  %332 = vmatprep.mubr.f32.mxu0 %v37
  %333 = vmatmul.mubr.f32.gmra.mrb[0].mxu0 %v36
  %v334 = vpop.f32.mrb[0].mxu0
  %v335 = vadd.f32 0.0, %v334
  %v336 = vpop.f32.mrb[0].mxu0
  %v337 = vadd.f32 0.0, %v336
  %338 = vmatprep.mubr.f32.mxu0 %v41
  %339 = vmatmul.mubr.f32.gmra.mrb[0].mxu0 %v40
  %v340 = vpop.f32.mrb[0].mxu0
  %v341 = vadd.f32 0.0, %v340
  %v342 = vpop.f32.mrb[0].mxu0
  %v343 = vadd.f32 0.0, %v342
  %344 = vmatprep.mubr.f32.mxu0 %v45
  %345 = vmatmul.mubr.f32.gmra.mrb[0].mxu0 %v44
  %v346 = vpop.f32.mrb[0].mxu0
  %v347 = vadd.f32 0.0, %v346
  %v348 = vpop.f32.mrb[0].mxu0
  %v349 = vadd.f32 0.0, %v348
  %350 = vmatprep.mubr.f32.mxu0 %v49
  %351 = vmatmul.mubr.f32.gmra.mrb[0].mxu0 %v48
  %v352 = vpop.f32.mrb[0].mxu0
  %v353 = vadd.f32 0.0, %v352
  %v354 = vpop.f32.mrb[0].mxu0
  %v355 = vadd.f32 0.0, %v354
  %356 = vdwg.mxu0
  %357 = vmatprep.subr.mxu0 %v149
  %358 = vmatpush1.msra.mxu0 %v148
  %359 = vmatprep.subr.mxu0 %v152
  %360 = vmatpush1.msra.mxu0 %v151
  %361 = vmatprep.subr.mxu0 %v155
  %362 = vmatpush1.msra.mxu0 %v154
  %363 = vmatprep.subr.mxu0 %v158
  %364 = vmatpush1.msra.mxu0 %v157
  %365 = vmatprep.subr.mxu0 %v161
  %366 = vmatpush1.msra.mxu0 %v160
  %367 = vmatprep.subr.mxu0 %v164
  %368 = vmatpush1.msra.mxu0 %v163
  %369 = vmatprep.subr.mxu0 %v167
  %370 = vmatpush1.msra.mxu0 %v166
  %371 = vmatprep.subr.mxu0 %v170
  %372 = vmatpush1.msra.mxu0 %v169
  %373 = vmatprep.subr.mxu0 %v173
  %374 = vmatpush1.msra.mxu0 %v172
  %375 = vmatprep.subr.mxu0 %v176
  %376 = vmatpush1.msra.mxu0 %v175
  %377 = vmatprep.subr.mxu0 %v179
  %378 = vmatpush1.msra.mxu0 %v178
  %379 = vmatprep.subr.mxu0 %v182
  %380 = vmatpush1.msra.mxu0 %v181
  %381 = vmatprep.subr.mxu0 %v185
  %382 = vmatpush1.msra.mxu0 %v184
  %383 = vmatprep.subr.mxu0 %v188
  %384 = vmatpush1.msra.mxu0 %v187
  %385 = vmatprep.subr.mxu0 %v191
  %386 = vmatpush1.msra.mxu0 %v190
  %387 = vmatprep.subr.mxu0 %v194
  %388 = vmatpush1.msra.mxu0 %v193
  %389 = vmatprep.subr.mxu0 %v197
  %390 = vmatpush1.msra.mxu0 %v196
  %391 = vmatprep.subr.mxu0 %v200
  %392 = vmatpush1.msra.mxu0 %v199
  %393 = vmatprep.subr.mxu0 %v203
  %394 = vmatpush1.msra.mxu0 %v202
  %395 = vmatprep.subr.mxu0 %v206
  %396 = vmatpush1.msra.mxu0 %v205
  %397 = vmatprep.subr.mxu0 %v209
  %398 = vmatpush1.msra.mxu0 %v208
  %399 = vmatprep.subr.mxu0 %v212
  %400 = vmatpush1.msra.mxu0 %v211
  %401 = vmatprep.subr.mxu0 %v215
  %402 = vmatpush1.msra.mxu0 %v214
  %403 = vmatprep.subr.mxu0 %v218
  %404 = vmatpush1.msra.mxu0 %v217
  %405 = vmatprep.subr.mxu0 %v221
  %406 = vmatpush1.msra.mxu0 %v220
  %407 = vmatprep.subr.mxu0 %v224
  %408 = vmatpush1.msra.mxu0 %v223
  %409 = vmatprep.subr.mxu0 %v227
  %410 = vmatpush1.msra.mxu0 %v226
  %411 = vmatprep.subr.mxu0 %v230
  %412 = vmatpush1.msra.mxu0 %v229
  %413 = vmatprep.subr.mxu0 %v233
  %414 = vmatpush1.msra.mxu0 %v232
  %415 = vmatprep.subr.mxu0 %v236
  %416 = vmatpush1.msra.mxu0 %v235
  %417 = vmatprep.subr.mxu0 %v239
  %418 = vmatpush1.msra.mxu0 %v238
  %419 = vmatprep.subr.mxu0 %v242
  %420 = vmatpush1.msra.mxu0 %v241
  %421 = vmatprep.mubr.f32.mxu0 %v23
  %422 = vmatmul.mubr.f32.gmra.mrb[0].mxu0 %v22
  %v423 = vpop.f32.mrb[0].mxu0
  %v424 = vadd.f32 %v311, %v423
  %v425 = vpop.f32.mrb[0].mxu0
  %v426 = vadd.f32 %v313, %v425
  %427 = vmatprep.mubr.f32.mxu0 %v27
  %428 = vmatmul.mubr.f32.gmra.mrb[0].mxu0 %v26
  %v429 = vpop.f32.mrb[0].mxu0
  %v430 = vadd.f32 %v317, %v429
  %v431 = vpop.f32.mrb[0].mxu0
  %v432 = vadd.f32 %v319, %v431
  %433 = vmatprep.mubr.f32.mxu0 %v31
  %434 = vmatmul.mubr.f32.gmra.mrb[0].mxu0 %v30
  %v435 = vpop.f32.mrb[0].mxu0
  %v436 = vadd.f32 %v323, %v435
  %v437 = vpop.f32.mrb[0].mxu0
  %v438 = vadd.f32 %v325, %v437
  %439 = vmatprep.mubr.f32.mxu0 %v35
  %440 = vmatmul.mubr.f32.gmra.mrb[0].mxu0 %v34
  %v441 = vpop.f32.mrb[0].mxu0
  %v442 = vadd.f32 %v329, %v441
  %v443 = vpop.f32.mrb[0].mxu0
  %v444 = vadd.f32 %v331, %v443
  %445 = vmatprep.mubr.f32.mxu0 %v39
  %446 = vmatmul.mubr.f32.gmra.mrb[0].mxu0 %v38
  %v447 = vpop.f32.mrb[0].mxu0
  %v448 = vadd.f32 %v335, %v447
  %v449 = vpop.f32.mrb[0].mxu0
  %v450 = vadd.f32 %v337, %v449
  %451 = vmatprep.mubr.f32.mxu0 %v43
  %452 = vmatmul.mubr.f32.gmra.mrb[0].mxu0 %v42
  %v453 = vpop.f32.mrb[0].mxu0
  %v454 = vadd.f32 %v341, %v453
  %v455 = vpop.f32.mrb[0].mxu0
  %v456 = vadd.f32 %v343, %v455
  %457 = vmatprep.mubr.f32.mxu0 %v47
  %458 = vmatmul.mubr.f32.gmra.mrb[0].mxu0 %v46
  %v459 = vpop.f32.mrb[0].mxu0
  %v460 = vadd.f32 %v347, %v459
  %v461 = vpop.f32.mrb[0].mxu0
  %v462 = vadd.f32 %v349, %v461
  %463 = vmatprep.mubr.f32.mxu0 %v51
  %464 = vmatmul.mubr.f32.gmra.mrb[0].mxu0 %v50
  %v465 = vpop.f32.mrb[0].mxu0
  %v466 = vadd.f32 %v353, %v465
  %v467 = vpop.f32.mrb[0].mxu0
  %v468 = vadd.f32 %v355, %v467
  %469 = vdwg.mxu0
  %470 = vmatprep.subr.mxu0 0.0
  %471 = vmatpush1.msra.mxu0 %v54
  %472 = vmatprep.subr.mxu0 0.0
  %473 = vmatpush1.msra.mxu0 %v57
  %474 = vmatprep.subr.mxu0 0.0
  %475 = vmatpush1.msra.mxu0 %v60
  %476 = vmatprep.subr.mxu0 0.0
  %477 = vmatpush1.msra.mxu0 %v63
  %478 = vmatprep.subr.mxu0 0.0
  %479 = vmatpush1.msra.mxu0 %v66
  %480 = vmatprep.subr.mxu0 0.0
  %481 = vmatpush1.msra.mxu0 %v69
  %482 = vmatprep.subr.mxu0 0.0
  %483 = vmatpush1.msra.mxu0 %v72
  %484 = vmatprep.subr.mxu0 0.0
  %485 = vmatpush1.msra.mxu0 %v75
  %486 = vmatprep.subr.mxu0 0.0
  %487 = vmatpush1.msra.mxu0 %v78
  %488 = vmatprep.subr.mxu0 0.0
  %489 = vmatpush1.msra.mxu0 %v81
  %490 = vmatprep.subr.mxu0 0.0
  %491 = vmatpush1.msra.mxu0 %v84
  %492 = vmatprep.subr.mxu0 0.0
  %493 = vmatpush1.msra.mxu0 %v87
  %494 = vmatprep.subr.mxu0 0.0
  %495 = vmatpush1.msra.mxu0 %v90
  %496 = vmatprep.subr.mxu0 0.0
  %497 = vmatpush1.msra.mxu0 %v93
  %498 = vmatprep.subr.mxu0 0.0
  %499 = vmatpush1.msra.mxu0 %v96
  %500 = vmatprep.subr.mxu0 0.0
  %501 = vmatpush1.msra.mxu0 %v99
  %502 = vmatprep.subr.mxu0 0.0
  %503 = vmatpush1.msra.mxu0 %v102
  %504 = vmatprep.subr.mxu0 0.0
  %505 = vmatpush1.msra.mxu0 %v105
  %506 = vmatprep.subr.mxu0 0.0
  %507 = vmatpush1.msra.mxu0 %v108
  %508 = vmatprep.subr.mxu0 0.0
  %509 = vmatpush1.msra.mxu0 %v111
  %510 = vmatprep.subr.mxu0 0.0
  %511 = vmatpush1.msra.mxu0 %v114
  %512 = vmatprep.subr.mxu0 0.0
  %513 = vmatpush1.msra.mxu0 %v117
  %514 = vmatprep.subr.mxu0 0.0
  %515 = vmatpush1.msra.mxu0 %v120
  %516 = vmatprep.subr.mxu0 0.0
  %517 = vmatpush1.msra.mxu0 %v123
  %518 = vmatprep.subr.mxu0 0.0
  %519 = vmatpush1.msra.mxu0 %v126
  %520 = vmatprep.subr.mxu0 0.0
  %521 = vmatpush1.msra.mxu0 %v129
  %522 = vmatprep.subr.mxu0 0.0
  %523 = vmatpush1.msra.mxu0 %v132
  %524 = vmatprep.subr.mxu0 0.0
  %525 = vmatpush1.msra.mxu0 %v135
  %526 = vmatprep.subr.mxu0 0.0
  %527 = vmatpush1.msra.mxu0 %v138
  %528 = vmatprep.subr.mxu0 0.0
  %529 = vmatpush1.msra.mxu0 %v141
  %530 = vmatprep.subr.mxu0 0.0
  %531 = vmatpush1.msra.mxu0 %v144
  %532 = vmatprep.subr.mxu0 0.0
  %533 = vmatpush1.msra.mxu0 %v147
  %534 = vmatprep.mubr.f32.mxu0 %v21
  %535 = vmatmul.mubr.f32.gmra.mrb[0].mxu0 %v20
  %v536 = vpop.f32.mrb[0].mxu0
  %v537 = vadd.f32 0.0, %v536
  %v538 = vpop.f32.mrb[0].mxu0
  %539 = vmatprep.mubr.f32.mxu0 %v25
  %540 = vmatmul.mubr.f32.gmra.mrb[0].mxu0 %v24
  %v541 = vpop.f32.mrb[0].mxu0
  %v542 = vadd.f32 0.0, %v541
  %v543 = vpop.f32.mrb[0].mxu0
  %544 = vmatprep.mubr.f32.mxu0 %v29
  %545 = vmatmul.mubr.f32.gmra.mrb[0].mxu0 %v28
  %v546 = vpop.f32.mrb[0].mxu0
  %v547 = vadd.f32 0.0, %v546
  %v548 = vpop.f32.mrb[0].mxu0
  %549 = vmatprep.mubr.f32.mxu0 %v33
  %550 = vmatmul.mubr.f32.gmra.mrb[0].mxu0 %v32
  %v551 = vpop.f32.mrb[0].mxu0
  %v552 = vadd.f32 0.0, %v551
  %v553 = vpop.f32.mrb[0].mxu0
  %554 = vmatprep.mubr.f32.mxu0 %v37
  %555 = vmatmul.mubr.f32.gmra.mrb[0].mxu0 %v36
  %v556 = vpop.f32.mrb[0].mxu0
  %v557 = vadd.f32 0.0, %v556
  %v558 = vpop.f32.mrb[0].mxu0
  %559 = vmatprep.mubr.f32.mxu0 %v41
  %560 = vmatmul.mubr.f32.gmra.mrb[0].mxu0 %v40
  %v561 = vpop.f32.mrb[0].mxu0
  %v562 = vadd.f32 0.0, %v561
  %v563 = vpop.f32.mrb[0].mxu0
  %564 = vmatprep.mubr.f32.mxu0 %v45
  %565 = vmatmul.mubr.f32.gmra.mrb[0].mxu0 %v44
  %v566 = vpop.f32.mrb[0].mxu0
  %v567 = vadd.f32 0.0, %v566
  %v568 = vpop.f32.mrb[0].mxu0
  %569 = vmatprep.mubr.f32.mxu0 %v49
  %570 = vmatmul.mubr.f32.gmra.mrb[0].mxu0 %v48
  %v571 = vpop.f32.mrb[0].mxu0
  %v572 = vadd.f32 0.0, %v571
  %v573 = vpop.f32.mrb[0].mxu0
  %574 = vdwg.mxu0
  %575 = vmatprep.subr.mxu0 0.0
  %576 = vmatpush1.msra.mxu0 %v150
  %577 = vmatprep.subr.mxu0 0.0
  %578 = vmatpush1.msra.mxu0 %v153
  %579 = vmatprep.subr.mxu0 0.0
  %580 = vmatpush1.msra.mxu0 %v156
  %581 = vmatprep.subr.mxu0 0.0
  %582 = vmatpush1.msra.mxu0 %v159
  %583 = vmatprep.subr.mxu0 0.0
  %584 = vmatpush1.msra.mxu0 %v162
  %585 = vmatprep.subr.mxu0 0.0
  %586 = vmatpush1.msra.mxu0 %v165
  %587 = vmatprep.subr.mxu0 0.0
  %588 = vmatpush1.msra.mxu0 %v168
  %589 = vmatprep.subr.mxu0 0.0
  %590 = vmatpush1.msra.mxu0 %v171
  %591 = vmatprep.subr.mxu0 0.0
  %592 = vmatpush1.msra.mxu0 %v174
  %593 = vmatprep.subr.mxu0 0.0
  %594 = vmatpush1.msra.mxu0 %v177
  %595 = vmatprep.subr.mxu0 0.0
  %596 = vmatpush1.msra.mxu0 %v180
  %597 = vmatprep.subr.mxu0 0.0
  %598 = vmatpush1.msra.mxu0 %v183
  %599 = vmatprep.subr.mxu0 0.0
  %600 = vmatpush1.msra.mxu0 %v186
  %601 = vmatprep.subr.mxu0 0.0
  %602 = vmatpush1.msra.mxu0 %v189
  %603 = vmatprep.subr.mxu0 0.0
  %604 = vmatpush1.msra.mxu0 %v192
  %605 = vmatprep.subr.mxu0 0.0
  %606 = vmatpush1.msra.mxu0 %v195
  %607 = vmatprep.subr.mxu0 0.0
  %608 = vmatpush1.msra.mxu0 %v198
  %609 = vmatprep.subr.mxu0 0.0
  %610 = vmatpush1.msra.mxu0 %v201
  %611 = vmatprep.subr.mxu0 0.0
  %612 = vmatpush1.msra.mxu0 %v204
  %613 = vmatprep.subr.mxu0 0.0
  %614 = vmatpush1.msra.mxu0 %v207
  %615 = vmatprep.subr.mxu0 0.0
  %616 = vmatpush1.msra.mxu0 %v210
  %617 = vmatprep.subr.mxu0 0.0
  %618 = vmatpush1.msra.mxu0 %v213
  %619 = vmatprep.subr.mxu0 0.0
  %620 = vmatpush1.msra.mxu0 %v216
  %621 = vmatprep.subr.mxu0 0.0
  %622 = vmatpush1.msra.mxu0 %v219
  %623 = vmatprep.subr.mxu0 0.0
  %624 = vmatpush1.msra.mxu0 %v222
  %625 = vmatprep.subr.mxu0 0.0
  %626 = vmatpush1.msra.mxu0 %v225
  %627 = vmatprep.subr.mxu0 0.0
  %628 = vmatpush1.msra.mxu0 %v228
  %629 = vmatprep.subr.mxu0 0.0
  %630 = vmatpush1.msra.mxu0 %v231
  %631 = vmatprep.subr.mxu0 0.0
  %632 = vmatpush1.msra.mxu0 %v234
  %633 = vmatprep.subr.mxu0 0.0
  %634 = vmatpush1.msra.mxu0 %v237
  %635 = vmatprep.subr.mxu0 0.0
  %636 = vmatpush1.msra.mxu0 %v240
  %637 = vmatprep.subr.mxu0 0.0
  %638 = vmatpush1.msra.mxu0 %v243
  %639 = vmatprep.mubr.f32.mxu0 %v23
  %640 = vmatmul.mubr.f32.gmra.mrb[0].mxu0 %v22
  %v641 = vpop.f32.mrb[0].mxu0
  %v642 = vadd.f32 %v537, %v641
  %v643 = vpop.f32.mrb[0].mxu0
  %644 = vmatprep.mubr.f32.mxu0 %v27
  %645 = vmatmul.mubr.f32.gmra.mrb[0].mxu0 %v26
  %v646 = vpop.f32.mrb[0].mxu0
  %v647 = vadd.f32 %v542, %v646
  %v648 = vpop.f32.mrb[0].mxu0
  %649 = vmatprep.mubr.f32.mxu0 %v31
  %650 = vmatmul.mubr.f32.gmra.mrb[0].mxu0 %v30
  %v651 = vpop.f32.mrb[0].mxu0
  %v652 = vadd.f32 %v547, %v651
  %v653 = vpop.f32.mrb[0].mxu0
  %654 = vmatprep.mubr.f32.mxu0 %v35
  %655 = vmatmul.mubr.f32.gmra.mrb[0].mxu0 %v34
  %v656 = vpop.f32.mrb[0].mxu0
  %v657 = vadd.f32 %v552, %v656
  %v658 = vpop.f32.mrb[0].mxu0
  %659 = vmatprep.mubr.f32.mxu0 %v39
  %660 = vmatmul.mubr.f32.gmra.mrb[0].mxu0 %v38
  %v661 = vpop.f32.mrb[0].mxu0
  %v662 = vadd.f32 %v557, %v661
  %v663 = vpop.f32.mrb[0].mxu0
  %664 = vmatprep.mubr.f32.mxu0 %v43
  %665 = vmatmul.mubr.f32.gmra.mrb[0].mxu0 %v42
  %v666 = vpop.f32.mrb[0].mxu0
  %v667 = vadd.f32 %v562, %v666
  %v668 = vpop.f32.mrb[0].mxu0
  %669 = vmatprep.mubr.f32.mxu0 %v47
  %670 = vmatmul.mubr.f32.gmra.mrb[0].mxu0 %v46
  %v671 = vpop.f32.mrb[0].mxu0
  %v672 = vadd.f32 %v567, %v671
  %v673 = vpop.f32.mrb[0].mxu0
  %674 = vmatprep.mubr.f32.mxu0 %v51
  %675 = vmatmul.mubr.f32.gmra.mrb[0].mxu0 %v50
  %v676 = vpop.f32.mrb[0].mxu0
  %v677 = vadd.f32 %v572, %v676
  %v678 = vpop.f32.mrb[0].mxu0
  %679 = vdwg.mxu0
  %680 = vst [vmem:[#allocation2] sm:$0xff] %v424
  %681 = vst [vmem:[#allocation2 + $0x8] sm:$0xff] %v426
  %682 = vst [vmem:[#allocation2 + $0x10] sm:$0xff] %v642
  %683 = vst [vmem:[#allocation2 + $0x18] sm:$0xff] %v430
  %684 = vst [vmem:[#allocation2 + $0x20] sm:$0xff] %v432
  %685 = vst [vmem:[#allocation2 + $0x28] sm:$0xff] %v647
  %686 = vst [vmem:[#allocation2 + $0x30] sm:$0xff] %v436
  %687 = vst [vmem:[#allocation2 + $0x38] sm:$0xff] %v438
  %688 = vst [vmem:[#allocation2 + $0x40] sm:$0xff] %v652
  %689 = vst [vmem:[#allocation2 + $0x48] sm:$0xff] %v442
  %690 = vst [vmem:[#allocation2 + $0x50] sm:$0xff] %v444
  %691 = vst [vmem:[#allocation2 + $0x58] sm:$0xff] %v657
  %692 = vst [vmem:[#allocation2 + $0x60] sm:$0xff] %v448
  %693 = vst [vmem:[#allocation2 + $0x68] sm:$0xff] %v450
  %694 = vst [vmem:[#allocation2 + $0x70] sm:$0xff] %v662
  %695 = vst [vmem:[#allocation2 + $0x78] sm:$0xff] %v454
  %696 = vst [vmem:[#allocation2 + $0x80] sm:$0xff] %v456
  %697 = vst [vmem:[#allocation2 + $0x88] sm:$0xff] %v667
  %698 = vst [vmem:[#allocation2 + $0x90] sm:$0xff] %v460
  %699 = vst [vmem:[#allocation2 + $0x98] sm:$0xff] %v462
  %700 = vst [vmem:[#allocation2 + $0xa0] sm:$0xff] %v672
  %701 = vst [vmem:[#allocation2 + $0xa8] sm:$0xff] %v466
  %702 = vst [vmem:[#allocation2 + $0xb0] sm:$0xff] %v468
  %703 = vst [vmem:[#allocation2 + $0xb8] sm:$0xff] %v677
  %v704 = vlaneseq
  %v705 = vshrl.u32 %v704, 7
  %vm706 = vcmp.lt.s32.totalorder %v705, 2
  %v707 = vsel %vm706, 1, 0
  %v708 = vcvt.s32.f32 %v707
  %v709 = vsub.f32 1.0, %v708
  %v710 = vld [vmem:[#allocation2] sm:$0xff]
  %v711 = vld [vmem:[#allocation2 + $0x8] sm:$0xff]
  %v712 = vld [vmem:[#allocation2 + $0x10] sm:$0xff]
  %v713 = vld [vmem:[%s2] sm:$0xff]
  %v714 = vld [vmem:[%s2 + $0x8] sm:$0xff]
  %v715 = vld [vmem:[%s2 + $0x10] sm:$0xff]
  %v716 = vadd.f32 %v710, %v713
  %v717 = vadd.f32 %v711, %v714
  %v718 = vadd.f32 %v712, %v715
  %v719 = vld [vmem:[%s3] sm:$0xff]
  %v720 = vld [vmem:[%s3 + $0x8] sm:$0xff]
  %v721 = vld [vmem:[%s3 + $0x10] sm:$0xff]
  %v722 = vld [vmem:[%s3 + $0x18] sm:$0xff]
  %v723 = vld [vmem:[%s3 + $0x20] sm:$0xff]
  %v724 = vld [vmem:[%s3 + $0x28] sm:$0xff]
  %v725 = vld [vmem:[%s3 + $0x30] sm:$0xff]
  %v726 = vld [vmem:[%s3 + $0x38] sm:$0xff]
  %v727 = vld [vmem:[%s3 + $0x40] sm:$0xff]
  %v728 = vld [vmem:[%s3 + $0x48] sm:$0xff]
  %v729 = vld [vmem:[%s3 + $0x50] sm:$0xff]
  %v730 = vld [vmem:[%s3 + $0x58] sm:$0xff]
  %v731 = vld [vmem:[%s3 + $0x60] sm:$0xff]
  %v732 = vld [vmem:[%s3 + $0x68] sm:$0xff]
  %v733 = vld [vmem:[%s3 + $0x70] sm:$0xff]
  %v734 = vld [vmem:[%s3 + $0x78] sm:$0xff]
  %v735 = vld [vmem:[%s3 + $0x80] sm:$0xff]
  %v736 = vld [vmem:[%s3 + $0x88] sm:$0xff]
  %v737 = vld [vmem:[%s3 + $0x90] sm:$0xff]
  %v738 = vld [vmem:[%s3 + $0x98] sm:$0xff]
  %v739 = vld [vmem:[%s3 + $0xa0] sm:$0xff]
  %v740 = vld [vmem:[%s3 + $0xa8] sm:$0xff]
  %v741 = vld [vmem:[%s3 + $0xb0] sm:$0xff]
  %v742 = vld [vmem:[%s3 + $0xb8] sm:$0xff]
  %v743 = vld [vmem:[%s3 + $0xc0] sm:$0xff]
  %v744 = vld [vmem:[%s3 + $0xc8] sm:$0xff]
  %v745 = vld [vmem:[%s3 + $0xd0] sm:$0xff]
  %v746 = vld [vmem:[%s3 + $0xd8] sm:$0xff]
  %v747 = vld [vmem:[%s3 + $0xe0] sm:$0xff]
  %v748 = vld [vmem:[%s3 + $0xe8] sm:$0xff]
  %v749 = vld [vmem:[%s3 + $0xf0] sm:$0xff]
  %v750 = vld [vmem:[%s3 + $0xf8] sm:$0xff]
  %v751 = vld [vmem:[%s3 + $0x100] sm:$0xff]
  %v752 = vld [vmem:[%s3 + $0x108] sm:$0xff]
  %v753 = vld [vmem:[%s3 + $0x110] sm:$0xff]
  %v754 = vld [vmem:[%s3 + $0x118] sm:$0xff]
  %v755 = vld [vmem:[%s3 + $0x120] sm:$0xff]
  %v756 = vld [vmem:[%s3 + $0x128] sm:$0xff]
  %v757 = vld [vmem:[%s3 + $0x130] sm:$0xff]
  %v758 = vld [vmem:[%s3 + $0x138] sm:$0xff]
  %v759 = vld [vmem:[%s3 + $0x140] sm:$0xff]
  %v760 = vld [vmem:[%s3 + $0x148] sm:$0xff]
  %v761 = vld [vmem:[%s3 + $0x150] sm:$0xff]
  %v762 = vld [vmem:[%s3 + $0x158] sm:$0xff]
  %v763 = vld [vmem:[%s3 + $0x160] sm:$0xff]
  %v764 = vld [vmem:[%s3 + $0x168] sm:$0xff]
  %v765 = vld [vmem:[%s3 + $0x170] sm:$0xff]
  %v766 = vld [vmem:[%s3 + $0x178] sm:$0xff]
  %v767 = vld [vmem:[%s3 + $0x180] sm:$0xff]
  %v768 = vld [vmem:[%s3 + $0x188] sm:$0xff]
  %v769 = vld [vmem:[%s3 + $0x190] sm:$0xff]
  %v770 = vld [vmem:[%s3 + $0x198] sm:$0xff]
  %v771 = vld [vmem:[%s3 + $0x1a0] sm:$0xff]
  %v772 = vld [vmem:[%s3 + $0x1a8] sm:$0xff]
  %v773 = vld [vmem:[%s3 + $0x1b0] sm:$0xff]
  %v774 = vld [vmem:[%s3 + $0x1b8] sm:$0xff]
  %v775 = vld [vmem:[%s3 + $0x1c0] sm:$0xff]
  %v776 = vld [vmem:[%s3 + $0x1c8] sm:$0xff]
  %v777 = vld [vmem:[%s3 + $0x1d0] sm:$0xff]
  %v778 = vld [vmem:[%s3 + $0x1d8] sm:$0xff]
  %v779 = vld [vmem:[%s3 + $0x1e0] sm:$0xff]
  %v780 = vld [vmem:[%s3 + $0x1e8] sm:$0xff]
  %v781 = vld [vmem:[%s3 + $0x1f0] sm:$0xff]
  %v782 = vld [vmem:[%s3 + $0x1f8] sm:$0xff]
  %v783 = vld [vmem:[%s3 + $0x200] sm:$0xff]
  %v784 = vld [vmem:[%s3 + $0x208] sm:$0xff]
  %v785 = vld [vmem:[%s3 + $0x210] sm:$0xff]
  %v786 = vld [vmem:[%s3 + $0x218] sm:$0xff]
  %v787 = vld [vmem:[%s3 + $0x220] sm:$0xff]
  %v788 = vld [vmem:[%s3 + $0x228] sm:$0xff]
  %v789 = vld [vmem:[%s3 + $0x230] sm:$0xff]
  %v790 = vld [vmem:[%s3 + $0x238] sm:$0xff]
  %v791 = vld [vmem:[%s3 + $0x240] sm:$0xff]
  %v792 = vld [vmem:[%s3 + $0x248] sm:$0xff]
  %v793 = vld [vmem:[%s3 + $0x250] sm:$0xff]
  %v794 = vld [vmem:[%s3 + $0x258] sm:$0xff]
  %v795 = vld [vmem:[%s3 + $0x260] sm:$0xff]
  %v796 = vld [vmem:[%s3 + $0x268] sm:$0xff]
  %v797 = vld [vmem:[%s3 + $0x270] sm:$0xff]
  %v798 = vld [vmem:[%s3 + $0x278] sm:$0xff]
  %v799 = vld [vmem:[%s3 + $0x280] sm:$0xff]
  %v800 = vld [vmem:[%s3 + $0x288] sm:$0xff]
  %v801 = vld [vmem:[%s3 + $0x290] sm:$0xff]
  %v802 = vld [vmem:[%s3 + $0x298] sm:$0xff]
  %v803 = vld [vmem:[%s3 + $0x2a0] sm:$0xff]
  %v804 = vld [vmem:[%s3 + $0x2a8] sm:$0xff]
  %v805 = vld [vmem:[%s3 + $0x2b0] sm:$0xff]
  %v806 = vld [vmem:[%s3 + $0x2b8] sm:$0xff]
  %v807 = vld [vmem:[%s3 + $0x2c0] sm:$0xff]
  %v808 = vld [vmem:[%s3 + $0x2c8] sm:$0xff]
  %v809 = vld [vmem:[%s3 + $0x2d0] sm:$0xff]
  %v810 = vld [vmem:[%s3 + $0x2d8] sm:$0xff]
  %v811 = vld [vmem:[%s3 + $0x2e0] sm:$0xff]
  %v812 = vld [vmem:[%s3 + $0x2e8] sm:$0xff]
  %v813 = vld [vmem:[%s3 + $0x2f0] sm:$0xff]
  %v814 = vld [vmem:[%s3 + $0x2f8] sm:$0xff]
  %v815 = vld [vmem:[%s4] sm:$0xff]
  %v816 = vld [vmem:[%s4 + $0x8] sm:$0xff]
  %v817 = vld [vmem:[%s4 + $0x10] sm:$0xff]
  %818 = vmatprep.subr.mxu0 %v720
  %819 = vmatpush1.msra.mxu0 %v719
  %820 = vmatprep.subr.mxu0 %v723
  %821 = vmatpush1.msra.mxu0 %v722
  %822 = vmatprep.subr.mxu0 %v726
  %823 = vmatpush1.msra.mxu0 %v725
  %824 = vmatprep.subr.mxu0 %v729
  %825 = vmatpush1.msra.mxu0 %v728
  %826 = vmatprep.subr.mxu0 %v732
  %827 = vmatpush1.msra.mxu0 %v731
  %828 = vmatprep.subr.mxu0 %v735
  %829 = vmatpush1.msra.mxu0 %v734
  %830 = vmatprep.subr.mxu0 %v738
  %831 = vmatpush1.msra.mxu0 %v737
  %832 = vmatprep.subr.mxu0 %v741
  %833 = vmatpush1.msra.mxu0 %v740
  %834 = vmatprep.subr.mxu0 %v744
  %835 = vmatpush1.msra.mxu0 %v743
  %836 = vmatprep.subr.mxu0 %v747
  %837 = vmatpush1.msra.mxu0 %v746
  %838 = vmatprep.subr.mxu0 %v750
  %839 = vmatpush1.msra.mxu0 %v749
  %840 = vmatprep.subr.mxu0 %v753
  %841 = vmatpush1.msra.mxu0 %v752
  %842 = vmatprep.subr.mxu0 %v756
  %843 = vmatpush1.msra.mxu0 %v755
  %844 = vmatprep.subr.mxu0 %v759
  %845 = vmatpush1.msra.mxu0 %v758
  %846 = vmatprep.subr.mxu0 %v762
  %847 = vmatpush1.msra.mxu0 %v761
  %848 = vmatprep.subr.mxu0 %v765
  %849 = vmatpush1.msra.mxu0 %v764
  %850 = vmatprep.subr.mxu0 %v768
  %851 = vmatpush1.msra.mxu0 %v767
  %852 = vmatprep.subr.mxu0 %v771
  %853 = vmatpush1.msra.mxu0 %v770
  %854 = vmatprep.subr.mxu0 %v774
  %855 = vmatpush1.msra.mxu0 %v773
  %856 = vmatprep.subr.mxu0 %v777
  %857 = vmatpush1.msra.mxu0 %v776
  %858 = vmatprep.subr.mxu0 %v780
  %859 = vmatpush1.msra.mxu0 %v779
  %860 = vmatprep.subr.mxu0 %v783
  %861 = vmatpush1.msra.mxu0 %v782
  %862 = vmatprep.subr.mxu0 %v786
  %863 = vmatpush1.msra.mxu0 %v785
  %864 = vmatprep.subr.mxu0 %v789
  %865 = vmatpush1.msra.mxu0 %v788
  %866 = vmatprep.subr.mxu0 %v792
  %867 = vmatpush1.msra.mxu0 %v791
  %868 = vmatprep.subr.mxu0 %v795
  %869 = vmatpush1.msra.mxu0 %v794
  %870 = vmatprep.subr.mxu0 %v798
  %871 = vmatpush1.msra.mxu0 %v797
  %872 = vmatprep.subr.mxu0 %v801
  %873 = vmatpush1.msra.mxu0 %v800
  %874 = vmatprep.subr.mxu0 %v804
  %875 = vmatpush1.msra.mxu0 %v803
  %876 = vmatprep.subr.mxu0 %v807
  %877 = vmatpush1.msra.mxu0 %v806
  %878 = vmatprep.subr.mxu0 %v810
  %879 = vmatpush1.msra.mxu0 %v809
  %880 = vmatprep.subr.mxu0 %v813
  %881 = vmatpush1.msra.mxu0 %v812
  %882 = vmatprep.mubr.f32.mxu0 0.0
  %883 = vmatmul.mubr.f32.gmra.mrb[0].mxu0 0.0
  %v884 = vpop.f32.mrb[0].mxu0
  %v885 = vadd.f32 %v815, %v884
  %v886 = vpop.f32.mrb[0].mxu0
  %v887 = vadd.f32 %v816, %v886
  %888 = vdwg.mxu0
  %889 = vmatprep.subr.mxu0 0.0
  %890 = vmatpush1.msra.mxu0 %v721
  %891 = vmatprep.subr.mxu0 0.0
  %892 = vmatpush1.msra.mxu0 %v724
  %893 = vmatprep.subr.mxu0 0.0
  %894 = vmatpush1.msra.mxu0 %v727
  %895 = vmatprep.subr.mxu0 0.0
  %896 = vmatpush1.msra.mxu0 %v730
  %897 = vmatprep.subr.mxu0 0.0
  %898 = vmatpush1.msra.mxu0 %v733
  %899 = vmatprep.subr.mxu0 0.0
  %900 = vmatpush1.msra.mxu0 %v736
  %901 = vmatprep.subr.mxu0 0.0
  %902 = vmatpush1.msra.mxu0 %v739
  %903 = vmatprep.subr.mxu0 0.0
  %904 = vmatpush1.msra.mxu0 %v742
  %905 = vmatprep.subr.mxu0 0.0
  %906 = vmatpush1.msra.mxu0 %v745
  %907 = vmatprep.subr.mxu0 0.0
  %908 = vmatpush1.msra.mxu0 %v748
  %909 = vmatprep.subr.mxu0 0.0
  %910 = vmatpush1.msra.mxu0 %v751
  %911 = vmatprep.subr.mxu0 0.0
  %912 = vmatpush1.msra.mxu0 %v754
  %913 = vmatprep.subr.mxu0 0.0
  %914 = vmatpush1.msra.mxu0 %v757
  %915 = vmatprep.subr.mxu0 0.0
  %916 = vmatpush1.msra.mxu0 %v760
  %917 = vmatprep.subr.mxu0 0.0
  %918 = vmatpush1.msra.mxu0 %v763
  %919 = vmatprep.subr.mxu0 0.0
  %920 = vmatpush1.msra.mxu0 %v766
  %921 = vmatprep.subr.mxu0 0.0
  %922 = vmatpush1.msra.mxu0 %v769
  %923 = vmatprep.subr.mxu0 0.0
  %924 = vmatpush1.msra.mxu0 %v772
  %925 = vmatprep.subr.mxu0 0.0
  %926 = vmatpush1.msra.mxu0 %v775
  %927 = vmatprep.subr.mxu0 0.0
  %928 = vmatpush1.msra.mxu0 %v778
  %929 = vmatprep.subr.mxu0 0.0
  %930 = vmatpush1.msra.mxu0 %v781
  %931 = vmatprep.subr.mxu0 0.0
  %932 = vmatpush1.msra.mxu0 %v784
  %933 = vmatprep.subr.mxu0 0.0
  %934 = vmatpush1.msra.mxu0 %v787
  %935 = vmatprep.subr.mxu0 0.0
  %936 = vmatpush1.msra.mxu0 %v790
  %937 = vmatprep.subr.mxu0 0.0
  %938 = vmatpush1.msra.mxu0 %v793
  %939 = vmatprep.subr.mxu0 0.0
  %940 = vmatpush1.msra.mxu0 %v796
  %941 = vmatprep.subr.mxu0 0.0
  %942 = vmatpush1.msra.mxu0 %v799
  %943 = vmatprep.subr.mxu0 0.0
  %944 = vmatpush1.msra.mxu0 %v802
  %945 = vmatprep.subr.mxu0 0.0
  %946 = vmatpush1.msra.mxu0 %v805
  %947 = vmatprep.subr.mxu0 0.0
  %948 = vmatpush1.msra.mxu0 %v808
  %949 = vmatprep.subr.mxu0 0.0
  %950 = vmatpush1.msra.mxu0 %v811
  %951 = vmatprep.subr.mxu0 0.0
  %952 = vmatpush1.msra.mxu0 %v814
  %953 = vmatprep.mubr.f32.mxu0 0.0
  %954 = vmatmul.mubr.f32.gmra.mrb[0].mxu0 0.0
  %v955 = vpop.f32.mrb[0].mxu0
  %v956 = vadd.f32 %v817, %v955
  %v957 = vpop.f32.mrb[0].mxu0
  %958 = vdwg.mxu0
  %v959 = vadd.f32 %v716, %v885
  %v960 = vxor.u32 %v959, 2147483648
  %v961 = vmul.f32 %v960, 1.442695
  %v962 = vpow.pop %v961
  %v963 = vadd.f32 %v962, 1.0
  %v964 = vrcp.pop %v963
  %v965 = vmul.f32 1.0, %v964
  %v966 = vadd.f32 %v717, %v887
  %v967 = vxor.u32 %v966, 2147483648
  %v968 = vmul.f32 %v967, 1.442695
  %v969 = vpow.pop %v968
  %v970 = vadd.f32 %v969, 1.0
  %v971 = vrcp.pop %v970
  %v972 = vmul.f32 1.0, %v971
  %v973 = vmul.f32 %v965, %v956
  %v974 = vadd.f32 %v718, %v973
  %v975 = vtanh.pop %v974
  %v976 = vsub.f32 1.0, %v972
  %v977 = vmul.f32 %v976, %v975
  %v978 = vmul.f32 %v972, 0.0
  %v979 = vadd.f32 %v977, %v978
  %980 = vst [vmem:[%s5] sm:$0xff] %v979
  %v981 = vmul.f32 %v979, %v708
  %v982 = vmul.f32 %v979, %v709
  %v983 = vadd.f32 %v981, %v982
  %s984 = scalar_lea.vmem [#allocation2], 24
  %v985 = vld [vmem:[%s984] sm:$0xff]
  %v986 = vld [vmem:[%s984 + $0x8] sm:$0xff]
  %v987 = vld [vmem:[%s984 + $0x10] sm:$0xff]
  %v988 = vld [vmem:[%s2] sm:$0xff]
  %v989 = vld [vmem:[%s2 + $0x8] sm:$0xff]
  %v990 = vld [vmem:[%s2 + $0x10] sm:$0xff]
  %v991 = vadd.f32 %v985, %v988
  %v992 = vadd.f32 %v986, %v989
  %v993 = vadd.f32 %v987, %v990
  %v994 = vld [vmem:[%s3] sm:$0xff]
  %v995 = vld [vmem:[%s3 + $0x8] sm:$0xff]
  %v996 = vld [vmem:[%s3 + $0x10] sm:$0xff]
  %v997 = vld [vmem:[%s3 + $0x18] sm:$0xff]
  %v998 = vld [vmem:[%s3 + $0x20] sm:$0xff]
  %v999 = vld [vmem:[%s3 + $0x28] sm:$0xff]
  %v1000 = vld [vmem:[%s3 + $0x30] sm:$0xff]
  %v1001 = vld [vmem:[%s3 + $0x38] sm:$0xff]
  %v1002 = vld [vmem:[%s3 + $0x40] sm:$0xff]
  %v1003 = vld [vmem:[%s3 + $0x48] sm:$0xff]
  %v1004 = vld [vmem:[%s3 + $0x50] sm:$0xff]
  %v1005 = vld [vmem:[%s3 + $0x58] sm:$0xff]
  %v1006 = vld [vmem:[%s3 + $0x60] sm:$0xff]
  %v1007 = vld [vmem:[%s3 + $0x68] sm:$0xff]
  %v1008 = vld [vmem:[%s3 + $0x70] sm:$0xff]
  %v1009 = vld [vmem:[%s3 + $0x78] sm:$0xff]
  %v1010 = vld [vmem:[%s3 + $0x80] sm:$0xff]
  %v1011 = vld [vmem:[%s3 + $0x88] sm:$0xff]
  %v1012 = vld [vmem:[%s3 + $0x90] sm:$0xff]
  %v1013 = vld [vmem:[%s3 + $0x98] sm:$0xff]
  %v1014 = vld [vmem:[%s3 + $0xa0] sm:$0xff]
  %v1015 = vld [vmem:[%s3 + $0xa8] sm:$0xff]
  %v1016 = vld [vmem:[%s3 + $0xb0] sm:$0xff]
  %v1017 = vld [vmem:[%s3 + $0xb8] sm:$0xff]
  %v1018 = vld [vmem:[%s3 + $0xc0] sm:$0xff]
  %v1019 = vld [vmem:[%s3 + $0xc8] sm:$0xff]
  %v1020 = vld [vmem:[%s3 + $0xd0] sm:$0xff]
  %v1021 = vld [vmem:[%s3 + $0xd8] sm:$0xff]
  %v1022 = vld [vmem:[%s3 + $0xe0] sm:$0xff]
  %v1023 = vld [vmem:[%s3 + $0xe8] sm:$0xff]
  %v1024 = vld [vmem:[%s3 + $0xf0] sm:$0xff]
  %v1025 = vld [vmem:[%s3 + $0xf8] sm:$0xff]
  %v1026 = vld [vmem:[%s3 + $0x100] sm:$0xff]
  %v1027 = vld [vmem:[%s3 + $0x108] sm:$0xff]
  %v1028 = vld [vmem:[%s3 + $0x110] sm:$0xff]
  %v1029 = vld [vmem:[%s3 + $0x118] sm:$0xff]
  %v1030 = vld [vmem:[%s3 + $0x120] sm:$0xff]
  %v1031 = vld [vmem:[%s3 + $0x128] sm:$0xff]
  %v1032 = vld [vmem:[%s3 + $0x130] sm:$0xff]
  %v1033 = vld [vmem:[%s3 + $0x138] sm:$0xff]
  %v1034 = vld [vmem:[%s3 + $0x140] sm:$0xff]
  %v1035 = vld [vmem:[%s3 + $0x148] sm:$0xff]
  %v1036 = vld [vmem:[%s3 + $0x150] sm:$0xff]
  %v1037 = vld [vmem:[%s3 + $0x158] sm:$0xff]
  %v1038 = vld [vmem:[%s3 + $0x160] sm:$0xff]
  %v1039 = vld [vmem:[%s3 + $0x168] sm:$0xff]
  %v1040 = vld [vmem:[%s3 + $0x170] sm:$0xff]
  %v1041 = vld [vmem:[%s3 + $0x178] sm:$0xff]
  %v1042 = vld [vmem:[%s3 + $0x180] sm:$0xff]
  %v1043 = vld [vmem:[%s3 + $0x188] sm:$0xff]
  %v1044 = vld [vmem:[%s3 + $0x190] sm:$0xff]
  %v1045 = vld [vmem:[%s3 + $0x198] sm:$0xff]
  %v1046 = vld [vmem:[%s3 + $0x1a0] sm:$0xff]
  %v1047 = vld [vmem:[%s3 + $0x1a8] sm:$0xff]
  %v1048 = vld [vmem:[%s3 + $0x1b0] sm:$0xff]
  %v1049 = vld [vmem:[%s3 + $0x1b8] sm:$0xff]
  %v1050 = vld [vmem:[%s3 + $0x1c0] sm:$0xff]
  %v1051 = vld [vmem:[%s3 + $0x1c8] sm:$0xff]
  %v1052 = vld [vmem:[%s3 + $0x1d0] sm:$0xff]
  %v1053 = vld [vmem:[%s3 + $0x1d8] sm:$0xff]
  %v1054 = vld [vmem:[%s3 + $0x1e0] sm:$0xff]
  %v1055 = vld [vmem:[%s3 + $0x1e8] sm:$0xff]
  %v1056 = vld [vmem:[%s3 + $0x1f0] sm:$0xff]
  %v1057 = vld [vmem:[%s3 + $0x1f8] sm:$0xff]
  %v1058 = vld [vmem:[%s3 + $0x200] sm:$0xff]
  %v1059 = vld [vmem:[%s3 + $0x208] sm:$0xff]
  %v1060 = vld [vmem:[%s3 + $0x210] sm:$0xff]
  %v1061 = vld [vmem:[%s3 + $0x218] sm:$0xff]
  %v1062 = vld [vmem:[%s3 + $0x220] sm:$0xff]
  %v1063 = vld [vmem:[%s3 + $0x228] sm:$0xff]
  %v1064 = vld [vmem:[%s3 + $0x230] sm:$0xff]
  %v1065 = vld [vmem:[%s3 + $0x238] sm:$0xff]
  %v1066 = vld [vmem:[%s3 + $0x240] sm:$0xff]
  %v1067 = vld [vmem:[%s3 + $0x248] sm:$0xff]
  %v1068 = vld [vmem:[%s3 + $0x250] sm:$0xff]
  %v1069 = vld [vmem:[%s3 + $0x258] sm:$0xff]
  %v1070 = vld [vmem:[%s3 + $0x260] sm:$0xff]
  %v1071 = vld [vmem:[%s3 + $0x268] sm:$0xff]
  %v1072 = vld [vmem:[%s3 + $0x270] sm:$0xff]
  %v1073 = vld [vmem:[%s3 + $0x278] sm:$0xff]
  %v1074 = vld [vmem:[%s3 + $0x280] sm:$0xff]
  %v1075 = vld [vmem:[%s3 + $0x288] sm:$0xff]
  %v1076 = vld [vmem:[%s3 + $0x290] sm:$0xff]
  %v1077 = vld [vmem:[%s3 + $0x298] sm:$0xff]
  %v1078 = vld [vmem:[%s3 + $0x2a0] sm:$0xff]
  %v1079 = vld [vmem:[%s3 + $0x2a8] sm:$0xff]
  %v1080 = vld [vmem:[%s3 + $0x2b0] sm:$0xff]
  %v1081 = vld [vmem:[%s3 + $0x2b8] sm:$0xff]
  %v1082 = vld [vmem:[%s3 + $0x2c0] sm:$0xff]
  %v1083 = vld [vmem:[%s3 + $0x2c8] sm:$0xff]
  %v1084 = vld [vmem:[%s3 + $0x2d0] sm:$0xff]
  %v1085 = vld [vmem:[%s3 + $0x2d8] sm:$0xff]
  %v1086 = vld [vmem:[%s3 + $0x2e0] sm:$0xff]
  %v1087 = vld [vmem:[%s3 + $0x2e8] sm:$0xff]
  %v1088 = vld [vmem:[%s3 + $0x2f0] sm:$0xff]
  %v1089 = vld [vmem:[%s3 + $0x2f8] sm:$0xff]
  %v1090 = vld [vmem:[%s4] sm:$0xff]
  %v1091 = vld [vmem:[%s4 + $0x8] sm:$0xff]
  %v1092 = vld [vmem:[%s4 + $0x10] sm:$0xff]
  %1093 = vmatprep.subr.mxu0 %v995
  %1094 = vmatpush1.msra.mxu0 %v994
  %1095 = vmatprep.subr.mxu0 %v998
  %1096 = vmatpush1.msra.mxu0 %v997
  %1097 = vmatprep.subr.mxu0 %v1001
  %1098 = vmatpush1.msra.mxu0 %v1000
  %1099 = vmatprep.subr.mxu0 %v1004
  %1100 = vmatpush1.msra.mxu0 %v1003
  %1101 = vmatprep.subr.mxu0 %v1007
  %1102 = vmatpush1.msra.mxu0 %v1006
  %1103 = vmatprep.subr.mxu0 %v1010
  %1104 = vmatpush1.msra.mxu0 %v1009
  %1105 = vmatprep.subr.mxu0 %v1013
  %1106 = vmatpush1.msra.mxu0 %v1012
  %1107 = vmatprep.subr.mxu0 %v1016
  %1108 = vmatpush1.msra.mxu0 %v1015
  %1109 = vmatprep.subr.mxu0 %v1019
  %1110 = vmatpush1.msra.mxu0 %v1018
  %1111 = vmatprep.subr.mxu0 %v1022
  %1112 = vmatpush1.msra.mxu0 %v1021
  %1113 = vmatprep.subr.mxu0 %v1025
  %1114 = vmatpush1.msra.mxu0 %v1024
  %1115 = vmatprep.subr.mxu0 %v1028
  %1116 = vmatpush1.msra.mxu0 %v1027
  %1117 = vmatprep.subr.mxu0 %v1031
  %1118 = vmatpush1.msra.mxu0 %v1030
  %1119 = vmatprep.subr.mxu0 %v1034
  %1120 = vmatpush1.msra.mxu0 %v1033
  %1121 = vmatprep.subr.mxu0 %v1037
  %1122 = vmatpush1.msra.mxu0 %v1036
  %1123 = vmatprep.subr.mxu0 %v1040
  %1124 = vmatpush1.msra.mxu0 %v1039
  %1125 = vmatprep.subr.mxu0 %v1043
  %1126 = vmatpush1.msra.mxu0 %v1042
  %1127 = vmatprep.subr.mxu0 %v1046
  %1128 = vmatpush1.msra.mxu0 %v1045
  %1129 = vmatprep.subr.mxu0 %v1049
  %1130 = vmatpush1.msra.mxu0 %v1048
  %1131 = vmatprep.subr.mxu0 %v1052
  %1132 = vmatpush1.msra.mxu0 %v1051
  %1133 = vmatprep.subr.mxu0 %v1055
  %1134 = vmatpush1.msra.mxu0 %v1054
  %1135 = vmatprep.subr.mxu0 %v1058
  %1136 = vmatpush1.msra.mxu0 %v1057
  %1137 = vmatprep.subr.mxu0 %v1061
  %1138 = vmatpush1.msra.mxu0 %v1060
  %1139 = vmatprep.subr.mxu0 %v1064
  %1140 = vmatpush1.msra.mxu0 %v1063
  %1141 = vmatprep.subr.mxu0 %v1067
  %1142 = vmatpush1.msra.mxu0 %v1066
  %1143 = vmatprep.subr.mxu0 %v1070
  %1144 = vmatpush1.msra.mxu0 %v1069
  %1145 = vmatprep.subr.mxu0 %v1073
  %1146 = vmatpush1.msra.mxu0 %v1072
  %1147 = vmatprep.subr.mxu0 %v1076
  %1148 = vmatpush1.msra.mxu0 %v1075
  %1149 = vmatprep.subr.mxu0 %v1079
  %1150 = vmatpush1.msra.mxu0 %v1078
  %1151 = vmatprep.subr.mxu0 %v1082
  %1152 = vmatpush1.msra.mxu0 %v1081
  %1153 = vmatprep.subr.mxu0 %v1085
  %1154 = vmatpush1.msra.mxu0 %v1084
  %1155 = vmatprep.subr.mxu0 %v1088
  %1156 = vmatpush1.msra.mxu0 %v1087
  %1157 = vmatprep.mubr.f32.mxu0 %v982
  %1158 = vmatmul.mubr.f32.gmra.mrb[0].mxu0 %v981
  %v1159 = vpop.f32.mrb[0].mxu0
  %v1160 = vadd.f32 %v1090, %v1159
  %v1161 = vpop.f32.mrb[0].mxu0
  %v1162 = vadd.f32 %v1091, %v1161
  %1163 = vdwg.mxu0
  %1164 = vmatprep.subr.mxu0 0.0
  %1165 = vmatpush1.msra.mxu0 %v996
  %1166 = vmatprep.subr.mxu0 0.0
  %1167 = vmatpush1.msra.mxu0 %v999
  %1168 = vmatprep.subr.mxu0 0.0
  %1169 = vmatpush1.msra.mxu0 %v1002
  %1170 = vmatprep.subr.mxu0 0.0
  %1171 = vmatpush1.msra.mxu0 %v1005
  %1172 = vmatprep.subr.mxu0 0.0
  %1173 = vmatpush1.msra.mxu0 %v1008
  %1174 = vmatprep.subr.mxu0 0.0
  %1175 = vmatpush1.msra.mxu0 %v1011
  %1176 = vmatprep.subr.mxu0 0.0
  %1177 = vmatpush1.msra.mxu0 %v1014
  %1178 = vmatprep.subr.mxu0 0.0
  %1179 = vmatpush1.msra.mxu0 %v1017
  %1180 = vmatprep.subr.mxu0 0.0
  %1181 = vmatpush1.msra.mxu0 %v1020
  %1182 = vmatprep.subr.mxu0 0.0
  %1183 = vmatpush1.msra.mxu0 %v1023
  %1184 = vmatprep.subr.mxu0 0.0
  %1185 = vmatpush1.msra.mxu0 %v1026
  %1186 = vmatprep.subr.mxu0 0.0
  %1187 = vmatpush1.msra.mxu0 %v1029
  %1188 = vmatprep.subr.mxu0 0.0
  %1189 = vmatpush1.msra.mxu0 %v1032
  %1190 = vmatprep.subr.mxu0 0.0
  %1191 = vmatpush1.msra.mxu0 %v1035
  %1192 = vmatprep.subr.mxu0 0.0
  %1193 = vmatpush1.msra.mxu0 %v1038
  %1194 = vmatprep.subr.mxu0 0.0
  %1195 = vmatpush1.msra.mxu0 %v1041
  %1196 = vmatprep.subr.mxu0 0.0
  %1197 = vmatpush1.msra.mxu0 %v1044
  %1198 = vmatprep.subr.mxu0 0.0
  %1199 = vmatpush1.msra.mxu0 %v1047
  %1200 = vmatprep.subr.mxu0 0.0
  %1201 = vmatpush1.msra.mxu0 %v1050
  %1202 = vmatprep.subr.mxu0 0.0
  %1203 = vmatpush1.msra.mxu0 %v1053
  %1204 = vmatprep.subr.mxu0 0.0
  %1205 = vmatpush1.msra.mxu0 %v1056
  %1206 = vmatprep.subr.mxu0 0.0
  %1207 = vmatpush1.msra.mxu0 %v1059
  %1208 = vmatprep.subr.mxu0 0.0
  %1209 = vmatpush1.msra.mxu0 %v1062
  %1210 = vmatprep.subr.mxu0 0.0
  %1211 = vmatpush1.msra.mxu0 %v1065
  %1212 = vmatprep.subr.mxu0 0.0
  %1213 = vmatpush1.msra.mxu0 %v1068
  %1214 = vmatprep.subr.mxu0 0.0
  %1215 = vmatpush1.msra.mxu0 %v1071
  %1216 = vmatprep.subr.mxu0 0.0
  %1217 = vmatpush1.msra.mxu0 %v1074
  %1218 = vmatprep.subr.mxu0 0.0
  %1219 = vmatpush1.msra.mxu0 %v1077
  %1220 = vmatprep.subr.mxu0 0.0
  %1221 = vmatpush1.msra.mxu0 %v1080
  %1222 = vmatprep.subr.mxu0 0.0
  %1223 = vmatpush1.msra.mxu0 %v1083
  %1224 = vmatprep.subr.mxu0 0.0
  %1225 = vmatpush1.msra.mxu0 %v1086
  %1226 = vmatprep.subr.mxu0 0.0
  %1227 = vmatpush1.msra.mxu0 %v1089
  %1228 = vmatprep.mubr.f32.mxu0 %v982
  %1229 = vmatmul.mubr.f32.gmra.mrb[0].mxu0 %v981
  %v1230 = vpop.f32.mrb[0].mxu0
  %v1231 = vadd.f32 %v1092, %v1230
  %v1232 = vpop.f32.mrb[0].mxu0
  %1233 = vdwg.mxu0
  %v1234 = vadd.f32 %v991, %v1160
  %v1235 = vxor.u32 %v1234, 2147483648
  %v1236 = vmul.f32 %v1235, 1.442695
  %v1237 = vpow.pop %v1236
  %v1238 = vadd.f32 %v1237, 1.0
  %v1239 = vrcp.pop %v1238
  %v1240 = vmul.f32 1.0, %v1239
  %v1241 = vadd.f32 %v992, %v1162
  %v1242 = vxor.u32 %v1241, 2147483648
  %v1243 = vmul.f32 %v1242, 1.442695
  %v1244 = vpow.pop %v1243
  %v1245 = vadd.f32 %v1244, 1.0
  %v1246 = vrcp.pop %v1245
  %v1247 = vmul.f32 1.0, %v1246
  %v1248 = vmul.f32 %v1240, %v1231
  %v1249 = vadd.f32 %v993, %v1248
  %v1250 = vtanh.pop %v1249
  %v1251 = vsub.f32 1.0, %v1247
  %v1252 = vmul.f32 %v1251, %v1250
  %v1253 = vmul.f32 %v1247, %v983
  %v1254 = vadd.f32 %v1252, %v1253
  %s1255 = scalar_lea.vmem %s5, 8
  %1256 = vst [vmem:[%s1255] sm:$0xff] %v1254
  %v1257 = vmul.f32 %v1254, %v708
  %v1258 = vmul.f32 %v1254, %v709
  %v1259 = vadd.f32 %v1257, %v1258
  %s1260 = scalar_lea.vmem [#allocation2], 48
  %v1261 = vld [vmem:[%s1260] sm:$0xff]
  %v1262 = vld [vmem:[%s1260 + $0x8] sm:$0xff]
  %v1263 = vld [vmem:[%s1260 + $0x10] sm:$0xff]
  %v1264 = vld [vmem:[%s2] sm:$0xff]
  %v1265 = vld [vmem:[%s2 + $0x8] sm:$0xff]
  %v1266 = vld [vmem:[%s2 + $0x10] sm:$0xff]
  %v1267 = vadd.f32 %v1261, %v1264
  %v1268 = vadd.f32 %v1262, %v1265
  %v1269 = vadd.f32 %v1263, %v1266
  %v1270 = vld [vmem:[%s3] sm:$0xff]
  %v1271 = vld [vmem:[%s3 + $0x8] sm:$0xff]
  %v1272 = vld [vmem:[%s3 + $0x10] sm:$0xff]
  %v1273 = vld [vmem:[%s3 + $0x18] sm:$0xff]
  %v1274 = vld [vmem:[%s3 + $0x20] sm:$0xff]
  %v1275 = vld [vmem:[%s3 + $0x28] sm:$0xff]
  %v1276 = vld [vmem:[%s3 + $0x30] sm:$0xff]
  %v1277 = vld [vmem:[%s3 + $0x38] sm:$0xff]
  %v1278 = vld [vmem:[%s3 + $0x40] sm:$0xff]
  %v1279 = vld [vmem:[%s3 + $0x48] sm:$0xff]
  %v1280 = vld [vmem:[%s3 + $0x50] sm:$0xff]
  %v1281 = vld [vmem:[%s3 + $0x58] sm:$0xff]
  %v1282 = vld [vmem:[%s3 + $0x60] sm:$0xff]
  %v1283 = vld [vmem:[%s3 + $0x68] sm:$0xff]
  %v1284 = vld [vmem:[%s3 + $0x70] sm:$0xff]
  %v1285 = vld [vmem:[%s3 + $0x78] sm:$0xff]
  %v1286 = vld [vmem:[%s3 + $0x80] sm:$0xff]
  %v1287 = vld [vmem:[%s3 + $0x88] sm:$0xff]
  %v1288 = vld [vmem:[%s3 + $0x90] sm:$0xff]
  %v1289 = vld [vmem:[%s3 + $0x98] sm:$0xff]
  %v1290 = vld [vmem:[%s3 + $0xa0] sm:$0xff]
  %v1291 = vld [vmem:[%s3 + $0xa8] sm:$0xff]
  %v1292 = vld [vmem:[%s3 + $0xb0] sm:$0xff]
  %v1293 = vld [vmem:[%s3 + $0xb8] sm:$0xff]
  %v1294 = vld [vmem:[%s3 + $0xc0] sm:$0xff]
  %v1295 = vld [vmem:[%s3 + $0xc8] sm:$0xff]
  %v1296 = vld [vmem:[%s3 + $0xd0] sm:$0xff]
  %v1297 = vld [vmem:[%s3 + $0xd8] sm:$0xff]
  %v1298 = vld [vmem:[%s3 + $0xe0] sm:$0xff]
  %v1299 = vld [vmem:[%s3 + $0xe8] sm:$0xff]
  %v1300 = vld [vmem:[%s3 + $0xf0] sm:$0xff]
  %v1301 = vld [vmem:[%s3 + $0xf8] sm:$0xff]
  %v1302 = vld [vmem:[%s3 + $0x100] sm:$0xff]
  %v1303 = vld [vmem:[%s3 + $0x108] sm:$0xff]
  %v1304 = vld [vmem:[%s3 + $0x110] sm:$0xff]
  %v1305 = vld [vmem:[%s3 + $0x118] sm:$0xff]
  %v1306 = vld [vmem:[%s3 + $0x120] sm:$0xff]
  %v1307 = vld [vmem:[%s3 + $0x128] sm:$0xff]
  %v1308 = vld [vmem:[%s3 + $0x130] sm:$0xff]
  %v1309 = vld [vmem:[%s3 + $0x138] sm:$0xff]
  %v1310 = vld [vmem:[%s3 + $0x140] sm:$0xff]
  %v1311 = vld [vmem:[%s3 + $0x148] sm:$0xff]
  %v1312 = vld [vmem:[%s3 + $0x150] sm:$0xff]
  %v1313 = vld [vmem:[%s3 + $0x158] sm:$0xff]
  %v1314 = vld [vmem:[%s3 + $0x160] sm:$0xff]
  %v1315 = vld [vmem:[%s3 + $0x168] sm:$0xff]
  %v1316 = vld [vmem:[%s3 + $0x170] sm:$0xff]
  %v1317 = vld [vmem:[%s3 + $0x178] sm:$0xff]
  %v1318 = vld [vmem:[%s3 + $0x180] sm:$0xff]
  %v1319 = vld [vmem:[%s3 + $0x188] sm:$0xff]
  %v1320 = vld [vmem:[%s3 + $0x190] sm:$0xff]
  %v1321 = vld [vmem:[%s3 + $0x198] sm:$0xff]
  %v1322 = vld [vmem:[%s3 + $0x1a0] sm:$0xff]
  %v1323 = vld [vmem:[%s3 + $0x1a8] sm:$0xff]
  %v1324 = vld [vmem:[%s3 + $0x1b0] sm:$0xff]
  %v1325 = vld [vmem:[%s3 + $0x1b8] sm:$0xff]
  %v1326 = vld [vmem:[%s3 + $0x1c0] sm:$0xff]
  %v1327 = vld [vmem:[%s3 + $0x1c8] sm:$0xff]
  %v1328 = vld [vmem:[%s3 + $0x1d0] sm:$0xff]
  %v1329 = vld [vmem:[%s3 + $0x1d8] sm:$0xff]
  %v1330 = vld [vmem:[%s3 + $0x1e0] sm:$0xff]
  %v1331 = vld [vmem:[%s3 + $0x1e8] sm:$0xff]
  %v1332 = vld [vmem:[%s3 + $0x1f0] sm:$0xff]
  %v1333 = vld [vmem:[%s3 + $0x1f8] sm:$0xff]
  %v1334 = vld [vmem:[%s3 + $0x200] sm:$0xff]
  %v1335 = vld [vmem:[%s3 + $0x208] sm:$0xff]
  %v1336 = vld [vmem:[%s3 + $0x210] sm:$0xff]
  %v1337 = vld [vmem:[%s3 + $0x218] sm:$0xff]
  %v1338 = vld [vmem:[%s3 + $0x220] sm:$0xff]
  %v1339 = vld [vmem:[%s3 + $0x228] sm:$0xff]
  %v1340 = vld [vmem:[%s3 + $0x230] sm:$0xff]
  %v1341 = vld [vmem:[%s3 + $0x238] sm:$0xff]
  %v1342 = vld [vmem:[%s3 + $0x240] sm:$0xff]
  %v1343 = vld [vmem:[%s3 + $0x248] sm:$0xff]
  %v1344 = vld [vmem:[%s3 + $0x250] sm:$0xff]
  %v1345 = vld [vmem:[%s3 + $0x258] sm:$0xff]
  %v1346 = vld [vmem:[%s3 + $0x260] sm:$0xff]
  %v1347 = vld [vmem:[%s3 + $0x268] sm:$0xff]
  %v1348 = vld [vmem:[%s3 + $0x270] sm:$0xff]
  %v1349 = vld [vmem:[%s3 + $0x278] sm:$0xff]
  %v1350 = vld [vmem:[%s3 + $0x280] sm:$0xff]
  %v1351 = vld [vmem:[%s3 + $0x288] sm:$0xff]
  %v1352 = vld [vmem:[%s3 + $0x290] sm:$0xff]
  %v1353 = vld [vmem:[%s3 + $0x298] sm:$0xff]
  %v1354 = vld [vmem:[%s3 + $0x2a0] sm:$0xff]
  %v1355 = vld [vmem:[%s3 + $0x2a8] sm:$0xff]
  %v1356 = vld [vmem:[%s3 + $0x2b0] sm:$0xff]
  %v1357 = vld [vmem:[%s3 + $0x2b8] sm:$0xff]
  %v1358 = vld [vmem:[%s3 + $0x2c0] sm:$0xff]
  %v1359 = vld [vmem:[%s3 + $0x2c8] sm:$0xff]
  %v1360 = vld [vmem:[%s3 + $0x2d0] sm:$0xff]
  %v1361 = vld [vmem:[%s3 + $0x2d8] sm:$0xff]
  %v1362 = vld [vmem:[%s3 + $0x2e0] sm:$0xff]
  %v1363 = vld [vmem:[%s3 + $0x2e8] sm:$0xff]
  %v1364 = vld [vmem:[%s3 + $0x2f0] sm:$0xff]
  %v1365 = vld [vmem:[%s3 + $0x2f8] sm:$0xff]
  %v1366 = vld [vmem:[%s4] sm:$0xff]
  %v1367 = vld [vmem:[%s4 + $0x8] sm:$0xff]
  %v1368 = vld [vmem:[%s4 + $0x10] sm:$0xff]
  %1369 = vmatprep.subr.mxu0 %v1271
  %1370 = vmatpush1.msra.mxu0 %v1270
  %1371 = vmatprep.subr.mxu0 %v1274
  %1372 = vmatpush1.msra.mxu0 %v1273
  %1373 = vmatprep.subr.mxu0 %v1277
  %1374 = vmatpush1.msra.mxu0 %v1276
  %1375 = vmatprep.subr.mxu0 %v1280
  %1376 = vmatpush1.msra.mxu0 %v1279
  %1377 = vmatprep.subr.mxu0 %v1283
  %1378 = vmatpush1.msra.mxu0 %v1282
  %1379 = vmatprep.subr.mxu0 %v1286
  %1380 = vmatpush1.msra.mxu0 %v1285
  %1381 = vmatprep.subr.mxu0 %v1289
  %1382 = vmatpush1.msra.mxu0 %v1288
  %1383 = vmatprep.subr.mxu0 %v1292
  %1384 = vmatpush1.msra.mxu0 %v1291
  %1385 = vmatprep.subr.mxu0 %v1295
  %1386 = vmatpush1.msra.mxu0 %v1294
  %1387 = vmatprep.subr.mxu0 %v1298
  %1388 = vmatpush1.msra.mxu0 %v1297
  %1389 = vmatprep.subr.mxu0 %v1301
  %1390 = vmatpush1.msra.mxu0 %v1300
  %1391 = vmatprep.subr.mxu0 %v1304
  %1392 = vmatpush1.msra.mxu0 %v1303
  %1393 = vmatprep.subr.mxu0 %v1307
  %1394 = vmatpush1.msra.mxu0 %v1306
  %1395 = vmatprep.subr.mxu0 %v1310
  %1396 = vmatpush1.msra.mxu0 %v1309
  %1397 = vmatprep.subr.mxu0 %v1313
  %1398 = vmatpush1.msra.mxu0 %v1312
  %1399 = vmatprep.subr.mxu0 %v1316
  %1400 = vmatpush1.msra.mxu0 %v1315
  %1401 = vmatprep.subr.mxu0 %v1319
  %1402 = vmatpush1.msra.mxu0 %v1318
  %1403 = vmatprep.subr.mxu0 %v1322
  %1404 = vmatpush1.msra.mxu0 %v1321
  %1405 = vmatprep.subr.mxu0 %v1325
  %1406 = vmatpush1.msra.mxu0 %v1324
  %1407 = vmatprep.subr.mxu0 %v1328
  %1408 = vmatpush1.msra.mxu0 %v1327
  %1409 = vmatprep.subr.mxu0 %v1331
  %1410 = vmatpush1.msra.mxu0 %v1330
  %1411 = vmatprep.subr.mxu0 %v1334
  %1412 = vmatpush1.msra.mxu0 %v1333
  %1413 = vmatprep.subr.mxu0 %v1337
  %1414 = vmatpush1.msra.mxu0 %v1336
  %1415 = vmatprep.subr.mxu0 %v1340
  %1416 = vmatpush1.msra.mxu0 %v1339
  %1417 = vmatprep.subr.mxu0 %v1343
  %1418 = vmatpush1.msra.mxu0 %v1342
  %1419 = vmatprep.subr.mxu0 %v1346
  %1420 = vmatpush1.msra.mxu0 %v1345
  %1421 = vmatprep.subr.mxu0 %v1349
  %1422 = vmatpush1.msra.mxu0 %v1348
  %1423 = vmatprep.subr.mxu0 %v1352
  %1424 = vmatpush1.msra.mxu0 %v1351
  %1425 = vmatprep.subr.mxu0 %v1355
  %1426 = vmatpush1.msra.mxu0 %v1354
  %1427 = vmatprep.subr.mxu0 %v1358
  %1428 = vmatpush1.msra.mxu0 %v1357
  %1429 = vmatprep.subr.mxu0 %v1361
  %1430 = vmatpush1.msra.mxu0 %v1360
  %1431 = vmatprep.subr.mxu0 %v1364
  %1432 = vmatpush1.msra.mxu0 %v1363
  %1433 = vmatprep.mubr.f32.mxu0 %v1258
  %1434 = vmatmul.mubr.f32.gmra.mrb[0].mxu0 %v1257
  %v1435 = vpop.f32.mrb[0].mxu0
  %v1436 = vadd.f32 %v1366, %v1435
  %v1437 = vpop.f32.mrb[0].mxu0
  %v1438 = vadd.f32 %v1367, %v1437
  %1439 = vdwg.mxu0
  %1440 = vmatprep.subr.mxu0 0.0
  %1441 = vmatpush1.msra.mxu0 %v1272
  %1442 = vmatprep.subr.mxu0 0.0
  %1443 = vmatpush1.msra.mxu0 %v1275
  %1444 = vmatprep.subr.mxu0 0.0
  %1445 = vmatpush1.msra.mxu0 %v1278
  %1446 = vmatprep.subr.mxu0 0.0
  %1447 = vmatpush1.msra.mxu0 %v1281
  %1448 = vmatprep.subr.mxu0 0.0
  %1449 = vmatpush1.msra.mxu0 %v1284
  %1450 = vmatprep.subr.mxu0 0.0
  %1451 = vmatpush1.msra.mxu0 %v1287
  %1452 = vmatprep.subr.mxu0 0.0
  %1453 = vmatpush1.msra.mxu0 %v1290
  %1454 = vmatprep.subr.mxu0 0.0
  %1455 = vmatpush1.msra.mxu0 %v1293
  %1456 = vmatprep.subr.mxu0 0.0
  %1457 = vmatpush1.msra.mxu0 %v1296
  %1458 = vmatprep.subr.mxu0 0.0
  %1459 = vmatpush1.msra.mxu0 %v1299
  %1460 = vmatprep.subr.mxu0 0.0
  %1461 = vmatpush1.msra.mxu0 %v1302
  %1462 = vmatprep.subr.mxu0 0.0
  %1463 = vmatpush1.msra.mxu0 %v1305
  %1464 = vmatprep.subr.mxu0 0.0
  %1465 = vmatpush1.msra.mxu0 %v1308
  %1466 = vmatprep.subr.mxu0 0.0
  %1467 = vmatpush1.msra.mxu0 %v1311
  %1468 = vmatprep.subr.mxu0 0.0
  %1469 = vmatpush1.msra.mxu0 %v1314
  %1470 = vmatprep.subr.mxu0 0.0
  %1471 = vmatpush1.msra.mxu0 %v1317
  %1472 = vmatprep.subr.mxu0 0.0
  %1473 = vmatpush1.msra.mxu0 %v1320
  %1474 = vmatprep.subr.mxu0 0.0
  %1475 = vmatpush1.msra.mxu0 %v1323
  %1476 = vmatprep.subr.mxu0 0.0
  %1477 = vmatpush1.msra.mxu0 %v1326
  %1478 = vmatprep.subr.mxu0 0.0
  %1479 = vmatpush1.msra.mxu0 %v1329
  %1480 = vmatprep.subr.mxu0 0.0
  %1481 = vmatpush1.msra.mxu0 %v1332
  %1482 = vmatprep.subr.mxu0 0.0
  %1483 = vmatpush1.msra.mxu0 %v1335
  %1484 = vmatprep.subr.mxu0 0.0
  %1485 = vmatpush1.msra.mxu0 %v1338
  %1486 = vmatprep.subr.mxu0 0.0
  %1487 = vmatpush1.msra.mxu0 %v1341
  %1488 = vmatprep.subr.mxu0 0.0
  %1489 = vmatpush1.msra.mxu0 %v1344
  %1490 = vmatprep.subr.mxu0 0.0
  %1491 = vmatpush1.msra.mxu0 %v1347
  %1492 = vmatprep.subr.mxu0 0.0
  %1493 = vmatpush1.msra.mxu0 %v1350
  %1494 = vmatprep.subr.mxu0 0.0
  %1495 = vmatpush1.msra.mxu0 %v1353
  %1496 = vmatprep.subr.mxu0 0.0
  %1497 = vmatpush1.msra.mxu0 %v1356
  %1498 = vmatprep.subr.mxu0 0.0
  %1499 = vmatpush1.msra.mxu0 %v1359
  %1500 = vmatprep.subr.mxu0 0.0
  %1501 = vmatpush1.msra.mxu0 %v1362
  %1502 = vmatprep.subr.mxu0 0.0
  %1503 = vmatpush1.msra.mxu0 %v1365
  %1504 = vmatprep.mubr.f32.mxu0 %v1258
  %1505 = vmatmul.mubr.f32.gmra.mrb[0].mxu0 %v1257
  %v1506 = vpop.f32.mrb[0].mxu0
  %v1507 = vadd.f32 %v1368, %v1506
  %v1508 = vpop.f32.mrb[0].mxu0
  %1509 = vdwg.mxu0
  %v1510 = vadd.f32 %v1267, %v1436
  %v1511 = vxor.u32 %v1510, 2147483648
  %v1512 = vmul.f32 %v1511, 1.442695
  %v1513 = vpow.pop %v1512
  %v1514 = vadd.f32 %v1513, 1.0
  %v1515 = vrcp.pop %v1514
  %v1516 = vmul.f32 1.0, %v1515
  %v1517 = vadd.f32 %v1268, %v1438
  %v1518 = vxor.u32 %v1517, 2147483648
  %v1519 = vmul.f32 %v1518, 1.442695
  %v1520 = vpow.pop %v1519
  %v1521 = vadd.f32 %v1520, 1.0
  %v1522 = vrcp.pop %v1521
  %v1523 = vmul.f32 1.0, %v1522
  %v1524 = vmul.f32 %v1516, %v1507
  %v1525 = vadd.f32 %v1269, %v1524
  %v1526 = vtanh.pop %v1525
  %v1527 = vsub.f32 1.0, %v1523
  %v1528 = vmul.f32 %v1527, %v1526
  %v1529 = vmul.f32 %v1523, %v1259
  %v1530 = vadd.f32 %v1528, %v1529
  %s1531 = scalar_lea.vmem %s5, 16
  %1532 = vst [vmem:[%s1531] sm:$0xff] %v1530
  %v1533 = vmul.f32 %v1530, %v708
  %v1534 = vmul.f32 %v1530, %v709
  %v1535 = vadd.f32 %v1533, %v1534
  %s1536 = scalar_lea.vmem [#allocation2], 72
  %v1537 = vld [vmem:[%s1536] sm:$0xff]
  %v1538 = vld [vmem:[%s1536 + $0x8] sm:$0xff]
  %v1539 = vld [vmem:[%s1536 + $0x10] sm:$0xff]
  %v1540 = vld [vmem:[%s2] sm:$0xff]
  %v1541 = vld [vmem:[%s2 + $0x8] sm:$0xff]
  %v1542 = vld [vmem:[%s2 + $0x10] sm:$0xff]
  %v1543 = vadd.f32 %v1537, %v1540
  %v1544 = vadd.f32 %v1538, %v1541
  %v1545 = vadd.f32 %v1539, %v1542
  %v1546 = vld [vmem:[%s3] sm:$0xff]
  %v1547 = vld [vmem:[%s3 + $0x8] sm:$0xff]
  %v1548 = vld [vmem:[%s3 + $0x10] sm:$0xff]
  %v1549 = vld [vmem:[%s3 + $0x18] sm:$0xff]
  %v1550 = vld [vmem:[%s3 + $0x20] sm:$0xff]
  %v1551 = vld [vmem:[%s3 + $0x28] sm:$0xff]
  %v1552 = vld [vmem:[%s3 + $0x30] sm:$0xff]
  %v1553 = vld [vmem:[%s3 + $0x38] sm:$0xff]
  %v1554 = vld [vmem:[%s3 + $0x40] sm:$0xff]
  %v1555 = vld [vmem:[%s3 + $0x48] sm:$0xff]
  %v1556 = vld [vmem:[%s3 + $0x50] sm:$0xff]
  %v1557 = vld [vmem:[%s3 + $0x58] sm:$0xff]
  %v1558 = vld [vmem:[%s3 + $0x60] sm:$0xff]
  %v1559 = vld [vmem:[%s3 + $0x68] sm:$0xff]
  %v1560 = vld [vmem:[%s3 + $0x70] sm:$0xff]
  %v1561 = vld [vmem:[%s3 + $0x78] sm:$0xff]
  %v1562 = vld [vmem:[%s3 + $0x80] sm:$0xff]
  %v1563 = vld [vmem:[%s3 + $0x88] sm:$0xff]
  %v1564 = vld [vmem:[%s3 + $0x90] sm:$0xff]
  %v1565 = vld [vmem:[%s3 + $0x98] sm:$0xff]
  %v1566 = vld [vmem:[%s3 + $0xa0] sm:$0xff]
  %v1567 = vld [vmem:[%s3 + $0xa8] sm:$0xff]
  %v1568 = vld [vmem:[%s3 + $0xb0] sm:$0xff]
  %v1569 = vld [vmem:[%s3 + $0xb8] sm:$0xff]
  %v1570 = vld [vmem:[%s3 + $0xc0] sm:$0xff]
  %v1571 = vld [vmem:[%s3 + $0xc8] sm:$0xff]
  %v1572 = vld [vmem:[%s3 + $0xd0] sm:$0xff]
  %v1573 = vld [vmem:[%s3 + $0xd8] sm:$0xff]
  %v1574 = vld [vmem:[%s3 + $0xe0] sm:$0xff]
  %v1575 = vld [vmem:[%s3 + $0xe8] sm:$0xff]
  %v1576 = vld [vmem:[%s3 + $0xf0] sm:$0xff]
  %v1577 = vld [vmem:[%s3 + $0xf8] sm:$0xff]
  %v1578 = vld [vmem:[%s3 + $0x100] sm:$0xff]
  %v1579 = vld [vmem:[%s3 + $0x108] sm:$0xff]
  %v1580 = vld [vmem:[%s3 + $0x110] sm:$0xff]
  %v1581 = vld [vmem:[%s3 + $0x118] sm:$0xff]
  %v1582 = vld [vmem:[%s3 + $0x120] sm:$0xff]
  %v1583 = vld [vmem:[%s3 + $0x128] sm:$0xff]
  %v1584 = vld [vmem:[%s3 + $0x130] sm:$0xff]
  %v1585 = vld [vmem:[%s3 + $0x138] sm:$0xff]
  %v1586 = vld [vmem:[%s3 + $0x140] sm:$0xff]
  %v1587 = vld [vmem:[%s3 + $0x148] sm:$0xff]
  %v1588 = vld [vmem:[%s3 + $0x150] sm:$0xff]
  %v1589 = vld [vmem:[%s3 + $0x158] sm:$0xff]
  %v1590 = vld [vmem:[%s3 + $0x160] sm:$0xff]
  %v1591 = vld [vmem:[%s3 + $0x168] sm:$0xff]
  %v1592 = vld [vmem:[%s3 + $0x170] sm:$0xff]
  %v1593 = vld [vmem:[%s3 + $0x178] sm:$0xff]
  %v1594 = vld [vmem:[%s3 + $0x180] sm:$0xff]
  %v1595 = vld [vmem:[%s3 + $0x188] sm:$0xff]
  %v1596 = vld [vmem:[%s3 + $0x190] sm:$0xff]
  %v1597 = vld [vmem:[%s3 + $0x198] sm:$0xff]
  %v1598 = vld [vmem:[%s3 + $0x1a0] sm:$0xff]
  %v1599 = vld [vmem:[%s3 + $0x1a8] sm:$0xff]
  %v1600 = vld [vmem:[%s3 + $0x1b0] sm:$0xff]
  %v1601 = vld [vmem:[%s3 + $0x1b8] sm:$0xff]
  %v1602 = vld [vmem:[%s3 + $0x1c0] sm:$0xff]
  %v1603 = vld [vmem:[%s3 + $0x1c8] sm:$0xff]
  %v1604 = vld [vmem:[%s3 + $0x1d0] sm:$0xff]
  %v1605 = vld [vmem:[%s3 + $0x1d8] sm:$0xff]
  %v1606 = vld [vmem:[%s3 + $0x1e0] sm:$0xff]
  %v1607 = vld [vmem:[%s3 + $0x1e8] sm:$0xff]
  %v1608 = vld [vmem:[%s3 + $0x1f0] sm:$0xff]
  %v1609 = vld [vmem:[%s3 + $0x1f8] sm:$0xff]
  %v1610 = vld [vmem:[%s3 + $0x200] sm:$0xff]
  %v1611 = vld [vmem:[%s3 + $0x208] sm:$0xff]
  %v1612 = vld [vmem:[%s3 + $0x210] sm:$0xff]
  %v1613 = vld [vmem:[%s3 + $0x218] sm:$0xff]
  %v1614 = vld [vmem:[%s3 + $0x220] sm:$0xff]
  %v1615 = vld [vmem:[%s3 + $0x228] sm:$0xff]
  %v1616 = vld [vmem:[%s3 + $0x230] sm:$0xff]
  %v1617 = vld [vmem:[%s3 + $0x238] sm:$0xff]
  %v1618 = vld [vmem:[%s3 + $0x240] sm:$0xff]
  %v1619 = vld [vmem:[%s3 + $0x248] sm:$0xff]
  %v1620 = vld [vmem:[%s3 + $0x250] sm:$0xff]
  %v1621 = vld [vmem:[%s3 + $0x258] sm:$0xff]
  %v1622 = vld [vmem:[%s3 + $0x260] sm:$0xff]
  %v1623 = vld [vmem:[%s3 + $0x268] sm:$0xff]
  %v1624 = vld [vmem:[%s3 + $0x270] sm:$0xff]
  %v1625 = vld [vmem:[%s3 + $0x278] sm:$0xff]
  %v1626 = vld [vmem:[%s3 + $0x280] sm:$0xff]
  %v1627 = vld [vmem:[%s3 + $0x288] sm:$0xff]
  %v1628 = vld [vmem:[%s3 + $0x290] sm:$0xff]
  %v1629 = vld [vmem:[%s3 + $0x298] sm:$0xff]
  %v1630 = vld [vmem:[%s3 + $0x2a0] sm:$0xff]
  %v1631 = vld [vmem:[%s3 + $0x2a8] sm:$0xff]
  %v1632 = vld [vmem:[%s3 + $0x2b0] sm:$0xff]
  %v1633 = vld [vmem:[%s3 + $0x2b8] sm:$0xff]
  %v1634 = vld [vmem:[%s3 + $0x2c0] sm:$0xff]
  %v1635 = vld [vmem:[%s3 + $0x2c8] sm:$0xff]
  %v1636 = vld [vmem:[%s3 + $0x2d0] sm:$0xff]
  %v1637 = vld [vmem:[%s3 + $0x2d8] sm:$0xff]
  %v1638 = vld [vmem:[%s3 + $0x2e0] sm:$0xff]
  %v1639 = vld [vmem:[%s3 + $0x2e8] sm:$0xff]
  %v1640 = vld [vmem:[%s3 + $0x2f0] sm:$0xff]
  %v1641 = vld [vmem:[%s3 + $0x2f8] sm:$0xff]
  %v1642 = vld [vmem:[%s4] sm:$0xff]
  %v1643 = vld [vmem:[%s4 + $0x8] sm:$0xff]
  %v1644 = vld [vmem:[%s4 + $0x10] sm:$0xff]
  %1645 = vmatprep.subr.mxu0 %v1547
  %1646 = vmatpush1.msra.mxu0 %v1546
  %1647 = vmatprep.subr.mxu0 %v1550
  %1648 = vmatpush1.msra.mxu0 %v1549
  %1649 = vmatprep.subr.mxu0 %v1553
  %1650 = vmatpush1.msra.mxu0 %v1552
  %1651 = vmatprep.subr.mxu0 %v1556
  %1652 = vmatpush1.msra.mxu0 %v1555
  %1653 = vmatprep.subr.mxu0 %v1559
  %1654 = vmatpush1.msra.mxu0 %v1558
  %1655 = vmatprep.subr.mxu0 %v1562
  %1656 = vmatpush1.msra.mxu0 %v1561
  %1657 = vmatprep.subr.mxu0 %v1565
  %1658 = vmatpush1.msra.mxu0 %v1564
  %1659 = vmatprep.subr.mxu0 %v1568
  %1660 = vmatpush1.msra.mxu0 %v1567
  %1661 = vmatprep.subr.mxu0 %v1571
  %1662 = vmatpush1.msra.mxu0 %v1570
  %1663 = vmatprep.subr.mxu0 %v1574
  %1664 = vmatpush1.msra.mxu0 %v1573
  %1665 = vmatprep.subr.mxu0 %v1577
  %1666 = vmatpush1.msra.mxu0 %v1576
  %1667 = vmatprep.subr.mxu0 %v1580
  %1668 = vmatpush1.msra.mxu0 %v1579
  %1669 = vmatprep.subr.mxu0 %v1583
  %1670 = vmatpush1.msra.mxu0 %v1582
  %1671 = vmatprep.subr.mxu0 %v1586
  %1672 = vmatpush1.msra.mxu0 %v1585
  %1673 = vmatprep.subr.mxu0 %v1589
  %1674 = vmatpush1.msra.mxu0 %v1588
  %1675 = vmatprep.subr.mxu0 %v1592
  %1676 = vmatpush1.msra.mxu0 %v1591
  %1677 = vmatprep.subr.mxu0 %v1595
  %1678 = vmatpush1.msra.mxu0 %v1594
  %1679 = vmatprep.subr.mxu0 %v1598
  %1680 = vmatpush1.msra.mxu0 %v1597
  %1681 = vmatprep.subr.mxu0 %v1601
  %1682 = vmatpush1.msra.mxu0 %v1600
  %1683 = vmatprep.subr.mxu0 %v1604
  %1684 = vmatpush1.msra.mxu0 %v1603
  %1685 = vmatprep.subr.mxu0 %v1607
  %1686 = vmatpush1.msra.mxu0 %v1606
  %1687 = vmatprep.subr.mxu0 %v1610
  %1688 = vmatpush1.msra.mxu0 %v1609
  %1689 = vmatprep.subr.mxu0 %v1613
  %1690 = vmatpush1.msra.mxu0 %v1612
  %1691 = vmatprep.subr.mxu0 %v1616
  %1692 = vmatpush1.msra.mxu0 %v1615
  %1693 = vmatprep.subr.mxu0 %v1619
  %1694 = vmatpush1.msra.mxu0 %v1618
  %1695 = vmatprep.subr.mxu0 %v1622
  %1696 = vmatpush1.msra.mxu0 %v1621
  %1697 = vmatprep.subr.mxu0 %v1625
  %1698 = vmatpush1.msra.mxu0 %v1624
  %1699 = vmatprep.subr.mxu0 %v1628
  %1700 = vmatpush1.msra.mxu0 %v1627
  %1701 = vmatprep.subr.mxu0 %v1631
  %1702 = vmatpush1.msra.mxu0 %v1630
  %1703 = vmatprep.subr.mxu0 %v1634
  %1704 = vmatpush1.msra.mxu0 %v1633
  %1705 = vmatprep.subr.mxu0 %v1637
  %1706 = vmatpush1.msra.mxu0 %v1636
  %1707 = vmatprep.subr.mxu0 %v1640
  %1708 = vmatpush1.msra.mxu0 %v1639
  %1709 = vmatprep.mubr.f32.mxu0 %v1534
  %1710 = vmatmul.mubr.f32.gmra.mrb[0].mxu0 %v1533
  %v1711 = vpop.f32.mrb[0].mxu0
  %v1712 = vadd.f32 %v1642, %v1711
  %v1713 = vpop.f32.mrb[0].mxu0
  %v1714 = vadd.f32 %v1643, %v1713
  %1715 = vdwg.mxu0
  %1716 = vmatprep.subr.mxu0 0.0
  %1717 = vmatpush1.msra.mxu0 %v1548
  %1718 = vmatprep.subr.mxu0 0.0
  %1719 = vmatpush1.msra.mxu0 %v1551
  %1720 = vmatprep.subr.mxu0 0.0
  %1721 = vmatpush1.msra.mxu0 %v1554
  %1722 = vmatprep.subr.mxu0 0.0
  %1723 = vmatpush1.msra.mxu0 %v1557
  %1724 = vmatprep.subr.mxu0 0.0
  %1725 = vmatpush1.msra.mxu0 %v1560
  %1726 = vmatprep.subr.mxu0 0.0
  %1727 = vmatpush1.msra.mxu0 %v1563
  %1728 = vmatprep.subr.mxu0 0.0
  %1729 = vmatpush1.msra.mxu0 %v1566
  %1730 = vmatprep.subr.mxu0 0.0
  %1731 = vmatpush1.msra.mxu0 %v1569
  %1732 = vmatprep.subr.mxu0 0.0
  %1733 = vmatpush1.msra.mxu0 %v1572
  %1734 = vmatprep.subr.mxu0 0.0
  %1735 = vmatpush1.msra.mxu0 %v1575
  %1736 = vmatprep.subr.mxu0 0.0
  %1737 = vmatpush1.msra.mxu0 %v1578
  %1738 = vmatprep.subr.mxu0 0.0
  %1739 = vmatpush1.msra.mxu0 %v1581
  %1740 = vmatprep.subr.mxu0 0.0
  %1741 = vmatpush1.msra.mxu0 %v1584
  %1742 = vmatprep.subr.mxu0 0.0
  %1743 = vmatpush1.msra.mxu0 %v1587
  %1744 = vmatprep.subr.mxu0 0.0
  %1745 = vmatpush1.msra.mxu0 %v1590
  %1746 = vmatprep.subr.mxu0 0.0
  %1747 = vmatpush1.msra.mxu0 %v1593
  %1748 = vmatprep.subr.mxu0 0.0
  %1749 = vmatpush1.msra.mxu0 %v1596
  %1750 = vmatprep.subr.mxu0 0.0
  %1751 = vmatpush1.msra.mxu0 %v1599
  %1752 = vmatprep.subr.mxu0 0.0
  %1753 = vmatpush1.msra.mxu0 %v1602
  %1754 = vmatprep.subr.mxu0 0.0
  %1755 = vmatpush1.msra.mxu0 %v1605
  %1756 = vmatprep.subr.mxu0 0.0
  %1757 = vmatpush1.msra.mxu0 %v1608
  %1758 = vmatprep.subr.mxu0 0.0
  %1759 = vmatpush1.msra.mxu0 %v1611
  %1760 = vmatprep.subr.mxu0 0.0
  %1761 = vmatpush1.msra.mxu0 %v1614
  %1762 = vmatprep.subr.mxu0 0.0
  %1763 = vmatpush1.msra.mxu0 %v1617
  %1764 = vmatprep.subr.mxu0 0.0
  %1765 = vmatpush1.msra.mxu0 %v1620
  %1766 = vmatprep.subr.mxu0 0.0
  %1767 = vmatpush1.msra.mxu0 %v1623
  %1768 = vmatprep.subr.mxu0 0.0
  %1769 = vmatpush1.msra.mxu0 %v1626
  %1770 = vmatprep.subr.mxu0 0.0
  %1771 = vmatpush1.msra.mxu0 %v1629
  %1772 = vmatprep.subr.mxu0 0.0
  %1773 = vmatpush1.msra.mxu0 %v1632
  %1774 = vmatprep.subr.mxu0 0.0
  %1775 = vmatpush1.msra.mxu0 %v1635
  %1776 = vmatprep.subr.mxu0 0.0
  %1777 = vmatpush1.msra.mxu0 %v1638
  %1778 = vmatprep.subr.mxu0 0.0
  %1779 = vmatpush1.msra.mxu0 %v1641
  %1780 = vmatprep.mubr.f32.mxu0 %v1534
  %1781 = vmatmul.mubr.f32.gmra.mrb[0].mxu0 %v1533
  %v1782 = vpop.f32.mrb[0].mxu0
  %v1783 = vadd.f32 %v1644, %v1782
  %v1784 = vpop.f32.mrb[0].mxu0
  %1785 = vdwg.mxu0
  %v1786 = vadd.f32 %v1543, %v1712
  %v1787 = vxor.u32 %v1786, 2147483648
  %v1788 = vmul.f32 %v1787, 1.442695
  %v1789 = vpow.pop %v1788
  %v1790 = vadd.f32 %v1789, 1.0
  %v1791 = vrcp.pop %v1790
  %v1792 = vmul.f32 1.0, %v1791
  %v1793 = vadd.f32 %v1544, %v1714
  %v1794 = vxor.u32 %v1793, 2147483648
  %v1795 = vmul.f32 %v1794, 1.442695
  %v1796 = vpow.pop %v1795
  %v1797 = vadd.f32 %v1796, 1.0
  %v1798 = vrcp.pop %v1797
  %v1799 = vmul.f32 1.0, %v1798
  %v1800 = vmul.f32 %v1792, %v1783
  %v1801 = vadd.f32 %v1545, %v1800
  %v1802 = vtanh.pop %v1801
  %v1803 = vsub.f32 1.0, %v1799
  %v1804 = vmul.f32 %v1803, %v1802
  %v1805 = vmul.f32 %v1799, %v1535
  %v1806 = vadd.f32 %v1804, %v1805
  %s1807 = scalar_lea.vmem %s5, 24
  %1808 = vst [vmem:[%s1807] sm:$0xff] %v1806
  %v1809 = vmul.f32 %v1806, %v708
  %v1810 = vmul.f32 %v1806, %v709
  %v1811 = vadd.f32 %v1809, %v1810
  %s1812 = scalar_lea.vmem [#allocation2], 96
  %v1813 = vld [vmem:[%s1812] sm:$0xff]
  %v1814 = vld [vmem:[%s1812 + $0x8] sm:$0xff]
  %v1815 = vld [vmem:[%s1812 + $0x10] sm:$0xff]
  %v1816 = vld [vmem:[%s2] sm:$0xff]
  %v1817 = vld [vmem:[%s2 + $0x8] sm:$0xff]
  %v1818 = vld [vmem:[%s2 + $0x10] sm:$0xff]
  %v1819 = vadd.f32 %v1813, %v1816
  %v1820 = vadd.f32 %v1814, %v1817
  %v1821 = vadd.f32 %v1815, %v1818
  %v1822 = vld [vmem:[%s3] sm:$0xff]
  %v1823 = vld [vmem:[%s3 + $0x8] sm:$0xff]
  %v1824 = vld [vmem:[%s3 + $0x10] sm:$0xff]
  %v1825 = vld [vmem:[%s3 + $0x18] sm:$0xff]
  %v1826 = vld [vmem:[%s3 + $0x20] sm:$0xff]
  %v1827 = vld [vmem:[%s3 + $0x28] sm:$0xff]
  %v1828 = vld [vmem:[%s3 + $0x30] sm:$0xff]
  %v1829 = vld [vmem:[%s3 + $0x38] sm:$0xff]
  %v1830 = vld [vmem:[%s3 + $0x40] sm:$0xff]
  %v1831 = vld [vmem:[%s3 + $0x48] sm:$0xff]
  %v1832 = vld [vmem:[%s3 + $0x50] sm:$0xff]
  %v1833 = vld [vmem:[%s3 + $0x58] sm:$0xff]
  %v1834 = vld [vmem:[%s3 + $0x60] sm:$0xff]
  %v1835 = vld [vmem:[%s3 + $0x68] sm:$0xff]
  %v1836 = vld [vmem:[%s3 + $0x70] sm:$0xff]
  %v1837 = vld [vmem:[%s3 + $0x78] sm:$0xff]
  %v1838 = vld [vmem:[%s3 + $0x80] sm:$0xff]
  %v1839 = vld [vmem:[%s3 + $0x88] sm:$0xff]
  %v1840 = vld [vmem:[%s3 + $0x90] sm:$0xff]
  %v1841 = vld [vmem:[%s3 + $0x98] sm:$0xff]
  %v1842 = vld [vmem:[%s3 + $0xa0] sm:$0xff]
  %v1843 = vld [vmem:[%s3 + $0xa8] sm:$0xff]
  %v1844 = vld [vmem:[%s3 + $0xb0] sm:$0xff]
  %v1845 = vld [vmem:[%s3 + $0xb8] sm:$0xff]
  %v1846 = vld [vmem:[%s3 + $0xc0] sm:$0xff]
  %v1847 = vld [vmem:[%s3 + $0xc8] sm:$0xff]
  %v1848 = vld [vmem:[%s3 + $0xd0] sm:$0xff]
  %v1849 = vld [vmem:[%s3 + $0xd8] sm:$0xff]
  %v1850 = vld [vmem:[%s3 + $0xe0] sm:$0xff]
  %v1851 = vld [vmem:[%s3 + $0xe8] sm:$0xff]
  %v1852 = vld [vmem:[%s3 + $0xf0] sm:$0xff]
  %v1853 = vld [vmem:[%s3 + $0xf8] sm:$0xff]
  %v1854 = vld [vmem:[%s3 + $0x100] sm:$0xff]
  %v1855 = vld [vmem:[%s3 + $0x108] sm:$0xff]
  %v1856 = vld [vmem:[%s3 + $0x110] sm:$0xff]
  %v1857 = vld [vmem:[%s3 + $0x118] sm:$0xff]
  %v1858 = vld [vmem:[%s3 + $0x120] sm:$0xff]
  %v1859 = vld [vmem:[%s3 + $0x128] sm:$0xff]
  %v1860 = vld [vmem:[%s3 + $0x130] sm:$0xff]
  %v1861 = vld [vmem:[%s3 + $0x138] sm:$0xff]
  %v1862 = vld [vmem:[%s3 + $0x140] sm:$0xff]
  %v1863 = vld [vmem:[%s3 + $0x148] sm:$0xff]
  %v1864 = vld [vmem:[%s3 + $0x150] sm:$0xff]
  %v1865 = vld [vmem:[%s3 + $0x158] sm:$0xff]
  %v1866 = vld [vmem:[%s3 + $0x160] sm:$0xff]
  %v1867 = vld [vmem:[%s3 + $0x168] sm:$0xff]
  %v1868 = vld [vmem:[%s3 + $0x170] sm:$0xff]
  %v1869 = vld [vmem:[%s3 + $0x178] sm:$0xff]
  %v1870 = vld [vmem:[%s3 + $0x180] sm:$0xff]
  %v1871 = vld [vmem:[%s3 + $0x188] sm:$0xff]
  %v1872 = vld [vmem:[%s3 + $0x190] sm:$0xff]
  %v1873 = vld [vmem:[%s3 + $0x198] sm:$0xff]
  %v1874 = vld [vmem:[%s3 + $0x1a0] sm:$0xff]
  %v1875 = vld [vmem:[%s3 + $0x1a8] sm:$0xff]
  %v1876 = vld [vmem:[%s3 + $0x1b0] sm:$0xff]
  %v1877 = vld [vmem:[%s3 + $0x1b8] sm:$0xff]
  %v1878 = vld [vmem:[%s3 + $0x1c0] sm:$0xff]
  %v1879 = vld [vmem:[%s3 + $0x1c8] sm:$0xff]
  %v1880 = vld [vmem:[%s3 + $0x1d0] sm:$0xff]
  %v1881 = vld [vmem:[%s3 + $0x1d8] sm:$0xff]
  %v1882 = vld [vmem:[%s3 + $0x1e0] sm:$0xff]
  %v1883 = vld [vmem:[%s3 + $0x1e8] sm:$0xff]
  %v1884 = vld [vmem:[%s3 + $0x1f0] sm:$0xff]
  %v1885 = vld [vmem:[%s3 + $0x1f8] sm:$0xff]
  %v1886 = vld [vmem:[%s3 + $0x200] sm:$0xff]
  %v1887 = vld [vmem:[%s3 + $0x208] sm:$0xff]
  %v1888 = vld [vmem:[%s3 + $0x210] sm:$0xff]
  %v1889 = vld [vmem:[%s3 + $0x218] sm:$0xff]
  %v1890 = vld [vmem:[%s3 + $0x220] sm:$0xff]
  %v1891 = vld [vmem:[%s3 + $0x228] sm:$0xff]
  %v1892 = vld [vmem:[%s3 + $0x230] sm:$0xff]
  %v1893 = vld [vmem:[%s3 + $0x238] sm:$0xff]
  %v1894 = vld [vmem:[%s3 + $0x240] sm:$0xff]
  %v1895 = vld [vmem:[%s3 + $0x248] sm:$0xff]
  %v1896 = vld [vmem:[%s3 + $0x250] sm:$0xff]
  %v1897 = vld [vmem:[%s3 + $0x258] sm:$0xff]
  %v1898 = vld [vmem:[%s3 + $0x260] sm:$0xff]
  %v1899 = vld [vmem:[%s3 + $0x268] sm:$0xff]
  %v1900 = vld [vmem:[%s3 + $0x270] sm:$0xff]
  %v1901 = vld [vmem:[%s3 + $0x278] sm:$0xff]
  %v1902 = vld [vmem:[%s3 + $0x280] sm:$0xff]
  %v1903 = vld [vmem:[%s3 + $0x288] sm:$0xff]
  %v1904 = vld [vmem:[%s3 + $0x290] sm:$0xff]
  %v1905 = vld [vmem:[%s3 + $0x298] sm:$0xff]
  %v1906 = vld [vmem:[%s3 + $0x2a0] sm:$0xff]
  %v1907 = vld [vmem:[%s3 + $0x2a8] sm:$0xff]
  %v1908 = vld [vmem:[%s3 + $0x2b0] sm:$0xff]
  %v1909 = vld [vmem:[%s3 + $0x2b8] sm:$0xff]
  %v1910 = vld [vmem:[%s3 + $0x2c0] sm:$0xff]
  %v1911 = vld [vmem:[%s3 + $0x2c8] sm:$0xff]
  %v1912 = vld [vmem:[%s3 + $0x2d0] sm:$0xff]
  %v1913 = vld [vmem:[%s3 + $0x2d8] sm:$0xff]
  %v1914 = vld [vmem:[%s3 + $0x2e0] sm:$0xff]
  %v1915 = vld [vmem:[%s3 + $0x2e8] sm:$0xff]
  %v1916 = vld [vmem:[%s3 + $0x2f0] sm:$0xff]
  %v1917 = vld [vmem:[%s3 + $0x2f8] sm:$0xff]
  %v1918 = vld [vmem:[%s4] sm:$0xff]
  %v1919 = vld [vmem:[%s4 + $0x8] sm:$0xff]
  %v1920 = vld [vmem:[%s4 + $0x10] sm:$0xff]
  %1921 = vmatprep.subr.mxu0 %v1823
  %1922 = vmatpush1.msra.mxu0 %v1822
  %1923 = vmatprep.subr.mxu0 %v1826
  %1924 = vmatpush1.msra.mxu0 %v1825
  %1925 = vmatprep.subr.mxu0 %v1829
  %1926 = vmatpush1.msra.mxu0 %v1828
  %1927 = vmatprep.subr.mxu0 %v1832
  %1928 = vmatpush1.msra.mxu0 %v1831
  %1929 = vmatprep.subr.mxu0 %v1835
  %1930 = vmatpush1.msra.mxu0 %v1834
  %1931 = vmatprep.subr.mxu0 %v1838
  %1932 = vmatpush1.msra.mxu0 %v1837
  %1933 = vmatprep.subr.mxu0 %v1841
  %1934 = vmatpush1.msra.mxu0 %v1840
  %1935 = vmatprep.subr.mxu0 %v1844
  %1936 = vmatpush1.msra.mxu0 %v1843
  %1937 = vmatprep.subr.mxu0 %v1847
  %1938 = vmatpush1.msra.mxu0 %v1846
  %1939 = vmatprep.subr.mxu0 %v1850
  %1940 = vmatpush1.msra.mxu0 %v1849
  %1941 = vmatprep.subr.mxu0 %v1853
  %1942 = vmatpush1.msra.mxu0 %v1852
  %1943 = vmatprep.subr.mxu0 %v1856
  %1944 = vmatpush1.msra.mxu0 %v1855
  %1945 = vmatprep.subr.mxu0 %v1859
  %1946 = vmatpush1.msra.mxu0 %v1858
  %1947 = vmatprep.subr.mxu0 %v1862
  %1948 = vmatpush1.msra.mxu0 %v1861
  %1949 = vmatprep.subr.mxu0 %v1865
  %1950 = vmatpush1.msra.mxu0 %v1864
  %1951 = vmatprep.subr.mxu0 %v1868
  %1952 = vmatpush1.msra.mxu0 %v1867
  %1953 = vmatprep.subr.mxu0 %v1871
  %1954 = vmatpush1.msra.mxu0 %v1870
  %1955 = vmatprep.subr.mxu0 %v1874
  %1956 = vmatpush1.msra.mxu0 %v1873
  %1957 = vmatprep.subr.mxu0 %v1877
  %1958 = vmatpush1.msra.mxu0 %v1876
  %1959 = vmatprep.subr.mxu0 %v1880
  %1960 = vmatpush1.msra.mxu0 %v1879
  %1961 = vmatprep.subr.mxu0 %v1883
  %1962 = vmatpush1.msra.mxu0 %v1882
  %1963 = vmatprep.subr.mxu0 %v1886
  %1964 = vmatpush1.msra.mxu0 %v1885
  %1965 = vmatprep.subr.mxu0 %v1889
  %1966 = vmatpush1.msra.mxu0 %v1888
  %1967 = vmatprep.subr.mxu0 %v1892
  %1968 = vmatpush1.msra.mxu0 %v1891
  %1969 = vmatprep.subr.mxu0 %v1895
  %1970 = vmatpush1.msra.mxu0 %v1894
  %1971 = vmatprep.subr.mxu0 %v1898
  %1972 = vmatpush1.msra.mxu0 %v1897
  %1973 = vmatprep.subr.mxu0 %v1901
  %1974 = vmatpush1.msra.mxu0 %v1900
  %1975 = vmatprep.subr.mxu0 %v1904
  %1976 = vmatpush1.msra.mxu0 %v1903
  %1977 = vmatprep.subr.mxu0 %v1907
  %1978 = vmatpush1.msra.mxu0 %v1906
  %1979 = vmatprep.subr.mxu0 %v1910
  %1980 = vmatpush1.msra.mxu0 %v1909
  %1981 = vmatprep.subr.mxu0 %v1913
  %1982 = vmatpush1.msra.mxu0 %v1912
  %1983 = vmatprep.subr.mxu0 %v1916
  %1984 = vmatpush1.msra.mxu0 %v1915
  %1985 = vmatprep.mubr.f32.mxu0 %v1810
  %1986 = vmatmul.mubr.f32.gmra.mrb[0].mxu0 %v1809
  %v1987 = vpop.f32.mrb[0].mxu0
  %v1988 = vadd.f32 %v1918, %v1987
  %v1989 = vpop.f32.mrb[0].mxu0
  %v1990 = vadd.f32 %v1919, %v1989
  %1991 = vdwg.mxu0
  %1992 = vmatprep.subr.mxu0 0.0
  %1993 = vmatpush1.msra.mxu0 %v1824
  %1994 = vmatprep.subr.mxu0 0.0
  %1995 = vmatpush1.msra.mxu0 %v1827
  %1996 = vmatprep.subr.mxu0 0.0
  %1997 = vmatpush1.msra.mxu0 %v1830
  %1998 = vmatprep.subr.mxu0 0.0
  %1999 = vmatpush1.msra.mxu0 %v1833
  %2000 = vmatprep.subr.mxu0 0.0
  %2001 = vmatpush1.msra.mxu0 %v1836
  %2002 = vmatprep.subr.mxu0 0.0
  %2003 = vmatpush1.msra.mxu0 %v1839
  %2004 = vmatprep.subr.mxu0 0.0
  %2005 = vmatpush1.msra.mxu0 %v1842
  %2006 = vmatprep.subr.mxu0 0.0
  %2007 = vmatpush1.msra.mxu0 %v1845
  %2008 = vmatprep.subr.mxu0 0.0
  %2009 = vmatpush1.msra.mxu0 %v1848
  %2010 = vmatprep.subr.mxu0 0.0
  %2011 = vmatpush1.msra.mxu0 %v1851
  %2012 = vmatprep.subr.mxu0 0.0
  %2013 = vmatpush1.msra.mxu0 %v1854
  %2014 = vmatprep.subr.mxu0 0.0
  %2015 = vmatpush1.msra.mxu0 %v1857
  %2016 = vmatprep.subr.mxu0 0.0
  %2017 = vmatpush1.msra.mxu0 %v1860
  %2018 = vmatprep.subr.mxu0 0.0
  %2019 = vmatpush1.msra.mxu0 %v1863
  %2020 = vmatprep.subr.mxu0 0.0
  %2021 = vmatpush1.msra.mxu0 %v1866
  %2022 = vmatprep.subr.mxu0 0.0
  %2023 = vmatpush1.msra.mxu0 %v1869
  %2024 = vmatprep.subr.mxu0 0.0
  %2025 = vmatpush1.msra.mxu0 %v1872
  %2026 = vmatprep.subr.mxu0 0.0
  %2027 = vmatpush1.msra.mxu0 %v1875
  %2028 = vmatprep.subr.mxu0 0.0
  %2029 = vmatpush1.msra.mxu0 %v1878
  %2030 = vmatprep.subr.mxu0 0.0
  %2031 = vmatpush1.msra.mxu0 %v1881
  %2032 = vmatprep.subr.mxu0 0.0
  %2033 = vmatpush1.msra.mxu0 %v1884
  %2034 = vmatprep.subr.mxu0 0.0
  %2035 = vmatpush1.msra.mxu0 %v1887
  %2036 = vmatprep.subr.mxu0 0.0
  %2037 = vmatpush1.msra.mxu0 %v1890
  %2038 = vmatprep.subr.mxu0 0.0
  %2039 = vmatpush1.msra.mxu0 %v1893
  %2040 = vmatprep.subr.mxu0 0.0
  %2041 = vmatpush1.msra.mxu0 %v1896
  %2042 = vmatprep.subr.mxu0 0.0
  %2043 = vmatpush1.msra.mxu0 %v1899
  %2044 = vmatprep.subr.mxu0 0.0
  %2045 = vmatpush1.msra.mxu0 %v1902
  %2046 = vmatprep.subr.mxu0 0.0
  %2047 = vmatpush1.msra.mxu0 %v1905
  %2048 = vmatprep.subr.mxu0 0.0
  %2049 = vmatpush1.msra.mxu0 %v1908
  %2050 = vmatprep.subr.mxu0 0.0
  %2051 = vmatpush1.msra.mxu0 %v1911
  %2052 = vmatprep.subr.mxu0 0.0
  %2053 = vmatpush1.msra.mxu0 %v1914
  %2054 = vmatprep.subr.mxu0 0.0
  %2055 = vmatpush1.msra.mxu0 %v1917
  %2056 = vmatprep.mubr.f32.mxu0 %v1810
  %2057 = vmatmul.mubr.f32.gmra.mrb[0].mxu0 %v1809
  %v2058 = vpop.f32.mrb[0].mxu0
  %v2059 = vadd.f32 %v1920, %v2058
  %v2060 = vpop.f32.mrb[0].mxu0
  %2061 = vdwg.mxu0
  %v2062 = vadd.f32 %v1819, %v1988
  %v2063 = vxor.u32 %v2062, 2147483648
  %v2064 = vmul.f32 %v2063, 1.442695
  %v2065 = vpow.pop %v2064
  %v2066 = vadd.f32 %v2065, 1.0
  %v2067 = vrcp.pop %v2066
  %v2068 = vmul.f32 1.0, %v2067
  %v2069 = vadd.f32 %v1820, %v1990
  %v2070 = vxor.u32 %v2069, 2147483648
  %v2071 = vmul.f32 %v2070, 1.442695
  %v2072 = vpow.pop %v2071
  %v2073 = vadd.f32 %v2072, 1.0
  %v2074 = vrcp.pop %v2073
  %v2075 = vmul.f32 1.0, %v2074
  %v2076 = vmul.f32 %v2068, %v2059
  %v2077 = vadd.f32 %v1821, %v2076
  %v2078 = vtanh.pop %v2077
  %v2079 = vsub.f32 1.0, %v2075
  %v2080 = vmul.f32 %v2079, %v2078
  %v2081 = vmul.f32 %v2075, %v1811
  %v2082 = vadd.f32 %v2080, %v2081
  %s2083 = scalar_lea.vmem %s5, 32
  %2084 = vst [vmem:[%s2083] sm:$0xff] %v2082
  %v2085 = vmul.f32 %v2082, %v708
  %v2086 = vmul.f32 %v2082, %v709
  %v2087 = vadd.f32 %v2085, %v2086
  %s2088 = scalar_lea.vmem [#allocation2], 120
  %v2089 = vld [vmem:[%s2088] sm:$0xff]
  %v2090 = vld [vmem:[%s2088 + $0x8] sm:$0xff]
  %v2091 = vld [vmem:[%s2088 + $0x10] sm:$0xff]
  %v2092 = vld [vmem:[%s2] sm:$0xff]
  %v2093 = vld [vmem:[%s2 + $0x8] sm:$0xff]
  %v2094 = vld [vmem:[%s2 + $0x10] sm:$0xff]
  %v2095 = vadd.f32 %v2089, %v2092
  %v2096 = vadd.f32 %v2090, %v2093
  %v2097 = vadd.f32 %v2091, %v2094
  %v2098 = vld [vmem:[%s3] sm:$0xff]
  %v2099 = vld [vmem:[%s3 + $0x8] sm:$0xff]
  %v2100 = vld [vmem:[%s3 + $0x10] sm:$0xff]
  %v2101 = vld [vmem:[%s3 + $0x18] sm:$0xff]
  %v2102 = vld [vmem:[%s3 + $0x20] sm:$0xff]
  %v2103 = vld [vmem:[%s3 + $0x28] sm:$0xff]
  %v2104 = vld [vmem:[%s3 + $0x30] sm:$0xff]
  %v2105 = vld [vmem:[%s3 + $0x38] sm:$0xff]
  %v2106 = vld [vmem:[%s3 + $0x40] sm:$0xff]
  %v2107 = vld [vmem:[%s3 + $0x48] sm:$0xff]
  %v2108 = vld [vmem:[%s3 + $0x50] sm:$0xff]
  %v2109 = vld [vmem:[%s3 + $0x58] sm:$0xff]
  %v2110 = vld [vmem:[%s3 + $0x60] sm:$0xff]
  %v2111 = vld [vmem:[%s3 + $0x68] sm:$0xff]
  %v2112 = vld [vmem:[%s3 + $0x70] sm:$0xff]
  %v2113 = vld [vmem:[%s3 + $0x78] sm:$0xff]
  %v2114 = vld [vmem:[%s3 + $0x80] sm:$0xff]
  %v2115 = vld [vmem:[%s3 + $0x88] sm:$0xff]
  %v2116 = vld [vmem:[%s3 + $0x90] sm:$0xff]
  %v2117 = vld [vmem:[%s3 + $0x98] sm:$0xff]
  %v2118 = vld [vmem:[%s3 + $0xa0] sm:$0xff]
  %v2119 = vld [vmem:[%s3 + $0xa8] sm:$0xff]
  %v2120 = vld [vmem:[%s3 + $0xb0] sm:$0xff]
  %v2121 = vld [vmem:[%s3 + $0xb8] sm:$0xff]
  %v2122 = vld [vmem:[%s3 + $0xc0] sm:$0xff]
  %v2123 = vld [vmem:[%s3 + $0xc8] sm:$0xff]
  %v2124 = vld [vmem:[%s3 + $0xd0] sm:$0xff]
  %v2125 = vld [vmem:[%s3 + $0xd8] sm:$0xff]
  %v2126 = vld [vmem:[%s3 + $0xe0] sm:$0xff]
  %v2127 = vld [vmem:[%s3 + $0xe8] sm:$0xff]
  %v2128 = vld [vmem:[%s3 + $0xf0] sm:$0xff]
  %v2129 = vld [vmem:[%s3 + $0xf8] sm:$0xff]
  %v2130 = vld [vmem:[%s3 + $0x100] sm:$0xff]
  %v2131 = vld [vmem:[%s3 + $0x108] sm:$0xff]
  %v2132 = vld [vmem:[%s3 + $0x110] sm:$0xff]
  %v2133 = vld [vmem:[%s3 + $0x118] sm:$0xff]
  %v2134 = vld [vmem:[%s3 + $0x120] sm:$0xff]
  %v2135 = vld [vmem:[%s3 + $0x128] sm:$0xff]
  %v2136 = vld [vmem:[%s3 + $0x130] sm:$0xff]
  %v2137 = vld [vmem:[%s3 + $0x138] sm:$0xff]
  %v2138 = vld [vmem:[%s3 + $0x140] sm:$0xff]
  %v2139 = vld [vmem:[%s3 + $0x148] sm:$0xff]
  %v2140 = vld [vmem:[%s3 + $0x150] sm:$0xff]
  %v2141 = vld [vmem:[%s3 + $0x158] sm:$0xff]
  %v2142 = vld [vmem:[%s3 + $0x160] sm:$0xff]
  %v2143 = vld [vmem:[%s3 + $0x168] sm:$0xff]
  %v2144 = vld [vmem:[%s3 + $0x170] sm:$0xff]
  %v2145 = vld [vmem:[%s3 + $0x178] sm:$0xff]
  %v2146 = vld [vmem:[%s3 + $0x180] sm:$0xff]
  %v2147 = vld [vmem:[%s3 + $0x188] sm:$0xff]
  %v2148 = vld [vmem:[%s3 + $0x190] sm:$0xff]
  %v2149 = vld [vmem:[%s3 + $0x198] sm:$0xff]
  %v2150 = vld [vmem:[%s3 + $0x1a0] sm:$0xff]
  %v2151 = vld [vmem:[%s3 + $0x1a8] sm:$0xff]
  %v2152 = vld [vmem:[%s3 + $0x1b0] sm:$0xff]
  %v2153 = vld [vmem:[%s3 + $0x1b8] sm:$0xff]
  %v2154 = vld [vmem:[%s3 + $0x1c0] sm:$0xff]
  %v2155 = vld [vmem:[%s3 + $0x1c8] sm:$0xff]
  %v2156 = vld [vmem:[%s3 + $0x1d0] sm:$0xff]
  %v2157 = vld [vmem:[%s3 + $0x1d8] sm:$0xff]
  %v2158 = vld [vmem:[%s3 + $0x1e0] sm:$0xff]
  %v2159 = vld [vmem:[%s3 + $0x1e8] sm:$0xff]
  %v2160 = vld [vmem:[%s3 + $0x1f0] sm:$0xff]
  %v2161 = vld [vmem:[%s3 + $0x1f8] sm:$0xff]
  %v2162 = vld [vmem:[%s3 + $0x200] sm:$0xff]
  %v2163 = vld [vmem:[%s3 + $0x208] sm:$0xff]
  %v2164 = vld [vmem:[%s3 + $0x210] sm:$0xff]
  %v2165 = vld [vmem:[%s3 + $0x218] sm:$0xff]
  %v2166 = vld [vmem:[%s3 + $0x220] sm:$0xff]
  %v2167 = vld [vmem:[%s3 + $0x228] sm:$0xff]
  %v2168 = vld [vmem:[%s3 + $0x230] sm:$0xff]
  %v2169 = vld [vmem:[%s3 + $0x238] sm:$0xff]
  %v2170 = vld [vmem:[%s3 + $0x240] sm:$0xff]
  %v2171 = vld [vmem:[%s3 + $0x248] sm:$0xff]
  %v2172 = vld [vmem:[%s3 + $0x250] sm:$0xff]
  %v2173 = vld [vmem:[%s3 + $0x258] sm:$0xff]
  %v2174 = vld [vmem:[%s3 + $0x260] sm:$0xff]
  %v2175 = vld [vmem:[%s3 + $0x268] sm:$0xff]
  %v2176 = vld [vmem:[%s3 + $0x270] sm:$0xff]
  %v2177 = vld [vmem:[%s3 + $0x278] sm:$0xff]
  %v2178 = vld [vmem:[%s3 + $0x280] sm:$0xff]
  %v2179 = vld [vmem:[%s3 + $0x288] sm:$0xff]
  %v2180 = vld [vmem:[%s3 + $0x290] sm:$0xff]
  %v2181 = vld [vmem:[%s3 + $0x298] sm:$0xff]
  %v2182 = vld [vmem:[%s3 + $0x2a0] sm:$0xff]
  %v2183 = vld [vmem:[%s3 + $0x2a8] sm:$0xff]
  %v2184 = vld [vmem:[%s3 + $0x2b0] sm:$0xff]
  %v2185 = vld [vmem:[%s3 + $0x2b8] sm:$0xff]
  %v2186 = vld [vmem:[%s3 + $0x2c0] sm:$0xff]
  %v2187 = vld [vmem:[%s3 + $0x2c8] sm:$0xff]
  %v2188 = vld [vmem:[%s3 + $0x2d0] sm:$0xff]
  %v2189 = vld [vmem:[%s3 + $0x2d8] sm:$0xff]
  %v2190 = vld [vmem:[%s3 + $0x2e0] sm:$0xff]
  %v2191 = vld [vmem:[%s3 + $0x2e8] sm:$0xff]
  %v2192 = vld [vmem:[%s3 + $0x2f0] sm:$0xff]
  %v2193 = vld [vmem:[%s3 + $0x2f8] sm:$0xff]
  %v2194 = vld [vmem:[%s4] sm:$0xff]
  %v2195 = vld [vmem:[%s4 + $0x8] sm:$0xff]
  %v2196 = vld [vmem:[%s4 + $0x10] sm:$0xff]
  %2197 = vmatprep.subr.mxu0 %v2099
  %2198 = vmatpush1.msra.mxu0 %v2098
  %2199 = vmatprep.subr.mxu0 %v2102
  %2200 = vmatpush1.msra.mxu0 %v2101
  %2201 = vmatprep.subr.mxu0 %v2105
  %2202 = vmatpush1.msra.mxu0 %v2104
  %2203 = vmatprep.subr.mxu0 %v2108
  %2204 = vmatpush1.msra.mxu0 %v2107
  %2205 = vmatprep.subr.mxu0 %v2111
  %2206 = vmatpush1.msra.mxu0 %v2110
  %2207 = vmatprep.subr.mxu0 %v2114
  %2208 = vmatpush1.msra.mxu0 %v2113
  %2209 = vmatprep.subr.mxu0 %v2117
  %2210 = vmatpush1.msra.mxu0 %v2116
  %2211 = vmatprep.subr.mxu0 %v2120
  %2212 = vmatpush1.msra.mxu0 %v2119
  %2213 = vmatprep.subr.mxu0 %v2123
  %2214 = vmatpush1.msra.mxu0 %v2122
  %2215 = vmatprep.subr.mxu0 %v2126
  %2216 = vmatpush1.msra.mxu0 %v2125
  %2217 = vmatprep.subr.mxu0 %v2129
  %2218 = vmatpush1.msra.mxu0 %v2128
  %2219 = vmatprep.subr.mxu0 %v2132
  %2220 = vmatpush1.msra.mxu0 %v2131
  %2221 = vmatprep.subr.mxu0 %v2135
  %2222 = vmatpush1.msra.mxu0 %v2134
  %2223 = vmatprep.subr.mxu0 %v2138
  %2224 = vmatpush1.msra.mxu0 %v2137
  %2225 = vmatprep.subr.mxu0 %v2141
  %2226 = vmatpush1.msra.mxu0 %v2140
  %2227 = vmatprep.subr.mxu0 %v2144
  %2228 = vmatpush1.msra.mxu0 %v2143
  %2229 = vmatprep.subr.mxu0 %v2147
  %2230 = vmatpush1.msra.mxu0 %v2146
  %2231 = vmatprep.subr.mxu0 %v2150
  %2232 = vmatpush1.msra.mxu0 %v2149
  %2233 = vmatprep.subr.mxu0 %v2153
  %2234 = vmatpush1.msra.mxu0 %v2152
  %2235 = vmatprep.subr.mxu0 %v2156
  %2236 = vmatpush1.msra.mxu0 %v2155
  %2237 = vmatprep.subr.mxu0 %v2159
  %2238 = vmatpush1.msra.mxu0 %v2158
  %2239 = vmatprep.subr.mxu0 %v2162
  %2240 = vmatpush1.msra.mxu0 %v2161
  %2241 = vmatprep.subr.mxu0 %v2165
  %2242 = vmatpush1.msra.mxu0 %v2164
  %2243 = vmatprep.subr.mxu0 %v2168
  %2244 = vmatpush1.msra.mxu0 %v2167
  %2245 = vmatprep.subr.mxu0 %v2171
  %2246 = vmatpush1.msra.mxu0 %v2170
  %2247 = vmatprep.subr.mxu0 %v2174
  %2248 = vmatpush1.msra.mxu0 %v2173
  %2249 = vmatprep.subr.mxu0 %v2177
  %2250 = vmatpush1.msra.mxu0 %v2176
  %2251 = vmatprep.subr.mxu0 %v2180
  %2252 = vmatpush1.msra.mxu0 %v2179
  %2253 = vmatprep.subr.mxu0 %v2183
  %2254 = vmatpush1.msra.mxu0 %v2182
  %2255 = vmatprep.subr.mxu0 %v2186
  %2256 = vmatpush1.msra.mxu0 %v2185
  %2257 = vmatprep.subr.mxu0 %v2189
  %2258 = vmatpush1.msra.mxu0 %v2188
  %2259 = vmatprep.subr.mxu0 %v2192
  %2260 = vmatpush1.msra.mxu0 %v2191
  %2261 = vmatprep.mubr.f32.mxu0 %v2086
  %2262 = vmatmul.mubr.f32.gmra.mrb[0].mxu0 %v2085
  %v2263 = vpop.f32.mrb[0].mxu0
  %v2264 = vadd.f32 %v2194, %v2263
  %v2265 = vpop.f32.mrb[0].mxu0
  %v2266 = vadd.f32 %v2195, %v2265
  %2267 = vdwg.mxu0
  %2268 = vmatprep.subr.mxu0 0.0
  %2269 = vmatpush1.msra.mxu0 %v2100
  %2270 = vmatprep.subr.mxu0 0.0
  %2271 = vmatpush1.msra.mxu0 %v2103
  %2272 = vmatprep.subr.mxu0 0.0
  %2273 = vmatpush1.msra.mxu0 %v2106
  %2274 = vmatprep.subr.mxu0 0.0
  %2275 = vmatpush1.msra.mxu0 %v2109
  %2276 = vmatprep.subr.mxu0 0.0
  %2277 = vmatpush1.msra.mxu0 %v2112
  %2278 = vmatprep.subr.mxu0 0.0
  %2279 = vmatpush1.msra.mxu0 %v2115
  %2280 = vmatprep.subr.mxu0 0.0
  %2281 = vmatpush1.msra.mxu0 %v2118
  %2282 = vmatprep.subr.mxu0 0.0
  %2283 = vmatpush1.msra.mxu0 %v2121
  %2284 = vmatprep.subr.mxu0 0.0
  %2285 = vmatpush1.msra.mxu0 %v2124
  %2286 = vmatprep.subr.mxu0 0.0
  %2287 = vmatpush1.msra.mxu0 %v2127
  %2288 = vmatprep.subr.mxu0 0.0
  %2289 = vmatpush1.msra.mxu0 %v2130
  %2290 = vmatprep.subr.mxu0 0.0
  %2291 = vmatpush1.msra.mxu0 %v2133
  %2292 = vmatprep.subr.mxu0 0.0
  %2293 = vmatpush1.msra.mxu0 %v2136
  %2294 = vmatprep.subr.mxu0 0.0
  %2295 = vmatpush1.msra.mxu0 %v2139
  %2296 = vmatprep.subr.mxu0 0.0
  %2297 = vmatpush1.msra.mxu0 %v2142
  %2298 = vmatprep.subr.mxu0 0.0
  %2299 = vmatpush1.msra.mxu0 %v2145
  %2300 = vmatprep.subr.mxu0 0.0
  %2301 = vmatpush1.msra.mxu0 %v2148
  %2302 = vmatprep.subr.mxu0 0.0
  %2303 = vmatpush1.msra.mxu0 %v2151
  %2304 = vmatprep.subr.mxu0 0.0
  %2305 = vmatpush1.msra.mxu0 %v2154
  %2306 = vmatprep.subr.mxu0 0.0
  %2307 = vmatpush1.msra.mxu0 %v2157
  %2308 = vmatprep.subr.mxu0 0.0
  %2309 = vmatpush1.msra.mxu0 %v2160
  %2310 = vmatprep.subr.mxu0 0.0
  %2311 = vmatpush1.msra.mxu0 %v2163
  %2312 = vmatprep.subr.mxu0 0.0
  %2313 = vmatpush1.msra.mxu0 %v2166
  %2314 = vmatprep.subr.mxu0 0.0
  %2315 = vmatpush1.msra.mxu0 %v2169
  %2316 = vmatprep.subr.mxu0 0.0
  %2317 = vmatpush1.msra.mxu0 %v2172
  %2318 = vmatprep.subr.mxu0 0.0
  %2319 = vmatpush1.msra.mxu0 %v2175
  %2320 = vmatprep.subr.mxu0 0.0
  %2321 = vmatpush1.msra.mxu0 %v2178
  %2322 = vmatprep.subr.mxu0 0.0
  %2323 = vmatpush1.msra.mxu0 %v2181
  %2324 = vmatprep.subr.mxu0 0.0
  %2325 = vmatpush1.msra.mxu0 %v2184
  %2326 = vmatprep.subr.mxu0 0.0
  %2327 = vmatpush1.msra.mxu0 %v2187
  %2328 = vmatprep.subr.mxu0 0.0
  %2329 = vmatpush1.msra.mxu0 %v2190
  %2330 = vmatprep.subr.mxu0 0.0
  %2331 = vmatpush1.msra.mxu0 %v2193
  %2332 = vmatprep.mubr.f32.mxu0 %v2086
  %2333 = vmatmul.mubr.f32.gmra.mrb[0].mxu0 %v2085
  %v2334 = vpop.f32.mrb[0].mxu0
  %v2335 = vadd.f32 %v2196, %v2334
  %v2336 = vpop.f32.mrb[0].mxu0
  %2337 = vdwg.mxu0
  %v2338 = vadd.f32 %v2095, %v2264
  %v2339 = vxor.u32 %v2338, 2147483648
  %v2340 = vmul.f32 %v2339, 1.442695
  %v2341 = vpow.pop %v2340
  %v2342 = vadd.f32 %v2341, 1.0
  %v2343 = vrcp.pop %v2342
  %v2344 = vmul.f32 1.0, %v2343
  %v2345 = vadd.f32 %v2096, %v2266
  %v2346 = vxor.u32 %v2345, 2147483648
  %v2347 = vmul.f32 %v2346, 1.442695
  %v2348 = vpow.pop %v2347
  %v2349 = vadd.f32 %v2348, 1.0
  %v2350 = vrcp.pop %v2349
  %v2351 = vmul.f32 1.0, %v2350
  %v2352 = vmul.f32 %v2344, %v2335
  %v2353 = vadd.f32 %v2097, %v2352
  %v2354 = vtanh.pop %v2353
  %v2355 = vsub.f32 1.0, %v2351
  %v2356 = vmul.f32 %v2355, %v2354
  %v2357 = vmul.f32 %v2351, %v2087
  %v2358 = vadd.f32 %v2356, %v2357
  %s2359 = scalar_lea.vmem %s5, 40
  %2360 = vst [vmem:[%s2359] sm:$0xff] %v2358
  %v2361 = vmul.f32 %v2358, %v708
  %v2362 = vmul.f32 %v2358, %v709
  %v2363 = vadd.f32 %v2361, %v2362
  %s2364 = scalar_lea.vmem [#allocation2], 144
  %v2365 = vld [vmem:[%s2364] sm:$0xff]
  %v2366 = vld [vmem:[%s2364 + $0x8] sm:$0xff]
  %v2367 = vld [vmem:[%s2364 + $0x10] sm:$0xff]
  %v2368 = vld [vmem:[%s2] sm:$0xff]
  %v2369 = vld [vmem:[%s2 + $0x8] sm:$0xff]
  %v2370 = vld [vmem:[%s2 + $0x10] sm:$0xff]
  %v2371 = vadd.f32 %v2365, %v2368
  %v2372 = vadd.f32 %v2366, %v2369
  %v2373 = vadd.f32 %v2367, %v2370
  %v2374 = vld [vmem:[%s3] sm:$0xff]
  %v2375 = vld [vmem:[%s3 + $0x8] sm:$0xff]
  %v2376 = vld [vmem:[%s3 + $0x10] sm:$0xff]
  %v2377 = vld [vmem:[%s3 + $0x18] sm:$0xff]
  %v2378 = vld [vmem:[%s3 + $0x20] sm:$0xff]
  %v2379 = vld [vmem:[%s3 + $0x28] sm:$0xff]
  %v2380 = vld [vmem:[%s3 + $0x30] sm:$0xff]
  %v2381 = vld [vmem:[%s3 + $0x38] sm:$0xff]
  %v2382 = vld [vmem:[%s3 + $0x40] sm:$0xff]
  %v2383 = vld [vmem:[%s3 + $0x48] sm:$0xff]
  %v2384 = vld [vmem:[%s3 + $0x50] sm:$0xff]
  %v2385 = vld [vmem:[%s3 + $0x58] sm:$0xff]
  %v2386 = vld [vmem:[%s3 + $0x60] sm:$0xff]
  %v2387 = vld [vmem:[%s3 + $0x68] sm:$0xff]
  %v2388 = vld [vmem:[%s3 + $0x70] sm:$0xff]
  %v2389 = vld [vmem:[%s3 + $0x78] sm:$0xff]
  %v2390 = vld [vmem:[%s3 + $0x80] sm:$0xff]
  %v2391 = vld [vmem:[%s3 + $0x88] sm:$0xff]
  %v2392 = vld [vmem:[%s3 + $0x90] sm:$0xff]
  %v2393 = vld [vmem:[%s3 + $0x98] sm:$0xff]
  %v2394 = vld [vmem:[%s3 + $0xa0] sm:$0xff]
  %v2395 = vld [vmem:[%s3 + $0xa8] sm:$0xff]
  %v2396 = vld [vmem:[%s3 + $0xb0] sm:$0xff]
  %v2397 = vld [vmem:[%s3 + $0xb8] sm:$0xff]
  %v2398 = vld [vmem:[%s3 + $0xc0] sm:$0xff]
  %v2399 = vld [vmem:[%s3 + $0xc8] sm:$0xff]
  %v2400 = vld [vmem:[%s3 + $0xd0] sm:$0xff]
  %v2401 = vld [vmem:[%s3 + $0xd8] sm:$0xff]
  %v2402 = vld [vmem:[%s3 + $0xe0] sm:$0xff]
  %v2403 = vld [vmem:[%s3 + $0xe8] sm:$0xff]
  %v2404 = vld [vmem:[%s3 + $0xf0] sm:$0xff]
  %v2405 = vld [vmem:[%s3 + $0xf8] sm:$0xff]
  %v2406 = vld [vmem:[%s3 + $0x100] sm:$0xff]
  %v2407 = vld [vmem:[%s3 + $0x108] sm:$0xff]
  %v2408 = vld [vmem:[%s3 + $0x110] sm:$0xff]
  %v2409 = vld [vmem:[%s3 + $0x118] sm:$0xff]
  %v2410 = vld [vmem:[%s3 + $0x120] sm:$0xff]
  %v2411 = vld [vmem:[%s3 + $0x128] sm:$0xff]
  %v2412 = vld [vmem:[%s3 + $0x130] sm:$0xff]
  %v2413 = vld [vmem:[%s3 + $0x138] sm:$0xff]
  %v2414 = vld [vmem:[%s3 + $0x140] sm:$0xff]
  %v2415 = vld [vmem:[%s3 + $0x148] sm:$0xff]
  %v2416 = vld [vmem:[%s3 + $0x150] sm:$0xff]
  %v2417 = vld [vmem:[%s3 + $0x158] sm:$0xff]
  %v2418 = vld [vmem:[%s3 + $0x160] sm:$0xff]
  %v2419 = vld [vmem:[%s3 + $0x168] sm:$0xff]
  %v2420 = vld [vmem:[%s3 + $0x170] sm:$0xff]
  %v2421 = vld [vmem:[%s3 + $0x178] sm:$0xff]
  %v2422 = vld [vmem:[%s3 + $0x180] sm:$0xff]
  %v2423 = vld [vmem:[%s3 + $0x188] sm:$0xff]
  %v2424 = vld [vmem:[%s3 + $0x190] sm:$0xff]
  %v2425 = vld [vmem:[%s3 + $0x198] sm:$0xff]
  %v2426 = vld [vmem:[%s3 + $0x1a0] sm:$0xff]
  %v2427 = vld [vmem:[%s3 + $0x1a8] sm:$0xff]
  %v2428 = vld [vmem:[%s3 + $0x1b0] sm:$0xff]
  %v2429 = vld [vmem:[%s3 + $0x1b8] sm:$0xff]
  %v2430 = vld [vmem:[%s3 + $0x1c0] sm:$0xff]
  %v2431 = vld [vmem:[%s3 + $0x1c8] sm:$0xff]
  %v2432 = vld [vmem:[%s3 + $0x1d0] sm:$0xff]
  %v2433 = vld [vmem:[%s3 + $0x1d8] sm:$0xff]
  %v2434 = vld [vmem:[%s3 + $0x1e0] sm:$0xff]
  %v2435 = vld [vmem:[%s3 + $0x1e8] sm:$0xff]
  %v2436 = vld [vmem:[%s3 + $0x1f0] sm:$0xff]
  %v2437 = vld [vmem:[%s3 + $0x1f8] sm:$0xff]
  %v2438 = vld [vmem:[%s3 + $0x200] sm:$0xff]
  %v2439 = vld [vmem:[%s3 + $0x208] sm:$0xff]
  %v2440 = vld [vmem:[%s3 + $0x210] sm:$0xff]
  %v2441 = vld [vmem:[%s3 + $0x218] sm:$0xff]
  %v2442 = vld [vmem:[%s3 + $0x220] sm:$0xff]
  %v2443 = vld [vmem:[%s3 + $0x228] sm:$0xff]
  %v2444 = vld [vmem:[%s3 + $0x230] sm:$0xff]
  %v2445 = vld [vmem:[%s3 + $0x238] sm:$0xff]
  %v2446 = vld [vmem:[%s3 + $0x240] sm:$0xff]
  %v2447 = vld [vmem:[%s3 + $0x248] sm:$0xff]
  %v2448 = vld [vmem:[%s3 + $0x250] sm:$0xff]
  %v2449 = vld [vmem:[%s3 + $0x258] sm:$0xff]
  %v2450 = vld [vmem:[%s3 + $0x260] sm:$0xff]
  %v2451 = vld [vmem:[%s3 + $0x268] sm:$0xff]
  %v2452 = vld [vmem:[%s3 + $0x270] sm:$0xff]
  %v2453 = vld [vmem:[%s3 + $0x278] sm:$0xff]
  %v2454 = vld [vmem:[%s3 + $0x280] sm:$0xff]
  %v2455 = vld [vmem:[%s3 + $0x288] sm:$0xff]
  %v2456 = vld [vmem:[%s3 + $0x290] sm:$0xff]
  %v2457 = vld [vmem:[%s3 + $0x298] sm:$0xff]
  %v2458 = vld [vmem:[%s3 + $0x2a0] sm:$0xff]
  %v2459 = vld [vmem:[%s3 + $0x2a8] sm:$0xff]
  %v2460 = vld [vmem:[%s3 + $0x2b0] sm:$0xff]
  %v2461 = vld [vmem:[%s3 + $0x2b8] sm:$0xff]
  %v2462 = vld [vmem:[%s3 + $0x2c0] sm:$0xff]
  %v2463 = vld [vmem:[%s3 + $0x2c8] sm:$0xff]
  %v2464 = vld [vmem:[%s3 + $0x2d0] sm:$0xff]
  %v2465 = vld [vmem:[%s3 + $0x2d8] sm:$0xff]
  %v2466 = vld [vmem:[%s3 + $0x2e0] sm:$0xff]
  %v2467 = vld [vmem:[%s3 + $0x2e8] sm:$0xff]
  %v2468 = vld [vmem:[%s3 + $0x2f0] sm:$0xff]
  %v2469 = vld [vmem:[%s3 + $0x2f8] sm:$0xff]
  %v2470 = vld [vmem:[%s4] sm:$0xff]
  %v2471 = vld [vmem:[%s4 + $0x8] sm:$0xff]
  %v2472 = vld [vmem:[%s4 + $0x10] sm:$0xff]
  %2473 = vmatprep.subr.mxu0 %v2375
  %2474 = vmatpush1.msra.mxu0 %v2374
  %2475 = vmatprep.subr.mxu0 %v2378
  %2476 = vmatpush1.msra.mxu0 %v2377
  %2477 = vmatprep.subr.mxu0 %v2381
  %2478 = vmatpush1.msra.mxu0 %v2380
  %2479 = vmatprep.subr.mxu0 %v2384
  %2480 = vmatpush1.msra.mxu0 %v2383
  %2481 = vmatprep.subr.mxu0 %v2387
  %2482 = vmatpush1.msra.mxu0 %v2386
  %2483 = vmatprep.subr.mxu0 %v2390
  %2484 = vmatpush1.msra.mxu0 %v2389
  %2485 = vmatprep.subr.mxu0 %v2393
  %2486 = vmatpush1.msra.mxu0 %v2392
  %2487 = vmatprep.subr.mxu0 %v2396
  %2488 = vmatpush1.msra.mxu0 %v2395
  %2489 = vmatprep.subr.mxu0 %v2399
  %2490 = vmatpush1.msra.mxu0 %v2398
  %2491 = vmatprep.subr.mxu0 %v2402
  %2492 = vmatpush1.msra.mxu0 %v2401
  %2493 = vmatprep.subr.mxu0 %v2405
  %2494 = vmatpush1.msra.mxu0 %v2404
  %2495 = vmatprep.subr.mxu0 %v2408
  %2496 = vmatpush1.msra.mxu0 %v2407
  %2497 = vmatprep.subr.mxu0 %v2411
  %2498 = vmatpush1.msra.mxu0 %v2410
  %2499 = vmatprep.subr.mxu0 %v2414
  %2500 = vmatpush1.msra.mxu0 %v2413
  %2501 = vmatprep.subr.mxu0 %v2417
  %2502 = vmatpush1.msra.mxu0 %v2416
  %2503 = vmatprep.subr.mxu0 %v2420
  %2504 = vmatpush1.msra.mxu0 %v2419
  %2505 = vmatprep.subr.mxu0 %v2423
  %2506 = vmatpush1.msra.mxu0 %v2422
  %2507 = vmatprep.subr.mxu0 %v2426
  %2508 = vmatpush1.msra.mxu0 %v2425
  %2509 = vmatprep.subr.mxu0 %v2429
  %2510 = vmatpush1.msra.mxu0 %v2428
  %2511 = vmatprep.subr.mxu0 %v2432
  %2512 = vmatpush1.msra.mxu0 %v2431
  %2513 = vmatprep.subr.mxu0 %v2435
  %2514 = vmatpush1.msra.mxu0 %v2434
  %2515 = vmatprep.subr.mxu0 %v2438
  %2516 = vmatpush1.msra.mxu0 %v2437
  %2517 = vmatprep.subr.mxu0 %v2441
  %2518 = vmatpush1.msra.mxu0 %v2440
  %2519 = vmatprep.subr.mxu0 %v2444
  %2520 = vmatpush1.msra.mxu0 %v2443
  %2521 = vmatprep.subr.mxu0 %v2447
  %2522 = vmatpush1.msra.mxu0 %v2446
  %2523 = vmatprep.subr.mxu0 %v2450
  %2524 = vmatpush1.msra.mxu0 %v2449
  %2525 = vmatprep.subr.mxu0 %v2453
  %2526 = vmatpush1.msra.mxu0 %v2452
  %2527 = vmatprep.subr.mxu0 %v2456
  %2528 = vmatpush1.msra.mxu0 %v2455
  %2529 = vmatprep.subr.mxu0 %v2459
  %2530 = vmatpush1.msra.mxu0 %v2458
  %2531 = vmatprep.subr.mxu0 %v2462
  %2532 = vmatpush1.msra.mxu0 %v2461
  %2533 = vmatprep.subr.mxu0 %v2465
  %2534 = vmatpush1.msra.mxu0 %v2464
  %2535 = vmatprep.subr.mxu0 %v2468
  %2536 = vmatpush1.msra.mxu0 %v2467
  %2537 = vmatprep.mubr.f32.mxu0 %v2362
  %2538 = vmatmul.mubr.f32.gmra.mrb[0].mxu0 %v2361
  %v2539 = vpop.f32.mrb[0].mxu0
  %v2540 = vadd.f32 %v2470, %v2539
  %v2541 = vpop.f32.mrb[0].mxu0
  %v2542 = vadd.f32 %v2471, %v2541
  %2543 = vdwg.mxu0
  %2544 = vmatprep.subr.mxu0 0.0
  %2545 = vmatpush1.msra.mxu0 %v2376
  %2546 = vmatprep.subr.mxu0 0.0
  %2547 = vmatpush1.msra.mxu0 %v2379
  %2548 = vmatprep.subr.mxu0 0.0
  %2549 = vmatpush1.msra.mxu0 %v2382
  %2550 = vmatprep.subr.mxu0 0.0
  %2551 = vmatpush1.msra.mxu0 %v2385
  %2552 = vmatprep.subr.mxu0 0.0
  %2553 = vmatpush1.msra.mxu0 %v2388
  %2554 = vmatprep.subr.mxu0 0.0
  %2555 = vmatpush1.msra.mxu0 %v2391
  %2556 = vmatprep.subr.mxu0 0.0
  %2557 = vmatpush1.msra.mxu0 %v2394
  %2558 = vmatprep.subr.mxu0 0.0
  %2559 = vmatpush1.msra.mxu0 %v2397
  %2560 = vmatprep.subr.mxu0 0.0
  %2561 = vmatpush1.msra.mxu0 %v2400
  %2562 = vmatprep.subr.mxu0 0.0
  %2563 = vmatpush1.msra.mxu0 %v2403
  %2564 = vmatprep.subr.mxu0 0.0
  %2565 = vmatpush1.msra.mxu0 %v2406
  %2566 = vmatprep.subr.mxu0 0.0
  %2567 = vmatpush1.msra.mxu0 %v2409
  %2568 = vmatprep.subr.mxu0 0.0
  %2569 = vmatpush1.msra.mxu0 %v2412
  %2570 = vmatprep.subr.mxu0 0.0
  %2571 = vmatpush1.msra.mxu0 %v2415
  %2572 = vmatprep.subr.mxu0 0.0
  %2573 = vmatpush1.msra.mxu0 %v2418
  %2574 = vmatprep.subr.mxu0 0.0
  %2575 = vmatpush1.msra.mxu0 %v2421
  %2576 = vmatprep.subr.mxu0 0.0
  %2577 = vmatpush1.msra.mxu0 %v2424
  %2578 = vmatprep.subr.mxu0 0.0
  %2579 = vmatpush1.msra.mxu0 %v2427
  %2580 = vmatprep.subr.mxu0 0.0
  %2581 = vmatpush1.msra.mxu0 %v2430
  %2582 = vmatprep.subr.mxu0 0.0
  %2583 = vmatpush1.msra.mxu0 %v2433
  %2584 = vmatprep.subr.mxu0 0.0
  %2585 = vmatpush1.msra.mxu0 %v2436
  %2586 = vmatprep.subr.mxu0 0.0
  %2587 = vmatpush1.msra.mxu0 %v2439
  %2588 = vmatprep.subr.mxu0 0.0
  %2589 = vmatpush1.msra.mxu0 %v2442
  %2590 = vmatprep.subr.mxu0 0.0
  %2591 = vmatpush1.msra.mxu0 %v2445
  %2592 = vmatprep.subr.mxu0 0.0
  %2593 = vmatpush1.msra.mxu0 %v2448
  %2594 = vmatprep.subr.mxu0 0.0
  %2595 = vmatpush1.msra.mxu0 %v2451
  %2596 = vmatprep.subr.mxu0 0.0
  %2597 = vmatpush1.msra.mxu0 %v2454
  %2598 = vmatprep.subr.mxu0 0.0
  %2599 = vmatpush1.msra.mxu0 %v2457
  %2600 = vmatprep.subr.mxu0 0.0
  %2601 = vmatpush1.msra.mxu0 %v2460
  %2602 = vmatprep.subr.mxu0 0.0
  %2603 = vmatpush1.msra.mxu0 %v2463
  %2604 = vmatprep.subr.mxu0 0.0
  %2605 = vmatpush1.msra.mxu0 %v2466
  %2606 = vmatprep.subr.mxu0 0.0
  %2607 = vmatpush1.msra.mxu0 %v2469
  %2608 = vmatprep.mubr.f32.mxu0 %v2362
  %2609 = vmatmul.mubr.f32.gmra.mrb[0].mxu0 %v2361
  %v2610 = vpop.f32.mrb[0].mxu0
  %v2611 = vadd.f32 %v2472, %v2610
  %v2612 = vpop.f32.mrb[0].mxu0
  %2613 = vdwg.mxu0
  %v2614 = vadd.f32 %v2371, %v2540
  %v2615 = vxor.u32 %v2614, 2147483648
  %v2616 = vmul.f32 %v2615, 1.442695
  %v2617 = vpow.pop %v2616
  %v2618 = vadd.f32 %v2617, 1.0
  %v2619 = vrcp.pop %v2618
  %v2620 = vmul.f32 1.0, %v2619
  %v2621 = vadd.f32 %v2372, %v2542
  %v2622 = vxor.u32 %v2621, 2147483648
  %v2623 = vmul.f32 %v2622, 1.442695
  %v2624 = vpow.pop %v2623
  %v2625 = vadd.f32 %v2624, 1.0
  %v2626 = vrcp.pop %v2625
  %v2627 = vmul.f32 1.0, %v2626
  %v2628 = vmul.f32 %v2620, %v2611
  %v2629 = vadd.f32 %v2373, %v2628
  %v2630 = vtanh.pop %v2629
  %v2631 = vsub.f32 1.0, %v2627
  %v2632 = vmul.f32 %v2631, %v2630
  %v2633 = vmul.f32 %v2627, %v2363
  %v2634 = vadd.f32 %v2632, %v2633
  %s2635 = scalar_lea.vmem %s5, 48
  %2636 = vst [vmem:[%s2635] sm:$0xff] %v2634
  %v2637 = vmul.f32 %v2634, %v708
  %v2638 = vmul.f32 %v2634, %v709
  %v2639 = vadd.f32 %v2637, %v2638
  %s2640 = scalar_lea.vmem [#allocation2], 168
  %v2641 = vld [vmem:[%s2640] sm:$0xff]
  %v2642 = vld [vmem:[%s2640 + $0x8] sm:$0xff]
  %v2643 = vld [vmem:[%s2640 + $0x10] sm:$0xff]
  %v2644 = vld [vmem:[%s2] sm:$0xff]
  %v2645 = vld [vmem:[%s2 + $0x8] sm:$0xff]
  %v2646 = vld [vmem:[%s2 + $0x10] sm:$0xff]
  %v2647 = vadd.f32 %v2641, %v2644
  %v2648 = vadd.f32 %v2642, %v2645
  %v2649 = vadd.f32 %v2643, %v2646
  %v2650 = vld [vmem:[%s3] sm:$0xff]
  %v2651 = vld [vmem:[%s3 + $0x8] sm:$0xff]
  %v2652 = vld [vmem:[%s3 + $0x10] sm:$0xff]
  %v2653 = vld [vmem:[%s3 + $0x18] sm:$0xff]
  %v2654 = vld [vmem:[%s3 + $0x20] sm:$0xff]
  %v2655 = vld [vmem:[%s3 + $0x28] sm:$0xff]
  %v2656 = vld [vmem:[%s3 + $0x30] sm:$0xff]
  %v2657 = vld [vmem:[%s3 + $0x38] sm:$0xff]
  %v2658 = vld [vmem:[%s3 + $0x40] sm:$0xff]
  %v2659 = vld [vmem:[%s3 + $0x48] sm:$0xff]
  %v2660 = vld [vmem:[%s3 + $0x50] sm:$0xff]
  %v2661 = vld [vmem:[%s3 + $0x58] sm:$0xff]
  %v2662 = vld [vmem:[%s3 + $0x60] sm:$0xff]
  %v2663 = vld [vmem:[%s3 + $0x68] sm:$0xff]
  %v2664 = vld [vmem:[%s3 + $0x70] sm:$0xff]
  %v2665 = vld [vmem:[%s3 + $0x78] sm:$0xff]
  %v2666 = vld [vmem:[%s3 + $0x80] sm:$0xff]
  %v2667 = vld [vmem:[%s3 + $0x88] sm:$0xff]
  %v2668 = vld [vmem:[%s3 + $0x90] sm:$0xff]
  %v2669 = vld [vmem:[%s3 + $0x98] sm:$0xff]
  %v2670 = vld [vmem:[%s3 + $0xa0] sm:$0xff]
  %v2671 = vld [vmem:[%s3 + $0xa8] sm:$0xff]
  %v2672 = vld [vmem:[%s3 + $0xb0] sm:$0xff]
  %v2673 = vld [vmem:[%s3 + $0xb8] sm:$0xff]
  %v2674 = vld [vmem:[%s3 + $0xc0] sm:$0xff]
  %v2675 = vld [vmem:[%s3 + $0xc8] sm:$0xff]
  %v2676 = vld [vmem:[%s3 + $0xd0] sm:$0xff]
  %v2677 = vld [vmem:[%s3 + $0xd8] sm:$0xff]
  %v2678 = vld [vmem:[%s3 + $0xe0] sm:$0xff]
  %v2679 = vld [vmem:[%s3 + $0xe8] sm:$0xff]
  %v2680 = vld [vmem:[%s3 + $0xf0] sm:$0xff]
  %v2681 = vld [vmem:[%s3 + $0xf8] sm:$0xff]
  %v2682 = vld [vmem:[%s3 + $0x100] sm:$0xff]
  %v2683 = vld [vmem:[%s3 + $0x108] sm:$0xff]
  %v2684 = vld [vmem:[%s3 + $0x110] sm:$0xff]
  %v2685 = vld [vmem:[%s3 + $0x118] sm:$0xff]
  %v2686 = vld [vmem:[%s3 + $0x120] sm:$0xff]
  %v2687 = vld [vmem:[%s3 + $0x128] sm:$0xff]
  %v2688 = vld [vmem:[%s3 + $0x130] sm:$0xff]
  %v2689 = vld [vmem:[%s3 + $0x138] sm:$0xff]
  %v2690 = vld [vmem:[%s3 + $0x140] sm:$0xff]
  %v2691 = vld [vmem:[%s3 + $0x148] sm:$0xff]
  %v2692 = vld [vmem:[%s3 + $0x150] sm:$0xff]
  %v2693 = vld [vmem:[%s3 + $0x158] sm:$0xff]
  %v2694 = vld [vmem:[%s3 + $0x160] sm:$0xff]
  %v2695 = vld [vmem:[%s3 + $0x168] sm:$0xff]
  %v2696 = vld [vmem:[%s3 + $0x170] sm:$0xff]
  %v2697 = vld [vmem:[%s3 + $0x178] sm:$0xff]
  %v2698 = vld [vmem:[%s3 + $0x180] sm:$0xff]
  %v2699 = vld [vmem:[%s3 + $0x188] sm:$0xff]
  %v2700 = vld [vmem:[%s3 + $0x190] sm:$0xff]
  %v2701 = vld [vmem:[%s3 + $0x198] sm:$0xff]
  %v2702 = vld [vmem:[%s3 + $0x1a0] sm:$0xff]
  %v2703 = vld [vmem:[%s3 + $0x1a8] sm:$0xff]
  %v2704 = vld [vmem:[%s3 + $0x1b0] sm:$0xff]
  %v2705 = vld [vmem:[%s3 + $0x1b8] sm:$0xff]
  %v2706 = vld [vmem:[%s3 + $0x1c0] sm:$0xff]
  %v2707 = vld [vmem:[%s3 + $0x1c8] sm:$0xff]
  %v2708 = vld [vmem:[%s3 + $0x1d0] sm:$0xff]
  %v2709 = vld [vmem:[%s3 + $0x1d8] sm:$0xff]
  %v2710 = vld [vmem:[%s3 + $0x1e0] sm:$0xff]
  %v2711 = vld [vmem:[%s3 + $0x1e8] sm:$0xff]
  %v2712 = vld [vmem:[%s3 + $0x1f0] sm:$0xff]
  %v2713 = vld [vmem:[%s3 + $0x1f8] sm:$0xff]
  %v2714 = vld [vmem:[%s3 + $0x200] sm:$0xff]
  %v2715 = vld [vmem:[%s3 + $0x208] sm:$0xff]
  %v2716 = vld [vmem:[%s3 + $0x210] sm:$0xff]
  %v2717 = vld [vmem:[%s3 + $0x218] sm:$0xff]
  %v2718 = vld [vmem:[%s3 + $0x220] sm:$0xff]
  %v2719 = vld [vmem:[%s3 + $0x228] sm:$0xff]
  %v2720 = vld [vmem:[%s3 + $0x230] sm:$0xff]
  %v2721 = vld [vmem:[%s3 + $0x238] sm:$0xff]
  %v2722 = vld [vmem:[%s3 + $0x240] sm:$0xff]
  %v2723 = vld [vmem:[%s3 + $0x248] sm:$0xff]
  %v2724 = vld [vmem:[%s3 + $0x250] sm:$0xff]
  %v2725 = vld [vmem:[%s3 + $0x258] sm:$0xff]
  %v2726 = vld [vmem:[%s3 + $0x260] sm:$0xff]
  %v2727 = vld [vmem:[%s3 + $0x268] sm:$0xff]
  %v2728 = vld [vmem:[%s3 + $0x270] sm:$0xff]
  %v2729 = vld [vmem:[%s3 + $0x278] sm:$0xff]
  %v2730 = vld [vmem:[%s3 + $0x280] sm:$0xff]
  %v2731 = vld [vmem:[%s3 + $0x288] sm:$0xff]
  %v2732 = vld [vmem:[%s3 + $0x290] sm:$0xff]
  %v2733 = vld [vmem:[%s3 + $0x298] sm:$0xff]
  %v2734 = vld [vmem:[%s3 + $0x2a0] sm:$0xff]
  %v2735 = vld [vmem:[%s3 + $0x2a8] sm:$0xff]
  %v2736 = vld [vmem:[%s3 + $0x2b0] sm:$0xff]
  %v2737 = vld [vmem:[%s3 + $0x2b8] sm:$0xff]
  %v2738 = vld [vmem:[%s3 + $0x2c0] sm:$0xff]
  %v2739 = vld [vmem:[%s3 + $0x2c8] sm:$0xff]
  %v2740 = vld [vmem:[%s3 + $0x2d0] sm:$0xff]
  %v2741 = vld [vmem:[%s3 + $0x2d8] sm:$0xff]
  %v2742 = vld [vmem:[%s3 + $0x2e0] sm:$0xff]
  %v2743 = vld [vmem:[%s3 + $0x2e8] sm:$0xff]
  %v2744 = vld [vmem:[%s3 + $0x2f0] sm:$0xff]
  %v2745 = vld [vmem:[%s3 + $0x2f8] sm:$0xff]
  %v2746 = vld [vmem:[%s4] sm:$0xff]
  %v2747 = vld [vmem:[%s4 + $0x8] sm:$0xff]
  %v2748 = vld [vmem:[%s4 + $0x10] sm:$0xff]
  %2749 = vmatprep.subr.mxu0 %v2651
  %2750 = vmatpush1.msra.mxu0 %v2650
  %2751 = vmatprep.subr.mxu0 %v2654
  %2752 = vmatpush1.msra.mxu0 %v2653
  %2753 = vmatprep.subr.mxu0 %v2657
  %2754 = vmatpush1.msra.mxu0 %v2656
  %2755 = vmatprep.subr.mxu0 %v2660
  %2756 = vmatpush1.msra.mxu0 %v2659
  %2757 = vmatprep.subr.mxu0 %v2663
  %2758 = vmatpush1.msra.mxu0 %v2662
  %2759 = vmatprep.subr.mxu0 %v2666
  %2760 = vmatpush1.msra.mxu0 %v2665
  %2761 = vmatprep.subr.mxu0 %v2669
  %2762 = vmatpush1.msra.mxu0 %v2668
  %2763 = vmatprep.subr.mxu0 %v2672
  %2764 = vmatpush1.msra.mxu0 %v2671
  %2765 = vmatprep.subr.mxu0 %v2675
  %2766 = vmatpush1.msra.mxu0 %v2674
  %2767 = vmatprep.subr.mxu0 %v2678
  %2768 = vmatpush1.msra.mxu0 %v2677
  %2769 = vmatprep.subr.mxu0 %v2681
  %2770 = vmatpush1.msra.mxu0 %v2680
  %2771 = vmatprep.subr.mxu0 %v2684
  %2772 = vmatpush1.msra.mxu0 %v2683
  %2773 = vmatprep.subr.mxu0 %v2687
  %2774 = vmatpush1.msra.mxu0 %v2686
  %2775 = vmatprep.subr.mxu0 %v2690
  %2776 = vmatpush1.msra.mxu0 %v2689
  %2777 = vmatprep.subr.mxu0 %v2693
  %2778 = vmatpush1.msra.mxu0 %v2692
  %2779 = vmatprep.subr.mxu0 %v2696
  %2780 = vmatpush1.msra.mxu0 %v2695
  %2781 = vmatprep.subr.mxu0 %v2699
  %2782 = vmatpush1.msra.mxu0 %v2698
  %2783 = vmatprep.subr.mxu0 %v2702
  %2784 = vmatpush1.msra.mxu0 %v2701
  %2785 = vmatprep.subr.mxu0 %v2705
  %2786 = vmatpush1.msra.mxu0 %v2704
  %2787 = vmatprep.subr.mxu0 %v2708
  %2788 = vmatpush1.msra.mxu0 %v2707
  %2789 = vmatprep.subr.mxu0 %v2711
  %2790 = vmatpush1.msra.mxu0 %v2710
  %2791 = vmatprep.subr.mxu0 %v2714
  %2792 = vmatpush1.msra.mxu0 %v2713
  %2793 = vmatprep.subr.mxu0 %v2717
  %2794 = vmatpush1.msra.mxu0 %v2716
  %2795 = vmatprep.subr.mxu0 %v2720
  %2796 = vmatpush1.msra.mxu0 %v2719
  %2797 = vmatprep.subr.mxu0 %v2723
  %2798 = vmatpush1.msra.mxu0 %v2722
  %2799 = vmatprep.subr.mxu0 %v2726
  %2800 = vmatpush1.msra.mxu0 %v2725
  %2801 = vmatprep.subr.mxu0 %v2729
  %2802 = vmatpush1.msra.mxu0 %v2728
  %2803 = vmatprep.subr.mxu0 %v2732
  %2804 = vmatpush1.msra.mxu0 %v2731
  %2805 = vmatprep.subr.mxu0 %v2735
  %2806 = vmatpush1.msra.mxu0 %v2734
  %2807 = vmatprep.subr.mxu0 %v2738
  %2808 = vmatpush1.msra.mxu0 %v2737
  %2809 = vmatprep.subr.mxu0 %v2741
  %2810 = vmatpush1.msra.mxu0 %v2740
  %2811 = vmatprep.subr.mxu0 %v2744
  %2812 = vmatpush1.msra.mxu0 %v2743
  %2813 = vmatprep.mubr.f32.mxu0 %v2638
  %2814 = vmatmul.mubr.f32.gmra.mrb[0].mxu0 %v2637
  %v2815 = vpop.f32.mrb[0].mxu0
  %v2816 = vadd.f32 %v2746, %v2815
  %v2817 = vpop.f32.mrb[0].mxu0
  %v2818 = vadd.f32 %v2747, %v2817
  %2819 = vdwg.mxu0
  %2820 = vmatprep.subr.mxu0 0.0
  %2821 = vmatpush1.msra.mxu0 %v2652
  %2822 = vmatprep.subr.mxu0 0.0
  %2823 = vmatpush1.msra.mxu0 %v2655
  %2824 = vmatprep.subr.mxu0 0.0
  %2825 = vmatpush1.msra.mxu0 %v2658
  %2826 = vmatprep.subr.mxu0 0.0
  %2827 = vmatpush1.msra.mxu0 %v2661
  %2828 = vmatprep.subr.mxu0 0.0
  %2829 = vmatpush1.msra.mxu0 %v2664
  %2830 = vmatprep.subr.mxu0 0.0
  %2831 = vmatpush1.msra.mxu0 %v2667
  %2832 = vmatprep.subr.mxu0 0.0
  %2833 = vmatpush1.msra.mxu0 %v2670
  %2834 = vmatprep.subr.mxu0 0.0
  %2835 = vmatpush1.msra.mxu0 %v2673
  %2836 = vmatprep.subr.mxu0 0.0
  %2837 = vmatpush1.msra.mxu0 %v2676
  %2838 = vmatprep.subr.mxu0 0.0
  %2839 = vmatpush1.msra.mxu0 %v2679
  %2840 = vmatprep.subr.mxu0 0.0
  %2841 = vmatpush1.msra.mxu0 %v2682
  %2842 = vmatprep.subr.mxu0 0.0
  %2843 = vmatpush1.msra.mxu0 %v2685
  %2844 = vmatprep.subr.mxu0 0.0
  %2845 = vmatpush1.msra.mxu0 %v2688
  %2846 = vmatprep.subr.mxu0 0.0
  %2847 = vmatpush1.msra.mxu0 %v2691
  %2848 = vmatprep.subr.mxu0 0.0
  %2849 = vmatpush1.msra.mxu0 %v2694
  %2850 = vmatprep.subr.mxu0 0.0
  %2851 = vmatpush1.msra.mxu0 %v2697
  %2852 = vmatprep.subr.mxu0 0.0
  %2853 = vmatpush1.msra.mxu0 %v2700
  %2854 = vmatprep.subr.mxu0 0.0
  %2855 = vmatpush1.msra.mxu0 %v2703
  %2856 = vmatprep.subr.mxu0 0.0
  %2857 = vmatpush1.msra.mxu0 %v2706
  %2858 = vmatprep.subr.mxu0 0.0
  %2859 = vmatpush1.msra.mxu0 %v2709
  %2860 = vmatprep.subr.mxu0 0.0
  %2861 = vmatpush1.msra.mxu0 %v2712
  %2862 = vmatprep.subr.mxu0 0.0
  %2863 = vmatpush1.msra.mxu0 %v2715
  %2864 = vmatprep.subr.mxu0 0.0
  %2865 = vmatpush1.msra.mxu0 %v2718
  %2866 = vmatprep.subr.mxu0 0.0
  %2867 = vmatpush1.msra.mxu0 %v2721
  %2868 = vmatprep.subr.mxu0 0.0
  %2869 = vmatpush1.msra.mxu0 %v2724
  %2870 = vmatprep.subr.mxu0 0.0
  %2871 = vmatpush1.msra.mxu0 %v2727
  %2872 = vmatprep.subr.mxu0 0.0
  %2873 = vmatpush1.msra.mxu0 %v2730
  %2874 = vmatprep.subr.mxu0 0.0
  %2875 = vmatpush1.msra.mxu0 %v2733
  %2876 = vmatprep.subr.mxu0 0.0
  %2877 = vmatpush1.msra.mxu0 %v2736
  %2878 = vmatprep.subr.mxu0 0.0
  %2879 = vmatpush1.msra.mxu0 %v2739
  %2880 = vmatprep.subr.mxu0 0.0
  %2881 = vmatpush1.msra.mxu0 %v2742
  %2882 = vmatprep.subr.mxu0 0.0
  %2883 = vmatpush1.msra.mxu0 %v2745
  %2884 = vmatprep.mubr.f32.mxu0 %v2638
  %2885 = vmatmul.mubr.f32.gmra.mrb[0].mxu0 %v2637
  %v2886 = vpop.f32.mrb[0].mxu0
  %v2887 = vadd.f32 %v2748, %v2886
  %v2888 = vpop.f32.mrb[0].mxu0
  %2889 = vdwg.mxu0
  %v2890 = vadd.f32 %v2647, %v2816
  %v2891 = vxor.u32 %v2890, 2147483648
  %v2892 = vmul.f32 %v2891, 1.442695
  %v2893 = vpow.pop %v2892
  %v2894 = vadd.f32 %v2893, 1.0
  %v2895 = vrcp.pop %v2894
  %v2896 = vmul.f32 1.0, %v2895
  %v2897 = vadd.f32 %v2648, %v2818
  %v2898 = vxor.u32 %v2897, 2147483648
  %v2899 = vmul.f32 %v2898, 1.442695
  %v2900 = vpow.pop %v2899
  %v2901 = vadd.f32 %v2900, 1.0
  %v2902 = vrcp.pop %v2901
  %v2903 = vmul.f32 1.0, %v2902
  %v2904 = vmul.f32 %v2896, %v2887
  %v2905 = vadd.f32 %v2649, %v2904
  %v2906 = vtanh.pop %v2905
  %v2907 = vsub.f32 1.0, %v2903
  %v2908 = vmul.f32 %v2907, %v2906
  %v2909 = vmul.f32 %v2903, %v2639
  %v2910 = vadd.f32 %v2908, %v2909
  %s2911 = scalar_lea.vmem %s5, 56
  %2912 = vst [vmem:[%s2911] sm:$0xff] %v2910
  // Predicated region
  $region22: #{conventional_net_forward.9} parent=0 // pred_check
    _
  $region23: #{conventional_net_forward.9} parent=0 // pred_check_branch
    %2914 = sbr.rel (0) target = $region25
  $region24: #{conventional_net_forward.9} parent=0 // pred_region
    _
  $region25: #{conventional_net_forward.9} parent=0 // pred_fallthru
    _
  // Predicated region
  $region26: #{conventional_net_forward.9} parent=0 // pred_check
    _
  $region27: #{conventional_net_forward.9} parent=0 // pred_check_branch
    %2916 = sbr.rel (0) target = $region29
  $region28: #{conventional_net_forward.9} parent=0 // pred_region
    _
  $region29: #{conventional_net_forward.9} parent=0 // pred_fallthru
    _

</llo_original>
